<compile_context>
chip_gen: v7x
topology: tpu7x:2x2x1
jax: 0.10.0
libtpu: 0.0.40
codegen_flags: <defaults>
</compile_context>

<pallas_src>
import functools

import jax
import jax.numpy as jnp
from jax import lax
from jax.experimental import pallas as pl
from jax.experimental.pallas import tpu as pltpu

EPS = 1e-5          # nn.LayerNorm default
_MIB = 1024 * 1024


# --------------------------------- helpers ------------------------------------

def _layernorm(y, g, b):
    # f32 LayerNorm over the last axis (affine)
    mu = jnp.mean(y, axis=-1, keepdims=True)
    var = jnp.mean(jnp.square(y - mu), axis=-1, keepdims=True)
    return (y - mu) * lax.rsqrt(var + EPS) * g + b


def _pick_tile(n, cap):
    """Largest tile <= cap that divides n and is a multiple of 8 (the (8,128) block rule
    for strict sub-blocks); fall back to the full dimension."""
    if n <= cap:
        return n
    for t in range(cap - cap % 8, 7, -8):
        if n % t == 0:
            return t
    return n


# --------------------------------- kernels ------------------------------------

def _mha_flash_kernel(res_ref, qin_ref, kin_ref, vin_ref,
                      wq_ref, wk_ref, wv_ref, wo_ref,
                      bq_ref, bk_ref, bv_ref, bo_ref,
                      g_ref, beta_ref,
                      o_ref,
                      qproj_sc, m_sc, l_sc, acc_sc,
                      *, num_heads):
    """Fused MHA block with flash-style K tiling.

    Grid = (batch, q-tile, k-tile); the k-tile axis is the innermost reduction axis and carries
    online-softmax accumulators in VMEM scratch.  Q/K/V projections are full-width (C,C) matmuls
    (bf16 operands, f32 accumulation); heads are split with static lane slices.  1/sqrt(Dh) is
    pre-folded into Wq/bq, so no score scaling happens here.  Softmax / LayerNorm stay in f32.
    """
    ki = pl.program_id(2)
    nk_steps = pl.num_programs(2)
    tq, c = qproj_sc.shape
    H = num_heads
    dh = c // H

    @pl.when(ki == 0)
    def _init():
        # Q projection (scale already folded into wq/bq); computed once per (batch, q-tile).
        q_full = (jnp.dot(qin_ref[0], wq_ref[...], preferred_element_type=jnp.float32)
                  + bq_ref[...])                                   # (TQ, C) f32
        qproj_sc[...] = q_full.astype(jnp.bfloat16)
        m_sc[...] = jnp.full_like(m_sc, -jnp.inf)
        l_sc[...] = jnp.zeros_like(l_sc)
        acc_sc[...] = jnp.zeros_like(acc_sc)

    # K/V projections for this k-tile (full-width matmuls for MXU utilization).
    k_full = (jnp.dot(kin_ref[0], wk_ref[...], preferred_element_type=jnp.float32)
              + bk_ref[...]).astype(jnp.bfloat16)                  # (TK, C)
    v_full = (jnp.dot(vin_ref[0], wv_ref[...], preferred_element_type=jnp.float32)
              + bv_ref[...]).astype(jnp.bfloat16)                  # (TK, C)
    q_full = qproj_sc[...]                                         # (TQ, C) bf16

    # Per-head online-softmax accumulation (static lane slices, no in-kernel transposes).
    for h in range(H):
        lo, hi = h * dh, (h + 1) * dh
        qh = q_full[:, lo:hi]                                      # (TQ, Dh)
        kh = k_full[:, lo:hi]                                      # (TK, Dh)
        vh = v_full[:, lo:hi]                                      # (TK, Dh)

        # scores = qh @ kh^T without materializing a transpose (scale pre-folded)
        s = lax.dot_general(qh, kh, (((1,), (1,)), ((), ())),
                            preferred_element_type=jnp.float32)    # (TQ, TK) f32

        m_prev = m_sc[h]                                           # (TQ, 1)
        m_new = jnp.maximum(m_prev, jnp.max(s, axis=-1, keepdims=True))
        alpha = jnp.exp(m_prev - m_new)
        p = jnp.exp(s - m_new)
        l_sc[h] = alpha * l_sc[h] + jnp.sum(p, axis=-1, keepdims=True)
        acc_sc[h] = alpha * acc_sc[h] + jnp.dot(p.astype(jnp.bfloat16), vh,
                                                preferred_element_type=jnp.float32)
        m_sc[h] = m_new

    @pl.when(ki == nk_steps - 1)
    def _finalize():
        # head merge + out-projection fused as an accumulation over head-major Wo slabs
        y = jnp.zeros((tq, c), jnp.float32)
        for h in range(H):
            oh = acc_sc[h] / l_sc[h]                               # exact softmax normalization
            y = y + jnp.dot(oh.astype(jnp.bfloat16), wo_ref[h],
                            preferred_element_type=jnp.float32)    # (TQ, C)
        y = res_ref[0] + y + bo_ref[...]                           # residual + out-proj bias (f32)
        o_ref[0, :, :] = _layernorm(y, g_ref[...], beta_ref[...])


def _ffn_ln_kernel(x_ref, w1_ref, b1_ref, w2_ref, b2_ref, g_ref, bt_ref, o_ref):
    """linear2(relu(linear1(x))) + residual + LayerNorm (dropout = identity)."""
    x = x_ref[...]                                                 # (TM, C) f32
    h = jnp.dot(x.astype(jnp.bfloat16), w1_ref[...],
                preferred_element_type=jnp.float32) + b1_ref[...]  # (TM, F) f32
    h = jnp.maximum(h, 0.0).astype(jnp.bfloat16)
    y2 = jnp.dot(h, w2_ref[...], preferred_element_type=jnp.float32) + b2_ref[...]
    o_ref[...] = _layernorm(x + y2, g_ref[...], bt_ref[...])


# --------------------------------- wrappers ------------------------------------

def _mha_block(res, q_in, k_in, v_in, mp, gamma, beta, num_heads):
    """One fused pallas_call: grid=(B, Nq tiles, Nk tiles), weights resident across steps."""
    B, Nq, C = res.shape
    Nk = k_in.shape[1]
    H = num_heads
    Dh = C // H
    TQ = _pick_tile(Nq, 256)
    TK = _pick_tile(Nk, 512)

    kern = functools.partial(_mha_flash_kernel, num_heads=H)

    spec_res = pl.BlockSpec((1, TQ, C), lambda b, qi, ki: (b, qi, 0))
    spec_qin = pl.BlockSpec((1, TQ, C), lambda b, qi, ki: (b, qi, 0))
    spec_kin = pl.BlockSpec((1, TK, C), lambda b, qi, ki: (b, ki, 0))
    spec_wcc = pl.BlockSpec((C, C), lambda b, qi, ki: (0, 0))
    spec_wo = pl.BlockSpec((H, Dh, C), lambda b, qi, ki: (0, 0, 0))
    spec_vec = pl.BlockSpec((1, C), lambda b, qi, ki: (0, 0))

    # VMEM budget estimate: double-buffered activation blocks + resident weights + scratch
    # + in-flight f32 temporaries; clamp to <= 56 MiB (headroom under v7x's 64 MiB physical).
    est = int(1.5 * (
        2 * (TQ * C * 6 + 2 * TK * C * 2)            # res f32 + q bf16, k/v bf16 (x2 buffers)
        + 2 * 4 * C * C * 2                          # wq/wk/wv/wo bf16 (x2 buffers)
        + 2 * TQ * C * 4                             # output f32 (x2 buffers)
        + TQ * C * 2 + H * TQ * (Dh + 2) * 4         # scratch (q proj + m/l/acc)
        + (TQ * TK + 2 * TK * C + 2 * TQ * C) * 4))  # f32 temporaries
    vmem_limit = int(min(max(est, 32 * _MIB), 56 * _MIB))

    cost = pl.CostEstimate(
        flops=int(2 * B * (2 * C * C * (Nq + Nk) + 2 * Nq * Nk * C)),
        transcendentals=int(B * H * Nq * Nk),
        bytes_accessed=int(B * C * (10 * Nq + 4 * Nk) + 8 * C * C + 2 * H * Dh * C))

    return pl.pallas_call(
        kern,
        out_shape=jax.ShapeDtypeStruct((B, Nq, C), jnp.float32),
        grid=(B, Nq // TQ, Nk // TK),
        in_specs=[spec_res, spec_qin, spec_kin, spec_kin,
                  spec_wcc, spec_wcc, spec_wcc, spec_wo,
                  spec_vec, spec_vec, spec_vec, spec_vec,
                  spec_vec, spec_vec],
        out_specs=pl.BlockSpec((1, TQ, C), lambda b, qi, ki: (b, qi, 0)),
        scratch_shapes=[pltpu.VMEM((TQ, C), jnp.bfloat16),      # scaled Q projection
                        pltpu.VMEM((H, TQ, 1), jnp.float32),    # running max
                        pltpu.VMEM((H, TQ, 1), jnp.float32),    # running denom
                        pltpu.VMEM((H, TQ, Dh), jnp.float32)],  # running numerator
        compiler_params=pltpu.CompilerParams(
            dimension_semantics=("parallel", "parallel", "arbitrary"),
            vmem_limit_bytes=vmem_limit),
        cost_estimate=cost,
    )(res, q_in, k_in, v_in,
      mp["wq_t"], mp["wk_t"], mp["wv_t"], mp["wo_h"],
      mp["bq"], mp["bk"], mp["bv"], mp["bo"],
      gamma, beta)


def _ffn_ln(x2d, w1_t, b1, w2_t, b2, gamma, beta):
    """Fused FFN + residual + LayerNorm, tiled over rows (512-row tiles, pipelined & parallel)."""
    M, C = x2d.shape
    F = w1_t.shape[1]
    TM = _pick_tile(M, 512)

    est = int(1.5 * (2 * TM * C * 4 * 2        # in/out f32 (x2 buffers)
                     + 2 * 2 * C * F * 2       # w1/w2 bf16 (x2 buffers)
                     + 2 * TM * F * 4))        # f32 intermediate
    vmem_limit = int(min(max(est, 32 * _MIB), 56 * _MIB))

    cost = pl.CostEstimate(flops=int(4 * M * C * F), transcendentals=0,
                           bytes_accessed=int(8 * M * C + 4 * C * F))

    return pl.pallas_call(
        _ffn_ln_kernel,
        out_shape=jax.ShapeDtypeStruct((M, C), jnp.float32),
        grid=(M // TM,),
        in_specs=[pl.BlockSpec((TM, C), lambda i: (i, 0)),
                  pl.BlockSpec((C, F), lambda i: (0, 0)),
                  pl.BlockSpec((1, F), lambda i: (0, 0)),
                  pl.BlockSpec((F, C), lambda i: (0, 0)),
                  pl.BlockSpec((1, C), lambda i: (0, 0)),
                  pl.BlockSpec((1, C), lambda i: (0, 0)),
                  pl.BlockSpec((1, C), lambda i: (0, 0))],
        out_specs=pl.BlockSpec((TM, C), lambda i: (i, 0)),
        compiler_params=pltpu.CompilerParams(
            dimension_semantics=("parallel",),
            vmem_limit_bytes=vmem_limit),
        cost_estimate=cost,
    )(x2d, w1_t, b1, w2_t, b2, gamma, beta)


@functools.partial(jax.jit, static_argnames=("num_heads",))
def _forward(p, queries, memory, query_pos, memory_pos, *, num_heads):
    B, Nq, C = queries.shape

    # ---- self attention + norm1 ----
    # q = k = queries + query_pos (bf16), v = queries (bf16), residual = queries (f32)
    q_self = (queries + query_pos).astype(jnp.bfloat16)
    v_self = queries.astype(jnp.bfloat16)
    q1 = _mha_block(queries, q_self, q_self, v_self,
                    p["self_attn"], p["norm1_weight"], p["norm1_bias"], num_heads)

    # ---- cross attention + norm2 ----
    # q = q1 + query_pos, k = memory + memory_pos, v = memory (K/V side bf16), residual = q1 (f32)
    q_cross = (q1 + query_pos).astype(jnp.bfloat16)
    k_cross = (memory + memory_pos).astype(jnp.bfloat16)
    v_cross = memory.astype(jnp.bfloat16)
    q2 = _mha_block(q1, q_cross, k_cross, v_cross,
                    p["cross_attn"], p["norm2_weight"], p["norm2_bias"], num_heads)

    # ---- FFN + norm3 ----
    q3 = _ffn_ln(q2.reshape(B * Nq, C),
                 p["w1_t"], p["b1"], p["w2_t"], p["b2"],
                 p["norm3_weight"], p["norm3_bias"])
    return q3.reshape(B, Nq, C)


def trajectory_query_refine_layer(prepared_params, queries, memory,
                                  query_pos=None, memory_pos=None, num_heads=8):
    """Pallas-backed forward of TrajectoryQueryRefineLayer (dropout = identity)."""
    # TODO(synk): no attention / key-padding mask path (the reference module never passes masks).
    if query_pos is None:
        query_pos = jnp.zeros_like(queries)
    if memory_pos is None:
        memory_pos = jnp.zeros_like(memory)
    return _forward(prepared_params, queries, memory, query_pos, memory_pos,
                    num_heads=num_heads)


# ------------------- parameter init (PyTorch layout) & preparation -------------------

def init_params(key, C, dim_feedforward):
    keys = jax.random.split(key, 12)

    def w(k, shape, s=0.05):
        return jax.random.normal(k, shape, jnp.float32) * s

    def mha_params(k0, k1, k2, k3):
        return {
            "in_proj_weight":  w(k0, (3 * C, C)),
            "in_proj_bias":    w(k1, (3 * C,), 0.01),
            "out_proj_weight": w(k2, (C, C)),
            "out_proj_bias":   w(k3, (C,), 0.01),
        }

    return {
        "self_attn":  mha_params(keys[0], keys[1], keys[2], keys[3]),
        "cross_attn": mha_params(keys[4], keys[5], keys[6], keys[7]),
        "linear1_weight": w(keys[8], (dim_feedforward, C)),
        "linear1_bias":   w(keys[9], (dim_feedforward,), 0.01),
        "linear2_weight": w(keys[10], (C, dim_feedforward)),
        "linear2_bias":   w(keys[11], (C,), 0.01),
        "norm1_weight": jnp.ones((C,), jnp.float32),
        "norm1_bias":   jnp.zeros((C,), jnp.float32),
        "norm2_weight": jnp.ones((C,), jnp.float32),
        "norm2_bias":   jnp.zeros((C,), jnp.float32),
        "norm3_weight": jnp.ones((C,), jnp.float32),
        "norm3_bias":   jnp.zeros((C,), jnp.float32),
    }


def prepare_params(params, num_heads):
    """One-time conversion from PyTorch layout to kernel layout:
       - Q/K/V projection weights pre-transposed to full-width (C, C) bf16, 1/sqrt(Dh) folded
         into Wq and bq
       - out-proj weight pre-transposed and split head-major (H, Dh, C), bf16
       - biases / LayerNorm params as (1, X) f32 rows."""
    C = params["norm1_weight"].shape[0]
    H = num_heads
    Dh = C // H
    scale = 1.0 / float(Dh) ** 0.5

    def prep_mha(p):
        wq, wk, wv = jnp.split(p["in_proj_weight"], 3, axis=0)   # each (C_out, C_in)
        bq, bk, bv = jnp.split(p["in_proj_bias"], 3, axis=0)
        return {
            "wq_t": (wq.T * scale).astype(jnp.bfloat16),         # (C, C), scale folded
            "wk_t": wk.T.astype(jnp.bfloat16),
            "wv_t": wv.T.astype(jnp.bfloat16),
            "wo_h": p["out_proj_weight"].T.reshape(H, Dh, C).astype(jnp.bfloat16),
            "bq":   (bq * scale).reshape(1, C).astype(jnp.float32),
            "bk":   bk.reshape(1, C).astype(jnp.float32),
            "bv":   bv.reshape(1, C).astype(jnp.float32),
            "bo":   p["out_proj_bias"].reshape(1, C).astype(jnp.float32),
        }

    def vec(v):
        return v.reshape(1, -1).astype(jnp.float32)

    return {
        "self_attn":  prep_mha(params["self_attn"]),
        "cross_attn": prep_mha(params["cross_attn"]),
        "w1_t": params["linear1_weight"].T.astype(jnp.bfloat16),   # (C, F)
        "b1":   vec(params["linear1_bias"]),
        "w2_t": params["linear2_weight"].T.astype(jnp.bfloat16),   # (F, C)
        "b2":   vec(params["linear2_bias"]),
        "norm1_weight": vec(params["norm1_weight"]), "norm1_bias": vec(params["norm1_bias"]),
        "norm2_weight": vec(params["norm2_weight"]), "norm2_bias": vec(params["norm2_bias"]),
        "norm3_weight": vec(params["norm3_weight"]), "norm3_bias": vec(params["norm3_bias"]),
    }


# ------------------------------- pure-JAX reference -----------------------------------

def _reference_forward(params, queries, memory, query_pos, memory_pos, num_heads):
    def mha(p, q, k, v, H):
        C = q.shape[-1]
        Dh = C // H
        wq, wk, wv = jnp.split(p["in_proj_weight"], 3, axis=0)
        bq, bk, bv = jnp.split(p["in_proj_bias"], 3, axis=0)

        def heads(x):                       # (B, N, C) -> (B, H, N, Dh)
            B, N, _ = x.shape
            return x.reshape(B, N, H, Dh).transpose(0, 2, 1, 3)

        qh = heads(q @ wq.T + bq) / (Dh ** 0.5)
        kh = heads(k @ wk.T + bk)
        vh = heads(v @ wv.T + bv)
        s = jnp.einsum('bhqd,bhkd->bhqk', qh, kh)
        a = jax.nn.softmax(s, axis=-1)
        o = jnp.einsum('bhqk,bhkd->bhqd', a, vh)
        B, _, Nq, _ = o.shape
        o = o.transpose(0, 2, 1, 3).reshape(B, Nq, C)
        return o @ p["out_proj_weight"].T + p["out_proj_bias"]

    def ln(x, g, b):
        mu = x.mean(-1, keepdims=True)
        var = ((x - mu) ** 2).mean(-1, keepdims=True)
        return (x - mu) / jnp.sqrt(var + EPS) * g + b

    q = queries + query_pos
    x1 = ln(queries + mha(params["self_attn"], q, q, queries, num_heads),
            params["norm1_weight"], params["norm1_bias"])
    q = x1 + query_pos
    k = memory + memory_pos
    x2 = ln(x1 + mha(params["cross_attn"], q, k, memory, num_heads),
            params["norm2_weight"], params["norm2_bias"])
    h = jax.nn.relu(x2 @ params["linear1_weight"].T + params["linear1_bias"])
    y = h @ params["linear2_weight"].T + params["linear2_bias"]
    return ln(x2 + y, params["norm3_weight"], params["norm3_bias"])


if __name__ == "__main__":
    B, Nq, C, num_heads, dim_ff = 2, 8, 32, 8, 64
    Nm = 16  # H*W flattened spatial memory length

    key = jax.random.PRNGKey(0)
    k1, k2, k3, k4, kp = jax.random.split(key, 5)
    queries    = jax.random.normal(k1, (B, Nq, C), jnp.float32)
    memory     = jax.random.normal(k2, (B, Nm, C), jnp.float32)
    query_pos  = jax.random.normal(k3, (B, Nq, C), jnp.float32)
    memory_pos = jax.random.normal(k4, (B, Nm, C), jnp.float32)

    params = init_params(kp, C, dim_ff)
    prepared = prepare_params(params, num_heads)

    out = trajectory_query_refine_layer(prepared, queries, memory,
                                        query_pos, memory_pos,
                                        num_heads=num_heads)
    out = jax.block_until_ready(out)
    assert out.shape == (B, Nq, C)
    assert bool(jnp.all(jnp.isfinite(out)))

    # correctness vs pure-JAX f32 reference (tolerance covers bf16 MXU operands)
    ref = _reference_forward(params, queries, memory, query_pos, memory_pos, num_heads)
    max_err = float(jnp.max(jnp.abs(out - ref)))
    assert max_err < 5e-2, f"max abs error {max_err}"
    print("KERNEL_OK")
</pallas_src>

<mosaic_0001>
module attributes {stable_mosaic.version = 11 : i64} {
  func.func @_mha_flash_kernel(%arg0: i32, %arg1: i32, %arg2: i32, %arg3: memref<1x8x32xf32, #tpu.memory_space<vmem>>, %arg4: memref<1x8x32xbf16, #tpu.memory_space<vmem>>, %arg5: memref<1x8x32xbf16, #tpu.memory_space<vmem>>, %arg6: memref<1x8x32xbf16, #tpu.memory_space<vmem>>, %arg7: memref<32x32xbf16, #tpu.memory_space<vmem>>, %arg8: memref<32x32xbf16, #tpu.memory_space<vmem>>, %arg9: memref<32x32xbf16, #tpu.memory_space<vmem>>, %arg10: memref<8x4x32xbf16, #tpu.memory_space<vmem>>, %arg11: memref<1x32xf32, #tpu.memory_space<vmem>>, %arg12: memref<1x32xf32, #tpu.memory_space<vmem>>, %arg13: memref<1x32xf32, #tpu.memory_space<vmem>>, %arg14: memref<1x32xf32, #tpu.memory_space<vmem>>, %arg15: memref<1x32xf32, #tpu.memory_space<vmem>>, %arg16: memref<1x32xf32, #tpu.memory_space<vmem>>, %arg17: memref<1x8x32xf32, #tpu.memory_space<vmem>>, %arg18: memref<8x32xbf16, #tpu.memory_space<vmem>>, %arg19: memref<8x8x1xf32, #tpu.memory_space<vmem>>, %arg20: memref<8x8x1xf32, #tpu.memory_space<vmem>>, %arg21: memref<8x8x4xf32, #tpu.memory_space<vmem>>) attributes {dimension_semantics = [#tpu.dimension_semantics<parallel>, #tpu.dimension_semantics<parallel>, #tpu.dimension_semantics<arbitrary>], iteration_bounds = array<i64: 2, 1, 1>, scalar_prefetch = 0 : i64, scratch_operands = 4 : i64, tpu.core_type = #tpu.core_type<tc>, window_params = [{transform_indices = @transform_0, window_bounds = array<i64: 1, 8, 32>}, {transform_indices = @transform_1, window_bounds = array<i64: 1, 8, 32>}, {transform_indices = @transform_2, window_bounds = array<i64: 1, 8, 32>}, {transform_indices = @transform_3, window_bounds = array<i64: 1, 8, 32>}, {pipeline_mode = #tpu.pipeline_mode<synchronous>, transform_indices = @transform_4, window_bounds = array<i64: 32, 32>}, {pipeline_mode = #tpu.pipeline_mode<synchronous>, transform_indices = @transform_5, window_bounds = array<i64: 32, 32>}, {pipeline_mode = #tpu.pipeline_mode<synchronous>, transform_indices = @transform_6, window_bounds = array<i64: 32, 32>}, {pipeline_mode = #tpu.pipeline_mode<synchronous>, transform_indices = @transform_7, window_bounds = array<i64: 8, 4, 32>}, {pipeline_mode = #tpu.pipeline_mode<synchronous>, transform_indices = @transform_8, window_bounds = array<i64: 1, 32>}, {pipeline_mode = #tpu.pipeline_mode<synchronous>, transform_indices = @transform_9, window_bounds = array<i64: 1, 32>}, {pipeline_mode = #tpu.pipeline_mode<synchronous>, transform_indices = @transform_10, window_bounds = array<i64: 1, 32>}, {pipeline_mode = #tpu.pipeline_mode<synchronous>, transform_indices = @transform_11, window_bounds = array<i64: 1, 32>}, {pipeline_mode = #tpu.pipeline_mode<synchronous>, transform_indices = @transform_12, window_bounds = array<i64: 1, 32>}, {pipeline_mode = #tpu.pipeline_mode<synchronous>, transform_indices = @transform_13, window_bounds = array<i64: 1, 32>}, {transform_indices = @transform_14, window_bounds = array<i64: 1, 8, 32>}]} {
    %c0_i32 = arith.constant 0 : i32
    %0 = arith.cmpi eq, %arg2, %c0_i32 : i32
    %1 = arith.extui %0 : i1 to i32
    %c0_i32_0 = arith.constant 0 : i32
    %2 = arith.cmpi ne, %1, %c0_i32_0 : i32
    scf.if %2 {
      %c0_188 = arith.constant 0 : index
      %c0_189 = arith.constant 0 : index
      %c0_190 = arith.constant 0 : index
      %311 = vector.load %arg4[%c0_188, %c0_189, %c0_190] : memref<1x8x32xbf16, #tpu.memory_space<vmem>>, vector<1x8x32xbf16>
      %312 = vector.shape_cast %311 : vector<1x8x32xbf16> to vector<8x32xbf16>
      %c0_191 = arith.constant 0 : index
      %c0_192 = arith.constant 0 : index
      %313 = vector.load %arg7[%c0_191, %c0_192] : memref<32x32xbf16, #tpu.memory_space<vmem>>, vector<32x32xbf16>
      %cst_193 = arith.constant dense<0.000000e+00> : vector<8x32xf32>
      %314 = tpu.matmul %312, %313, %cst_193 {dimension_numbers = #tpu.dot_dimension_numbers<[1], [0], [0], [1], [0, 0, 1, 1], [], []>} : vector<8x32xbf16>, vector<32x32xbf16>, vector<8x32xf32> -> vector<8x32xf32>
      %c0_194 = arith.constant 0 : index
      %c0_195 = arith.constant 0 : index
      %315 = vector.load %arg11[%c0_194, %c0_195] : memref<1x32xf32, #tpu.memory_space<vmem>>, vector<1x32xf32>
      %316 = vector.broadcast %315 : vector<1x32xf32> to vector<8x32xf32>
      %317 = arith.addf %314, %316 : vector<8x32xf32>
      %318 = arith.truncf %317 : vector<8x32xf32> to vector<8x32xbf16>
      %c0_196 = arith.constant 0 : index
      %c0_197 = arith.constant 0 : index
      %319 = vector.load %arg18[%c0_196, %c0_197] : memref<8x32xbf16, #tpu.memory_space<vmem>>, vector<8x32xbf16>
      tpu.vector_store %arg18[%c0_196, %c0_197], %318 {strides = array<i32>} : memref<8x32xbf16, #tpu.memory_space<vmem>>, vector<8x32xbf16>,
      %cst_198 = arith.constant 0xFF800000 : f32
      %320 = vector.broadcast %cst_198 : f32 to vector<8x8x1xf32>
      %c0_199 = arith.constant 0 : index
      %c0_200 = arith.constant 0 : index
      %c0_201 = arith.constant 0 : index
      %321 = vector.load %arg19[%c0_199, %c0_200, %c0_201] : memref<8x8x1xf32, #tpu.memory_space<vmem>>, vector<8x8x1xf32>
      tpu.vector_store %arg19[%c0_199, %c0_200, %c0_201], %320 {strides = array<i32>} : memref<8x8x1xf32, #tpu.memory_space<vmem>>, vector<8x8x1xf32>,
      %cst_202 = arith.constant 0.000000e+00 : f32
      %322 = vector.broadcast %cst_202 : f32 to vector<8x8x1xf32>
      %c0_203 = arith.constant 0 : index
      %c0_204 = arith.constant 0 : index
      %c0_205 = arith.constant 0 : index
      %323 = vector.load %arg20[%c0_203, %c0_204, %c0_205] : memref<8x8x1xf32, #tpu.memory_space<vmem>>, vector<8x8x1xf32>
      tpu.vector_store %arg20[%c0_203, %c0_204, %c0_205], %322 {strides = array<i32>} : memref<8x8x1xf32, #tpu.memory_space<vmem>>, vector<8x8x1xf32>,
      %cst_206 = arith.constant 0.000000e+00 : f32
      %324 = vector.broadcast %cst_206 : f32 to vector<8x8x4xf32>
      %c0_207 = arith.constant 0 : index
      %c0_208 = arith.constant 0 : index
      %c0_209 = arith.constant 0 : index
      %325 = vector.load %arg21[%c0_207, %c0_208, %c0_209] : memref<8x8x4xf32, #tpu.memory_space<vmem>>, vector<8x8x4xf32>
      tpu.vector_store %arg21[%c0_207, %c0_208, %c0_209], %324 {strides = array<i32>} : memref<8x8x4xf32, #tpu.memory_space<vmem>>, vector<8x8x4xf32>,
    } else {
    }
    %c0 = arith.constant 0 : index
    %c0_1 = arith.constant 0 : index
    %c0_2 = arith.constant 0 : index
    %3 = vector.load %arg5[%c0, %c0_1, %c0_2] : memref<1x8x32xbf16, #tpu.memory_space<vmem>>, vector<1x8x32xbf16>
    %4 = vector.shape_cast %3 : vector<1x8x32xbf16> to vector<8x32xbf16>
    %c0_3 = arith.constant 0 : index
    %c0_4 = arith.constant 0 : index
    %5 = vector.load %arg8[%c0_3, %c0_4] : memref<32x32xbf16, #tpu.memory_space<vmem>>, vector<32x32xbf16>
    %cst = arith.constant dense<0.000000e+00> : vector<8x32xf32>
    %6 = tpu.matmul %4, %5, %cst {dimension_numbers = #tpu.dot_dimension_numbers<[1], [0], [0], [1], [0, 0, 1, 1], [], []>} : vector<8x32xbf16>, vector<32x32xbf16>, vector<8x32xf32> -> vector<8x32xf32>
    %c0_5 = arith.constant 0 : index
    %c0_6 = arith.constant 0 : index
    %7 = vector.load %arg12[%c0_5, %c0_6] : memref<1x32xf32, #tpu.memory_space<vmem>>, vector<1x32xf32>
    %8 = vector.broadcast %7 : vector<1x32xf32> to vector<8x32xf32>
    %9 = arith.addf %6, %8 : vector<8x32xf32>
    %10 = arith.truncf %9 : vector<8x32xf32> to vector<8x32xbf16>
    %c0_7 = arith.constant 0 : index
    %c0_8 = arith.constant 0 : index
    %c0_9 = arith.constant 0 : index
    %11 = vector.load %arg6[%c0_7, %c0_8, %c0_9] : memref<1x8x32xbf16, #tpu.memory_space<vmem>>, vector<1x8x32xbf16>
    %12 = vector.shape_cast %11 : vector<1x8x32xbf16> to vector<8x32xbf16>
    %c0_10 = arith.constant 0 : index
    %c0_11 = arith.constant 0 : index
    %13 = vector.load %arg9[%c0_10, %c0_11] : memref<32x32xbf16, #tpu.memory_space<vmem>>, vector<32x32xbf16>
    %cst_12 = arith.constant dense<0.000000e+00> : vector<8x32xf32>
    %14 = tpu.matmul %12, %13, %cst_12 {dimension_numbers = #tpu.dot_dimension_numbers<[1], [0], [0], [1], [0, 0, 1, 1], [], []>} : vector<8x32xbf16>, vector<32x32xbf16>, vector<8x32xf32> -> vector<8x32xf32>
    %c0_13 = arith.constant 0 : index
    %c0_14 = arith.constant 0 : index
    %15 = vector.load %arg13[%c0_13, %c0_14] : memref<1x32xf32, #tpu.memory_space<vmem>>, vector<1x32xf32>
    %16 = vector.broadcast %15 : vector<1x32xf32> to vector<8x32xf32>
    %17 = arith.addf %14, %16 : vector<8x32xf32>
    %18 = arith.truncf %17 : vector<8x32xf32> to vector<8x32xbf16>
    %c0_15 = arith.constant 0 : index
    %c0_16 = arith.constant 0 : index
    %19 = vector.load %arg18[%c0_15, %c0_16] : memref<8x32xbf16, #tpu.memory_space<vmem>>, vector<8x32xbf16>
    %20 = vector.extract_strided_slice %19 {offsets = [0, 0], sizes = [8, 4], strides = [1, 1]} : vector<8x32xbf16> to vector<8x4xbf16>
    %21 = vector.extract_strided_slice %10 {offsets = [0, 0], sizes = [8, 4], strides = [1, 1]} : vector<8x32xbf16> to vector<8x4xbf16>
    %22 = vector.extract_strided_slice %18 {offsets = [0, 0], sizes = [8, 4], strides = [1, 1]} : vector<8x32xbf16> to vector<8x4xbf16>
    %cst_17 = arith.constant dense<0.000000e+00> : vector<8x8xf32>
    %23 = tpu.matmul %20, %21, %cst_17 {dimension_numbers = #tpu.dot_dimension_numbers<[1], [1], [0], [0], [0, 0, 1, 0], [], []>} : vector<8x4xbf16>, vector<8x4xbf16>, vector<8x8xf32> -> vector<8x8xf32>
    %c0_18 = arith.constant 0 : index
    %c0_19 = arith.constant 0 : index
    %c0_20 = arith.constant 0 : index
    %24 = vector.load %arg19[%c0_18, %c0_19, %c0_20] : memref<8x8x1xf32, #tpu.memory_space<vmem>>, vector<1x8x1xf32>
    %25 = vector.shape_cast %24 : vector<1x8x1xf32> to vector<8x1xf32>
    %cst_21 = arith.constant dense<0xFF800000> : vector<8xf32>
    %26 = vector.multi_reduction <maximumf>, %23, %cst_21 [1] : vector<8x8xf32> to vector<8xf32>
    %27 = vector.shape_cast %26 : vector<8xf32> to vector<8x1xf32>
    %28 = arith.maximumf %25, %27 : vector<8x1xf32>
    %29 = arith.subf %25, %28 : vector<8x1xf32>
    %30 = math.exp %29 : vector<8x1xf32>
    %31 = vector.broadcast %28 : vector<8x1xf32> to vector<8x8xf32>
    %32 = arith.subf %23, %31 : vector<8x8xf32>
    %33 = math.exp %32 : vector<8x8xf32>
    %c0_22 = arith.constant 0 : index
    %c0_23 = arith.constant 0 : index
    %c0_24 = arith.constant 0 : index
    %34 = vector.load %arg20[%c0_22, %c0_23, %c0_24] : memref<8x8x1xf32, #tpu.memory_space<vmem>>, vector<1x8x1xf32>
    %35 = vector.shape_cast %34 : vector<1x8x1xf32> to vector<8x1xf32>
    %36 = arith.mulf %30, %35 : vector<8x1xf32>
    %cst_25 = arith.constant dense<0.000000e+00> : vector<8xf32>
    %37 = vector.multi_reduction <add>, %33, %cst_25 [1] : vector<8x8xf32> to vector<8xf32>
    %38 = vector.shape_cast %37 : vector<8xf32> to vector<8x1xf32>
    %39 = arith.addf %36, %38 : vector<8x1xf32>
    %c0_26 = arith.constant 0 : index
    %c0_27 = arith.constant 0 : index
    %c0_28 = arith.constant 0 : index
    %40 = vector.load %arg20[%c0_26, %c0_27, %c0_28] : memref<8x8x1xf32, #tpu.memory_space<vmem>>, vector<1x8x1xf32>
    %41 = vector.shape_cast %40 : vector<1x8x1xf32> to vector<8x1xf32>
    %42 = vector.shape_cast %39 : vector<8x1xf32> to vector<1x8x1xf32>
    tpu.vector_store %arg20[%c0_26, %c0_27, %c0_28], %42 {strides = array<i32>} : memref<8x8x1xf32, #tpu.memory_space<vmem>>, vector<1x8x1xf32>,
    %c0_29 = arith.constant 0 : index
    %c0_30 = arith.constant 0 : index
    %c0_31 = arith.constant 0 : index
    %43 = vector.load %arg21[%c0_29, %c0_30, %c0_31] : memref<8x8x4xf32, #tpu.memory_space<vmem>>, vector<1x8x4xf32>
    %44 = vector.shape_cast %43 : vector<1x8x4xf32> to vector<8x4xf32>
    %45 = vector.broadcast %30 : vector<8x1xf32> to vector<8x4xf32>
    %46 = arith.mulf %45, %44 : vector<8x4xf32>
    %47 = arith.truncf %33 : vector<8x8xf32> to vector<8x8xbf16>
    %cst_32 = arith.constant dense<0.000000e+00> : vector<8x4xf32>
    %48 = tpu.matmul %47, %22, %cst_32 {dimension_numbers = #tpu.dot_dimension_numbers<[1], [0], [0], [1], [0, 0, 1, 1], [], []>} : vector<8x8xbf16>, vector<8x4xbf16>, vector<8x4xf32> -> vector<8x4xf32>
    %49 = arith.addf %46, %48 : vector<8x4xf32>
    %c0_33 = arith.constant 0 : index
    %c0_34 = arith.constant 0 : index
    %c0_35 = arith.constant 0 : index
    %50 = vector.load %arg21[%c0_33, %c0_34, %c0_35] : memref<8x8x4xf32, #tpu.memory_space<vmem>>, vector<1x8x4xf32>
    %51 = vector.shape_cast %50 : vector<1x8x4xf32> to vector<8x4xf32>
    %52 = vector.shape_cast %49 : vector<8x4xf32> to vector<1x8x4xf32>
    tpu.vector_store %arg21[%c0_33, %c0_34, %c0_35], %52 {strides = array<i32>} : memref<8x8x4xf32, #tpu.memory_space<vmem>>, vector<1x8x4xf32>,
    %c0_36 = arith.constant 0 : index
    %c0_37 = arith.constant 0 : index
    %c0_38 = arith.constant 0 : index
    %53 = vector.load %arg19[%c0_36, %c0_37, %c0_38] : memref<8x8x1xf32, #tpu.memory_space<vmem>>, vector<1x8x1xf32>
    %54 = vector.shape_cast %53 : vector<1x8x1xf32> to vector<8x1xf32>
    %55 = vector.shape_cast %28 : vector<8x1xf32> to vector<1x8x1xf32>
    tpu.vector_store %arg19[%c0_36, %c0_37, %c0_38], %55 {strides = array<i32>} : memref<8x8x1xf32, #tpu.memory_space<vmem>>, vector<1x8x1xf32>,
    %56 = vector.extract_strided_slice %19 {offsets = [0, 4], sizes = [8, 4], strides = [1, 1]} : vector<8x32xbf16> to vector<8x4xbf16>
    %57 = vector.extract_strided_slice %10 {offsets = [0, 4], sizes = [8, 4], strides = [1, 1]} : vector<8x32xbf16> to vector<8x4xbf16>
    %58 = vector.extract_strided_slice %18 {offsets = [0, 4], sizes = [8, 4], strides = [1, 1]} : vector<8x32xbf16> to vector<8x4xbf16>
    %cst_39 = arith.constant dense<0.000000e+00> : vector<8x8xf32>
    %59 = tpu.matmul %56, %57, %cst_39 {dimension_numbers = #tpu.dot_dimension_numbers<[1], [1], [0], [0], [0, 0, 1, 0], [], []>} : vector<8x4xbf16>, vector<8x4xbf16>, vector<8x8xf32> -> vector<8x8xf32>
    %c1 = arith.constant 1 : index
    %c0_40 = arith.constant 0 : index
    %c0_41 = arith.constant 0 : index
    %60 = vector.load %arg19[%c1, %c0_40, %c0_41] : memref<8x8x1xf32, #tpu.memory_space<vmem>>, vector<1x8x1xf32>
    %61 = vector.shape_cast %60 : vector<1x8x1xf32> to vector<8x1xf32>
    %cst_42 = arith.constant dense<0xFF800000> : vector<8xf32>
    %62 = vector.multi_reduction <maximumf>, %59, %cst_42 [1] : vector<8x8xf32> to vector<8xf32>
    %63 = vector.shape_cast %62 : vector<8xf32> to vector<8x1xf32>
    %64 = arith.maximumf %61, %63 : vector<8x1xf32>
    %65 = arith.subf %61, %64 : vector<8x1xf32>
    %66 = math.exp %65 : vector<8x1xf32>
    %67 = vector.broadcast %64 : vector<8x1xf32> to vector<8x8xf32>
    %68 = arith.subf %59, %67 : vector<8x8xf32>
    %69 = math.exp %68 : vector<8x8xf32>
    %c1_43 = arith.constant 1 : index
    %c0_44 = arith.constant 0 : index
    %c0_45 = arith.constant 0 : index
    %70 = vector.load %arg20[%c1_43, %c0_44, %c0_45] : memref<8x8x1xf32, #tpu.memory_space<vmem>>, vector<1x8x1xf32>
    %71 = vector.shape_cast %70 : vector<1x8x1xf32> to vector<8x1xf32>
    %72 = arith.mulf %66, %71 : vector<8x1xf32>
    %cst_46 = arith.constant dense<0.000000e+00> : vector<8xf32>
    %73 = vector.multi_reduction <add>, %69, %cst_46 [1] : vector<8x8xf32> to vector<8xf32>
    %74 = vector.shape_cast %73 : vector<8xf32> to vector<8x1xf32>
    %75 = arith.addf %72, %74 : vector<8x1xf32>
    %c1_47 = arith.constant 1 : index
    %c0_48 = arith.constant 0 : index
    %c0_49 = arith.constant 0 : index
    %76 = vector.load %arg20[%c1_47, %c0_48, %c0_49] : memref<8x8x1xf32, #tpu.memory_space<vmem>>, vector<1x8x1xf32>
    %77 = vector.shape_cast %76 : vector<1x8x1xf32> to vector<8x1xf32>
    %78 = vector.shape_cast %75 : vector<8x1xf32> to vector<1x8x1xf32>
    tpu.vector_store %arg20[%c1_47, %c0_48, %c0_49], %78 {strides = array<i32>} : memref<8x8x1xf32, #tpu.memory_space<vmem>>, vector<1x8x1xf32>,
    %c1_50 = arith.constant 1 : index
    %c0_51 = arith.constant 0 : index
    %c0_52 = arith.constant 0 : index
    %79 = vector.load %arg21[%c1_50, %c0_51, %c0_52] : memref<8x8x4xf32, #tpu.memory_space<vmem>>, vector<1x8x4xf32>
    %80 = vector.shape_cast %79 : vector<1x8x4xf32> to vector<8x4xf32>
    %81 = vector.broadcast %66 : vector<8x1xf32> to vector<8x4xf32>
    %82 = arith.mulf %81, %80 : vector<8x4xf32>
    %83 = arith.truncf %69 : vector<8x8xf32> to vector<8x8xbf16>
    %cst_53 = arith.constant dense<0.000000e+00> : vector<8x4xf32>
    %84 = tpu.matmul %83, %58, %cst_53 {dimension_numbers = #tpu.dot_dimension_numbers<[1], [0], [0], [1], [0, 0, 1, 1], [], []>} : vector<8x8xbf16>, vector<8x4xbf16>, vector<8x4xf32> -> vector<8x4xf32>
    %85 = arith.addf %82, %84 : vector<8x4xf32>
    %c1_54 = arith.constant 1 : index
    %c0_55 = arith.constant 0 : index
    %c0_56 = arith.constant 0 : index
    %86 = vector.load %arg21[%c1_54, %c0_55, %c0_56] : memref<8x8x4xf32, #tpu.memory_space<vmem>>, vector<1x8x4xf32>
    %87 = vector.shape_cast %86 : vector<1x8x4xf32> to vector<8x4xf32>
    %88 = vector.shape_cast %85 : vector<8x4xf32> to vector<1x8x4xf32>
    tpu.vector_store %arg21[%c1_54, %c0_55, %c0_56], %88 {strides = array<i32>} : memref<8x8x4xf32, #tpu.memory_space<vmem>>, vector<1x8x4xf32>,
    %c1_57 = arith.constant 1 : index
    %c0_58 = arith.constant 0 : index
    %c0_59 = arith.constant 0 : index
    %89 = vector.load %arg19[%c1_57, %c0_58, %c0_59] : memref<8x8x1xf32, #tpu.memory_space<vmem>>, vector<1x8x1xf32>
    %90 = vector.shape_cast %89 : vector<1x8x1xf32> to vector<8x1xf32>
    %91 = vector.shape_cast %64 : vector<8x1xf32> to vector<1x8x1xf32>
    tpu.vector_store %arg19[%c1_57, %c0_58, %c0_59], %91 {strides = array<i32>} : memref<8x8x1xf32, #tpu.memory_space<vmem>>, vector<1x8x1xf32>,
    %92 = vector.extract_strided_slice %19 {offsets = [0, 8], sizes = [8, 4], strides = [1, 1]} : vector<8x32xbf16> to vector<8x4xbf16>
    %93 = vector.extract_strided_slice %10 {offsets = [0, 8], sizes = [8, 4], strides = [1, 1]} : vector<8x32xbf16> to vector<8x4xbf16>
    %94 = vector.extract_strided_slice %18 {offsets = [0, 8], sizes = [8, 4], strides = [1, 1]} : vector<8x32xbf16> to vector<8x4xbf16>
    %cst_60 = arith.constant dense<0.000000e+00> : vector<8x8xf32>
    %95 = tpu.matmul %92, %93, %cst_60 {dimension_numbers = #tpu.dot_dimension_numbers<[1], [1], [0], [0], [0, 0, 1, 0], [], []>} : vector<8x4xbf16>, vector<8x4xbf16>, vector<8x8xf32> -> vector<8x8xf32>
    %c2 = arith.constant 2 : index
    %c0_61 = arith.constant 0 : index
    %c0_62 = arith.constant 0 : index
    %96 = vector.load %arg19[%c2, %c0_61, %c0_62] : memref<8x8x1xf32, #tpu.memory_space<vmem>>, vector<1x8x1xf32>
    %97 = vector.shape_cast %96 : vector<1x8x1xf32> to vector<8x1xf32>
    %cst_63 = arith.constant dense<0xFF800000> : vector<8xf32>
    %98 = vector.multi_reduction <maximumf>, %95, %cst_63 [1] : vector<8x8xf32> to vector<8xf32>
    %99 = vector.shape_cast %98 : vector<8xf32> to vector<8x1xf32>
    %100 = arith.maximumf %97, %99 : vector<8x1xf32>
    %101 = arith.subf %97, %100 : vector<8x1xf32>
    %102 = math.exp %101 : vector<8x1xf32>
    %103 = vector.broadcast %100 : vector<8x1xf32> to vector<8x8xf32>
    %104 = arith.subf %95, %103 : vector<8x8xf32>
    %105 = math.exp %104 : vector<8x8xf32>
    %c2_64 = arith.constant 2 : index
    %c0_65 = arith.constant 0 : index
    %c0_66 = arith.constant 0 : index
    %106 = vector.load %arg20[%c2_64, %c0_65, %c0_66] : memref<8x8x1xf32, #tpu.memory_space<vmem>>, vector<1x8x1xf32>
    %107 = vector.shape_cast %106 : vector<1x8x1xf32> to vector<8x1xf32>
    %108 = arith.mulf %102, %107 : vector<8x1xf32>
    %cst_67 = arith.constant dense<0.000000e+00> : vector<8xf32>
    %109 = vector.multi_reduction <add>, %105, %cst_67 [1] : vector<8x8xf32> to vector<8xf32>
    %110 = vector.shape_cast %109 : vector<8xf32> to vector<8x1xf32>
    %111 = arith.addf %108, %110 : vector<8x1xf32>
    %c2_68 = arith.constant 2 : index
    %c0_69 = arith.constant 0 : index
    %c0_70 = arith.constant 0 : index
    %112 = vector.load %arg20[%c2_68, %c0_69, %c0_70] : memref<8x8x1xf32, #tpu.memory_space<vmem>>, vector<1x8x1xf32>
    %113 = vector.shape_cast %112 : vector<1x8x1xf32> to vector<8x1xf32>
    %114 = vector.shape_cast %111 : vector<8x1xf32> to vector<1x8x1xf32>
    tpu.vector_store %arg20[%c2_68, %c0_69, %c0_70], %114 {strides = array<i32>} : memref<8x8x1xf32, #tpu.memory_space<vmem>>, vector<1x8x1xf32>,
    %c2_71 = arith.constant 2 : index
    %c0_72 = arith.constant 0 : index
    %c0_73 = arith.constant 0 : index
    %115 = vector.load %arg21[%c2_71, %c0_72, %c0_73] : memref<8x8x4xf32, #tpu.memory_space<vmem>>, vector<1x8x4xf32>
    %116 = vector.shape_cast %115 : vector<1x8x4xf32> to vector<8x4xf32>
    %117 = vector.broadcast %102 : vector<8x1xf32> to vector<8x4xf32>
    %118 = arith.mulf %117, %116 : vector<8x4xf32>
    %119 = arith.truncf %105 : vector<8x8xf32> to vector<8x8xbf16>
    %cst_74 = arith.constant dense<0.000000e+00> : vector<8x4xf32>
    %120 = tpu.matmul %119, %94, %cst_74 {dimension_numbers = #tpu.dot_dimension_numbers<[1], [0], [0], [1], [0, 0, 1, 1], [], []>} : vector<8x8xbf16>, vector<8x4xbf16>, vector<8x4xf32> -> vector<8x4xf32>
    %121 = arith.addf %118, %120 : vector<8x4xf32>
    %c2_75 = arith.constant 2 : index
    %c0_76 = arith.constant 0 : index
    %c0_77 = arith.constant 0 : index
    %122 = vector.load %arg21[%c2_75, %c0_76, %c0_77] : memref<8x8x4xf32, #tpu.memory_space<vmem>>, vector<1x8x4xf32>
    %123 = vector.shape_cast %122 : vector<1x8x4xf32> to vector<8x4xf32>
    %124 = vector.shape_cast %121 : vector<8x4xf32> to vector<1x8x4xf32>
    tpu.vector_store %arg21[%c2_75, %c0_76, %c0_77], %124 {strides = array<i32>} : memref<8x8x4xf32, #tpu.memory_space<vmem>>, vector<1x8x4xf32>,
    %c2_78 = arith.constant 2 : index
    %c0_79 = arith.constant 0 : index
    %c0_80 = arith.constant 0 : index
    %125 = vector.load %arg19[%c2_78, %c0_79, %c0_80] : memref<8x8x1xf32, #tpu.memory_space<vmem>>, vector<1x8x1xf32>
    %126 = vector.shape_cast %125 : vector<1x8x1xf32> to vector<8x1xf32>
    %127 = vector.shape_cast %100 : vector<8x1xf32> to vector<1x8x1xf32>
    tpu.vector_store %arg19[%c2_78, %c0_79, %c0_80], %127 {strides = array<i32>} : memref<8x8x1xf32, #tpu.memory_space<vmem>>, vector<1x8x1xf32>,
    %128 = vector.extract_strided_slice %19 {offsets = [0, 12], sizes = [8, 4], strides = [1, 1]} : vector<8x32xbf16> to vector<8x4xbf16>
    %129 = vector.extract_strided_slice %10 {offsets = [0, 12], sizes = [8, 4], strides = [1, 1]} : vector<8x32xbf16> to vector<8x4xbf16>
    %130 = vector.extract_strided_slice %18 {offsets = [0, 12], sizes = [8, 4], strides = [1, 1]} : vector<8x32xbf16> to vector<8x4xbf16>
    %cst_81 = arith.constant dense<0.000000e+00> : vector<8x8xf32>
    %131 = tpu.matmul %128, %129, %cst_81 {dimension_numbers = #tpu.dot_dimension_numbers<[1], [1], [0], [0], [0, 0, 1, 0], [], []>} : vector<8x4xbf16>, vector<8x4xbf16>, vector<8x8xf32> -> vector<8x8xf32>
    %c3 = arith.constant 3 : index
    %c0_82 = arith.constant 0 : index
    %c0_83 = arith.constant 0 : index
    %132 = vector.load %arg19[%c3, %c0_82, %c0_83] : memref<8x8x1xf32, #tpu.memory_space<vmem>>, vector<1x8x1xf32>
    %133 = vector.shape_cast %132 : vector<1x8x1xf32> to vector<8x1xf32>
    %cst_84 = arith.constant dense<0xFF800000> : vector<8xf32>
    %134 = vector.multi_reduction <maximumf>, %131, %cst_84 [1] : vector<8x8xf32> to vector<8xf32>
    %135 = vector.shape_cast %134 : vector<8xf32> to vector<8x1xf32>
    %136 = arith.maximumf %133, %135 : vector<8x1xf32>
    %137 = arith.subf %133, %136 : vector<8x1xf32>
    %138 = math.exp %137 : vector<8x1xf32>
    %139 = vector.broadcast %136 : vector<8x1xf32> to vector<8x8xf32>
    %140 = arith.subf %131, %139 : vector<8x8xf32>
    %141 = math.exp %140 : vector<8x8xf32>
    %c3_85 = arith.constant 3 : index
    %c0_86 = arith.constant 0 : index
    %c0_87 = arith.constant 0 : index
    %142 = vector.load %arg20[%c3_85, %c0_86, %c0_87] : memref<8x8x1xf32, #tpu.memory_space<vmem>>, vector<1x8x1xf32>
    %143 = vector.shape_cast %142 : vector<1x8x1xf32> to vector<8x1xf32>
    %144 = arith.mulf %138, %143 : vector<8x1xf32>
    %cst_88 = arith.constant dense<0.000000e+00> : vector<8xf32>
    %145 = vector.multi_reduction <add>, %141, %cst_88 [1] : vector<8x8xf32> to vector<8xf32>
    %146 = vector.shape_cast %145 : vector<8xf32> to vector<8x1xf32>
    %147 = arith.addf %144, %146 : vector<8x1xf32>
    %c3_89 = arith.constant 3 : index
    %c0_90 = arith.constant 0 : index
    %c0_91 = arith.constant 0 : index
    %148 = vector.load %arg20[%c3_89, %c0_90, %c0_91] : memref<8x8x1xf32, #tpu.memory_space<vmem>>, vector<1x8x1xf32>
    %149 = vector.shape_cast %148 : vector<1x8x1xf32> to vector<8x1xf32>
    %150 = vector.shape_cast %147 : vector<8x1xf32> to vector<1x8x1xf32>
    tpu.vector_store %arg20[%c3_89, %c0_90, %c0_91], %150 {strides = array<i32>} : memref<8x8x1xf32, #tpu.memory_space<vmem>>, vector<1x8x1xf32>,
    %c3_92 = arith.constant 3 : index
    %c0_93 = arith.constant 0 : index
    %c0_94 = arith.constant 0 : index
    %151 = vector.load %arg21[%c3_92, %c0_93, %c0_94] : memref<8x8x4xf32, #tpu.memory_space<vmem>>, vector<1x8x4xf32>
    %152 = vector.shape_cast %151 : vector<1x8x4xf32> to vector<8x4xf32>
    %153 = vector.broadcast %138 : vector<8x1xf32> to vector<8x4xf32>
    %154 = arith.mulf %153, %152 : vector<8x4xf32>
    %155 = arith.truncf %141 : vector<8x8xf32> to vector<8x8xbf16>
    %cst_95 = arith.constant dense<0.000000e+00> : vector<8x4xf32>
    %156 = tpu.matmul %155, %130, %cst_95 {dimension_numbers = #tpu.dot_dimension_numbers<[1], [0], [0], [1], [0, 0, 1, 1], [], []>} : vector<8x8xbf16>, vector<8x4xbf16>, vector<8x4xf32> -> vector<8x4xf32>
    %157 = arith.addf %154, %156 : vector<8x4xf32>
    %c3_96 = arith.constant 3 : index
    %c0_97 = arith.constant 0 : index
    %c0_98 = arith.constant 0 : index
    %158 = vector.load %arg21[%c3_96, %c0_97, %c0_98] : memref<8x8x4xf32, #tpu.memory_space<vmem>>, vector<1x8x4xf32>
    %159 = vector.shape_cast %158 : vector<1x8x4xf32> to vector<8x4xf32>
    %160 = vector.shape_cast %157 : vector<8x4xf32> to vector<1x8x4xf32>
    tpu.vector_store %arg21[%c3_96, %c0_97, %c0_98], %160 {strides = array<i32>} : memref<8x8x4xf32, #tpu.memory_space<vmem>>, vector<1x8x4xf32>,
    %c3_99 = arith.constant 3 : index
    %c0_100 = arith.constant 0 : index
    %c0_101 = arith.constant 0 : index
    %161 = vector.load %arg19[%c3_99, %c0_100, %c0_101] : memref<8x8x1xf32, #tpu.memory_space<vmem>>, vector<1x8x1xf32>
    %162 = vector.shape_cast %161 : vector<1x8x1xf32> to vector<8x1xf32>
    %163 = vector.shape_cast %136 : vector<8x1xf32> to vector<1x8x1xf32>
    tpu.vector_store %arg19[%c3_99, %c0_100, %c0_101], %163 {strides = array<i32>} : memref<8x8x1xf32, #tpu.memory_space<vmem>>, vector<1x8x1xf32>,
    %164 = vector.extract_strided_slice %19 {offsets = [0, 16], sizes = [8, 4], strides = [1, 1]} : vector<8x32xbf16> to vector<8x4xbf16>
    %165 = vector.extract_strided_slice %10 {offsets = [0, 16], sizes = [8, 4], strides = [1, 1]} : vector<8x32xbf16> to vector<8x4xbf16>
    %166 = vector.extract_strided_slice %18 {offsets = [0, 16], sizes = [8, 4], strides = [1, 1]} : vector<8x32xbf16> to vector<8x4xbf16>
    %cst_102 = arith.constant dense<0.000000e+00> : vector<8x8xf32>
    %167 = tpu.matmul %164, %165, %cst_102 {dimension_numbers = #tpu.dot_dimension_numbers<[1], [1], [0], [0], [0, 0, 1, 0], [], []>} : vector<8x4xbf16>, vector<8x4xbf16>, vector<8x8xf32> -> vector<8x8xf32>
    %c4 = arith.constant 4 : index
    %c0_103 = arith.constant 0 : index
    %c0_104 = arith.constant 0 : index
    %168 = vector.load %arg19[%c4, %c0_103, %c0_104] : memref<8x8x1xf32, #tpu.memory_space<vmem>>, vector<1x8x1xf32>
    %169 = vector.shape_cast %168 : vector<1x8x1xf32> to vector<8x1xf32>
    %cst_105 = arith.constant dense<0xFF800000> : vector<8xf32>
    %170 = vector.multi_reduction <maximumf>, %167, %cst_105 [1] : vector<8x8xf32> to vector<8xf32>
    %171 = vector.shape_cast %170 : vector<8xf32> to vector<8x1xf32>
    %172 = arith.maximumf %169, %171 : vector<8x1xf32>
    %173 = arith.subf %169, %172 : vector<8x1xf32>
    %174 = math.exp %173 : vector<8x1xf32>
    %175 = vector.broadcast %172 : vector<8x1xf32> to vector<8x8xf32>
    %176 = arith.subf %167, %175 : vector<8x8xf32>
    %177 = math.exp %176 : vector<8x8xf32>
    %c4_106 = arith.constant 4 : index
    %c0_107 = arith.constant 0 : index
    %c0_108 = arith.constant 0 : index
    %178 = vector.load %arg20[%c4_106, %c0_107, %c0_108] : memref<8x8x1xf32, #tpu.memory_space<vmem>>, vector<1x8x1xf32>
    %179 = vector.shape_cast %178 : vector<1x8x1xf32> to vector<8x1xf32>
    %180 = arith.mulf %174, %179 : vector<8x1xf32>
    %cst_109 = arith.constant dense<0.000000e+00> : vector<8xf32>
    %181 = vector.multi_reduction <add>, %177, %cst_109 [1] : vector<8x8xf32> to vector<8xf32>
    %182 = vector.shape_cast %181 : vector<8xf32> to vector<8x1xf32>
    %183 = arith.addf %180, %182 : vector<8x1xf32>
    %c4_110 = arith.constant 4 : index
    %c0_111 = arith.constant 0 : index
    %c0_112 = arith.constant 0 : index
    %184 = vector.load %arg20[%c4_110, %c0_111, %c0_112] : memref<8x8x1xf32, #tpu.memory_space<vmem>>, vector<1x8x1xf32>
    %185 = vector.shape_cast %184 : vector<1x8x1xf32> to vector<8x1xf32>
    %186 = vector.shape_cast %183 : vector<8x1xf32> to vector<1x8x1xf32>
    tpu.vector_store %arg20[%c4_110, %c0_111, %c0_112], %186 {strides = array<i32>} : memref<8x8x1xf32, #tpu.memory_space<vmem>>, vector<1x8x1xf32>,
    %c4_113 = arith.constant 4 : index
    %c0_114 = arith.constant 0 : index
    %c0_115 = arith.constant 0 : index
    %187 = vector.load %arg21[%c4_113, %c0_114, %c0_115] : memref<8x8x4xf32, #tpu.memory_space<vmem>>, vector<1x8x4xf32>
    %188 = vector.shape_cast %187 : vector<1x8x4xf32> to vector<8x4xf32>
    %189 = vector.broadcast %174 : vector<8x1xf32> to vector<8x4xf32>
    %190 = arith.mulf %189, %188 : vector<8x4xf32>
    %191 = arith.truncf %177 : vector<8x8xf32> to vector<8x8xbf16>
    %cst_116 = arith.constant dense<0.000000e+00> : vector<8x4xf32>
    %192 = tpu.matmul %191, %166, %cst_116 {dimension_numbers = #tpu.dot_dimension_numbers<[1], [0], [0], [1], [0, 0, 1, 1], [], []>} : vector<8x8xbf16>, vector<8x4xbf16>, vector<8x4xf32> -> vector<8x4xf32>
    %193 = arith.addf %190, %192 : vector<8x4xf32>
    %c4_117 = arith.constant 4 : index
    %c0_118 = arith.constant 0 : index
    %c0_119 = arith.constant 0 : index
    %194 = vector.load %arg21[%c4_117, %c0_118, %c0_119] : memref<8x8x4xf32, #tpu.memory_space<vmem>>, vector<1x8x4xf32>
    %195 = vector.shape_cast %194 : vector<1x8x4xf32> to vector<8x4xf32>
    %196 = vector.shape_cast %193 : vector<8x4xf32> to vector<1x8x4xf32>
    tpu.vector_store %arg21[%c4_117, %c0_118, %c0_119], %196 {strides = array<i32>} : memref<8x8x4xf32, #tpu.memory_space<vmem>>, vector<1x8x4xf32>,
    %c4_120 = arith.constant 4 : index
    %c0_121 = arith.constant 0 : index
    %c0_122 = arith.constant 0 : index
    %197 = vector.load %arg19[%c4_120, %c0_121, %c0_122] : memref<8x8x1xf32, #tpu.memory_space<vmem>>, vector<1x8x1xf32>
    %198 = vector.shape_cast %197 : vector<1x8x1xf32> to vector<8x1xf32>
    %199 = vector.shape_cast %172 : vector<8x1xf32> to vector<1x8x1xf32>
    tpu.vector_store %arg19[%c4_120, %c0_121, %c0_122], %199 {strides = array<i32>} : memref<8x8x1xf32, #tpu.memory_space<vmem>>, vector<1x8x1xf32>,
    %200 = vector.extract_strided_slice %19 {offsets = [0, 20], sizes = [8, 4], strides = [1, 1]} : vector<8x32xbf16> to vector<8x4xbf16>
    %201 = vector.extract_strided_slice %10 {offsets = [0, 20], sizes = [8, 4], strides = [1, 1]} : vector<8x32xbf16> to vector<8x4xbf16>
    %202 = vector.extract_strided_slice %18 {offsets = [0, 20], sizes = [8, 4], strides = [1, 1]} : vector<8x32xbf16> to vector<8x4xbf16>
    %cst_123 = arith.constant dense<0.000000e+00> : vector<8x8xf32>
    %203 = tpu.matmul %200, %201, %cst_123 {dimension_numbers = #tpu.dot_dimension_numbers<[1], [1], [0], [0], [0, 0, 1, 0], [], []>} : vector<8x4xbf16>, vector<8x4xbf16>, vector<8x8xf32> -> vector<8x8xf32>
    %c5 = arith.constant 5 : index
    %c0_124 = arith.constant 0 : index
    %c0_125 = arith.constant 0 : index
    %204 = vector.load %arg19[%c5, %c0_124, %c0_125] : memref<8x8x1xf32, #tpu.memory_space<vmem>>, vector<1x8x1xf32>
    %205 = vector.shape_cast %204 : vector<1x8x1xf32> to vector<8x1xf32>
    %cst_126 = arith.constant dense<0xFF800000> : vector<8xf32>
    %206 = vector.multi_reduction <maximumf>, %203, %cst_126 [1] : vector<8x8xf32> to vector<8xf32>
    %207 = vector.shape_cast %206 : vector<8xf32> to vector<8x1xf32>
    %208 = arith.maximumf %205, %207 : vector<8x1xf32>
    %209 = arith.subf %205, %208 : vector<8x1xf32>
    %210 = math.exp %209 : vector<8x1xf32>
    %211 = vector.broadcast %208 : vector<8x1xf32> to vector<8x8xf32>
    %212 = arith.subf %203, %211 : vector<8x8xf32>
    %213 = math.exp %212 : vector<8x8xf32>
    %c5_127 = arith.constant 5 : index
    %c0_128 = arith.constant 0 : index
    %c0_129 = arith.constant 0 : index
    %214 = vector.load %arg20[%c5_127, %c0_128, %c0_129] : memref<8x8x1xf32, #tpu.memory_space<vmem>>, vector<1x8x1xf32>
    %215 = vector.shape_cast %214 : vector<1x8x1xf32> to vector<8x1xf32>
    %216 = arith.mulf %210, %215 : vector<8x1xf32>
    %cst_130 = arith.constant dense<0.000000e+00> : vector<8xf32>
    %217 = vector.multi_reduction <add>, %213, %cst_130 [1] : vector<8x8xf32> to vector<8xf32>
    %218 = vector.shape_cast %217 : vector<8xf32> to vector<8x1xf32>
    %219 = arith.addf %216, %218 : vector<8x1xf32>
    %c5_131 = arith.constant 5 : index
    %c0_132 = arith.constant 0 : index
    %c0_133 = arith.constant 0 : index
    %220 = vector.load %arg20[%c5_131, %c0_132, %c0_133] : memref<8x8x1xf32, #tpu.memory_space<vmem>>, vector<1x8x1xf32>
    %221 = vector.shape_cast %220 : vector<1x8x1xf32> to vector<8x1xf32>
    %222 = vector.shape_cast %219 : vector<8x1xf32> to vector<1x8x1xf32>
    tpu.vector_store %arg20[%c5_131, %c0_132, %c0_133], %222 {strides = array<i32>} : memref<8x8x1xf32, #tpu.memory_space<vmem>>, vector<1x8x1xf32>,
    %c5_134 = arith.constant 5 : index
    %c0_135 = arith.constant 0 : index
    %c0_136 = arith.constant 0 : index
    %223 = vector.load %arg21[%c5_134, %c0_135, %c0_136] : memref<8x8x4xf32, #tpu.memory_space<vmem>>, vector<1x8x4xf32>
    %224 = vector.shape_cast %223 : vector<1x8x4xf32> to vector<8x4xf32>
    %225 = vector.broadcast %210 : vector<8x1xf32> to vector<8x4xf32>
    %226 = arith.mulf %225, %224 : vector<8x4xf32>
    %227 = arith.truncf %213 : vector<8x8xf32> to vector<8x8xbf16>
    %cst_137 = arith.constant dense<0.000000e+00> : vector<8x4xf32>
    %228 = tpu.matmul %227, %202, %cst_137 {dimension_numbers = #tpu.dot_dimension_numbers<[1], [0], [0], [1], [0, 0, 1, 1], [], []>} : vector<8x8xbf16>, vector<8x4xbf16>, vector<8x4xf32> -> vector<8x4xf32>
    %229 = arith.addf %226, %228 : vector<8x4xf32>
    %c5_138 = arith.constant 5 : index
    %c0_139 = arith.constant 0 : index
    %c0_140 = arith.constant 0 : index
    %230 = vector.load %arg21[%c5_138, %c0_139, %c0_140] : memref<8x8x4xf32, #tpu.memory_space<vmem>>, vector<1x8x4xf32>
    %231 = vector.shape_cast %230 : vector<1x8x4xf32> to vector<8x4xf32>
    %232 = vector.shape_cast %229 : vector<8x4xf32> to vector<1x8x4xf32>
    tpu.vector_store %arg21[%c5_138, %c0_139, %c0_140], %232 {strides = array<i32>} : memref<8x8x4xf32, #tpu.memory_space<vmem>>, vector<1x8x4xf32>,
    %c5_141 = arith.constant 5 : index
    %c0_142 = arith.constant 0 : index
    %c0_143 = arith.constant 0 : index
    %233 = vector.load %arg19[%c5_141, %c0_142, %c0_143] : memref<8x8x1xf32, #tpu.memory_space<vmem>>, vector<1x8x1xf32>
    %234 = vector.shape_cast %233 : vector<1x8x1xf32> to vector<8x1xf32>
    %235 = vector.shape_cast %208 : vector<8x1xf32> to vector<1x8x1xf32>
    tpu.vector_store %arg19[%c5_141, %c0_142, %c0_143], %235 {strides = array<i32>} : memref<8x8x1xf32, #tpu.memory_space<vmem>>, vector<1x8x1xf32>,
    %236 = vector.extract_strided_slice %19 {offsets = [0, 24], sizes = [8, 4], strides = [1, 1]} : vector<8x32xbf16> to vector<8x4xbf16>
    %237 = vector.extract_strided_slice %10 {offsets = [0, 24], sizes = [8, 4], strides = [1, 1]} : vector<8x32xbf16> to vector<8x4xbf16>
    %238 = vector.extract_strided_slice %18 {offsets = [0, 24], sizes = [8, 4], strides = [1, 1]} : vector<8x32xbf16> to vector<8x4xbf16>
    %cst_144 = arith.constant dense<0.000000e+00> : vector<8x8xf32>
    %239 = tpu.matmul %236, %237, %cst_144 {dimension_numbers = #tpu.dot_dimension_numbers<[1], [1], [0], [0], [0, 0, 1, 0], [], []>} : vector<8x4xbf16>, vector<8x4xbf16>, vector<8x8xf32> -> vector<8x8xf32>
    %c6 = arith.constant 6 : index
    %c0_145 = arith.constant 0 : index
    %c0_146 = arith.constant 0 : index
    %240 = vector.load %arg19[%c6, %c0_145, %c0_146] : memref<8x8x1xf32, #tpu.memory_space<vmem>>, vector<1x8x1xf32>
    %241 = vector.shape_cast %240 : vector<1x8x1xf32> to vector<8x1xf32>
    %cst_147 = arith.constant dense<0xFF800000> : vector<8xf32>
    %242 = vector.multi_reduction <maximumf>, %239, %cst_147 [1] : vector<8x8xf32> to vector<8xf32>
    %243 = vector.shape_cast %242 : vector<8xf32> to vector<8x1xf32>
    %244 = arith.maximumf %241, %243 : vector<8x1xf32>
    %245 = arith.subf %241, %244 : vector<8x1xf32>
    %246 = math.exp %245 : vector<8x1xf32>
    %247 = vector.broadcast %244 : vector<8x1xf32> to vector<8x8xf32>
    %248 = arith.subf %239, %247 : vector<8x8xf32>
    %249 = math.exp %248 : vector<8x8xf32>
    %c6_148 = arith.constant 6 : index
    %c0_149 = arith.constant 0 : index
    %c0_150 = arith.constant 0 : index
    %250 = vector.load %arg20[%c6_148, %c0_149, %c0_150] : memref<8x8x1xf32, #tpu.memory_space<vmem>>, vector<1x8x1xf32>
    %251 = vector.shape_cast %250 : vector<1x8x1xf32> to vector<8x1xf32>
    %252 = arith.mulf %246, %251 : vector<8x1xf32>
    %cst_151 = arith.constant dense<0.000000e+00> : vector<8xf32>
    %253 = vector.multi_reduction <add>, %249, %cst_151 [1] : vector<8x8xf32> to vector<8xf32>
    %254 = vector.shape_cast %253 : vector<8xf32> to vector<8x1xf32>
    %255 = arith.addf %252, %254 : vector<8x1xf32>
    %c6_152 = arith.constant 6 : index
    %c0_153 = arith.constant 0 : index
    %c0_154 = arith.constant 0 : index
    %256 = vector.load %arg20[%c6_152, %c0_153, %c0_154] : memref<8x8x1xf32, #tpu.memory_space<vmem>>, vector<1x8x1xf32>
    %257 = vector.shape_cast %256 : vector<1x8x1xf32> to vector<8x1xf32>
    %258 = vector.shape_cast %255 : vector<8x1xf32> to vector<1x8x1xf32>
    tpu.vector_store %arg20[%c6_152, %c0_153, %c0_154], %258 {strides = array<i32>} : memref<8x8x1xf32, #tpu.memory_space<vmem>>, vector<1x8x1xf32>,
    %c6_155 = arith.constant 6 : index
    %c0_156 = arith.constant 0 : index
    %c0_157 = arith.constant 0 : index
    %259 = vector.load %arg21[%c6_155, %c0_156, %c0_157] : memref<8x8x4xf32, #tpu.memory_space<vmem>>, vector<1x8x4xf32>
    %260 = vector.shape_cast %259 : vector<1x8x4xf32> to vector<8x4xf32>
    %261 = vector.broadcast %246 : vector<8x1xf32> to vector<8x4xf32>
    %262 = arith.mulf %261, %260 : vector<8x4xf32>
    %263 = arith.truncf %249 : vector<8x8xf32> to vector<8x8xbf16>
    %cst_158 = arith.constant dense<0.000000e+00> : vector<8x4xf32>
    %264 = tpu.matmul %263, %238, %cst_158 {dimension_numbers = #tpu.dot_dimension_numbers<[1], [0], [0], [1], [0, 0, 1, 1], [], []>} : vector<8x8xbf16>, vector<8x4xbf16>, vector<8x4xf32> -> vector<8x4xf32>
    %265 = arith.addf %262, %264 : vector<8x4xf32>
    %c6_159 = arith.constant 6 : index
    %c0_160 = arith.constant 0 : index
    %c0_161 = arith.constant 0 : index
    %266 = vector.load %arg21[%c6_159, %c0_160, %c0_161] : memref<8x8x4xf32, #tpu.memory_space<vmem>>, vector<1x8x4xf32>
    %267 = vector.shape_cast %266 : vector<1x8x4xf32> to vector<8x4xf32>
    %268 = vector.shape_cast %265 : vector<8x4xf32> to vector<1x8x4xf32>
    tpu.vector_store %arg21[%c6_159, %c0_160, %c0_161], %268 {strides = array<i32>} : memref<8x8x4xf32, #tpu.memory_space<vmem>>, vector<1x8x4xf32>,
    %c6_162 = arith.constant 6 : index
    %c0_163 = arith.constant 0 : index
    %c0_164 = arith.constant 0 : index
    %269 = vector.load %arg19[%c6_162, %c0_163, %c0_164] : memref<8x8x1xf32, #tpu.memory_space<vmem>>, vector<1x8x1xf32>
    %270 = vector.shape_cast %269 : vector<1x8x1xf32> to vector<8x1xf32>
    %271 = vector.shape_cast %244 : vector<8x1xf32> to vector<1x8x1xf32>
    tpu.vector_store %arg19[%c6_162, %c0_163, %c0_164], %271 {strides = array<i32>} : memref<8x8x1xf32, #tpu.memory_space<vmem>>, vector<1x8x1xf32>,
    %272 = vector.extract_strided_slice %19 {offsets = [0, 28], sizes = [8, 4], strides = [1, 1]} : vector<8x32xbf16> to vector<8x4xbf16>
    %273 = vector.extract_strided_slice %10 {offsets = [0, 28], sizes = [8, 4], strides = [1, 1]} : vector<8x32xbf16> to vector<8x4xbf16>
    %274 = vector.extract_strided_slice %18 {offsets = [0, 28], sizes = [8, 4], strides = [1, 1]} : vector<8x32xbf16> to vector<8x4xbf16>
    %cst_165 = arith.constant dense<0.000000e+00> : vector<8x8xf32>
    %275 = tpu.matmul %272, %273, %cst_165 {dimension_numbers = #tpu.dot_dimension_numbers<[1], [1], [0], [0], [0, 0, 1, 0], [], []>} : vector<8x4xbf16>, vector<8x4xbf16>, vector<8x8xf32> -> vector<8x8xf32>
    %c7 = arith.constant 7 : index
    %c0_166 = arith.constant 0 : index
    %c0_167 = arith.constant 0 : index
    %276 = vector.load %arg19[%c7, %c0_166, %c0_167] : memref<8x8x1xf32, #tpu.memory_space<vmem>>, vector<1x8x1xf32>
    %277 = vector.shape_cast %276 : vector<1x8x1xf32> to vector<8x1xf32>
    %cst_168 = arith.constant dense<0xFF800000> : vector<8xf32>
    %278 = vector.multi_reduction <maximumf>, %275, %cst_168 [1] : vector<8x8xf32> to vector<8xf32>
    %279 = vector.shape_cast %278 : vector<8xf32> to vector<8x1xf32>
    %280 = arith.maximumf %277, %279 : vector<8x1xf32>
    %281 = arith.subf %277, %280 : vector<8x1xf32>
    %282 = math.exp %281 : vector<8x1xf32>
    %283 = vector.broadcast %280 : vector<8x1xf32> to vector<8x8xf32>
    %284 = arith.subf %275, %283 : vector<8x8xf32>
    %285 = math.exp %284 : vector<8x8xf32>
    %c7_169 = arith.constant 7 : index
    %c0_170 = arith.constant 0 : index
    %c0_171 = arith.constant 0 : index
    %286 = vector.load %arg20[%c7_169, %c0_170, %c0_171] : memref<8x8x1xf32, #tpu.memory_space<vmem>>, vector<1x8x1xf32>
    %287 = vector.shape_cast %286 : vector<1x8x1xf32> to vector<8x1xf32>
    %288 = arith.mulf %282, %287 : vector<8x1xf32>
    %cst_172 = arith.constant dense<0.000000e+00> : vector<8xf32>
    %289 = vector.multi_reduction <add>, %285, %cst_172 [1] : vector<8x8xf32> to vector<8xf32>
    %290 = vector.shape_cast %289 : vector<8xf32> to vector<8x1xf32>
    %291 = arith.addf %288, %290 : vector<8x1xf32>
    %c7_173 = arith.constant 7 : index
    %c0_174 = arith.constant 0 : index
    %c0_175 = arith.constant 0 : index
    %292 = vector.load %arg20[%c7_173, %c0_174, %c0_175] : memref<8x8x1xf32, #tpu.memory_space<vmem>>, vector<1x8x1xf32>
    %293 = vector.shape_cast %292 : vector<1x8x1xf32> to vector<8x1xf32>
    %294 = vector.shape_cast %291 : vector<8x1xf32> to vector<1x8x1xf32>
    tpu.vector_store %arg20[%c7_173, %c0_174, %c0_175], %294 {strides = array<i32>} : memref<8x8x1xf32, #tpu.memory_space<vmem>>, vector<1x8x1xf32>,
    %c7_176 = arith.constant 7 : index
    %c0_177 = arith.constant 0 : index
    %c0_178 = arith.constant 0 : index
    %295 = vector.load %arg21[%c7_176, %c0_177, %c0_178] : memref<8x8x4xf32, #tpu.memory_space<vmem>>, vector<1x8x4xf32>
    %296 = vector.shape_cast %295 : vector<1x8x4xf32> to vector<8x4xf32>
    %297 = vector.broadcast %282 : vector<8x1xf32> to vector<8x4xf32>
    %298 = arith.mulf %297, %296 : vector<8x4xf32>
    %299 = arith.truncf %285 : vector<8x8xf32> to vector<8x8xbf16>
    %cst_179 = arith.constant dense<0.000000e+00> : vector<8x4xf32>
    %300 = tpu.matmul %299, %274, %cst_179 {dimension_numbers = #tpu.dot_dimension_numbers<[1], [0], [0], [1], [0, 0, 1, 1], [], []>} : vector<8x8xbf16>, vector<8x4xbf16>, vector<8x4xf32> -> vector<8x4xf32>
    %301 = arith.addf %298, %300 : vector<8x4xf32>
    %c7_180 = arith.constant 7 : index
    %c0_181 = arith.constant 0 : index
    %c0_182 = arith.constant 0 : index
    %302 = vector.load %arg21[%c7_180, %c0_181, %c0_182] : memref<8x8x4xf32, #tpu.memory_space<vmem>>, vector<1x8x4xf32>
    %303 = vector.shape_cast %302 : vector<1x8x4xf32> to vector<8x4xf32>
    %304 = vector.shape_cast %301 : vector<8x4xf32> to vector<1x8x4xf32>
    tpu.vector_store %arg21[%c7_180, %c0_181, %c0_182], %304 {strides = array<i32>} : memref<8x8x4xf32, #tpu.memory_space<vmem>>, vector<1x8x4xf32>,
    %c7_183 = arith.constant 7 : index
    %c0_184 = arith.constant 0 : index
    %c0_185 = arith.constant 0 : index
    %305 = vector.load %arg19[%c7_183, %c0_184, %c0_185] : memref<8x8x1xf32, #tpu.memory_space<vmem>>, vector<1x8x1xf32>
    %306 = vector.shape_cast %305 : vector<1x8x1xf32> to vector<8x1xf32>
    %307 = vector.shape_cast %280 : vector<8x1xf32> to vector<1x8x1xf32>
    tpu.vector_store %arg19[%c7_183, %c0_184, %c0_185], %307 {strides = array<i32>} : memref<8x8x1xf32, #tpu.memory_space<vmem>>, vector<1x8x1xf32>,
    %c0_i32_186 = arith.constant 0 : i32
    %308 = arith.cmpi eq, %arg2, %c0_i32_186 : i32
    %309 = arith.extui %308 : i1 to i32
    %c0_i32_187 = arith.constant 0 : i32
    %310 = arith.cmpi ne, %309, %c0_i32_187 : i32
    scf.if %310 {
      %cst_188 = arith.constant 0.000000e+00 : f32
      %311 = vector.broadcast %cst_188 : f32 to vector<8x32xf32>
      %c0_189 = arith.constant 0 : index
      %c0_190 = arith.constant 0 : index
      %c0_191 = arith.constant 0 : index
      %312 = vector.load %arg21[%c0_189, %c0_190, %c0_191] : memref<8x8x4xf32, #tpu.memory_space<vmem>>, vector<1x8x4xf32>
      %313 = vector.shape_cast %312 : vector<1x8x4xf32> to vector<8x4xf32>
      %c0_192 = arith.constant 0 : index
      %c0_193 = arith.constant 0 : index
      %c0_194 = arith.constant 0 : index
      %314 = vector.load %arg20[%c0_192, %c0_193, %c0_194] : memref<8x8x1xf32, #tpu.memory_space<vmem>>, vector<1x8x1xf32>
      %315 = vector.shape_cast %314 : vector<1x8x1xf32> to vector<8x1xf32>
      %316 = vector.broadcast %315 : vector<8x1xf32> to vector<8x4xf32>
      %317 = arith.divf %313, %316 : vector<8x4xf32>
      %318 = arith.truncf %317 : vector<8x4xf32> to vector<8x4xbf16>
      %c0_195 = arith.constant 0 : index
      %c0_196 = arith.constant 0 : index
      %c0_197 = arith.constant 0 : index
      %319 = vector.load %arg10[%c0_195, %c0_196, %c0_197] : memref<8x4x32xbf16, #tpu.memory_space<vmem>>, vector<1x4x32xbf16>
      %320 = vector.shape_cast %319 : vector<1x4x32xbf16> to vector<4x32xbf16>
      %cst_198 = arith.constant dense<0.000000e+00> : vector<8x32xf32>
      %321 = tpu.matmul %318, %320, %cst_198 {dimension_numbers = #tpu.dot_dimension_numbers<[1], [0], [0], [1], [0, 0, 1, 1], [], []>} : vector<8x4xbf16>, vector<4x32xbf16>, vector<8x32xf32> -> vector<8x32xf32>
      %322 = arith.addf %311, %321 : vector<8x32xf32>
      %c1_199 = arith.constant 1 : index
      %c0_200 = arith.constant 0 : index
      %c0_201 = arith.constant 0 : index
      %323 = vector.load %arg21[%c1_199, %c0_200, %c0_201] : memref<8x8x4xf32, #tpu.memory_space<vmem>>, vector<1x8x4xf32>
      %324 = vector.shape_cast %323 : vector<1x8x4xf32> to vector<8x4xf32>
      %c1_202 = arith.constant 1 : index
      %c0_203 = arith.constant 0 : index
      %c0_204 = arith.constant 0 : index
      %325 = vector.load %arg20[%c1_202, %c0_203, %c0_204] : memref<8x8x1xf32, #tpu.memory_space<vmem>>, vector<1x8x1xf32>
      %326 = vector.shape_cast %325 : vector<1x8x1xf32> to vector<8x1xf32>
      %327 = vector.broadcast %326 : vector<8x1xf32> to vector<8x4xf32>
      %328 = arith.divf %324, %327 : vector<8x4xf32>
      %329 = arith.truncf %328 : vector<8x4xf32> to vector<8x4xbf16>
      %c1_205 = arith.constant 1 : index
      %c0_206 = arith.constant 0 : index
      %c0_207 = arith.constant 0 : index
      %330 = vector.load %arg10[%c1_205, %c0_206, %c0_207] : memref<8x4x32xbf16, #tpu.memory_space<vmem>>, vector<1x4x32xbf16>
      %331 = vector.shape_cast %330 : vector<1x4x32xbf16> to vector<4x32xbf16>
      %cst_208 = arith.constant dense<0.000000e+00> : vector<8x32xf32>
      %332 = tpu.matmul %329, %331, %cst_208 {dimension_numbers = #tpu.dot_dimension_numbers<[1], [0], [0], [1], [0, 0, 1, 1], [], []>} : vector<8x4xbf16>, vector<4x32xbf16>, vector<8x32xf32> -> vector<8x32xf32>
      %333 = arith.addf %322, %332 : vector<8x32xf32>
      %c2_209 = arith.constant 2 : index
      %c0_210 = arith.constant 0 : index
      %c0_211 = arith.constant 0 : index
      %334 = vector.load %arg21[%c2_209, %c0_210, %c0_211] : memref<8x8x4xf32, #tpu.memory_space<vmem>>, vector<1x8x4xf32>
      %335 = vector.shape_cast %334 : vector<1x8x4xf32> to vector<8x4xf32>
      %c2_212 = arith.constant 2 : index
      %c0_213 = arith.constant 0 : index
      %c0_214 = arith.constant 0 : index
      %336 = vector.load %arg20[%c2_212, %c0_213, %c0_214] : memref<8x8x1xf32, #tpu.memory_space<vmem>>, vector<1x8x1xf32>
      %337 = vector.shape_cast %336 : vector<1x8x1xf32> to vector<8x1xf32>
      %338 = vector.broadcast %337 : vector<8x1xf32> to vector<8x4xf32>
      %339 = arith.divf %335, %338 : vector<8x4xf32>
      %340 = arith.truncf %339 : vector<8x4xf32> to vector<8x4xbf16>
      %c2_215 = arith.constant 2 : index
      %c0_216 = arith.constant 0 : index
      %c0_217 = arith.constant 0 : index
      %341 = vector.load %arg10[%c2_215, %c0_216, %c0_217] : memref<8x4x32xbf16, #tpu.memory_space<vmem>>, vector<1x4x32xbf16>
      %342 = vector.shape_cast %341 : vector<1x4x32xbf16> to vector<4x32xbf16>
      %cst_218 = arith.constant dense<0.000000e+00> : vector<8x32xf32>
      %343 = tpu.matmul %340, %342, %cst_218 {dimension_numbers = #tpu.dot_dimension_numbers<[1], [0], [0], [1], [0, 0, 1, 1], [], []>} : vector<8x4xbf16>, vector<4x32xbf16>, vector<8x32xf32> -> vector<8x32xf32>
      %344 = arith.addf %333, %343 : vector<8x32xf32>
      %c3_219 = arith.constant 3 : index
      %c0_220 = arith.constant 0 : index
      %c0_221 = arith.constant 0 : index
      %345 = vector.load %arg21[%c3_219, %c0_220, %c0_221] : memref<8x8x4xf32, #tpu.memory_space<vmem>>, vector<1x8x4xf32>
      %346 = vector.shape_cast %345 : vector<1x8x4xf32> to vector<8x4xf32>
      %c3_222 = arith.constant 3 : index
      %c0_223 = arith.constant 0 : index
      %c0_224 = arith.constant 0 : index
      %347 = vector.load %arg20[%c3_222, %c0_223, %c0_224] : memref<8x8x1xf32, #tpu.memory_space<vmem>>, vector<1x8x1xf32>
      %348 = vector.shape_cast %347 : vector<1x8x1xf32> to vector<8x1xf32>
      %349 = vector.broadcast %348 : vector<8x1xf32> to vector<8x4xf32>
      %350 = arith.divf %346, %349 : vector<8x4xf32>
      %351 = arith.truncf %350 : vector<8x4xf32> to vector<8x4xbf16>
      %c3_225 = arith.constant 3 : index
      %c0_226 = arith.constant 0 : index
      %c0_227 = arith.constant 0 : index
      %352 = vector.load %arg10[%c3_225, %c0_226, %c0_227] : memref<8x4x32xbf16, #tpu.memory_space<vmem>>, vector<1x4x32xbf16>
      %353 = vector.shape_cast %352 : vector<1x4x32xbf16> to vector<4x32xbf16>
      %cst_228 = arith.constant dense<0.000000e+00> : vector<8x32xf32>
      %354 = tpu.matmul %351, %353, %cst_228 {dimension_numbers = #tpu.dot_dimension_numbers<[1], [0], [0], [1], [0, 0, 1, 1], [], []>} : vector<8x4xbf16>, vector<4x32xbf16>, vector<8x32xf32> -> vector<8x32xf32>
      %355 = arith.addf %344, %354 : vector<8x32xf32>
      %c4_229 = arith.constant 4 : index
      %c0_230 = arith.constant 0 : index
      %c0_231 = arith.constant 0 : index
      %356 = vector.load %arg21[%c4_229, %c0_230, %c0_231] : memref<8x8x4xf32, #tpu.memory_space<vmem>>, vector<1x8x4xf32>
      %357 = vector.shape_cast %356 : vector<1x8x4xf32> to vector<8x4xf32>
      %c4_232 = arith.constant 4 : index
      %c0_233 = arith.constant 0 : index
      %c0_234 = arith.constant 0 : index
      %358 = vector.load %arg20[%c4_232, %c0_233, %c0_234] : memref<8x8x1xf32, #tpu.memory_space<vmem>>, vector<1x8x1xf32>
      %359 = vector.shape_cast %358 : vector<1x8x1xf32> to vector<8x1xf32>
      %360 = vector.broadcast %359 : vector<8x1xf32> to vector<8x4xf32>
      %361 = arith.divf %357, %360 : vector<8x4xf32>
      %362 = arith.truncf %361 : vector<8x4xf32> to vector<8x4xbf16>
      %c4_235 = arith.constant 4 : index
      %c0_236 = arith.constant 0 : index
      %c0_237 = arith.constant 0 : index
      %363 = vector.load %arg10[%c4_235, %c0_236, %c0_237] : memref<8x4x32xbf16, #tpu.memory_space<vmem>>, vector<1x4x32xbf16>
      %364 = vector.shape_cast %363 : vector<1x4x32xbf16> to vector<4x32xbf16>
      %cst_238 = arith.constant dense<0.000000e+00> : vector<8x32xf32>
      %365 = tpu.matmul %362, %364, %cst_238 {dimension_numbers = #tpu.dot_dimension_numbers<[1], [0], [0], [1], [0, 0, 1, 1], [], []>} : vector<8x4xbf16>, vector<4x32xbf16>, vector<8x32xf32> -> vector<8x32xf32>
      %366 = arith.addf %355, %365 : vector<8x32xf32>
      %c5_239 = arith.constant 5 : index
      %c0_240 = arith.constant 0 : index
      %c0_241 = arith.constant 0 : index
      %367 = vector.load %arg21[%c5_239, %c0_240, %c0_241] : memref<8x8x4xf32, #tpu.memory_space<vmem>>, vector<1x8x4xf32>
      %368 = vector.shape_cast %367 : vector<1x8x4xf32> to vector<8x4xf32>
      %c5_242 = arith.constant 5 : index
      %c0_243 = arith.constant 0 : index
      %c0_244 = arith.constant 0 : index
      %369 = vector.load %arg20[%c5_242, %c0_243, %c0_244] : memref<8x8x1xf32, #tpu.memory_space<vmem>>, vector<1x8x1xf32>
      %370 = vector.shape_cast %369 : vector<1x8x1xf32> to vector<8x1xf32>
      %371 = vector.broadcast %370 : vector<8x1xf32> to vector<8x4xf32>
      %372 = arith.divf %368, %371 : vector<8x4xf32>
      %373 = arith.truncf %372 : vector<8x4xf32> to vector<8x4xbf16>
      %c5_245 = arith.constant 5 : index
      %c0_246 = arith.constant 0 : index
      %c0_247 = arith.constant 0 : index
      %374 = vector.load %arg10[%c5_245, %c0_246, %c0_247] : memref<8x4x32xbf16, #tpu.memory_space<vmem>>, vector<1x4x32xbf16>
      %375 = vector.shape_cast %374 : vector<1x4x32xbf16> to vector<4x32xbf16>
      %cst_248 = arith.constant dense<0.000000e+00> : vector<8x32xf32>
      %376 = tpu.matmul %373, %375, %cst_248 {dimension_numbers = #tpu.dot_dimension_numbers<[1], [0], [0], [1], [0, 0, 1, 1], [], []>} : vector<8x4xbf16>, vector<4x32xbf16>, vector<8x32xf32> -> vector<8x32xf32>
      %377 = arith.addf %366, %376 : vector<8x32xf32>
      %c6_249 = arith.constant 6 : index
      %c0_250 = arith.constant 0 : index
      %c0_251 = arith.constant 0 : index
      %378 = vector.load %arg21[%c6_249, %c0_250, %c0_251] : memref<8x8x4xf32, #tpu.memory_space<vmem>>, vector<1x8x4xf32>
      %379 = vector.shape_cast %378 : vector<1x8x4xf32> to vector<8x4xf32>
      %c6_252 = arith.constant 6 : index
      %c0_253 = arith.constant 0 : index
      %c0_254 = arith.constant 0 : index
      %380 = vector.load %arg20[%c6_252, %c0_253, %c0_254] : memref<8x8x1xf32, #tpu.memory_space<vmem>>, vector<1x8x1xf32>
      %381 = vector.shape_cast %380 : vector<1x8x1xf32> to vector<8x1xf32>
      %382 = vector.broadcast %381 : vector<8x1xf32> to vector<8x4xf32>
      %383 = arith.divf %379, %382 : vector<8x4xf32>
      %384 = arith.truncf %383 : vector<8x4xf32> to vector<8x4xbf16>
      %c6_255 = arith.constant 6 : index
      %c0_256 = arith.constant 0 : index
      %c0_257 = arith.constant 0 : index
      %385 = vector.load %arg10[%c6_255, %c0_256, %c0_257] : memref<8x4x32xbf16, #tpu.memory_space<vmem>>, vector<1x4x32xbf16>
      %386 = vector.shape_cast %385 : vector<1x4x32xbf16> to vector<4x32xbf16>
      %cst_258 = arith.constant dense<0.000000e+00> : vector<8x32xf32>
      %387 = tpu.matmul %384, %386, %cst_258 {dimension_numbers = #tpu.dot_dimension_numbers<[1], [0], [0], [1], [0, 0, 1, 1], [], []>} : vector<8x4xbf16>, vector<4x32xbf16>, vector<8x32xf32> -> vector<8x32xf32>
      %388 = arith.addf %377, %387 : vector<8x32xf32>
      %c7_259 = arith.constant 7 : index
      %c0_260 = arith.constant 0 : index
      %c0_261 = arith.constant 0 : index
      %389 = vector.load %arg21[%c7_259, %c0_260, %c0_261] : memref<8x8x4xf32, #tpu.memory_space<vmem>>, vector<1x8x4xf32>
      %390 = vector.shape_cast %389 : vector<1x8x4xf32> to vector<8x4xf32>
      %c7_262 = arith.constant 7 : index
      %c0_263 = arith.constant 0 : index
      %c0_264 = arith.constant 0 : index
      %391 = vector.load %arg20[%c7_262, %c0_263, %c0_264] : memref<8x8x1xf32, #tpu.memory_space<vmem>>, vector<1x8x1xf32>
      %392 = vector.shape_cast %391 : vector<1x8x1xf32> to vector<8x1xf32>
      %393 = vector.broadcast %392 : vector<8x1xf32> to vector<8x4xf32>
      %394 = arith.divf %390, %393 : vector<8x4xf32>
      %395 = arith.truncf %394 : vector<8x4xf32> to vector<8x4xbf16>
      %c7_265 = arith.constant 7 : index
      %c0_266 = arith.constant 0 : index
      %c0_267 = arith.constant 0 : index
      %396 = vector.load %arg10[%c7_265, %c0_266, %c0_267] : memref<8x4x32xbf16, #tpu.memory_space<vmem>>, vector<1x4x32xbf16>
      %397 = vector.shape_cast %396 : vector<1x4x32xbf16> to vector<4x32xbf16>
      %cst_268 = arith.constant dense<0.000000e+00> : vector<8x32xf32>
      %398 = tpu.matmul %395, %397, %cst_268 {dimension_numbers = #tpu.dot_dimension_numbers<[1], [0], [0], [1], [0, 0, 1, 1], [], []>} : vector<8x4xbf16>, vector<4x32xbf16>, vector<8x32xf32> -> vector<8x32xf32>
      %399 = arith.addf %388, %398 : vector<8x32xf32>
      %c0_269 = arith.constant 0 : index
      %c0_270 = arith.constant 0 : index
      %c0_271 = arith.constant 0 : index
      %400 = vector.load %arg3[%c0_269, %c0_270, %c0_271] : memref<1x8x32xf32, #tpu.memory_space<vmem>>, vector<1x8x32xf32>
      %401 = vector.shape_cast %400 : vector<1x8x32xf32> to vector<8x32xf32>
      %402 = arith.addf %401, %399 : vector<8x32xf32>
      %c0_272 = arith.constant 0 : index
      %c0_273 = arith.constant 0 : index
      %403 = vector.load %arg14[%c0_272, %c0_273] : memref<1x32xf32, #tpu.memory_space<vmem>>, vector<1x32xf32>
      %404 = vector.broadcast %403 : vector<1x32xf32> to vector<8x32xf32>
      %405 = arith.addf %402, %404 : vector<8x32xf32>
      %c0_274 = arith.constant 0 : index
      %c0_275 = arith.constant 0 : index
      %406 = vector.load %arg15[%c0_274, %c0_275] : memref<1x32xf32, #tpu.memory_space<vmem>>, vector<1x32xf32>
      %c0_276 = arith.constant 0 : index
      %c0_277 = arith.constant 0 : index
      %407 = vector.load %arg16[%c0_276, %c0_277] : memref<1x32xf32, #tpu.memory_space<vmem>>, vector<1x32xf32>
      %cst_278 = arith.constant dense<0.000000e+00> : vector<8xf32>
      %408 = vector.multi_reduction <add>, %405, %cst_278 [1] : vector<8x32xf32> to vector<8xf32>
      %409 = vector.shape_cast %408 : vector<8xf32> to vector<8x1xf32>
      %cst_279 = arith.constant 3.200000e+01 : f32
      %410 = vector.broadcast %cst_279 : f32 to vector<8x1xf32>
      %411 = arith.divf %409, %410 : vector<8x1xf32>
      %412 = vector.broadcast %411 : vector<8x1xf32> to vector<8x32xf32>
      %413 = arith.subf %405, %412 : vector<8x32xf32>
      %414 = arith.mulf %413, %413 : vector<8x32xf32>
      %cst_280 = arith.constant dense<0.000000e+00> : vector<8xf32>
      %415 = vector.multi_reduction <add>, %414, %cst_280 [1] : vector<8x32xf32> to vector<8xf32>
      %416 = vector.shape_cast %415 : vector<8xf32> to vector<8x1xf32>
      %cst_281 = arith.constant 3.200000e+01 : f32
      %417 = vector.broadcast %cst_281 : f32 to vector<8x1xf32>
      %418 = arith.divf %416, %417 : vector<8x1xf32>
      %419 = vector.broadcast %411 : vector<8x1xf32> to vector<8x32xf32>
      %420 = arith.subf %405, %419 : vector<8x32xf32>
      %cst_282 = arith.constant 9.99999974E-6 : f32
      %421 = vector.broadcast %cst_282 : f32 to vector<8x1xf32>
      %422 = arith.addf %418, %421 : vector<8x1xf32>
      %423 = math.rsqrt %422 : vector<8x1xf32>
      %424 = vector.broadcast %423 : vector<8x1xf32> to vector<8x32xf32>
      %425 = arith.mulf %420, %424 : vector<8x32xf32>
      %426 = vector.broadcast %406 : vector<1x32xf32> to vector<8x32xf32>
      %427 = arith.mulf %425, %426 : vector<8x32xf32>
      %428 = vector.broadcast %407 : vector<1x32xf32> to vector<8x32xf32>
      %429 = arith.addf %427, %428 : vector<8x32xf32>
      %c0_283 = arith.constant 0 : index
      %c0_284 = arith.constant 0 : index
      %c0_285 = arith.constant 0 : index
      %430 = vector.load %arg17[%c0_283, %c0_284, %c0_285] : memref<1x8x32xf32, #tpu.memory_space<vmem>>, vector<1x8x32xf32>
      %431 = vector.shape_cast %430 : vector<1x8x32xf32> to vector<8x32xf32>
      %432 = vector.shape_cast %429 : vector<8x32xf32> to vector<1x8x32xf32>
      tpu.vector_store %arg17[%c0_283, %c0_284, %c0_285], %432 {strides = array<i32>} : memref<1x8x32xf32, #tpu.memory_space<vmem>>, vector<1x8x32xf32>,
    } else {
    }
    return
  }
  func.func @transform_0(%arg0: i32, %arg1: i32, %arg2: i32) -> (i32, i32, i32) {
    %c0_i32 = arith.constant 0 : i32
    %c0_i32_0 = arith.constant 0 : i32
    return %arg0, %arg1, %c0_i32 : i32, i32, i32
  }
  func.func @transform_1(%arg0: i32, %arg1: i32, %arg2: i32) -> (i32, i32, i32) {
    %c0_i32 = arith.constant 0 : i32
    %c0_i32_0 = arith.constant 0 : i32
    return %arg0, %arg1, %c0_i32 : i32, i32, i32
  }
  func.func @transform_2(%arg0: i32, %arg1: i32, %arg2: i32) -> (i32, i32, i32) {
    %c0_i32 = arith.constant 0 : i32
    %c0_i32_0 = arith.constant 0 : i32
    return %arg0, %arg2, %c0_i32 : i32, i32, i32
  }
  func.func @transform_3(%arg0: i32, %arg1: i32, %arg2: i32) -> (i32, i32, i32) {
    %c0_i32 = arith.constant 0 : i32
    %c0_i32_0 = arith.constant 0 : i32
    return %arg0, %arg2, %c0_i32 : i32, i32, i32
  }
  func.func @transform_4(%arg0: i32, %arg1: i32, %arg2: i32) -> (i32, i32) {
    %c0_i32 = arith.constant 0 : i32
    %c0_i32_0 = arith.constant 0 : i32
    %c0_i32_1 = arith.constant 0 : i32
    return %c0_i32, %c0_i32_0 : i32, i32
  }
  func.func @transform_5(%arg0: i32, %arg1: i32, %arg2: i32) -> (i32, i32) {
    %c0_i32 = arith.constant 0 : i32
    %c0_i32_0 = arith.constant 0 : i32
    %c0_i32_1 = arith.constant 0 : i32
    return %c0_i32, %c0_i32_0 : i32, i32
  }
  func.func @transform_6(%arg0: i32, %arg1: i32, %arg2: i32) -> (i32, i32) {
    %c0_i32 = arith.constant 0 : i32
    %c0_i32_0 = arith.constant 0 : i32
    %c0_i32_1 = arith.constant 0 : i32
    return %c0_i32, %c0_i32_0 : i32, i32
  }
  func.func @transform_7(%arg0: i32, %arg1: i32, %arg2: i32) -> (i32, i32, i32) {
    %c0_i32 = arith.constant 0 : i32
    %c0_i32_0 = arith.constant 0 : i32
    %c0_i32_1 = arith.constant 0 : i32
    %c0_i32_2 = arith.constant 0 : i32
    return %c0_i32, %c0_i32_0, %c0_i32_1 : i32, i32, i32
  }
  func.func @transform_8(%arg0: i32, %arg1: i32, %arg2: i32) -> (i32, i32) {
    %c0_i32 = arith.constant 0 : i32
    %c0_i32_0 = arith.constant 0 : i32
    %c0_i32_1 = arith.constant 0 : i32
    return %c0_i32, %c0_i32_0 : i32, i32
  }
  func.func @transform_9(%arg0: i32, %arg1: i32, %arg2: i32) -> (i32, i32) {
    %c0_i32 = arith.constant 0 : i32
    %c0_i32_0 = arith.constant 0 : i32
    %c0_i32_1 = arith.constant 0 : i32
    return %c0_i32, %c0_i32_0 : i32, i32
  }
  func.func @transform_10(%arg0: i32, %arg1: i32, %arg2: i32) -> (i32, i32) {
    %c0_i32 = arith.constant 0 : i32
    %c0_i32_0 = arith.constant 0 : i32
    %c0_i32_1 = arith.constant 0 : i32
    return %c0_i32, %c0_i32_0 : i32, i32
  }
  func.func @transform_11(%arg0: i32, %arg1: i32, %arg2: i32) -> (i32, i32) {
    %c0_i32 = arith.constant 0 : i32
    %c0_i32_0 = arith.constant 0 : i32
    %c0_i32_1 = arith.constant 0 : i32
    return %c0_i32, %c0_i32_0 : i32, i32
  }
  func.func @transform_12(%arg0: i32, %arg1: i32, %arg2: i32) -> (i32, i32) {
    %c0_i32 = arith.constant 0 : i32
    %c0_i32_0 = arith.constant 0 : i32
    %c0_i32_1 = arith.constant 0 : i32
    return %c0_i32, %c0_i32_0 : i32, i32
  }
  func.func @transform_13(%arg0: i32, %arg1: i32, %arg2: i32) -> (i32, i32) {
    %c0_i32 = arith.constant 0 : i32
    %c0_i32_0 = arith.constant 0 : i32
    %c0_i32_1 = arith.constant 0 : i32
    return %c0_i32, %c0_i32_0 : i32, i32
  }
  func.func @transform_14(%arg0: i32, %arg1: i32, %arg2: i32) -> (i32, i32, i32) {
    %c0_i32 = arith.constant 0 : i32
    %c0_i32_0 = arith.constant 0 : i32
    return %arg0, %arg1, %c0_i32 : i32, i32, i32
  }
}

module attributes {stable_mosaic.version = 11 : i64} {
  func.func @_ffn_ln_kernel(%arg0: i32, %arg1: memref<16x32xf32, #tpu.memory_space<vmem>>, %arg2: memref<32x64xbf16, #tpu.memory_space<vmem>>, %arg3: memref<1x64xf32, #tpu.memory_space<vmem>>, %arg4: memref<64x32xbf16, #tpu.memory_space<vmem>>, %arg5: memref<1x32xf32, #tpu.memory_space<vmem>>, %arg6: memref<1x32xf32, #tpu.memory_space<vmem>>, %arg7: memref<1x32xf32, #tpu.memory_space<vmem>>, %arg8: memref<16x32xf32, #tpu.memory_space<vmem>>) attributes {dimension_semantics = [#tpu.dimension_semantics<parallel>], iteration_bounds = array<i64: 1>, scalar_prefetch = 0 : i64, scratch_operands = 0 : i64, tpu.core_type = #tpu.core_type<tc>, window_params = [{transform_indices = @transform_0, window_bounds = array<i64: 16, 32>}, {pipeline_mode = #tpu.pipeline_mode<synchronous>, transform_indices = @transform_1, window_bounds = array<i64: 32, 64>}, {pipeline_mode = #tpu.pipeline_mode<synchronous>, transform_indices = @transform_2, window_bounds = array<i64: 1, 64>}, {pipeline_mode = #tpu.pipeline_mode<synchronous>, transform_indices = @transform_3, window_bounds = array<i64: 64, 32>}, {pipeline_mode = #tpu.pipeline_mode<synchronous>, transform_indices = @transform_4, window_bounds = array<i64: 1, 32>}, {pipeline_mode = #tpu.pipeline_mode<synchronous>, transform_indices = @transform_5, window_bounds = array<i64: 1, 32>}, {pipeline_mode = #tpu.pipeline_mode<synchronous>, transform_indices = @transform_6, window_bounds = array<i64: 1, 32>}, {transform_indices = @transform_7, window_bounds = array<i64: 16, 32>}]} {
    %c0 = arith.constant 0 : index
    %c0_0 = arith.constant 0 : index
    %0 = vector.load %arg1[%c0, %c0_0] : memref<16x32xf32, #tpu.memory_space<vmem>>, vector<16x32xf32>
    %1 = arith.truncf %0 : vector<16x32xf32> to vector<16x32xbf16>
    %c0_1 = arith.constant 0 : index
    %c0_2 = arith.constant 0 : index
    %2 = vector.load %arg2[%c0_1, %c0_2] : memref<32x64xbf16, #tpu.memory_space<vmem>>, vector<32x64xbf16>
    %cst = arith.constant dense<0.000000e+00> : vector<16x64xf32>
    %3 = tpu.matmul %1, %2, %cst {dimension_numbers = #tpu.dot_dimension_numbers<[1], [0], [0], [1], [0, 0, 1, 1], [], []>} : vector<16x32xbf16>, vector<32x64xbf16>, vector<16x64xf32> -> vector<16x64xf32>
    %c0_3 = arith.constant 0 : index
    %c0_4 = arith.constant 0 : index
    %4 = vector.load %arg3[%c0_3, %c0_4] : memref<1x64xf32, #tpu.memory_space<vmem>>, vector<1x64xf32>
    %5 = vector.broadcast %4 : vector<1x64xf32> to vector<16x64xf32>
    %6 = arith.addf %3, %5 : vector<16x64xf32>
    %cst_5 = arith.constant 0.000000e+00 : f32
    %7 = vector.broadcast %cst_5 : f32 to vector<16x64xf32>
    %8 = arith.maximumf %6, %7 : vector<16x64xf32>
    %9 = arith.truncf %8 : vector<16x64xf32> to vector<16x64xbf16>
    %c0_6 = arith.constant 0 : index
    %c0_7 = arith.constant 0 : index
    %10 = vector.load %arg4[%c0_6, %c0_7] : memref<64x32xbf16, #tpu.memory_space<vmem>>, vector<64x32xbf16>
    %cst_8 = arith.constant dense<0.000000e+00> : vector<16x32xf32>
    %11 = tpu.matmul %9, %10, %cst_8 {dimension_numbers = #tpu.dot_dimension_numbers<[1], [0], [0], [1], [0, 0, 1, 1], [], []>} : vector<16x64xbf16>, vector<64x32xbf16>, vector<16x32xf32> -> vector<16x32xf32>
    %c0_9 = arith.constant 0 : index
    %c0_10 = arith.constant 0 : index
    %12 = vector.load %arg5[%c0_9, %c0_10] : memref<1x32xf32, #tpu.memory_space<vmem>>, vector<1x32xf32>
    %13 = vector.broadcast %12 : vector<1x32xf32> to vector<16x32xf32>
    %14 = arith.addf %11, %13 : vector<16x32xf32>
    %15 = arith.addf %0, %14 : vector<16x32xf32>
    %c0_11 = arith.constant 0 : index
    %c0_12 = arith.constant 0 : index
    %16 = vector.load %arg6[%c0_11, %c0_12] : memref<1x32xf32, #tpu.memory_space<vmem>>, vector<1x32xf32>
    %c0_13 = arith.constant 0 : index
    %c0_14 = arith.constant 0 : index
    %17 = vector.load %arg7[%c0_13, %c0_14] : memref<1x32xf32, #tpu.memory_space<vmem>>, vector<1x32xf32>
    %cst_15 = arith.constant dense<0.000000e+00> : vector<16xf32>
    %18 = vector.multi_reduction <add>, %15, %cst_15 [1] : vector<16x32xf32> to vector<16xf32>
    %19 = vector.shape_cast %18 : vector<16xf32> to vector<16x1xf32>
    %cst_16 = arith.constant 3.200000e+01 : f32
    %20 = vector.broadcast %cst_16 : f32 to vector<16x1xf32>
    %21 = arith.divf %19, %20 : vector<16x1xf32>
    %22 = vector.broadcast %21 : vector<16x1xf32> to vector<16x32xf32>
    %23 = arith.subf %15, %22 : vector<16x32xf32>
    %24 = arith.mulf %23, %23 : vector<16x32xf32>
    %cst_17 = arith.constant dense<0.000000e+00> : vector<16xf32>
    %25 = vector.multi_reduction <add>, %24, %cst_17 [1] : vector<16x32xf32> to vector<16xf32>
    %26 = vector.shape_cast %25 : vector<16xf32> to vector<16x1xf32>
    %cst_18 = arith.constant 3.200000e+01 : f32
    %27 = vector.broadcast %cst_18 : f32 to vector<16x1xf32>
    %28 = arith.divf %26, %27 : vector<16x1xf32>
    %29 = vector.broadcast %21 : vector<16x1xf32> to vector<16x32xf32>
    %30 = arith.subf %15, %29 : vector<16x32xf32>
    %cst_19 = arith.constant 9.99999974E-6 : f32
    %31 = vector.broadcast %cst_19 : f32 to vector<16x1xf32>
    %32 = arith.addf %28, %31 : vector<16x1xf32>
    %33 = math.rsqrt %32 : vector<16x1xf32>
    %34 = vector.broadcast %33 : vector<16x1xf32> to vector<16x32xf32>
    %35 = arith.mulf %30, %34 : vector<16x32xf32>
    %36 = vector.broadcast %16 : vector<1x32xf32> to vector<16x32xf32>
    %37 = arith.mulf %35, %36 : vector<16x32xf32>
    %38 = vector.broadcast %17 : vector<1x32xf32> to vector<16x32xf32>
    %39 = arith.addf %37, %38 : vector<16x32xf32>
    %c0_20 = arith.constant 0 : index
    %c0_21 = arith.constant 0 : index
    %40 = vector.load %arg8[%c0_20, %c0_21] : memref<16x32xf32, #tpu.memory_space<vmem>>, vector<16x32xf32>
    tpu.vector_store %arg8[%c0_20, %c0_21], %39 {strides = array<i32>} : memref<16x32xf32, #tpu.memory_space<vmem>>, vector<16x32xf32>,
    return
  }
  func.func @transform_0(%arg0: i32) -> (i32, i32) {
    %c0_i32 = arith.constant 0 : i32
    %c0_i32_0 = arith.constant 0 : i32
    return %arg0, %c0_i32 : i32, i32
  }
  func.func @transform_1(%arg0: i32) -> (i32, i32) {
    %c0_i32 = arith.constant 0 : i32
    %c0_i32_0 = arith.constant 0 : i32
    %c0_i32_1 = arith.constant 0 : i32
    return %c0_i32, %c0_i32_0 : i32, i32
  }
  func.func @transform_2(%arg0: i32) -> (i32, i32) {
    %c0_i32 = arith.constant 0 : i32
    %c0_i32_0 = arith.constant 0 : i32
    %c0_i32_1 = arith.constant 0 : i32
    return %c0_i32, %c0_i32_0 : i32, i32
  }
  func.func @transform_3(%arg0: i32) -> (i32, i32) {
    %c0_i32 = arith.constant 0 : i32
    %c0_i32_0 = arith.constant 0 : i32
    %c0_i32_1 = arith.constant 0 : i32
    return %c0_i32, %c0_i32_0 : i32, i32
  }
  func.func @transform_4(%arg0: i32) -> (i32, i32) {
    %c0_i32 = arith.constant 0 : i32
    %c0_i32_0 = arith.constant 0 : i32
    %c0_i32_1 = arith.constant 0 : i32
    return %c0_i32, %c0_i32_0 : i32, i32
  }
  func.func @transform_5(%arg0: i32) -> (i32, i32) {
    %c0_i32 = arith.constant 0 : i32
    %c0_i32_0 = arith.constant 0 : i32
    %c0_i32_1 = arith.constant 0 : i32
    return %c0_i32, %c0_i32_0 : i32, i32
  }
  func.func @transform_6(%arg0: i32) -> (i32, i32) {
    %c0_i32 = arith.constant 0 : i32
    %c0_i32_0 = arith.constant 0 : i32
    %c0_i32_1 = arith.constant 0 : i32
    return %c0_i32, %c0_i32_0 : i32, i32
  }
  func.func @transform_7(%arg0: i32) -> (i32, i32) {
    %c0_i32 = arith.constant 0 : i32
    %c0_i32_0 = arith.constant 0 : i32
    return %arg0, %c0_i32 : i32, i32
  }
}

module attributes {stable_mosaic.version = 11 : i64} {
  func.func @_mha_flash_kernel(%arg0: i32, %arg1: i32, %arg2: i32, %arg3: memref<1x8x32xf32, #tpu.memory_space<vmem>>, %arg4: memref<1x8x32xbf16, #tpu.memory_space<vmem>>, %arg5: memref<1x16x32xbf16, #tpu.memory_space<vmem>>, %arg6: memref<1x16x32xbf16, #tpu.memory_space<vmem>>, %arg7: memref<32x32xbf16, #tpu.memory_space<vmem>>, %arg8: memref<32x32xbf16, #tpu.memory_space<vmem>>, %arg9: memref<32x32xbf16, #tpu.memory_space<vmem>>, %arg10: memref<8x4x32xbf16, #tpu.memory_space<vmem>>, %arg11: memref<1x32xf32, #tpu.memory_space<vmem>>, %arg12: memref<1x32xf32, #tpu.memory_space<vmem>>, %arg13: memref<1x32xf32, #tpu.memory_space<vmem>>, %arg14: memref<1x32xf32, #tpu.memory_space<vmem>>, %arg15: memref<1x32xf32, #tpu.memory_space<vmem>>, %arg16: memref<1x32xf32, #tpu.memory_space<vmem>>, %arg17: memref<1x8x32xf32, #tpu.memory_space<vmem>>, %arg18: memref<8x32xbf16, #tpu.memory_space<vmem>>, %arg19: memref<8x8x1xf32, #tpu.memory_space<vmem>>, %arg20: memref<8x8x1xf32, #tpu.memory_space<vmem>>, %arg21: memref<8x8x4xf32, #tpu.memory_space<vmem>>) attributes {dimension_semantics = [#tpu.dimension_semantics<parallel>, #tpu.dimension_semantics<parallel>, #tpu.dimension_semantics<arbitrary>], iteration_bounds = array<i64: 2, 1, 1>, scalar_prefetch = 0 : i64, scratch_operands = 4 : i64, tpu.core_type = #tpu.core_type<tc>, window_params = [{transform_indices = @transform_0, window_bounds = array<i64: 1, 8, 32>}, {transform_indices = @transform_1, window_bounds = array<i64: 1, 8, 32>}, {transform_indices = @transform_2, window_bounds = array<i64: 1, 16, 32>}, {transform_indices = @transform_3, window_bounds = array<i64: 1, 16, 32>}, {pipeline_mode = #tpu.pipeline_mode<synchronous>, transform_indices = @transform_4, window_bounds = array<i64: 32, 32>}, {pipeline_mode = #tpu.pipeline_mode<synchronous>, transform_indices = @transform_5, window_bounds = array<i64: 32, 32>}, {pipeline_mode = #tpu.pipeline_mode<synchronous>, transform_indices = @transform_6, window_bounds = array<i64: 32, 32>}, {pipeline_mode = #tpu.pipeline_mode<synchronous>, transform_indices = @transform_7, window_bounds = array<i64: 8, 4, 32>}, {pipeline_mode = #tpu.pipeline_mode<synchronous>, transform_indices = @transform_8, window_bounds = array<i64: 1, 32>}, {pipeline_mode = #tpu.pipeline_mode<synchronous>, transform_indices = @transform_9, window_bounds = array<i64: 1, 32>}, {pipeline_mode = #tpu.pipeline_mode<synchronous>, transform_indices = @transform_10, window_bounds = array<i64: 1, 32>}, {pipeline_mode = #tpu.pipeline_mode<synchronous>, transform_indices = @transform_11, window_bounds = array<i64: 1, 32>}, {pipeline_mode = #tpu.pipeline_mode<synchronous>, transform_indices = @transform_12, window_bounds = array<i64: 1, 32>}, {pipeline_mode = #tpu.pipeline_mode<synchronous>, transform_indices = @transform_13, window_bounds = array<i64: 1, 32>}, {transform_indices = @transform_14, window_bounds = array<i64: 1, 8, 32>}]} {
    %c0_i32 = arith.constant 0 : i32
    %0 = arith.cmpi eq, %arg2, %c0_i32 : i32
    %1 = arith.extui %0 : i1 to i32
    %c0_i32_0 = arith.constant 0 : i32
    %2 = arith.cmpi ne, %1, %c0_i32_0 : i32
    scf.if %2 {
      %c0_188 = arith.constant 0 : index
      %c0_189 = arith.constant 0 : index
      %c0_190 = arith.constant 0 : index
      %311 = vector.load %arg4[%c0_188, %c0_189, %c0_190] : memref<1x8x32xbf16, #tpu.memory_space<vmem>>, vector<1x8x32xbf16>
      %312 = vector.shape_cast %311 : vector<1x8x32xbf16> to vector<8x32xbf16>
      %c0_191 = arith.constant 0 : index
      %c0_192 = arith.constant 0 : index
      %313 = vector.load %arg7[%c0_191, %c0_192] : memref<32x32xbf16, #tpu.memory_space<vmem>>, vector<32x32xbf16>
      %cst_193 = arith.constant dense<0.000000e+00> : vector<8x32xf32>
      %314 = tpu.matmul %312, %313, %cst_193 {dimension_numbers = #tpu.dot_dimension_numbers<[1], [0], [0], [1], [0, 0, 1, 1], [], []>} : vector<8x32xbf16>, vector<32x32xbf16>, vector<8x32xf32> -> vector<8x32xf32>
      %c0_194 = arith.constant 0 : index
      %c0_195 = arith.constant 0 : index
      %315 = vector.load %arg11[%c0_194, %c0_195] : memref<1x32xf32, #tpu.memory_space<vmem>>, vector<1x32xf32>
      %316 = vector.broadcast %315 : vector<1x32xf32> to vector<8x32xf32>
      %317 = arith.addf %314, %316 : vector<8x32xf32>
      %318 = arith.truncf %317 : vector<8x32xf32> to vector<8x32xbf16>
      %c0_196 = arith.constant 0 : index
      %c0_197 = arith.constant 0 : index
      %319 = vector.load %arg18[%c0_196, %c0_197] : memref<8x32xbf16, #tpu.memory_space<vmem>>, vector<8x32xbf16>
      tpu.vector_store %arg18[%c0_196, %c0_197], %318 {strides = array<i32>} : memref<8x32xbf16, #tpu.memory_space<vmem>>, vector<8x32xbf16>,
      %cst_198 = arith.constant 0xFF800000 : f32
      %320 = vector.broadcast %cst_198 : f32 to vector<8x8x1xf32>
      %c0_199 = arith.constant 0 : index
      %c0_200 = arith.constant 0 : index
      %c0_201 = arith.constant 0 : index
      %321 = vector.load %arg19[%c0_199, %c0_200, %c0_201] : memref<8x8x1xf32, #tpu.memory_space<vmem>>, vector<8x8x1xf32>
      tpu.vector_store %arg19[%c0_199, %c0_200, %c0_201], %320 {strides = array<i32>} : memref<8x8x1xf32, #tpu.memory_space<vmem>>, vector<8x8x1xf32>,
      %cst_202 = arith.constant 0.000000e+00 : f32
      %322 = vector.broadcast %cst_202 : f32 to vector<8x8x1xf32>
      %c0_203 = arith.constant 0 : index
      %c0_204 = arith.constant 0 : index
      %c0_205 = arith.constant 0 : index
      %323 = vector.load %arg20[%c0_203, %c0_204, %c0_205] : memref<8x8x1xf32, #tpu.memory_space<vmem>>, vector<8x8x1xf32>
      tpu.vector_store %arg20[%c0_203, %c0_204, %c0_205], %322 {strides = array<i32>} : memref<8x8x1xf32, #tpu.memory_space<vmem>>, vector<8x8x1xf32>,
      %cst_206 = arith.constant 0.000000e+00 : f32
      %324 = vector.broadcast %cst_206 : f32 to vector<8x8x4xf32>
      %c0_207 = arith.constant 0 : index
      %c0_208 = arith.constant 0 : index
      %c0_209 = arith.constant 0 : index
      %325 = vector.load %arg21[%c0_207, %c0_208, %c0_209] : memref<8x8x4xf32, #tpu.memory_space<vmem>>, vector<8x8x4xf32>
      tpu.vector_store %arg21[%c0_207, %c0_208, %c0_209], %324 {strides = array<i32>} : memref<8x8x4xf32, #tpu.memory_space<vmem>>, vector<8x8x4xf32>,
    } else {
    }
    %c0 = arith.constant 0 : index
    %c0_1 = arith.constant 0 : index
    %c0_2 = arith.constant 0 : index
    %3 = vector.load %arg5[%c0, %c0_1, %c0_2] : memref<1x16x32xbf16, #tpu.memory_space<vmem>>, vector<1x16x32xbf16>
    %4 = vector.shape_cast %3 : vector<1x16x32xbf16> to vector<16x32xbf16>
    %c0_3 = arith.constant 0 : index
    %c0_4 = arith.constant 0 : index
    %5 = vector.load %arg8[%c0_3, %c0_4] : memref<32x32xbf16, #tpu.memory_space<vmem>>, vector<32x32xbf16>
    %cst = arith.constant dense<0.000000e+00> : vector<16x32xf32>
    %6 = tpu.matmul %4, %5, %cst {dimension_numbers = #tpu.dot_dimension_numbers<[1], [0], [0], [1], [0, 0, 1, 1], [], []>} : vector<16x32xbf16>, vector<32x32xbf16>, vector<16x32xf32> -> vector<16x32xf32>
    %c0_5 = arith.constant 0 : index
    %c0_6 = arith.constant 0 : index
    %7 = vector.load %arg12[%c0_5, %c0_6] : memref<1x32xf32, #tpu.memory_space<vmem>>, vector<1x32xf32>
    %8 = vector.broadcast %7 : vector<1x32xf32> to vector<16x32xf32>
    %9 = arith.addf %6, %8 : vector<16x32xf32>
    %10 = arith.truncf %9 : vector<16x32xf32> to vector<16x32xbf16>
    %c0_7 = arith.constant 0 : index
    %c0_8 = arith.constant 0 : index
    %c0_9 = arith.constant 0 : index
    %11 = vector.load %arg6[%c0_7, %c0_8, %c0_9] : memref<1x16x32xbf16, #tpu.memory_space<vmem>>, vector<1x16x32xbf16>
    %12 = vector.shape_cast %11 : vector<1x16x32xbf16> to vector<16x32xbf16>
    %c0_10 = arith.constant 0 : index
    %c0_11 = arith.constant 0 : index
    %13 = vector.load %arg9[%c0_10, %c0_11] : memref<32x32xbf16, #tpu.memory_space<vmem>>, vector<32x32xbf16>
    %cst_12 = arith.constant dense<0.000000e+00> : vector<16x32xf32>
    %14 = tpu.matmul %12, %13, %cst_12 {dimension_numbers = #tpu.dot_dimension_numbers<[1], [0], [0], [1], [0, 0, 1, 1], [], []>} : vector<16x32xbf16>, vector<32x32xbf16>, vector<16x32xf32> -> vector<16x32xf32>
    %c0_13 = arith.constant 0 : index
    %c0_14 = arith.constant 0 : index
    %15 = vector.load %arg13[%c0_13, %c0_14] : memref<1x32xf32, #tpu.memory_space<vmem>>, vector<1x32xf32>
    %16 = vector.broadcast %15 : vector<1x32xf32> to vector<16x32xf32>
    %17 = arith.addf %14, %16 : vector<16x32xf32>
    %18 = arith.truncf %17 : vector<16x32xf32> to vector<16x32xbf16>
    %c0_15 = arith.constant 0 : index
    %c0_16 = arith.constant 0 : index
    %19 = vector.load %arg18[%c0_15, %c0_16] : memref<8x32xbf16, #tpu.memory_space<vmem>>, vector<8x32xbf16>
    %20 = vector.extract_strided_slice %19 {offsets = [0, 0], sizes = [8, 4], strides = [1, 1]} : vector<8x32xbf16> to vector<8x4xbf16>
    %21 = vector.extract_strided_slice %10 {offsets = [0, 0], sizes = [16, 4], strides = [1, 1]} : vector<16x32xbf16> to vector<16x4xbf16>
    %22 = vector.extract_strided_slice %18 {offsets = [0, 0], sizes = [16, 4], strides = [1, 1]} : vector<16x32xbf16> to vector<16x4xbf16>
    %cst_17 = arith.constant dense<0.000000e+00> : vector<8x16xf32>
    %23 = tpu.matmul %20, %21, %cst_17 {dimension_numbers = #tpu.dot_dimension_numbers<[1], [1], [0], [0], [0, 0, 1, 0], [], []>} : vector<8x4xbf16>, vector<16x4xbf16>, vector<8x16xf32> -> vector<8x16xf32>
    %c0_18 = arith.constant 0 : index
    %c0_19 = arith.constant 0 : index
    %c0_20 = arith.constant 0 : index
    %24 = vector.load %arg19[%c0_18, %c0_19, %c0_20] : memref<8x8x1xf32, #tpu.memory_space<vmem>>, vector<1x8x1xf32>
    %25 = vector.shape_cast %24 : vector<1x8x1xf32> to vector<8x1xf32>
    %cst_21 = arith.constant dense<0xFF800000> : vector<8xf32>
    %26 = vector.multi_reduction <maximumf>, %23, %cst_21 [1] : vector<8x16xf32> to vector<8xf32>
    %27 = vector.shape_cast %26 : vector<8xf32> to vector<8x1xf32>
    %28 = arith.maximumf %25, %27 : vector<8x1xf32>
    %29 = arith.subf %25, %28 : vector<8x1xf32>
    %30 = math.exp %29 : vector<8x1xf32>
    %31 = vector.broadcast %28 : vector<8x1xf32> to vector<8x16xf32>
    %32 = arith.subf %23, %31 : vector<8x16xf32>
    %33 = math.exp %32 : vector<8x16xf32>
    %c0_22 = arith.constant 0 : index
    %c0_23 = arith.constant 0 : index
    %c0_24 = arith.constant 0 : index
    %34 = vector.load %arg20[%c0_22, %c0_23, %c0_24] : memref<8x8x1xf32, #tpu.memory_space<vmem>>, vector<1x8x1xf32>
    %35 = vector.shape_cast %34 : vector<1x8x1xf32> to vector<8x1xf32>
    %36 = arith.mulf %30, %35 : vector<8x1xf32>
    %cst_25 = arith.constant dense<0.000000e+00> : vector<8xf32>
    %37 = vector.multi_reduction <add>, %33, %cst_25 [1] : vector<8x16xf32> to vector<8xf32>
    %38 = vector.shape_cast %37 : vector<8xf32> to vector<8x1xf32>
    %39 = arith.addf %36, %38 : vector<8x1xf32>
    %c0_26 = arith.constant 0 : index
    %c0_27 = arith.constant 0 : index
    %c0_28 = arith.constant 0 : index
    %40 = vector.load %arg20[%c0_26, %c0_27, %c0_28] : memref<8x8x1xf32, #tpu.memory_space<vmem>>, vector<1x8x1xf32>
    %41 = vector.shape_cast %40 : vector<1x8x1xf32> to vector<8x1xf32>
    %42 = vector.shape_cast %39 : vector<8x1xf32> to vector<1x8x1xf32>
    tpu.vector_store %arg20[%c0_26, %c0_27, %c0_28], %42 {strides = array<i32>} : memref<8x8x1xf32, #tpu.memory_space<vmem>>, vector<1x8x1xf32>,
    %c0_29 = arith.constant 0 : index
    %c0_30 = arith.constant 0 : index
    %c0_31 = arith.constant 0 : index
    %43 = vector.load %arg21[%c0_29, %c0_30, %c0_31] : memref<8x8x4xf32, #tpu.memory_space<vmem>>, vector<1x8x4xf32>
    %44 = vector.shape_cast %43 : vector<1x8x4xf32> to vector<8x4xf32>
    %45 = vector.broadcast %30 : vector<8x1xf32> to vector<8x4xf32>
    %46 = arith.mulf %45, %44 : vector<8x4xf32>
    %47 = arith.truncf %33 : vector<8x16xf32> to vector<8x16xbf16>
    %cst_32 = arith.constant dense<0.000000e+00> : vector<8x4xf32>
    %48 = tpu.matmul %47, %22, %cst_32 {dimension_numbers = #tpu.dot_dimension_numbers<[1], [0], [0], [1], [0, 0, 1, 1], [], []>} : vector<8x16xbf16>, vector<16x4xbf16>, vector<8x4xf32> -> vector<8x4xf32>
    %49 = arith.addf %46, %48 : vector<8x4xf32>
    %c0_33 = arith.constant 0 : index
    %c0_34 = arith.constant 0 : index
    %c0_35 = arith.constant 0 : index
    %50 = vector.load %arg21[%c0_33, %c0_34, %c0_35] : memref<8x8x4xf32, #tpu.memory_space<vmem>>, vector<1x8x4xf32>
    %51 = vector.shape_cast %50 : vector<1x8x4xf32> to vector<8x4xf32>
    %52 = vector.shape_cast %49 : vector<8x4xf32> to vector<1x8x4xf32>
    tpu.vector_store %arg21[%c0_33, %c0_34, %c0_35], %52 {strides = array<i32>} : memref<8x8x4xf32, #tpu.memory_space<vmem>>, vector<1x8x4xf32>,
    %c0_36 = arith.constant 0 : index
    %c0_37 = arith.constant 0 : index
    %c0_38 = arith.constant 0 : index
    %53 = vector.load %arg19[%c0_36, %c0_37, %c0_38] : memref<8x8x1xf32, #tpu.memory_space<vmem>>, vector<1x8x1xf32>
    %54 = vector.shape_cast %53 : vector<1x8x1xf32> to vector<8x1xf32>
    %55 = vector.shape_cast %28 : vector<8x1xf32> to vector<1x8x1xf32>
    tpu.vector_store %arg19[%c0_36, %c0_37, %c0_38], %55 {strides = array<i32>} : memref<8x8x1xf32, #tpu.memory_space<vmem>>, vector<1x8x1xf32>,
    %56 = vector.extract_strided_slice %19 {offsets = [0, 4], sizes = [8, 4], strides = [1, 1]} : vector<8x32xbf16> to vector<8x4xbf16>
    %57 = vector.extract_strided_slice %10 {offsets = [0, 4], sizes = [16, 4], strides = [1, 1]} : vector<16x32xbf16> to vector<16x4xbf16>
    %58 = vector.extract_strided_slice %18 {offsets = [0, 4], sizes = [16, 4], strides = [1, 1]} : vector<16x32xbf16> to vector<16x4xbf16>
    %cst_39 = arith.constant dense<0.000000e+00> : vector<8x16xf32>
    %59 = tpu.matmul %56, %57, %cst_39 {dimension_numbers = #tpu.dot_dimension_numbers<[1], [1], [0], [0], [0, 0, 1, 0], [], []>} : vector<8x4xbf16>, vector<16x4xbf16>, vector<8x16xf32> -> vector<8x16xf32>
    %c1 = arith.constant 1 : index
    %c0_40 = arith.constant 0 : index
    %c0_41 = arith.constant 0 : index
    %60 = vector.load %arg19[%c1, %c0_40, %c0_41] : memref<8x8x1xf32, #tpu.memory_space<vmem>>, vector<1x8x1xf32>
    %61 = vector.shape_cast %60 : vector<1x8x1xf32> to vector<8x1xf32>
    %cst_42 = arith.constant dense<0xFF800000> : vector<8xf32>
    %62 = vector.multi_reduction <maximumf>, %59, %cst_42 [1] : vector<8x16xf32> to vector<8xf32>
    %63 = vector.shape_cast %62 : vector<8xf32> to vector<8x1xf32>
    %64 = arith.maximumf %61, %63 : vector<8x1xf32>
    %65 = arith.subf %61, %64 : vector<8x1xf32>
    %66 = math.exp %65 : vector<8x1xf32>
    %67 = vector.broadcast %64 : vector<8x1xf32> to vector<8x16xf32>
    %68 = arith.subf %59, %67 : vector<8x16xf32>
    %69 = math.exp %68 : vector<8x16xf32>
    %c1_43 = arith.constant 1 : index
    %c0_44 = arith.constant 0 : index
    %c0_45 = arith.constant 0 : index
    %70 = vector.load %arg20[%c1_43, %c0_44, %c0_45] : memref<8x8x1xf32, #tpu.memory_space<vmem>>, vector<1x8x1xf32>
    %71 = vector.shape_cast %70 : vector<1x8x1xf32> to vector<8x1xf32>
    %72 = arith.mulf %66, %71 : vector<8x1xf32>
    %cst_46 = arith.constant dense<0.000000e+00> : vector<8xf32>
    %73 = vector.multi_reduction <add>, %69, %cst_46 [1] : vector<8x16xf32> to vector<8xf32>
    %74 = vector.shape_cast %73 : vector<8xf32> to vector<8x1xf32>
    %75 = arith.addf %72, %74 : vector<8x1xf32>
    %c1_47 = arith.constant 1 : index
    %c0_48 = arith.constant 0 : index
    %c0_49 = arith.constant 0 : index
    %76 = vector.load %arg20[%c1_47, %c0_48, %c0_49] : memref<8x8x1xf32, #tpu.memory_space<vmem>>, vector<1x8x1xf32>
    %77 = vector.shape_cast %76 : vector<1x8x1xf32> to vector<8x1xf32>
    %78 = vector.shape_cast %75 : vector<8x1xf32> to vector<1x8x1xf32>
    tpu.vector_store %arg20[%c1_47, %c0_48, %c0_49], %78 {strides = array<i32>} : memref<8x8x1xf32, #tpu.memory_space<vmem>>, vector<1x8x1xf32>,
    %c1_50 = arith.constant 1 : index
    %c0_51 = arith.constant 0 : index
    %c0_52 = arith.constant 0 : index
    %79 = vector.load %arg21[%c1_50, %c0_51, %c0_52] : memref<8x8x4xf32, #tpu.memory_space<vmem>>, vector<1x8x4xf32>
    %80 = vector.shape_cast %79 : vector<1x8x4xf32> to vector<8x4xf32>
    %81 = vector.broadcast %66 : vector<8x1xf32> to vector<8x4xf32>
    %82 = arith.mulf %81, %80 : vector<8x4xf32>
    %83 = arith.truncf %69 : vector<8x16xf32> to vector<8x16xbf16>
    %cst_53 = arith.constant dense<0.000000e+00> : vector<8x4xf32>
    %84 = tpu.matmul %83, %58, %cst_53 {dimension_numbers = #tpu.dot_dimension_numbers<[1], [0], [0], [1], [0, 0, 1, 1], [], []>} : vector<8x16xbf16>, vector<16x4xbf16>, vector<8x4xf32> -> vector<8x4xf32>
    %85 = arith.addf %82, %84 : vector<8x4xf32>
    %c1_54 = arith.constant 1 : index
    %c0_55 = arith.constant 0 : index
    %c0_56 = arith.constant 0 : index
    %86 = vector.load %arg21[%c1_54, %c0_55, %c0_56] : memref<8x8x4xf32, #tpu.memory_space<vmem>>, vector<1x8x4xf32>
    %87 = vector.shape_cast %86 : vector<1x8x4xf32> to vector<8x4xf32>
    %88 = vector.shape_cast %85 : vector<8x4xf32> to vector<1x8x4xf32>
    tpu.vector_store %arg21[%c1_54, %c0_55, %c0_56], %88 {strides = array<i32>} : memref<8x8x4xf32, #tpu.memory_space<vmem>>, vector<1x8x4xf32>,
    %c1_57 = arith.constant 1 : index
    %c0_58 = arith.constant 0 : index
    %c0_59 = arith.constant 0 : index
    %89 = vector.load %arg19[%c1_57, %c0_58, %c0_59] : memref<8x8x1xf32, #tpu.memory_space<vmem>>, vector<1x8x1xf32>
    %90 = vector.shape_cast %89 : vector<1x8x1xf32> to vector<8x1xf32>
    %91 = vector.shape_cast %64 : vector<8x1xf32> to vector<1x8x1xf32>
    tpu.vector_store %arg19[%c1_57, %c0_58, %c0_59], %91 {strides = array<i32>} : memref<8x8x1xf32, #tpu.memory_space<vmem>>, vector<1x8x1xf32>,
    %92 = vector.extract_strided_slice %19 {offsets = [0, 8], sizes = [8, 4], strides = [1, 1]} : vector<8x32xbf16> to vector<8x4xbf16>
    %93 = vector.extract_strided_slice %10 {offsets = [0, 8], sizes = [16, 4], strides = [1, 1]} : vector<16x32xbf16> to vector<16x4xbf16>
    %94 = vector.extract_strided_slice %18 {offsets = [0, 8], sizes = [16, 4], strides = [1, 1]} : vector<16x32xbf16> to vector<16x4xbf16>
    %cst_60 = arith.constant dense<0.000000e+00> : vector<8x16xf32>
    %95 = tpu.matmul %92, %93, %cst_60 {dimension_numbers = #tpu.dot_dimension_numbers<[1], [1], [0], [0], [0, 0, 1, 0], [], []>} : vector<8x4xbf16>, vector<16x4xbf16>, vector<8x16xf32> -> vector<8x16xf32>
    %c2 = arith.constant 2 : index
    %c0_61 = arith.constant 0 : index
    %c0_62 = arith.constant 0 : index
    %96 = vector.load %arg19[%c2, %c0_61, %c0_62] : memref<8x8x1xf32, #tpu.memory_space<vmem>>, vector<1x8x1xf32>
    %97 = vector.shape_cast %96 : vector<1x8x1xf32> to vector<8x1xf32>
    %cst_63 = arith.constant dense<0xFF800000> : vector<8xf32>
    %98 = vector.multi_reduction <maximumf>, %95, %cst_63 [1] : vector<8x16xf32> to vector<8xf32>
    %99 = vector.shape_cast %98 : vector<8xf32> to vector<8x1xf32>
    %100 = arith.maximumf %97, %99 : vector<8x1xf32>
    %101 = arith.subf %97, %100 : vector<8x1xf32>
    %102 = math.exp %101 : vector<8x1xf32>
    %103 = vector.broadcast %100 : vector<8x1xf32> to vector<8x16xf32>
    %104 = arith.subf %95, %103 : vector<8x16xf32>
    %105 = math.exp %104 : vector<8x16xf32>
    %c2_64 = arith.constant 2 : index
    %c0_65 = arith.constant 0 : index
    %c0_66 = arith.constant 0 : index
    %106 = vector.load %arg20[%c2_64, %c0_65, %c0_66] : memref<8x8x1xf32, #tpu.memory_space<vmem>>, vector<1x8x1xf32>
    %107 = vector.shape_cast %106 : vector<1x8x1xf32> to vector<8x1xf32>
    %108 = arith.mulf %102, %107 : vector<8x1xf32>
    %cst_67 = arith.constant dense<0.000000e+00> : vector<8xf32>
    %109 = vector.multi_reduction <add>, %105, %cst_67 [1] : vector<8x16xf32> to vector<8xf32>
    %110 = vector.shape_cast %109 : vector<8xf32> to vector<8x1xf32>
    %111 = arith.addf %108, %110 : vector<8x1xf32>
    %c2_68 = arith.constant 2 : index
    %c0_69 = arith.constant 0 : index
    %c0_70 = arith.constant 0 : index
    %112 = vector.load %arg20[%c2_68, %c0_69, %c0_70] : memref<8x8x1xf32, #tpu.memory_space<vmem>>, vector<1x8x1xf32>
    %113 = vector.shape_cast %112 : vector<1x8x1xf32> to vector<8x1xf32>
    %114 = vector.shape_cast %111 : vector<8x1xf32> to vector<1x8x1xf32>
    tpu.vector_store %arg20[%c2_68, %c0_69, %c0_70], %114 {strides = array<i32>} : memref<8x8x1xf32, #tpu.memory_space<vmem>>, vector<1x8x1xf32>,
    %c2_71 = arith.constant 2 : index
    %c0_72 = arith.constant 0 : index
    %c0_73 = arith.constant 0 : index
    %115 = vector.load %arg21[%c2_71, %c0_72, %c0_73] : memref<8x8x4xf32, #tpu.memory_space<vmem>>, vector<1x8x4xf32>
    %116 = vector.shape_cast %115 : vector<1x8x4xf32> to vector<8x4xf32>
    %117 = vector.broadcast %102 : vector<8x1xf32> to vector<8x4xf32>
    %118 = arith.mulf %117, %116 : vector<8x4xf32>
    %119 = arith.truncf %105 : vector<8x16xf32> to vector<8x16xbf16>
    %cst_74 = arith.constant dense<0.000000e+00> : vector<8x4xf32>
    %120 = tpu.matmul %119, %94, %cst_74 {dimension_numbers = #tpu.dot_dimension_numbers<[1], [0], [0], [1], [0, 0, 1, 1], [], []>} : vector<8x16xbf16>, vector<16x4xbf16>, vector<8x4xf32> -> vector<8x4xf32>
    %121 = arith.addf %118, %120 : vector<8x4xf32>
    %c2_75 = arith.constant 2 : index
    %c0_76 = arith.constant 0 : index
    %c0_77 = arith.constant 0 : index
    %122 = vector.load %arg21[%c2_75, %c0_76, %c0_77] : memref<8x8x4xf32, #tpu.memory_space<vmem>>, vector<1x8x4xf32>
    %123 = vector.shape_cast %122 : vector<1x8x4xf32> to vector<8x4xf32>
    %124 = vector.shape_cast %121 : vector<8x4xf32> to vector<1x8x4xf32>
    tpu.vector_store %arg21[%c2_75, %c0_76, %c0_77], %124 {strides = array<i32>} : memref<8x8x4xf32, #tpu.memory_space<vmem>>, vector<1x8x4xf32>,
    %c2_78 = arith.constant 2 : index
    %c0_79 = arith.constant 0 : index
    %c0_80 = arith.constant 0 : index
    %125 = vector.load %arg19[%c2_78, %c0_79, %c0_80] : memref<8x8x1xf32, #tpu.memory_space<vmem>>, vector<1x8x1xf32>
    %126 = vector.shape_cast %125 : vector<1x8x1xf32> to vector<8x1xf32>
    %127 = vector.shape_cast %100 : vector<8x1xf32> to vector<1x8x1xf32>
    tpu.vector_store %arg19[%c2_78, %c0_79, %c0_80], %127 {strides = array<i32>} : memref<8x8x1xf32, #tpu.memory_space<vmem>>, vector<1x8x1xf32>,
    %128 = vector.extract_strided_slice %19 {offsets = [0, 12], sizes = [8, 4], strides = [1, 1]} : vector<8x32xbf16> to vector<8x4xbf16>
    %129 = vector.extract_strided_slice %10 {offsets = [0, 12], sizes = [16, 4], strides = [1, 1]} : vector<16x32xbf16> to vector<16x4xbf16>
    %130 = vector.extract_strided_slice %18 {offsets = [0, 12], sizes = [16, 4], strides = [1, 1]} : vector<16x32xbf16> to vector<16x4xbf16>
    %cst_81 = arith.constant dense<0.000000e+00> : vector<8x16xf32>
    %131 = tpu.matmul %128, %129, %cst_81 {dimension_numbers = #tpu.dot_dimension_numbers<[1], [1], [0], [0], [0, 0, 1, 0], [], []>} : vector<8x4xbf16>, vector<16x4xbf16>, vector<8x16xf32> -> vector<8x16xf32>
    %c3 = arith.constant 3 : index
    %c0_82 = arith.constant 0 : index
    %c0_83 = arith.constant 0 : index
    %132 = vector.load %arg19[%c3, %c0_82, %c0_83] : memref<8x8x1xf32, #tpu.memory_space<vmem>>, vector<1x8x1xf32>
    %133 = vector.shape_cast %132 : vector<1x8x1xf32> to vector<8x1xf32>
    %cst_84 = arith.constant dense<0xFF800000> : vector<8xf32>
    %134 = vector.multi_reduction <maximumf>, %131, %cst_84 [1] : vector<8x16xf32> to vector<8xf32>
    %135 = vector.shape_cast %134 : vector<8xf32> to vector<8x1xf32>
    %136 = arith.maximumf %133, %135 : vector<8x1xf32>
    %137 = arith.subf %133, %136 : vector<8x1xf32>
    %138 = math.exp %137 : vector<8x1xf32>
    %139 = vector.broadcast %136 : vector<8x1xf32> to vector<8x16xf32>
    %140 = arith.subf %131, %139 : vector<8x16xf32>
    %141 = math.exp %140 : vector<8x16xf32>
    %c3_85 = arith.constant 3 : index
    %c0_86 = arith.constant 0 : index
    %c0_87 = arith.constant 0 : index
    %142 = vector.load %arg20[%c3_85, %c0_86, %c0_87] : memref<8x8x1xf32, #tpu.memory_space<vmem>>, vector<1x8x1xf32>
    %143 = vector.shape_cast %142 : vector<1x8x1xf32> to vector<8x1xf32>
    %144 = arith.mulf %138, %143 : vector<8x1xf32>
    %cst_88 = arith.constant dense<0.000000e+00> : vector<8xf32>
    %145 = vector.multi_reduction <add>, %141, %cst_88 [1] : vector<8x16xf32> to vector<8xf32>
    %146 = vector.shape_cast %145 : vector<8xf32> to vector<8x1xf32>
    %147 = arith.addf %144, %146 : vector<8x1xf32>
    %c3_89 = arith.constant 3 : index
    %c0_90 = arith.constant 0 : index
    %c0_91 = arith.constant 0 : index
    %148 = vector.load %arg20[%c3_89, %c0_90, %c0_91] : memref<8x8x1xf32, #tpu.memory_space<vmem>>, vector<1x8x1xf32>
    %149 = vector.shape_cast %148 : vector<1x8x1xf32> to vector<8x1xf32>
    %150 = vector.shape_cast %147 : vector<8x1xf32> to vector<1x8x1xf32>
    tpu.vector_store %arg20[%c3_89, %c0_90, %c0_91], %150 {strides = array<i32>} : memref<8x8x1xf32, #tpu.memory_space<vmem>>, vector<1x8x1xf32>,
    %c3_92 = arith.constant 3 : index
    %c0_93 = arith.constant 0 : index
    %c0_94 = arith.constant 0 : index
    %151 = vector.load %arg21[%c3_92, %c0_93, %c0_94] : memref<8x8x4xf32, #tpu.memory_space<vmem>>, vector<1x8x4xf32>
    %152 = vector.shape_cast %151 : vector<1x8x4xf32> to vector<8x4xf32>
    %153 = vector.broadcast %138 : vector<8x1xf32> to vector<8x4xf32>
    %154 = arith.mulf %153, %152 : vector<8x4xf32>
    %155 = arith.truncf %141 : vector<8x16xf32> to vector<8x16xbf16>
    %cst_95 = arith.constant dense<0.000000e+00> : vector<8x4xf32>
    %156 = tpu.matmul %155, %130, %cst_95 {dimension_numbers = #tpu.dot_dimension_numbers<[1], [0], [0], [1], [0, 0, 1, 1], [], []>} : vector<8x16xbf16>, vector<16x4xbf16>, vector<8x4xf32> -> vector<8x4xf32>
    %157 = arith.addf %154, %156 : vector<8x4xf32>
    %c3_96 = arith.constant 3 : index
    %c0_97 = arith.constant 0 : index
    %c0_98 = arith.constant 0 : index
    %158 = vector.load %arg21[%c3_96, %c0_97, %c0_98] : memref<8x8x4xf32, #tpu.memory_space<vmem>>, vector<1x8x4xf32>
    %159 = vector.shape_cast %158 : vector<1x8x4xf32> to vector<8x4xf32>
    %160 = vector.shape_cast %157 : vector<8x4xf32> to vector<1x8x4xf32>
    tpu.vector_store %arg21[%c3_96, %c0_97, %c0_98], %160 {strides = array<i32>} : memref<8x8x4xf32, #tpu.memory_space<vmem>>, vector<1x8x4xf32>,
    %c3_99 = arith.constant 3 : index
    %c0_100 = arith.constant 0 : index
    %c0_101 = arith.constant 0 : index
    %161 = vector.load %arg19[%c3_99, %c0_100, %c0_101] : memref<8x8x1xf32, #tpu.memory_space<vmem>>, vector<1x8x1xf32>
    %162 = vector.shape_cast %161 : vector<1x8x1xf32> to vector<8x1xf32>
    %163 = vector.shape_cast %136 : vector<8x1xf32> to vector<1x8x1xf32>
    tpu.vector_store %arg19[%c3_99, %c0_100, %c0_101], %163 {strides = array<i32>} : memref<8x8x1xf32, #tpu.memory_space<vmem>>, vector<1x8x1xf32>,
    %164 = vector.extract_strided_slice %19 {offsets = [0, 16], sizes = [8, 4], strides = [1, 1]} : vector<8x32xbf16> to vector<8x4xbf16>
    %165 = vector.extract_strided_slice %10 {offsets = [0, 16], sizes = [16, 4], strides = [1, 1]} : vector<16x32xbf16> to vector<16x4xbf16>
    %166 = vector.extract_strided_slice %18 {offsets = [0, 16], sizes = [16, 4], strides = [1, 1]} : vector<16x32xbf16> to vector<16x4xbf16>
    %cst_102 = arith.constant dense<0.000000e+00> : vector<8x16xf32>
    %167 = tpu.matmul %164, %165, %cst_102 {dimension_numbers = #tpu.dot_dimension_numbers<[1], [1], [0], [0], [0, 0, 1, 0], [], []>} : vector<8x4xbf16>, vector<16x4xbf16>, vector<8x16xf32> -> vector<8x16xf32>
    %c4 = arith.constant 4 : index
    %c0_103 = arith.constant 0 : index
    %c0_104 = arith.constant 0 : index
    %168 = vector.load %arg19[%c4, %c0_103, %c0_104] : memref<8x8x1xf32, #tpu.memory_space<vmem>>, vector<1x8x1xf32>
    %169 = vector.shape_cast %168 : vector<1x8x1xf32> to vector<8x1xf32>
    %cst_105 = arith.constant dense<0xFF800000> : vector<8xf32>
    %170 = vector.multi_reduction <maximumf>, %167, %cst_105 [1] : vector<8x16xf32> to vector<8xf32>
    %171 = vector.shape_cast %170 : vector<8xf32> to vector<8x1xf32>
    %172 = arith.maximumf %169, %171 : vector<8x1xf32>
    %173 = arith.subf %169, %172 : vector<8x1xf32>
    %174 = math.exp %173 : vector<8x1xf32>
    %175 = vector.broadcast %172 : vector<8x1xf32> to vector<8x16xf32>
    %176 = arith.subf %167, %175 : vector<8x16xf32>
    %177 = math.exp %176 : vector<8x16xf32>
    %c4_106 = arith.constant 4 : index
    %c0_107 = arith.constant 0 : index
    %c0_108 = arith.constant 0 : index
    %178 = vector.load %arg20[%c4_106, %c0_107, %c0_108] : memref<8x8x1xf32, #tpu.memory_space<vmem>>, vector<1x8x1xf32>
    %179 = vector.shape_cast %178 : vector<1x8x1xf32> to vector<8x1xf32>
    %180 = arith.mulf %174, %179 : vector<8x1xf32>
    %cst_109 = arith.constant dense<0.000000e+00> : vector<8xf32>
    %181 = vector.multi_reduction <add>, %177, %cst_109 [1] : vector<8x16xf32> to vector<8xf32>
    %182 = vector.shape_cast %181 : vector<8xf32> to vector<8x1xf32>
    %183 = arith.addf %180, %182 : vector<8x1xf32>
    %c4_110 = arith.constant 4 : index
    %c0_111 = arith.constant 0 : index
    %c0_112 = arith.constant 0 : index
    %184 = vector.load %arg20[%c4_110, %c0_111, %c0_112] : memref<8x8x1xf32, #tpu.memory_space<vmem>>, vector<1x8x1xf32>
    %185 = vector.shape_cast %184 : vector<1x8x1xf32> to vector<8x1xf32>
    %186 = vector.shape_cast %183 : vector<8x1xf32> to vector<1x8x1xf32>
    tpu.vector_store %arg20[%c4_110, %c0_111, %c0_112], %186 {strides = array<i32>} : memref<8x8x1xf32, #tpu.memory_space<vmem>>, vector<1x8x1xf32>,
    %c4_113 = arith.constant 4 : index
    %c0_114 = arith.constant 0 : index
    %c0_115 = arith.constant 0 : index
    %187 = vector.load %arg21[%c4_113, %c0_114, %c0_115] : memref<8x8x4xf32, #tpu.memory_space<vmem>>, vector<1x8x4xf32>
    %188 = vector.shape_cast %187 : vector<1x8x4xf32> to vector<8x4xf32>
    %189 = vector.broadcast %174 : vector<8x1xf32> to vector<8x4xf32>
    %190 = arith.mulf %189, %188 : vector<8x4xf32>
    %191 = arith.truncf %177 : vector<8x16xf32> to vector<8x16xbf16>
    %cst_116 = arith.constant dense<0.000000e+00> : vector<8x4xf32>
    %192 = tpu.matmul %191, %166, %cst_116 {dimension_numbers = #tpu.dot_dimension_numbers<[1], [0], [0], [1], [0, 0, 1, 1], [], []>} : vector<8x16xbf16>, vector<16x4xbf16>, vector<8x4xf32> -> vector<8x4xf32>
    %193 = arith.addf %190, %192 : vector<8x4xf32>
    %c4_117 = arith.constant 4 : index
    %c0_118 = arith.constant 0 : index
    %c0_119 = arith.constant 0 : index
    %194 = vector.load %arg21[%c4_117, %c0_118, %c0_119] : memref<8x8x4xf32, #tpu.memory_space<vmem>>, vector<1x8x4xf32>
    %195 = vector.shape_cast %194 : vector<1x8x4xf32> to vector<8x4xf32>
    %196 = vector.shape_cast %193 : vector<8x4xf32> to vector<1x8x4xf32>
    tpu.vector_store %arg21[%c4_117, %c0_118, %c0_119], %196 {strides = array<i32>} : memref<8x8x4xf32, #tpu.memory_space<vmem>>, vector<1x8x4xf32>,
    %c4_120 = arith.constant 4 : index
    %c0_121 = arith.constant 0 : index
    %c0_122 = arith.constant 0 : index
    %197 = vector.load %arg19[%c4_120, %c0_121, %c0_122] : memref<8x8x1xf32, #tpu.memory_space<vmem>>, vector<1x8x1xf32>
    %198 = vector.shape_cast %197 : vector<1x8x1xf32> to vector<8x1xf32>
    %199 = vector.shape_cast %172 : vector<8x1xf32> to vector<1x8x1xf32>
    tpu.vector_store %arg19[%c4_120, %c0_121, %c0_122], %199 {strides = array<i32>} : memref<8x8x1xf32, #tpu.memory_space<vmem>>, vector<1x8x1xf32>,
    %200 = vector.extract_strided_slice %19 {offsets = [0, 20], sizes = [8, 4], strides = [1, 1]} : vector<8x32xbf16> to vector<8x4xbf16>
    %201 = vector.extract_strided_slice %10 {offsets = [0, 20], sizes = [16, 4], strides = [1, 1]} : vector<16x32xbf16> to vector<16x4xbf16>
    %202 = vector.extract_strided_slice %18 {offsets = [0, 20], sizes = [16, 4], strides = [1, 1]} : vector<16x32xbf16> to vector<16x4xbf16>
    %cst_123 = arith.constant dense<0.000000e+00> : vector<8x16xf32>
    %203 = tpu.matmul %200, %201, %cst_123 {dimension_numbers = #tpu.dot_dimension_numbers<[1], [1], [0], [0], [0, 0, 1, 0], [], []>} : vector<8x4xbf16>, vector<16x4xbf16>, vector<8x16xf32> -> vector<8x16xf32>
    %c5 = arith.constant 5 : index
    %c0_124 = arith.constant 0 : index
    %c0_125 = arith.constant 0 : index
    %204 = vector.load %arg19[%c5, %c0_124, %c0_125] : memref<8x8x1xf32, #tpu.memory_space<vmem>>, vector<1x8x1xf32>
    %205 = vector.shape_cast %204 : vector<1x8x1xf32> to vector<8x1xf32>
    %cst_126 = arith.constant dense<0xFF800000> : vector<8xf32>
    %206 = vector.multi_reduction <maximumf>, %203, %cst_126 [1] : vector<8x16xf32> to vector<8xf32>
    %207 = vector.shape_cast %206 : vector<8xf32> to vector<8x1xf32>
    %208 = arith.maximumf %205, %207 : vector<8x1xf32>
    %209 = arith.subf %205, %208 : vector<8x1xf32>
    %210 = math.exp %209 : vector<8x1xf32>
    %211 = vector.broadcast %208 : vector<8x1xf32> to vector<8x16xf32>
    %212 = arith.subf %203, %211 : vector<8x16xf32>
    %213 = math.exp %212 : vector<8x16xf32>
    %c5_127 = arith.constant 5 : index
    %c0_128 = arith.constant 0 : index
    %c0_129 = arith.constant 0 : index
    %214 = vector.load %arg20[%c5_127, %c0_128, %c0_129] : memref<8x8x1xf32, #tpu.memory_space<vmem>>, vector<1x8x1xf32>
    %215 = vector.shape_cast %214 : vector<1x8x1xf32> to vector<8x1xf32>
    %216 = arith.mulf %210, %215 : vector<8x1xf32>
    %cst_130 = arith.constant dense<0.000000e+00> : vector<8xf32>
    %217 = vector.multi_reduction <add>, %213, %cst_130 [1] : vector<8x16xf32> to vector<8xf32>
    %218 = vector.shape_cast %217 : vector<8xf32> to vector<8x1xf32>
    %219 = arith.addf %216, %218 : vector<8x1xf32>
    %c5_131 = arith.constant 5 : index
    %c0_132 = arith.constant 0 : index
    %c0_133 = arith.constant 0 : index
    %220 = vector.load %arg20[%c5_131, %c0_132, %c0_133] : memref<8x8x1xf32, #tpu.memory_space<vmem>>, vector<1x8x1xf32>
    %221 = vector.shape_cast %220 : vector<1x8x1xf32> to vector<8x1xf32>
    %222 = vector.shape_cast %219 : vector<8x1xf32> to vector<1x8x1xf32>
    tpu.vector_store %arg20[%c5_131, %c0_132, %c0_133], %222 {strides = array<i32>} : memref<8x8x1xf32, #tpu.memory_space<vmem>>, vector<1x8x1xf32>,
    %c5_134 = arith.constant 5 : index
    %c0_135 = arith.constant 0 : index
    %c0_136 = arith.constant 0 : index
    %223 = vector.load %arg21[%c5_134, %c0_135, %c0_136] : memref<8x8x4xf32, #tpu.memory_space<vmem>>, vector<1x8x4xf32>
    %224 = vector.shape_cast %223 : vector<1x8x4xf32> to vector<8x4xf32>
    %225 = vector.broadcast %210 : vector<8x1xf32> to vector<8x4xf32>
    %226 = arith.mulf %225, %224 : vector<8x4xf32>
    %227 = arith.truncf %213 : vector<8x16xf32> to vector<8x16xbf16>
    %cst_137 = arith.constant dense<0.000000e+00> : vector<8x4xf32>
    %228 = tpu.matmul %227, %202, %cst_137 {dimension_numbers = #tpu.dot_dimension_numbers<[1], [0], [0], [1], [0, 0, 1, 1], [], []>} : vector<8x16xbf16>, vector<16x4xbf16>, vector<8x4xf32> -> vector<8x4xf32>
    %229 = arith.addf %226, %228 : vector<8x4xf32>
    %c5_138 = arith.constant 5 : index
    %c0_139 = arith.constant 0 : index
    %c0_140 = arith.constant 0 : index
    %230 = vector.load %arg21[%c5_138, %c0_139, %c0_140] : memref<8x8x4xf32, #tpu.memory_space<vmem>>, vector<1x8x4xf32>
    %231 = vector.shape_cast %230 : vector<1x8x4xf32> to vector<8x4xf32>
    %232 = vector.shape_cast %229 : vector<8x4xf32> to vector<1x8x4xf32>
    tpu.vector_store %arg21[%c5_138, %c0_139, %c0_140], %232 {strides = array<i32>} : memref<8x8x4xf32, #tpu.memory_space<vmem>>, vector<1x8x4xf32>,
    %c5_141 = arith.constant 5 : index
    %c0_142 = arith.constant 0 : index
    %c0_143 = arith.constant 0 : index
    %233 = vector.load %arg19[%c5_141, %c0_142, %c0_143] : memref<8x8x1xf32, #tpu.memory_space<vmem>>, vector<1x8x1xf32>
    %234 = vector.shape_cast %233 : vector<1x8x1xf32> to vector<8x1xf32>
    %235 = vector.shape_cast %208 : vector<8x1xf32> to vector<1x8x1xf32>
    tpu.vector_store %arg19[%c5_141, %c0_142, %c0_143], %235 {strides = array<i32>} : memref<8x8x1xf32, #tpu.memory_space<vmem>>, vector<1x8x1xf32>,
    %236 = vector.extract_strided_slice %19 {offsets = [0, 24], sizes = [8, 4], strides = [1, 1]} : vector<8x32xbf16> to vector<8x4xbf16>
    %237 = vector.extract_strided_slice %10 {offsets = [0, 24], sizes = [16, 4], strides = [1, 1]} : vector<16x32xbf16> to vector<16x4xbf16>
    %238 = vector.extract_strided_slice %18 {offsets = [0, 24], sizes = [16, 4], strides = [1, 1]} : vector<16x32xbf16> to vector<16x4xbf16>
    %cst_144 = arith.constant dense<0.000000e+00> : vector<8x16xf32>
    %239 = tpu.matmul %236, %237, %cst_144 {dimension_numbers = #tpu.dot_dimension_numbers<[1], [1], [0], [0], [0, 0, 1, 0], [], []>} : vector<8x4xbf16>, vector<16x4xbf16>, vector<8x16xf32> -> vector<8x16xf32>
    %c6 = arith.constant 6 : index
    %c0_145 = arith.constant 0 : index
    %c0_146 = arith.constant 0 : index
    %240 = vector.load %arg19[%c6, %c0_145, %c0_146] : memref<8x8x1xf32, #tpu.memory_space<vmem>>, vector<1x8x1xf32>
    %241 = vector.shape_cast %240 : vector<1x8x1xf32> to vector<8x1xf32>
    %cst_147 = arith.constant dense<0xFF800000> : vector<8xf32>
    %242 = vector.multi_reduction <maximumf>, %239, %cst_147 [1] : vector<8x16xf32> to vector<8xf32>
    %243 = vector.shape_cast %242 : vector<8xf32> to vector<8x1xf32>
    %244 = arith.maximumf %241, %243 : vector<8x1xf32>
    %245 = arith.subf %241, %244 : vector<8x1xf32>
    %246 = math.exp %245 : vector<8x1xf32>
    %247 = vector.broadcast %244 : vector<8x1xf32> to vector<8x16xf32>
    %248 = arith.subf %239, %247 : vector<8x16xf32>
    %249 = math.exp %248 : vector<8x16xf32>
    %c6_148 = arith.constant 6 : index
    %c0_149 = arith.constant 0 : index
    %c0_150 = arith.constant 0 : index
    %250 = vector.load %arg20[%c6_148, %c0_149, %c0_150] : memref<8x8x1xf32, #tpu.memory_space<vmem>>, vector<1x8x1xf32>
    %251 = vector.shape_cast %250 : vector<1x8x1xf32> to vector<8x1xf32>
    %252 = arith.mulf %246, %251 : vector<8x1xf32>
    %cst_151 = arith.constant dense<0.000000e+00> : vector<8xf32>
    %253 = vector.multi_reduction <add>, %249, %cst_151 [1] : vector<8x16xf32> to vector<8xf32>
    %254 = vector.shape_cast %253 : vector<8xf32> to vector<8x1xf32>
    %255 = arith.addf %252, %254 : vector<8x1xf32>
    %c6_152 = arith.constant 6 : index
    %c0_153 = arith.constant 0 : index
    %c0_154 = arith.constant 0 : index
    %256 = vector.load %arg20[%c6_152, %c0_153, %c0_154] : memref<8x8x1xf32, #tpu.memory_space<vmem>>, vector<1x8x1xf32>
    %257 = vector.shape_cast %256 : vector<1x8x1xf32> to vector<8x1xf32>
    %258 = vector.shape_cast %255 : vector<8x1xf32> to vector<1x8x1xf32>
    tpu.vector_store %arg20[%c6_152, %c0_153, %c0_154], %258 {strides = array<i32>} : memref<8x8x1xf32, #tpu.memory_space<vmem>>, vector<1x8x1xf32>,
    %c6_155 = arith.constant 6 : index
    %c0_156 = arith.constant 0 : index
    %c0_157 = arith.constant 0 : index
    %259 = vector.load %arg21[%c6_155, %c0_156, %c0_157] : memref<8x8x4xf32, #tpu.memory_space<vmem>>, vector<1x8x4xf32>
    %260 = vector.shape_cast %259 : vector<1x8x4xf32> to vector<8x4xf32>
    %261 = vector.broadcast %246 : vector<8x1xf32> to vector<8x4xf32>
    %262 = arith.mulf %261, %260 : vector<8x4xf32>
    %263 = arith.truncf %249 : vector<8x16xf32> to vector<8x16xbf16>
    %cst_158 = arith.constant dense<0.000000e+00> : vector<8x4xf32>
    %264 = tpu.matmul %263, %238, %cst_158 {dimension_numbers = #tpu.dot_dimension_numbers<[1], [0], [0], [1], [0, 0, 1, 1], [], []>} : vector<8x16xbf16>, vector<16x4xbf16>, vector<8x4xf32> -> vector<8x4xf32>
    %265 = arith.addf %262, %264 : vector<8x4xf32>
    %c6_159 = arith.constant 6 : index
    %c0_160 = arith.constant 0 : index
    %c0_161 = arith.constant 0 : index
    %266 = vector.load %arg21[%c6_159, %c0_160, %c0_161] : memref<8x8x4xf32, #tpu.memory_space<vmem>>, vector<1x8x4xf32>
    %267 = vector.shape_cast %266 : vector<1x8x4xf32> to vector<8x4xf32>
    %268 = vector.shape_cast %265 : vector<8x4xf32> to vector<1x8x4xf32>
    tpu.vector_store %arg21[%c6_159, %c0_160, %c0_161], %268 {strides = array<i32>} : memref<8x8x4xf32, #tpu.memory_space<vmem>>, vector<1x8x4xf32>,
    %c6_162 = arith.constant 6 : index
    %c0_163 = arith.constant 0 : index
    %c0_164 = arith.constant 0 : index
    %269 = vector.load %arg19[%c6_162, %c0_163, %c0_164] : memref<8x8x1xf32, #tpu.memory_space<vmem>>, vector<1x8x1xf32>
    %270 = vector.shape_cast %269 : vector<1x8x1xf32> to vector<8x1xf32>
    %271 = vector.shape_cast %244 : vector<8x1xf32> to vector<1x8x1xf32>
    tpu.vector_store %arg19[%c6_162, %c0_163, %c0_164], %271 {strides = array<i32>} : memref<8x8x1xf32, #tpu.memory_space<vmem>>, vector<1x8x1xf32>,
    %272 = vector.extract_strided_slice %19 {offsets = [0, 28], sizes = [8, 4], strides = [1, 1]} : vector<8x32xbf16> to vector<8x4xbf16>
    %273 = vector.extract_strided_slice %10 {offsets = [0, 28], sizes = [16, 4], strides = [1, 1]} : vector<16x32xbf16> to vector<16x4xbf16>
    %274 = vector.extract_strided_slice %18 {offsets = [0, 28], sizes = [16, 4], strides = [1, 1]} : vector<16x32xbf16> to vector<16x4xbf16>
    %cst_165 = arith.constant dense<0.000000e+00> : vector<8x16xf32>
    %275 = tpu.matmul %272, %273, %cst_165 {dimension_numbers = #tpu.dot_dimension_numbers<[1], [1], [0], [0], [0, 0, 1, 0], [], []>} : vector<8x4xbf16>, vector<16x4xbf16>, vector<8x16xf32> -> vector<8x16xf32>
    %c7 = arith.constant 7 : index
    %c0_166 = arith.constant 0 : index
    %c0_167 = arith.constant 0 : index
    %276 = vector.load %arg19[%c7, %c0_166, %c0_167] : memref<8x8x1xf32, #tpu.memory_space<vmem>>, vector<1x8x1xf32>
    %277 = vector.shape_cast %276 : vector<1x8x1xf32> to vector<8x1xf32>
    %cst_168 = arith.constant dense<0xFF800000> : vector<8xf32>
    %278 = vector.multi_reduction <maximumf>, %275, %cst_168 [1] : vector<8x16xf32> to vector<8xf32>
    %279 = vector.shape_cast %278 : vector<8xf32> to vector<8x1xf32>
    %280 = arith.maximumf %277, %279 : vector<8x1xf32>
    %281 = arith.subf %277, %280 : vector<8x1xf32>
    %282 = math.exp %281 : vector<8x1xf32>
    %283 = vector.broadcast %280 : vector<8x1xf32> to vector<8x16xf32>
    %284 = arith.subf %275, %283 : vector<8x16xf32>
    %285 = math.exp %284 : vector<8x16xf32>
    %c7_169 = arith.constant 7 : index
    %c0_170 = arith.constant 0 : index
    %c0_171 = arith.constant 0 : index
    %286 = vector.load %arg20[%c7_169, %c0_170, %c0_171] : memref<8x8x1xf32, #tpu.memory_space<vmem>>, vector<1x8x1xf32>
    %287 = vector.shape_cast %286 : vector<1x8x1xf32> to vector<8x1xf32>
    %288 = arith.mulf %282, %287 : vector<8x1xf32>
    %cst_172 = arith.constant dense<0.000000e+00> : vector<8xf32>
    %289 = vector.multi_reduction <add>, %285, %cst_172 [1] : vector<8x16xf32> to vector<8xf32>
    %290 = vector.shape_cast %289 : vector<8xf32> to vector<8x1xf32>
    %291 = arith.addf %288, %290 : vector<8x1xf32>
    %c7_173 = arith.constant 7 : index
    %c0_174 = arith.constant 0 : index
    %c0_175 = arith.constant 0 : index
    %292 = vector.load %arg20[%c7_173, %c0_174, %c0_175] : memref<8x8x1xf32, #tpu.memory_space<vmem>>, vector<1x8x1xf32>
    %293 = vector.shape_cast %292 : vector<1x8x1xf32> to vector<8x1xf32>
    %294 = vector.shape_cast %291 : vector<8x1xf32> to vector<1x8x1xf32>
    tpu.vector_store %arg20[%c7_173, %c0_174, %c0_175], %294 {strides = array<i32>} : memref<8x8x1xf32, #tpu.memory_space<vmem>>, vector<1x8x1xf32>,
    %c7_176 = arith.constant 7 : index
    %c0_177 = arith.constant 0 : index
    %c0_178 = arith.constant 0 : index
    %295 = vector.load %arg21[%c7_176, %c0_177, %c0_178] : memref<8x8x4xf32, #tpu.memory_space<vmem>>, vector<1x8x4xf32>
    %296 = vector.shape_cast %295 : vector<1x8x4xf32> to vector<8x4xf32>
    %297 = vector.broadcast %282 : vector<8x1xf32> to vector<8x4xf32>
    %298 = arith.mulf %297, %296 : vector<8x4xf32>
    %299 = arith.truncf %285 : vector<8x16xf32> to vector<8x16xbf16>
    %cst_179 = arith.constant dense<0.000000e+00> : vector<8x4xf32>
    %300 = tpu.matmul %299, %274, %cst_179 {dimension_numbers = #tpu.dot_dimension_numbers<[1], [0], [0], [1], [0, 0, 1, 1], [], []>} : vector<8x16xbf16>, vector<16x4xbf16>, vector<8x4xf32> -> vector<8x4xf32>
    %301 = arith.addf %298, %300 : vector<8x4xf32>
    %c7_180 = arith.constant 7 : index
    %c0_181 = arith.constant 0 : index
    %c0_182 = arith.constant 0 : index
    %302 = vector.load %arg21[%c7_180, %c0_181, %c0_182] : memref<8x8x4xf32, #tpu.memory_space<vmem>>, vector<1x8x4xf32>
    %303 = vector.shape_cast %302 : vector<1x8x4xf32> to vector<8x4xf32>
    %304 = vector.shape_cast %301 : vector<8x4xf32> to vector<1x8x4xf32>
    tpu.vector_store %arg21[%c7_180, %c0_181, %c0_182], %304 {strides = array<i32>} : memref<8x8x4xf32, #tpu.memory_space<vmem>>, vector<1x8x4xf32>,
    %c7_183 = arith.constant 7 : index
    %c0_184 = arith.constant 0 : index
    %c0_185 = arith.constant 0 : index
    %305 = vector.load %arg19[%c7_183, %c0_184, %c0_185] : memref<8x8x1xf32, #tpu.memory_space<vmem>>, vector<1x8x1xf32>
    %306 = vector.shape_cast %305 : vector<1x8x1xf32> to vector<8x1xf32>
    %307 = vector.shape_cast %280 : vector<8x1xf32> to vector<1x8x1xf32>
    tpu.vector_store %arg19[%c7_183, %c0_184, %c0_185], %307 {strides = array<i32>} : memref<8x8x1xf32, #tpu.memory_space<vmem>>, vector<1x8x1xf32>,
    %c0_i32_186 = arith.constant 0 : i32
    %308 = arith.cmpi eq, %arg2, %c0_i32_186 : i32
    %309 = arith.extui %308 : i1 to i32
    %c0_i32_187 = arith.constant 0 : i32
    %310 = arith.cmpi ne, %309, %c0_i32_187 : i32
    scf.if %310 {
      %cst_188 = arith.constant 0.000000e+00 : f32
      %311 = vector.broadcast %cst_188 : f32 to vector<8x32xf32>
      %c0_189 = arith.constant 0 : index
      %c0_190 = arith.constant 0 : index
      %c0_191 = arith.constant 0 : index
      %312 = vector.load %arg21[%c0_189, %c0_190, %c0_191] : memref<8x8x4xf32, #tpu.memory_space<vmem>>, vector<1x8x4xf32>
      %313 = vector.shape_cast %312 : vector<1x8x4xf32> to vector<8x4xf32>
      %c0_192 = arith.constant 0 : index
      %c0_193 = arith.constant 0 : index
      %c0_194 = arith.constant 0 : index
      %314 = vector.load %arg20[%c0_192, %c0_193, %c0_194] : memref<8x8x1xf32, #tpu.memory_space<vmem>>, vector<1x8x1xf32>
      %315 = vector.shape_cast %314 : vector<1x8x1xf32> to vector<8x1xf32>
      %316 = vector.broadcast %315 : vector<8x1xf32> to vector<8x4xf32>
      %317 = arith.divf %313, %316 : vector<8x4xf32>
      %318 = arith.truncf %317 : vector<8x4xf32> to vector<8x4xbf16>
      %c0_195 = arith.constant 0 : index
      %c0_196 = arith.constant 0 : index
      %c0_197 = arith.constant 0 : index
      %319 = vector.load %arg10[%c0_195, %c0_196, %c0_197] : memref<8x4x32xbf16, #tpu.memory_space<vmem>>, vector<1x4x32xbf16>
      %320 = vector.shape_cast %319 : vector<1x4x32xbf16> to vector<4x32xbf16>
      %cst_198 = arith.constant dense<0.000000e+00> : vector<8x32xf32>
      %321 = tpu.matmul %318, %320, %cst_198 {dimension_numbers = #tpu.dot_dimension_numbers<[1], [0], [0], [1], [0, 0, 1, 1], [], []>} : vector<8x4xbf16>, vector<4x32xbf16>, vector<8x32xf32> -> vector<8x32xf32>
      %322 = arith.addf %311, %321 : vector<8x32xf32>
      %c1_199 = arith.constant 1 : index
      %c0_200 = arith.constant 0 : index
      %c0_201 = arith.constant 0 : index
      %323 = vector.load %arg21[%c1_199, %c0_200, %c0_201] : memref<8x8x4xf32, #tpu.memory_space<vmem>>, vector<1x8x4xf32>
      %324 = vector.shape_cast %323 : vector<1x8x4xf32> to vector<8x4xf32>
      %c1_202 = arith.constant 1 : index
      %c0_203 = arith.constant 0 : index
      %c0_204 = arith.constant 0 : index
      %325 = vector.load %arg20[%c1_202, %c0_203, %c0_204] : memref<8x8x1xf32, #tpu.memory_space<vmem>>, vector<1x8x1xf32>
      %326 = vector.shape_cast %325 : vector<1x8x1xf32> to vector<8x1xf32>
      %327 = vector.broadcast %326 : vector<8x1xf32> to vector<8x4xf32>
      %328 = arith.divf %324, %327 : vector<8x4xf32>
      %329 = arith.truncf %328 : vector<8x4xf32> to vector<8x4xbf16>
      %c1_205 = arith.constant 1 : index
      %c0_206 = arith.constant 0 : index
      %c0_207 = arith.constant 0 : index
      %330 = vector.load %arg10[%c1_205, %c0_206, %c0_207] : memref<8x4x32xbf16, #tpu.memory_space<vmem>>, vector<1x4x32xbf16>
      %331 = vector.shape_cast %330 : vector<1x4x32xbf16> to vector<4x32xbf16>
      %cst_208 = arith.constant dense<0.000000e+00> : vector<8x32xf32>
      %332 = tpu.matmul %329, %331, %cst_208 {dimension_numbers = #tpu.dot_dimension_numbers<[1], [0], [0], [1], [0, 0, 1, 1], [], []>} : vector<8x4xbf16>, vector<4x32xbf16>, vector<8x32xf32> -> vector<8x32xf32>
      %333 = arith.addf %322, %332 : vector<8x32xf32>
      %c2_209 = arith.constant 2 : index
      %c0_210 = arith.constant 0 : index
      %c0_211 = arith.constant 0 : index
      %334 = vector.load %arg21[%c2_209, %c0_210, %c0_211] : memref<8x8x4xf32, #tpu.memory_space<vmem>>, vector<1x8x4xf32>
      %335 = vector.shape_cast %334 : vector<1x8x4xf32> to vector<8x4xf32>
      %c2_212 = arith.constant 2 : index
      %c0_213 = arith.constant 0 : index
      %c0_214 = arith.constant 0 : index
      %336 = vector.load %arg20[%c2_212, %c0_213, %c0_214] : memref<8x8x1xf32, #tpu.memory_space<vmem>>, vector<1x8x1xf32>
      %337 = vector.shape_cast %336 : vector<1x8x1xf32> to vector<8x1xf32>
      %338 = vector.broadcast %337 : vector<8x1xf32> to vector<8x4xf32>
      %339 = arith.divf %335, %338 : vector<8x4xf32>
      %340 = arith.truncf %339 : vector<8x4xf32> to vector<8x4xbf16>
      %c2_215 = arith.constant 2 : index
      %c0_216 = arith.constant 0 : index
      %c0_217 = arith.constant 0 : index
      %341 = vector.load %arg10[%c2_215, %c0_216, %c0_217] : memref<8x4x32xbf16, #tpu.memory_space<vmem>>, vector<1x4x32xbf16>
      %342 = vector.shape_cast %341 : vector<1x4x32xbf16> to vector<4x32xbf16>
      %cst_218 = arith.constant dense<0.000000e+00> : vector<8x32xf32>
      %343 = tpu.matmul %340, %342, %cst_218 {dimension_numbers = #tpu.dot_dimension_numbers<[1], [0], [0], [1], [0, 0, 1, 1], [], []>} : vector<8x4xbf16>, vector<4x32xbf16>, vector<8x32xf32> -> vector<8x32xf32>
      %344 = arith.addf %333, %343 : vector<8x32xf32>
      %c3_219 = arith.constant 3 : index
      %c0_220 = arith.constant 0 : index
      %c0_221 = arith.constant 0 : index
      %345 = vector.load %arg21[%c3_219, %c0_220, %c0_221] : memref<8x8x4xf32, #tpu.memory_space<vmem>>, vector<1x8x4xf32>
      %346 = vector.shape_cast %345 : vector<1x8x4xf32> to vector<8x4xf32>
      %c3_222 = arith.constant 3 : index
      %c0_223 = arith.constant 0 : index
      %c0_224 = arith.constant 0 : index
      %347 = vector.load %arg20[%c3_222, %c0_223, %c0_224] : memref<8x8x1xf32, #tpu.memory_space<vmem>>, vector<1x8x1xf32>
      %348 = vector.shape_cast %347 : vector<1x8x1xf32> to vector<8x1xf32>
      %349 = vector.broadcast %348 : vector<8x1xf32> to vector<8x4xf32>
      %350 = arith.divf %346, %349 : vector<8x4xf32>
      %351 = arith.truncf %350 : vector<8x4xf32> to vector<8x4xbf16>
      %c3_225 = arith.constant 3 : index
      %c0_226 = arith.constant 0 : index
      %c0_227 = arith.constant 0 : index
      %352 = vector.load %arg10[%c3_225, %c0_226, %c0_227] : memref<8x4x32xbf16, #tpu.memory_space<vmem>>, vector<1x4x32xbf16>
      %353 = vector.shape_cast %352 : vector<1x4x32xbf16> to vector<4x32xbf16>
      %cst_228 = arith.constant dense<0.000000e+00> : vector<8x32xf32>
      %354 = tpu.matmul %351, %353, %cst_228 {dimension_numbers = #tpu.dot_dimension_numbers<[1], [0], [0], [1], [0, 0, 1, 1], [], []>} : vector<8x4xbf16>, vector<4x32xbf16>, vector<8x32xf32> -> vector<8x32xf32>
      %355 = arith.addf %344, %354 : vector<8x32xf32>
      %c4_229 = arith.constant 4 : index
      %c0_230 = arith.constant 0 : index
      %c0_231 = arith.constant 0 : index
      %356 = vector.load %arg21[%c4_229, %c0_230, %c0_231] : memref<8x8x4xf32, #tpu.memory_space<vmem>>, vector<1x8x4xf32>
      %357 = vector.shape_cast %356 : vector<1x8x4xf32> to vector<8x4xf32>
      %c4_232 = arith.constant 4 : index
      %c0_233 = arith.constant 0 : index
      %c0_234 = arith.constant 0 : index
      %358 = vector.load %arg20[%c4_232, %c0_233, %c0_234] : memref<8x8x1xf32, #tpu.memory_space<vmem>>, vector<1x8x1xf32>
      %359 = vector.shape_cast %358 : vector<1x8x1xf32> to vector<8x1xf32>
      %360 = vector.broadcast %359 : vector<8x1xf32> to vector<8x4xf32>
      %361 = arith.divf %357, %360 : vector<8x4xf32>
      %362 = arith.truncf %361 : vector<8x4xf32> to vector<8x4xbf16>
      %c4_235 = arith.constant 4 : index
      %c0_236 = arith.constant 0 : index
      %c0_237 = arith.constant 0 : index
      %363 = vector.load %arg10[%c4_235, %c0_236, %c0_237] : memref<8x4x32xbf16, #tpu.memory_space<vmem>>, vector<1x4x32xbf16>
      %364 = vector.shape_cast %363 : vector<1x4x32xbf16> to vector<4x32xbf16>
      %cst_238 = arith.constant dense<0.000000e+00> : vector<8x32xf32>
      %365 = tpu.matmul %362, %364, %cst_238 {dimension_numbers = #tpu.dot_dimension_numbers<[1], [0], [0], [1], [0, 0, 1, 1], [], []>} : vector<8x4xbf16>, vector<4x32xbf16>, vector<8x32xf32> -> vector<8x32xf32>
      %366 = arith.addf %355, %365 : vector<8x32xf32>
      %c5_239 = arith.constant 5 : index
      %c0_240 = arith.constant 0 : index
      %c0_241 = arith.constant 0 : index
      %367 = vector.load %arg21[%c5_239, %c0_240, %c0_241] : memref<8x8x4xf32, #tpu.memory_space<vmem>>, vector<1x8x4xf32>
      %368 = vector.shape_cast %367 : vector<1x8x4xf32> to vector<8x4xf32>
      %c5_242 = arith.constant 5 : index
      %c0_243 = arith.constant 0 : index
      %c0_244 = arith.constant 0 : index
      %369 = vector.load %arg20[%c5_242, %c0_243, %c0_244] : memref<8x8x1xf32, #tpu.memory_space<vmem>>, vector<1x8x1xf32>
      %370 = vector.shape_cast %369 : vector<1x8x1xf32> to vector<8x1xf32>
      %371 = vector.broadcast %370 : vector<8x1xf32> to vector<8x4xf32>
      %372 = arith.divf %368, %371 : vector<8x4xf32>
      %373 = arith.truncf %372 : vector<8x4xf32> to vector<8x4xbf16>
      %c5_245 = arith.constant 5 : index
      %c0_246 = arith.constant 0 : index
      %c0_247 = arith.constant 0 : index
      %374 = vector.load %arg10[%c5_245, %c0_246, %c0_247] : memref<8x4x32xbf16, #tpu.memory_space<vmem>>, vector<1x4x32xbf16>
      %375 = vector.shape_cast %374 : vector<1x4x32xbf16> to vector<4x32xbf16>
      %cst_248 = arith.constant dense<0.000000e+00> : vector<8x32xf32>
      %376 = tpu.matmul %373, %375, %cst_248 {dimension_numbers = #tpu.dot_dimension_numbers<[1], [0], [0], [1], [0, 0, 1, 1], [], []>} : vector<8x4xbf16>, vector<4x32xbf16>, vector<8x32xf32> -> vector<8x32xf32>
      %377 = arith.addf %366, %376 : vector<8x32xf32>
      %c6_249 = arith.constant 6 : index
      %c0_250 = arith.constant 0 : index
      %c0_251 = arith.constant 0 : index
      %378 = vector.load %arg21[%c6_249, %c0_250, %c0_251] : memref<8x8x4xf32, #tpu.memory_space<vmem>>, vector<1x8x4xf32>
      %379 = vector.shape_cast %378 : vector<1x8x4xf32> to vector<8x4xf32>
      %c6_252 = arith.constant 6 : index
      %c0_253 = arith.constant 0 : index
      %c0_254 = arith.constant 0 : index
      %380 = vector.load %arg20[%c6_252, %c0_253, %c0_254] : memref<8x8x1xf32, #tpu.memory_space<vmem>>, vector<1x8x1xf32>
      %381 = vector.shape_cast %380 : vector<1x8x1xf32> to vector<8x1xf32>
      %382 = vector.broadcast %381 : vector<8x1xf32> to vector<8x4xf32>
      %383 = arith.divf %379, %382 : vector<8x4xf32>
      %384 = arith.truncf %383 : vector<8x4xf32> to vector<8x4xbf16>
      %c6_255 = arith.constant 6 : index
      %c0_256 = arith.constant 0 : index
      %c0_257 = arith.constant 0 : index
      %385 = vector.load %arg10[%c6_255, %c0_256, %c0_257] : memref<8x4x32xbf16, #tpu.memory_space<vmem>>, vector<1x4x32xbf16>
      %386 = vector.shape_cast %385 : vector<1x4x32xbf16> to vector<4x32xbf16>
      %cst_258 = arith.constant dense<0.000000e+00> : vector<8x32xf32>
      %387 = tpu.matmul %384, %386, %cst_258 {dimension_numbers = #tpu.dot_dimension_numbers<[1], [0], [0], [1], [0, 0, 1, 1], [], []>} : vector<8x4xbf16>, vector<4x32xbf16>, vector<8x32xf32> -> vector<8x32xf32>
      %388 = arith.addf %377, %387 : vector<8x32xf32>
      %c7_259 = arith.constant 7 : index
      %c0_260 = arith.constant 0 : index
      %c0_261 = arith.constant 0 : index
      %389 = vector.load %arg21[%c7_259, %c0_260, %c0_261] : memref<8x8x4xf32, #tpu.memory_space<vmem>>, vector<1x8x4xf32>
      %390 = vector.shape_cast %389 : vector<1x8x4xf32> to vector<8x4xf32>
      %c7_262 = arith.constant 7 : index
      %c0_263 = arith.constant 0 : index
      %c0_264 = arith.constant 0 : index
      %391 = vector.load %arg20[%c7_262, %c0_263, %c0_264] : memref<8x8x1xf32, #tpu.memory_space<vmem>>, vector<1x8x1xf32>
      %392 = vector.shape_cast %391 : vector<1x8x1xf32> to vector<8x1xf32>
      %393 = vector.broadcast %392 : vector<8x1xf32> to vector<8x4xf32>
      %394 = arith.divf %390, %393 : vector<8x4xf32>
      %395 = arith.truncf %394 : vector<8x4xf32> to vector<8x4xbf16>
      %c7_265 = arith.constant 7 : index
      %c0_266 = arith.constant 0 : index
      %c0_267 = arith.constant 0 : index
      %396 = vector.load %arg10[%c7_265, %c0_266, %c0_267] : memref<8x4x32xbf16, #tpu.memory_space<vmem>>, vector<1x4x32xbf16>
      %397 = vector.shape_cast %396 : vector<1x4x32xbf16> to vector<4x32xbf16>
      %cst_268 = arith.constant dense<0.000000e+00> : vector<8x32xf32>
      %398 = tpu.matmul %395, %397, %cst_268 {dimension_numbers = #tpu.dot_dimension_numbers<[1], [0], [0], [1], [0, 0, 1, 1], [], []>} : vector<8x4xbf16>, vector<4x32xbf16>, vector<8x32xf32> -> vector<8x32xf32>
      %399 = arith.addf %388, %398 : vector<8x32xf32>
      %c0_269 = arith.constant 0 : index
      %c0_270 = arith.constant 0 : index
      %c0_271 = arith.constant 0 : index
      %400 = vector.load %arg3[%c0_269, %c0_270, %c0_271] : memref<1x8x32xf32, #tpu.memory_space<vmem>>, vector<1x8x32xf32>
      %401 = vector.shape_cast %400 : vector<1x8x32xf32> to vector<8x32xf32>
      %402 = arith.addf %401, %399 : vector<8x32xf32>
      %c0_272 = arith.constant 0 : index
      %c0_273 = arith.constant 0 : index
      %403 = vector.load %arg14[%c0_272, %c0_273] : memref<1x32xf32, #tpu.memory_space<vmem>>, vector<1x32xf32>
      %404 = vector.broadcast %403 : vector<1x32xf32> to vector<8x32xf32>
      %405 = arith.addf %402, %404 : vector<8x32xf32>
      %c0_274 = arith.constant 0 : index
      %c0_275 = arith.constant 0 : index
      %406 = vector.load %arg15[%c0_274, %c0_275] : memref<1x32xf32, #tpu.memory_space<vmem>>, vector<1x32xf32>
      %c0_276 = arith.constant 0 : index
      %c0_277 = arith.constant 0 : index
      %407 = vector.load %arg16[%c0_276, %c0_277] : memref<1x32xf32, #tpu.memory_space<vmem>>, vector<1x32xf32>
      %cst_278 = arith.constant dense<0.000000e+00> : vector<8xf32>
      %408 = vector.multi_reduction <add>, %405, %cst_278 [1] : vector<8x32xf32> to vector<8xf32>
      %409 = vector.shape_cast %408 : vector<8xf32> to vector<8x1xf32>
      %cst_279 = arith.constant 3.200000e+01 : f32
      %410 = vector.broadcast %cst_279 : f32 to vector<8x1xf32>
      %411 = arith.divf %409, %410 : vector<8x1xf32>
      %412 = vector.broadcast %411 : vector<8x1xf32> to vector<8x32xf32>
      %413 = arith.subf %405, %412 : vector<8x32xf32>
      %414 = arith.mulf %413, %413 : vector<8x32xf32>
      %cst_280 = arith.constant dense<0.000000e+00> : vector<8xf32>
      %415 = vector.multi_reduction <add>, %414, %cst_280 [1] : vector<8x32xf32> to vector<8xf32>
      %416 = vector.shape_cast %415 : vector<8xf32> to vector<8x1xf32>
      %cst_281 = arith.constant 3.200000e+01 : f32
      %417 = vector.broadcast %cst_281 : f32 to vector<8x1xf32>
      %418 = arith.divf %416, %417 : vector<8x1xf32>
      %419 = vector.broadcast %411 : vector<8x1xf32> to vector<8x32xf32>
      %420 = arith.subf %405, %419 : vector<8x32xf32>
      %cst_282 = arith.constant 9.99999974E-6 : f32
      %421 = vector.broadcast %cst_282 : f32 to vector<8x1xf32>
      %422 = arith.addf %418, %421 : vector<8x1xf32>
      %423 = math.rsqrt %422 : vector<8x1xf32>
      %424 = vector.broadcast %423 : vector<8x1xf32> to vector<8x32xf32>
      %425 = arith.mulf %420, %424 : vector<8x32xf32>
      %426 = vector.broadcast %406 : vector<1x32xf32> to vector<8x32xf32>
      %427 = arith.mulf %425, %426 : vector<8x32xf32>
      %428 = vector.broadcast %407 : vector<1x32xf32> to vector<8x32xf32>
      %429 = arith.addf %427, %428 : vector<8x32xf32>
      %c0_283 = arith.constant 0 : index
      %c0_284 = arith.constant 0 : index
      %c0_285 = arith.constant 0 : index
      %430 = vector.load %arg17[%c0_283, %c0_284, %c0_285] : memref<1x8x32xf32, #tpu.memory_space<vmem>>, vector<1x8x32xf32>
      %431 = vector.shape_cast %430 : vector<1x8x32xf32> to vector<8x32xf32>
      %432 = vector.shape_cast %429 : vector<8x32xf32> to vector<1x8x32xf32>
      tpu.vector_store %arg17[%c0_283, %c0_284, %c0_285], %432 {strides = array<i32>} : memref<1x8x32xf32, #tpu.memory_space<vmem>>, vector<1x8x32xf32>,
    } else {
    }
    return
  }
  func.func @transform_0(%arg0: i32, %arg1: i32, %arg2: i32) -> (i32, i32, i32) {
    %c0_i32 = arith.constant 0 : i32
    %c0_i32_0 = arith.constant 0 : i32
    return %arg0, %arg1, %c0_i32 : i32, i32, i32
  }
  func.func @transform_1(%arg0: i32, %arg1: i32, %arg2: i32) -> (i32, i32, i32) {
    %c0_i32 = arith.constant 0 : i32
    %c0_i32_0 = arith.constant 0 : i32
    return %arg0, %arg1, %c0_i32 : i32, i32, i32
  }
  func.func @transform_2(%arg0: i32, %arg1: i32, %arg2: i32) -> (i32, i32, i32) {
    %c0_i32 = arith.constant 0 : i32
    %c0_i32_0 = arith.constant 0 : i32
    return %arg0, %arg2, %c0_i32 : i32, i32, i32
  }
  func.func @transform_3(%arg0: i32, %arg1: i32, %arg2: i32) -> (i32, i32, i32) {
    %c0_i32 = arith.constant 0 : i32
    %c0_i32_0 = arith.constant 0 : i32
    return %arg0, %arg2, %c0_i32 : i32, i32, i32
  }
  func.func @transform_4(%arg0: i32, %arg1: i32, %arg2: i32) -> (i32, i32) {
    %c0_i32 = arith.constant 0 : i32
    %c0_i32_0 = arith.constant 0 : i32
    %c0_i32_1 = arith.constant 0 : i32
    return %c0_i32, %c0_i32_0 : i32, i32
  }
  func.func @transform_5(%arg0: i32, %arg1: i32, %arg2: i32) -> (i32, i32) {
    %c0_i32 = arith.constant 0 : i32
    %c0_i32_0 = arith.constant 0 : i32
    %c0_i32_1 = arith.constant 0 : i32
    return %c0_i32, %c0_i32_0 : i32, i32
  }
  func.func @transform_6(%arg0: i32, %arg1: i32, %arg2: i32) -> (i32, i32) {
    %c0_i32 = arith.constant 0 : i32
    %c0_i32_0 = arith.constant 0 : i32
    %c0_i32_1 = arith.constant 0 : i32
    return %c0_i32, %c0_i32_0 : i32, i32
  }
  func.func @transform_7(%arg0: i32, %arg1: i32, %arg2: i32) -> (i32, i32, i32) {
    %c0_i32 = arith.constant 0 : i32
    %c0_i32_0 = arith.constant 0 : i32
    %c0_i32_1 = arith.constant 0 : i32
    %c0_i32_2 = arith.constant 0 : i32
    return %c0_i32, %c0_i32_0, %c0_i32_1 : i32, i32, i32
  }
  func.func @transform_8(%arg0: i32, %arg1: i32, %arg2: i32) -> (i32, i32) {
    %c0_i32 = arith.constant 0 : i32
    %c0_i32_0 = arith.constant 0 : i32
    %c0_i32_1 = arith.constant 0 : i32
    return %c0_i32, %c0_i32_0 : i32, i32
  }
  func.func @transform_9(%arg0: i32, %arg1: i32, %arg2: i32) -> (i32, i32) {
    %c0_i32 = arith.constant 0 : i32
    %c0_i32_0 = arith.constant 0 : i32
    %c0_i32_1 = arith.constant 0 : i32
    return %c0_i32, %c0_i32_0 : i32, i32
  }
  func.func @transform_10(%arg0: i32, %arg1: i32, %arg2: i32) -> (i32, i32) {
    %c0_i32 = arith.constant 0 : i32
    %c0_i32_0 = arith.constant 0 : i32
    %c0_i32_1 = arith.constant 0 : i32
    return %c0_i32, %c0_i32_0 : i32, i32
  }
  func.func @transform_11(%arg0: i32, %arg1: i32, %arg2: i32) -> (i32, i32) {
    %c0_i32 = arith.constant 0 : i32
    %c0_i32_0 = arith.constant 0 : i32
    %c0_i32_1 = arith.constant 0 : i32
    return %c0_i32, %c0_i32_0 : i32, i32
  }
  func.func @transform_12(%arg0: i32, %arg1: i32, %arg2: i32) -> (i32, i32) {
    %c0_i32 = arith.constant 0 : i32
    %c0_i32_0 = arith.constant 0 : i32
    %c0_i32_1 = arith.constant 0 : i32
    return %c0_i32, %c0_i32_0 : i32, i32
  }
  func.func @transform_13(%arg0: i32, %arg1: i32, %arg2: i32) -> (i32, i32) {
    %c0_i32 = arith.constant 0 : i32
    %c0_i32_0 = arith.constant 0 : i32
    %c0_i32_1 = arith.constant 0 : i32
    return %c0_i32, %c0_i32_0 : i32, i32
  }
  func.func @transform_14(%arg0: i32, %arg1: i32, %arg2: i32) -> (i32, i32, i32) {
    %c0_i32 = arith.constant 0 : i32
    %c0_i32_0 = arith.constant 0 : i32
    return %arg0, %arg1, %c0_i32 : i32, i32, i32
  }
}

</mosaic_0001>

<llo_original>
// kernel: _forward.5
$region0: #{_forward.5}
  #allocation0 [shape = 'u32[]', space=smem, size = 0x4, offset = 0x4, fixed_abs, tag = 'smem constant byte address 0x4 - core index']
  #allocation1 [shape = 'u32[144,128]{1,0:T(1,128)}', space=vmem, size = 0x12000, scoped, tag = 'internal scratch']
  %s0 = inlined_call_operand.vmem [shape: f32[16,32], index: 0, kind: input, shape index: {}]
  %s1 = inlined_call_operand.vmem [shape: bf16[32,64], index: 1, kind: input, shape index: {}]
  %s2 = inlined_call_operand.vmem [shape: f32[1,64], index: 2, kind: input, shape index: {}]
  %s3 = inlined_call_operand.vmem [shape: bf16[64,32], index: 3, kind: input, shape index: {}]
  %s4 = inlined_call_operand.vmem [shape: f32[1,32], index: 4, kind: input, shape index: {}]
  %s5 = inlined_call_operand.vmem [shape: f32[1,32], index: 5, kind: input, shape index: {}]
  %s6 = inlined_call_operand.vmem [shape: f32[1,32], index: 6, kind: input, shape index: {}]
  %s7 = inlined_call_operand.hbm [shape: f32[16,32], index: 7, kind: output, shape index: {}]
  %s8 = sld [smem:[#allocation0]]
  $region38: #{_forward.5} parent=0
    _
  %s10 = ssub.s32 1, %s8
  %s11 = scalar_select 0, %s10, %s8
  $region1: #{_forward.5} parent=0
    #allocation2 [shape = 'u8[8192]{0}', space=vmem, size = 0x2000, scoped, tag = 'output window, operand 0, single buffered']
    #allocation3 [shape = 's32[1]{0}', space=sflag, size = 0x4, scoped, tag = 'scoped memory for _forward.5']
    %12 = vsyncpa [#allocation3], 0
    // Predicated region
    $region2: #{_forward.5} parent=1 // pred_check
      _
    $region3: #{_forward.5} parent=1 // pred_check_branch
      %14 = sbr.rel (0) target = $region5
    $region4: #{_forward.5} parent=1 // pred_region
      _
    $region5: #{_forward.5} parent=1 // pred_fallthru
      _
    // Predicated region
    $region6: #{_forward.5} parent=1 // pred_check
      _
    $region7: #{_forward.5} parent=1 // pred_check_branch
      %16 = sbr.rel (0) target = $region9
    $region8: #{_forward.5} parent=1 // pred_region
      _
    $region9: #{_forward.5} parent=1 // pred_fallthru
      _
    // Predicated region
    $region10: #{_forward.5} parent=1 // pred_check
      _
    $region11: #{_forward.5} parent=1 // pred_check_branch
      %18 = sbr.rel (0) target = $region13
    $region12: #{_forward.5} parent=1 // pred_region
      _
    $region13: #{_forward.5} parent=1 // pred_fallthru
      _
    // Predicated region
    $region14: #{_forward.5} parent=1 // pred_check
      _
    $region15: #{_forward.5} parent=1 // pred_check_branch
      %20 = sbr.rel (0) target = $region17
    $region16: #{_forward.5} parent=1 // pred_region
      _
    $region17: #{_forward.5} parent=1 // pred_fallthru
      _
    // Predicated region
    $region18: #{_forward.5} parent=1 // pred_check
      _
    $region19: #{_forward.5} parent=1 // pred_check_branch
      %22 = sbr.rel (0) target = $region21
    $region20: #{_forward.5} parent=1 // pred_region
      _
    $region21: #{_forward.5} parent=1 // pred_fallthru
      _
    // Predicated region
    $region22: #{_forward.5} parent=1 // pred_check
      _
    $region23: #{_forward.5} parent=1 // pred_check_branch
      %24 = sbr.rel (0) target = $region25
    $region24: #{_forward.5} parent=1 // pred_region
      _
    $region25: #{_forward.5} parent=1 // pred_fallthru
      _
    // Predicated region
    $region26: #{_forward.5} parent=1 // pred_check
      _
    $region27: #{_forward.5} parent=1 // pred_check_branch
      %26 = sbr.rel (0) target = $region29
    $region28: #{_forward.5} parent=1 // pred_region
      _
    $region29: #{_forward.5} parent=1 // pred_fallthru
      _
    %v28 = vld [vmem:[%s0] sm:$0xff]
    %v29 = vld [vmem:[%s0 + $0x8] sm:$0xff]
    %v30 = vpack.c.bf16 %v29, %v28
    %v31 = vld [vmem:[%s1] sm:$0xf]
    %v32 = vld [vmem:[%s1 + $0x4] sm:$0xf]
    %v33 = vld [vmem:[%s1 + $0x8] sm:$0xf]
    %v34 = vld [vmem:[%s1 + $0xc] sm:$0xf]
    %v35 = vld [vmem:[%s2] sm:$0x1]
    %v37 = vlaneseq
    %v38 = vshrl.u32 %v37, 7
    %v39 = vsub.s32 0, %v38
    %v40 = vrot.slane %v35, %v39
    %v46 = vunpack.c.l.b16 %v31
    %v47 = vunpack.c.l.b16 %v32
    %v48 = vunpack.c.l.b16 %v33
    %v49 = vunpack.c.l.b16 %v34
    %v50 = vpack.c.b16 %v47, %v46
    %v51 = vpack.c.b16 %v49, %v48
    %vm54 = vcmask 261120
    %v56 = vsel %vm54, %v30, 0
    %58 = vmatprep.subr.bf16.mxu0 0
    %59 = vmatpush1.bf16.msra.mxu0 %v50
    %60 = vmatprep.subr.bf16.mxu0 0
    %61 = vmatpush1.bf16.msra.mxu0 %v51
    %62 = vmatprep.subr.bf16.mxu0 0
    %63 = vmatpush1.bf16.msra.mxu0 0
    %64 = vmatprep.subr.bf16.mxu0 0
    %65 = vmatpush1.bf16.msra.mxu0 0
    %66 = vmatprep.subr.bf16.mxu0 0
    %67 = vmatpush1.bf16.msra.mxu0 0
    %68 = vmatprep.subr.bf16.mxu0 0
    %69 = vmatpush1.bf16.msra.mxu0 0
    %70 = vmatprep.subr.bf16.mxu0 0
    %71 = vmatpush1.bf16.msra.mxu0 0
    %72 = vmatprep.subr.bf16.mxu0 0
    %73 = vmatpush1.bf16.msra.mxu0 0
    %74 = vmatprep.subr.bf16.mxu0 0
    %75 = vmatpush1.bf16.msra.mxu0 0
    %76 = vmatprep.subr.bf16.mxu0 0
    %77 = vmatpush1.bf16.msra.mxu0 0
    %78 = vmatprep.subr.bf16.mxu0 0
    %79 = vmatpush1.bf16.msra.mxu0 0
    %80 = vmatprep.subr.bf16.mxu0 0
    %81 = vmatpush1.bf16.msra.mxu0 0
    %82 = vmatprep.subr.bf16.mxu0 0
    %83 = vmatpush1.bf16.msra.mxu0 0
    %84 = vmatprep.subr.bf16.mxu0 0
    %85 = vmatpush1.bf16.msra.mxu0 0
    %86 = vmatprep.subr.bf16.mxu0 0
    %87 = vmatpush1.bf16.msra.mxu0 0
    %88 = vmatprep.subr.bf16.mxu0 0
    %89 = vmatpush1.bf16.msra.mxu0 0
    %90 = vmatprep.mubr.bf16.mxu0 0
    %91 = vmatmul.mubr.bf16.gmra.mrb[0].mxu0 %v56
    %v92 = vpop.f32.mrb[0].mxu0
    %v93 = vadd.f32 %v40, %v92
    %v94 = vpop.f32.mrb[0].mxu0
    %v95 = vpop.f32.mrb[0].mxu0
    %v96 = vadd.f32 %v40, %v95
    %v97 = vpop.f32.mrb[0].mxu0
    %98 = vdwg.mxu0
    %v99 = vmax.f32 %v93, 0.0
    %v100 = vmax.f32 %v96, 0.0
    %v101 = vpack.c.bf16 %v100, %v99
    %v102 = vld [vmem:[%s3] sm:$0xf]
    %v103 = vld [vmem:[%s3 + $0x4] sm:$0xf]
    %v104 = vld [vmem:[%s3 + $0x8] sm:$0xf]
    %v105 = vld [vmem:[%s3 + $0xc] sm:$0xf]
    %v106 = vld [vmem:[%s3 + $0x10] sm:$0xf]
    %v107 = vld [vmem:[%s3 + $0x14] sm:$0xf]
    %v108 = vld [vmem:[%s3 + $0x18] sm:$0xf]
    %v109 = vld [vmem:[%s3 + $0x1c] sm:$0xf]
    %v110 = vld [vmem:[%s4] sm:$0x1]
    %v112 = vlaneseq
    %v113 = vshrl.u32 %v112, 7
    %v114 = vsub.s32 0, %v113
    %v115 = vrot.slane %v110, %v114
    %v125 = vunpack.c.l.b16 %v102
    %v126 = vunpack.c.l.b16 %v103
    %v127 = vunpack.c.l.b16 %v104
    %v128 = vunpack.c.l.b16 %v105
    %v129 = vunpack.c.l.b16 %v106
    %v130 = vunpack.c.l.b16 %v107
    %v131 = vunpack.c.l.b16 %v108
    %v132 = vunpack.c.l.b16 %v109
    %v133 = vpack.c.b16 %v126, %v125
    %v134 = vpack.c.b16 %v128, %v127
    %v135 = vpack.c.b16 %v130, %v129
    %v136 = vpack.c.b16 %v132, %v131
    %vm141 = vcmask 523264
    %v143 = vsel %vm141, %v101, 0
    %145 = vmatprep.subr.bf16.mxu0 0
    %146 = vmatpush1.bf16.msra.mxu0 %v133
    %147 = vmatprep.subr.bf16.mxu0 0
    %148 = vmatpush1.bf16.msra.mxu0 %v134
    %149 = vmatprep.subr.bf16.mxu0 0
    %150 = vmatpush1.bf16.msra.mxu0 %v135
    %151 = vmatprep.subr.bf16.mxu0 0
    %152 = vmatpush1.bf16.msra.mxu0 %v136
    %153 = vmatprep.subr.bf16.mxu0 0
    %154 = vmatpush1.bf16.msra.mxu0 0
    %155 = vmatprep.subr.bf16.mxu0 0
    %156 = vmatpush1.bf16.msra.mxu0 0
    %157 = vmatprep.subr.bf16.mxu0 0
    %158 = vmatpush1.bf16.msra.mxu0 0
    %159 = vmatprep.subr.bf16.mxu0 0
    %160 = vmatpush1.bf16.msra.mxu0 0
    %161 = vmatprep.subr.bf16.mxu0 0
    %162 = vmatpush1.bf16.msra.mxu0 0
    %163 = vmatprep.subr.bf16.mxu0 0
    %164 = vmatpush1.bf16.msra.mxu0 0
    %165 = vmatprep.subr.bf16.mxu0 0
    %166 = vmatpush1.bf16.msra.mxu0 0
    %167 = vmatprep.subr.bf16.mxu0 0
    %168 = vmatpush1.bf16.msra.mxu0 0
    %169 = vmatprep.subr.bf16.mxu0 0
    %170 = vmatpush1.bf16.msra.mxu0 0
    %171 = vmatprep.subr.bf16.mxu0 0
    %172 = vmatpush1.bf16.msra.mxu0 0
    %173 = vmatprep.subr.bf16.mxu0 0
    %174 = vmatpush1.bf16.msra.mxu0 0
    %175 = vmatprep.subr.bf16.mxu0 0
    %176 = vmatpush1.bf16.msra.mxu0 0
    %177 = vmatprep.mubr.bf16.mxu0 0
    %178 = vmatmul.mubr.bf16.gmra.mrb[0].mxu0 %v143
    %v179 = vpop.f32.mrb[0].mxu0
    %v180 = vadd.f32 %v115, %v179
    %v181 = vpop.f32.mrb[0].mxu0
    %v182 = vpop.f32.mrb[0].mxu0
    %v183 = vadd.f32 %v115, %v182
    %v184 = vpop.f32.mrb[0].mxu0
    %185 = vdwg.mxu0
    %v186 = vadd.f32 %v28, %v180
    %v187 = vadd.f32 %v29, %v183
    %v188 = vld [vmem:[%s5] sm:$0x1]
    %v189 = vld [vmem:[%s6] sm:$0x1]
    %v190 = vsel %vm54, %v186, 0.0
    %191 = vadd.xlane.f32.xlu0 %v190
    %v192 = vpop.xlane.xlu0 %191
    %v193 = vsel %vm54, %v187, 0.0
    %194 = vadd.xlane.f32.xlu0 %v193
    %v195 = vpop.xlane.xlu0 %194
    %v196 = vrcp.pop 32.0
    %v197 = vmul.f32 %v192, %v196
    %v198 = vmul.f32 %v195, %v196
    %v199 = vsub.f32 %v186, %v197
    %v200 = vsub.f32 %v187, %v198
    %v201 = vmul.f32 %v199, %v199
    %v202 = vmul.f32 %v200, %v200
    %v203 = vsel %vm54, %v201, 0.0
    %204 = vadd.xlane.f32.xlu0 %v203
    %v205 = vpop.xlane.xlu0 %204
    %v206 = vsel %vm54, %v202, 0.0
    %207 = vadd.xlane.f32.xlu0 %v206
    %v208 = vpop.xlane.xlu0 %207
    %v209 = vmul.f32 %v205, %v196
    %v210 = vmul.f32 %v208, %v196
    %v211 = vadd.f32 %v209, 1e-05
    %v212 = vadd.f32 %v210, 1e-05
    %v213 = vrsqrt.pop %v211
    %v214 = vrsqrt.pop %v212
    %v215 = vmul.f32 %v199, %v213
    %v216 = vmul.f32 %v200, %v214
    %v218 = vlaneseq
    %v219 = vshrl.u32 %v218, 7
    %v220 = vsub.s32 0, %v219
    %v221 = vrot.slane %v188, %v220
    %v223 = vmul.f32 %v215, %v221
    %v224 = vmul.f32 %v216, %v221
    %v226 = vlaneseq
    %v227 = vshrl.u32 %v226, 7
    %v228 = vsub.s32 0, %v227
    %v229 = vrot.slane %v189, %v228
    %v231 = vadd.f32 %v223, %v229
    %v232 = vadd.f32 %v224, %v229
    %233 = vst.msk [vmem:[#allocation2] sm:$0xff] %vm54, %v231
    %234 = vst.msk [vmem:[#allocation2 + $0x8] sm:$0xff] %vm54, %v232
    // Predicated region
    $region30: #{_forward.5} parent=1 // pred_check
      _
    $region31: #{_forward.5} parent=1 // pred_check_branch
      %236 = sbr.rel (0) target = $region33
    $region32: #{_forward.5} parent=1 // pred_region
      %s238 = ssub.s32 256, 256
      %239 = vsyncadd [#allocation3], %s238
      %s240 = sshll.u32 [#allocation2], 4
      %s241 = int_to_ptr.vmem [resolvable:$true] %s240
      %246 = dma.vmem_to_hbm [thread:$0]  %s241, 256, %s7, [#allocation3], 128, 128, 8
    $region33: #{_forward.5} parent=1 // pred_fallthru
      _
    // Predicated region
    $region34: #{_forward.5} parent=1 // pred_check
      _
    $region35: #{_forward.5} parent=1 // pred_check_branch
      %248 = sbr.rel (0) target = $region37
    $region36: #{_forward.5} parent=1 // pred_region
      %249 = dma.done [#allocation3], 256
    $region37: #{_forward.5} parent=1 // pred_fallthru
      _
    %250 = vsyncpa [#allocation3], 1

// kernel: _forward.3
$region0: #{_forward.3}
  #allocation0 [shape = 'u32[]', space=smem, size = 0x4, offset = 0x4, fixed_abs, tag = 'smem constant byte address 0x4 - core index']
  #allocation1 [shape = 'u32[144,128]{1,0:T(1,128)}', space=vmem, size = 0x12000, scoped, tag = 'internal scratch']
  #allocation2 [shape = 'bf16[8,32]{1,0:T(8,128)(2,1)}', space=vmem, size = 0x800, scoped, tag = 'scratch operand']
  #allocation3 [shape = 'f32[8,8,1]{2,1,0:T(8,128)}', space=vmem, size = 0x8000, scoped, tag = 'scratch operand']
  #allocation4 [shape = 'f32[8,8,1]{2,1,0:T(8,128)}', space=vmem, size = 0x8000, scoped, tag = 'scratch operand']
  #allocation5 [shape = 'f32[8,8,4]{2,1,0:T(8,128)}', space=vmem, size = 0x8000, scoped, tag = 'scratch operand']
  %s0 = inlined_call_operand.vmem [shape: f32[2,8,32], index: 0, kind: input, shape index: {}]
  %s1 = inlined_call_operand.vmem [shape: bf16[2,8,32], index: 1, kind: input, shape index: {}, may-alias: {1,2}]
  %s2 = inlined_call_operand.vmem [shape: bf16[2,8,32], index: 2, kind: input, shape index: {}, may-alias: {1,2}]
  %s3 = inlined_call_operand.vmem [shape: bf16[2,8,32], index: 3, kind: input, shape index: {}]
  %s4 = inlined_call_operand.vmem [shape: bf16[32,32], index: 4, kind: input, shape index: {}]
  %s5 = inlined_call_operand.vmem [shape: bf16[32,32], index: 5, kind: input, shape index: {}]
  %s6 = inlined_call_operand.vmem [shape: bf16[32,32], index: 6, kind: input, shape index: {}]
  %s7 = inlined_call_operand.vmem [shape: bf16[8,4,32], index: 7, kind: input, shape index: {}]
  %s8 = inlined_call_operand.vmem [shape: f32[1,32], index: 8, kind: input, shape index: {}]
  %s9 = inlined_call_operand.vmem [shape: f32[1,32], index: 9, kind: input, shape index: {}]
  %s10 = inlined_call_operand.vmem [shape: f32[1,32], index: 10, kind: input, shape index: {}]
  %s11 = inlined_call_operand.vmem [shape: f32[1,32], index: 11, kind: input, shape index: {}]
  %s12 = inlined_call_operand.vmem [shape: f32[1,32], index: 12, kind: input, shape index: {}]
  %s13 = inlined_call_operand.vmem [shape: f32[1,32], index: 13, kind: input, shape index: {}]
  %s14 = inlined_call_operand.vmem [shape: f32[2,8,32], index: 14, kind: output, shape index: {}]
  %s15 = sld [smem:[#allocation0]]
  $region97: #{_forward.3} parent=0
    _
  %s17 = ssub.s32 1, %s15
  %s18 = scalar_select 0, %s17, %s15
  loop: start=0, step=1, limit=4
  $region2: #{_forward.3} parent=0 // loop_pre_header
    _
  $region3: #{_forward.3} parent=0 // loop_header
    %s20 = sphi 0, %s24
    %p21 = scmp.ge.s32.totalorder %s20, 4
    %s27 = sphi 0, %s46
    %s28 = sphi 0, %s42
    %s29 = sphi 0, %s38
    %s30 = sphi 0, %s27
    %s31 = sphi 0, %s28
    %s32 = sphi 0, %s29
    %s33 = sphi 0, %s30
    %s34 = sphi 0, %s31
    %s35 = sphi 0, %s32
    %s51 = sphi 0, %s53
    %s54 = sphi 0, %s51
    %s55 = sphi 0, %s54
    %s71 = sphi 0, %s55
    %s79 = sphi 0, %s81
    %s82 = sphi 0, %s79
    %s83 = sphi 0, %s82
    %s99 = sphi 0, %s83
    %s107 = sphi 0, %s109
    %s110 = sphi 0, %s107
    %s111 = sphi 0, %s110
    %s127 = sphi 0, %s111
    %s135 = sphi 0, %s137
    %s138 = sphi 0, %s135
    %s139 = sphi 0, %s138
    %s155 = sphi 0, %s139
    %s159 = sphi 0, %s159
    %s161 = sphi 0, %s159
    %s162 = sphi 0, %s161
    %s176 = sphi 0, %s162
    %s180 = sphi 0, %s180
    %s182 = sphi 0, %s180
    %s183 = sphi 0, %s182
    %s197 = sphi 0, %s183
    %s201 = sphi 0, %s201
    %s203 = sphi 0, %s201
    %s204 = sphi 0, %s203
    %s218 = sphi 0, %s204
    %s222 = sphi 0, %s222
    %s224 = sphi 0, %s222
    %s225 = sphi 0, %s224
    %s239 = sphi 0, %s225
    %s243 = sphi 0, %s243
    %s245 = sphi 0, %s243
    %s246 = sphi 0, %s245
    %s260 = sphi 0, %s246
    %s264 = sphi 0, %s264
    %s266 = sphi 0, %s264
    %s267 = sphi 0, %s266
    %s281 = sphi 0, %s267
    %s285 = sphi 0, %s285
    %s287 = sphi 0, %s285
    %s288 = sphi 0, %s287
    %s302 = sphi 0, %s288
    %s306 = sphi 0, %s306
    %s308 = sphi 0, %s306
    %s309 = sphi 0, %s308
    %s323 = sphi 0, %s309
    %s327 = sphi 0, %s327
    %s329 = sphi 0, %s327
    %s330 = sphi 0, %s329
    %s344 = sphi 0, %s330
    %s348 = sphi 0, %s348
    %s350 = sphi 0, %s348
    %s351 = sphi 0, %s350
    %s365 = sphi 0, %s351
    %s373 = sphi 0, %s375
    %s376 = sphi 0, %s373
    %s377 = sphi 0, %s376
    %s393 = sphi 0, %s377
  $region4: #{_forward.3} parent=0 // loop_header_branch
    %23 = sbr.rel (%p21) target = $region8
  $region5: #{_forward.3} parent=0 // loop_body
    %s25 = ssub.s32 %s20, 1
    %s26 = ssub.s32 %s20, 2
    %s36 = sadd.s32 1, %s29
    %p37 = scmp.ge.s32.totalorder %s36, 1
    %s38 = scalar_select %p37, 0, %s36
    %s39 = sadd.s32 1, %s28
    %s40 = scalar_select %p37, %s39, %s28
    %p41 = scmp.ge.s32.totalorder %s40, 1
    %s42 = scalar_select %p41, 0, %s40
    %s43 = sadd.s32 1, %s27
    %s44 = scalar_select %p41, %s43, %s27
    %p45 = scmp.ge.s32.totalorder %s44, 2
    %s46 = scalar_select %p45, 0, %s44
    %s47 = ssub.s32 %s27, %s46
    %s48 = ssub.s32 %s28, %s42
    %s49 = sor.u32 %s47, %s48
    %p50 = scmp.eq.s32.totalorder %s49, 0
    %s52 = sadd.s32 %s51, 1
    %s53 = scalar_select %p50, %s51, %s52
    %p56 = pneg %p50
    %p57 = scmp.eq.s32.totalorder %s20, 1
    %p58 = por %p56, %p57
    %p59 = scmp.ne.s32.totalorder %s51, %s54
    %p60 = scmp.eq.s32.totalorder %s20, 0
    %p61 = por %p59, %p60
    %p62 = scmp.ne.s32.totalorder %s51, %s54
    %p63 = scmp.eq.s32.totalorder %s25, 1
    %p64 = por %p62, %p63
    %p65 = scmp.ne.s32.totalorder %s54, %s55
    %p66 = scmp.eq.s32.totalorder %s25, 0
    %p67 = por %p65, %p66
    %p68 = scmp.ne.s32.totalorder %s54, %s55
    %p69 = scmp.eq.s32.totalorder %s26, 1
    %p70 = por %p68, %p69
    %p72 = scmp.ne.s32.totalorder %s55, %s71
    %p73 = scmp.eq.s32.totalorder %s26, 0
    %p74 = por %p72, %p73
    %s75 = ssub.s32 %s27, %s46
    %s76 = ssub.s32 %s28, %s42
    %s77 = sor.u32 %s75, %s76
    %p78 = scmp.eq.s32.totalorder %s77, 0
    %s80 = sadd.s32 %s79, 1
    %s81 = scalar_select %p78, %s79, %s80
    %p84 = pneg %p78
    %p85 = scmp.eq.s32.totalorder %s20, 1
    %p86 = por %p84, %p85
    %p87 = scmp.ne.s32.totalorder %s79, %s82
    %p88 = scmp.eq.s32.totalorder %s20, 0
    %p89 = por %p87, %p88
    %p90 = scmp.ne.s32.totalorder %s79, %s82
    %p91 = scmp.eq.s32.totalorder %s25, 1
    %p92 = por %p90, %p91
    %p93 = scmp.ne.s32.totalorder %s82, %s83
    %p94 = scmp.eq.s32.totalorder %s25, 0
    %p95 = por %p93, %p94
    %p96 = scmp.ne.s32.totalorder %s82, %s83
    %p97 = scmp.eq.s32.totalorder %s26, 1
    %p98 = por %p96, %p97
    %p100 = scmp.ne.s32.totalorder %s83, %s99
    %p101 = scmp.eq.s32.totalorder %s26, 0
    %p102 = por %p100, %p101
    %s103 = ssub.s32 %s27, %s46
    %s104 = ssub.s32 %s29, %s38
    %s105 = sor.u32 %s103, %s104
    %p106 = scmp.eq.s32.totalorder %s105, 0
    %s108 = sadd.s32 %s107, 1
    %s109 = scalar_select %p106, %s107, %s108
    %p112 = pneg %p106
    %p113 = scmp.eq.s32.totalorder %s20, 1
    %p114 = por %p112, %p113
    %p115 = scmp.ne.s32.totalorder %s107, %s110
    %p116 = scmp.eq.s32.totalorder %s20, 0
    %p117 = por %p115, %p116
    %p118 = scmp.ne.s32.totalorder %s107, %s110
    %p119 = scmp.eq.s32.totalorder %s25, 1
    %p120 = por %p118, %p119
    %p121 = scmp.ne.s32.totalorder %s110, %s111
    %p122 = scmp.eq.s32.totalorder %s25, 0
    %p123 = por %p121, %p122
    %p124 = scmp.ne.s32.totalorder %s110, %s111
    %p125 = scmp.eq.s32.totalorder %s26, 1
    %p126 = por %p124, %p125
    %p128 = scmp.ne.s32.totalorder %s111, %s127
    %p129 = scmp.eq.s32.totalorder %s26, 0
    %p130 = por %p128, %p129
    %s131 = ssub.s32 %s27, %s46
    %s132 = ssub.s32 %s29, %s38
    %s133 = sor.u32 %s131, %s132
    %p134 = scmp.eq.s32.totalorder %s133, 0
    %s136 = sadd.s32 %s135, 1
    %s137 = scalar_select %p134, %s135, %s136
    %p140 = pneg %p134
    %p141 = scmp.eq.s32.totalorder %s20, 1
    %p142 = por %p140, %p141
    %p143 = scmp.ne.s32.totalorder %s135, %s138
    %p144 = scmp.eq.s32.totalorder %s20, 0
    %p145 = por %p143, %p144
    %p146 = scmp.ne.s32.totalorder %s135, %s138
    %p147 = scmp.eq.s32.totalorder %s25, 1
    %p148 = por %p146, %p147
    %p149 = scmp.ne.s32.totalorder %s138, %s139
    %p150 = scmp.eq.s32.totalorder %s25, 0
    %p151 = por %p149, %p150
    %p152 = scmp.ne.s32.totalorder %s138, %s139
    %p153 = scmp.eq.s32.totalorder %s26, 1
    %p154 = por %p152, %p153
    %p156 = scmp.ne.s32.totalorder %s139, %s155
    %p157 = scmp.eq.s32.totalorder %s26, 0
    %p158 = por %p156, %p157
    %s160 = sadd.s32 %s159, 1
    %p163 = scmp.eq.s32.totalorder %s20, 1
    %p164 = scmp.ne.s32.totalorder %s159, %s161
    %p165 = scmp.eq.s32.totalorder %s20, 0
    %p166 = por %p164, %p165
    %p167 = scmp.ne.s32.totalorder %s159, %s161
    %p168 = scmp.eq.s32.totalorder %s25, 1
    %p169 = por %p167, %p168
    %p170 = scmp.ne.s32.totalorder %s161, %s162
    %p171 = scmp.eq.s32.totalorder %s25, 0
    %p172 = por %p170, %p171
    %p173 = scmp.ne.s32.totalorder %s161, %s162
    %p174 = scmp.eq.s32.totalorder %s26, 1
    %p175 = por %p173, %p174
    %p177 = scmp.ne.s32.totalorder %s162, %s176
    %p178 = scmp.eq.s32.totalorder %s26, 0
    %p179 = por %p177, %p178
    %s181 = sadd.s32 %s180, 1
    %p184 = scmp.eq.s32.totalorder %s20, 1
    %p185 = scmp.ne.s32.totalorder %s180, %s182
    %p186 = scmp.eq.s32.totalorder %s20, 0
    %p187 = por %p185, %p186
    %p188 = scmp.ne.s32.totalorder %s180, %s182
    %p189 = scmp.eq.s32.totalorder %s25, 1
    %p190 = por %p188, %p189
    %p191 = scmp.ne.s32.totalorder %s182, %s183
    %p192 = scmp.eq.s32.totalorder %s25, 0
    %p193 = por %p191, %p192
    %p194 = scmp.ne.s32.totalorder %s182, %s183
    %p195 = scmp.eq.s32.totalorder %s26, 1
    %p196 = por %p194, %p195
    %p198 = scmp.ne.s32.totalorder %s183, %s197
    %p199 = scmp.eq.s32.totalorder %s26, 0
    %p200 = por %p198, %p199
    %s202 = sadd.s32 %s201, 1
    %p205 = scmp.eq.s32.totalorder %s20, 1
    %p206 = scmp.ne.s32.totalorder %s201, %s203
    %p207 = scmp.eq.s32.totalorder %s20, 0
    %p208 = por %p206, %p207
    %p209 = scmp.ne.s32.totalorder %s201, %s203
    %p210 = scmp.eq.s32.totalorder %s25, 1
    %p211 = por %p209, %p210
    %p212 = scmp.ne.s32.totalorder %s203, %s204
    %p213 = scmp.eq.s32.totalorder %s25, 0
    %p214 = por %p212, %p213
    %p215 = scmp.ne.s32.totalorder %s203, %s204
    %p216 = scmp.eq.s32.totalorder %s26, 1
    %p217 = por %p215, %p216
    %p219 = scmp.ne.s32.totalorder %s204, %s218
    %p220 = scmp.eq.s32.totalorder %s26, 0
    %p221 = por %p219, %p220
    %s223 = sadd.s32 %s222, 1
    %p226 = scmp.eq.s32.totalorder %s20, 1
    %p227 = scmp.ne.s32.totalorder %s222, %s224
    %p228 = scmp.eq.s32.totalorder %s20, 0
    %p229 = por %p227, %p228
    %p230 = scmp.ne.s32.totalorder %s222, %s224
    %p231 = scmp.eq.s32.totalorder %s25, 1
    %p232 = por %p230, %p231
    %p233 = scmp.ne.s32.totalorder %s224, %s225
    %p234 = scmp.eq.s32.totalorder %s25, 0
    %p235 = por %p233, %p234
    %p236 = scmp.ne.s32.totalorder %s224, %s225
    %p237 = scmp.eq.s32.totalorder %s26, 1
    %p238 = por %p236, %p237
    %p240 = scmp.ne.s32.totalorder %s225, %s239
    %p241 = scmp.eq.s32.totalorder %s26, 0
    %p242 = por %p240, %p241
    %s244 = sadd.s32 %s243, 1
    %p247 = scmp.eq.s32.totalorder %s20, 1
    %p248 = scmp.ne.s32.totalorder %s243, %s245
    %p249 = scmp.eq.s32.totalorder %s20, 0
    %p250 = por %p248, %p249
    %p251 = scmp.ne.s32.totalorder %s243, %s245
    %p252 = scmp.eq.s32.totalorder %s25, 1
    %p253 = por %p251, %p252
    %p254 = scmp.ne.s32.totalorder %s245, %s246
    %p255 = scmp.eq.s32.totalorder %s25, 0
    %p256 = por %p254, %p255
    %p257 = scmp.ne.s32.totalorder %s245, %s246
    %p258 = scmp.eq.s32.totalorder %s26, 1
    %p259 = por %p257, %p258
    %p261 = scmp.ne.s32.totalorder %s246, %s260
    %p262 = scmp.eq.s32.totalorder %s26, 0
    %p263 = por %p261, %p262
    %s265 = sadd.s32 %s264, 1
    %p268 = scmp.eq.s32.totalorder %s20, 1
    %p269 = scmp.ne.s32.totalorder %s264, %s266
    %p270 = scmp.eq.s32.totalorder %s20, 0
    %p271 = por %p269, %p270
    %p272 = scmp.ne.s32.totalorder %s264, %s266
    %p273 = scmp.eq.s32.totalorder %s25, 1
    %p274 = por %p272, %p273
    %p275 = scmp.ne.s32.totalorder %s266, %s267
    %p276 = scmp.eq.s32.totalorder %s25, 0
    %p277 = por %p275, %p276
    %p278 = scmp.ne.s32.totalorder %s266, %s267
    %p279 = scmp.eq.s32.totalorder %s26, 1
    %p280 = por %p278, %p279
    %p282 = scmp.ne.s32.totalorder %s267, %s281
    %p283 = scmp.eq.s32.totalorder %s26, 0
    %p284 = por %p282, %p283
    %s286 = sadd.s32 %s285, 1
    %p289 = scmp.eq.s32.totalorder %s20, 1
    %p290 = scmp.ne.s32.totalorder %s285, %s287
    %p291 = scmp.eq.s32.totalorder %s20, 0
    %p292 = por %p290, %p291
    %p293 = scmp.ne.s32.totalorder %s285, %s287
    %p294 = scmp.eq.s32.totalorder %s25, 1
    %p295 = por %p293, %p294
    %p296 = scmp.ne.s32.totalorder %s287, %s288
    %p297 = scmp.eq.s32.totalorder %s25, 0
    %p298 = por %p296, %p297
    %p299 = scmp.ne.s32.totalorder %s287, %s288
    %p300 = scmp.eq.s32.totalorder %s26, 1
    %p301 = por %p299, %p300
    %p303 = scmp.ne.s32.totalorder %s288, %s302
    %p304 = scmp.eq.s32.totalorder %s26, 0
    %p305 = por %p303, %p304
    %s307 = sadd.s32 %s306, 1
    %p310 = scmp.eq.s32.totalorder %s20, 1
    %p311 = scmp.ne.s32.totalorder %s306, %s308
    %p312 = scmp.eq.s32.totalorder %s20, 0
    %p313 = por %p311, %p312
    %p314 = scmp.ne.s32.totalorder %s306, %s308
    %p315 = scmp.eq.s32.totalorder %s25, 1
    %p316 = por %p314, %p315
    %p317 = scmp.ne.s32.totalorder %s308, %s309
    %p318 = scmp.eq.s32.totalorder %s25, 0
    %p319 = por %p317, %p318
    %p320 = scmp.ne.s32.totalorder %s308, %s309
    %p321 = scmp.eq.s32.totalorder %s26, 1
    %p322 = por %p320, %p321
    %p324 = scmp.ne.s32.totalorder %s309, %s323
    %p325 = scmp.eq.s32.totalorder %s26, 0
    %p326 = por %p324, %p325
    %s328 = sadd.s32 %s327, 1
    %p331 = scmp.eq.s32.totalorder %s20, 1
    %p332 = scmp.ne.s32.totalorder %s327, %s329
    %p333 = scmp.eq.s32.totalorder %s20, 0
    %p334 = por %p332, %p333
    %p335 = scmp.ne.s32.totalorder %s327, %s329
    %p336 = scmp.eq.s32.totalorder %s25, 1
    %p337 = por %p335, %p336
    %p338 = scmp.ne.s32.totalorder %s329, %s330
    %p339 = scmp.eq.s32.totalorder %s25, 0
    %p340 = por %p338, %p339
    %p341 = scmp.ne.s32.totalorder %s329, %s330
    %p342 = scmp.eq.s32.totalorder %s26, 1
    %p343 = por %p341, %p342
    %p345 = scmp.ne.s32.totalorder %s330, %s344
    %p346 = scmp.eq.s32.totalorder %s26, 0
    %p347 = por %p345, %p346
    %s349 = sadd.s32 %s348, 1
    %p352 = scmp.eq.s32.totalorder %s20, 1
    %p353 = scmp.ne.s32.totalorder %s348, %s350
    %p354 = scmp.eq.s32.totalorder %s20, 0
    %p355 = por %p353, %p354
    %p356 = scmp.ne.s32.totalorder %s348, %s350
    %p357 = scmp.eq.s32.totalorder %s25, 1
    %p358 = por %p356, %p357
    %p359 = scmp.ne.s32.totalorder %s350, %s351
    %p360 = scmp.eq.s32.totalorder %s25, 0
    %p361 = por %p359, %p360
    %p362 = scmp.ne.s32.totalorder %s350, %s351
    %p363 = scmp.eq.s32.totalorder %s26, 1
    %p364 = por %p362, %p363
    %p366 = scmp.ne.s32.totalorder %s351, %s365
    %p367 = scmp.eq.s32.totalorder %s26, 0
    %p368 = por %p366, %p367
    %s369 = ssub.s32 %s27, %s46
    %s370 = ssub.s32 %s28, %s42
    %s371 = sor.u32 %s369, %s370
    %p372 = scmp.eq.s32.totalorder %s371, 0
    %s374 = sadd.s32 %s373, 1
    %s375 = scalar_select %p372, %s373, %s374
    %p378 = pneg %p372
    %p379 = scmp.eq.s32.totalorder %s20, 1
    %p380 = por %p378, %p379
    %p381 = scmp.ne.s32.totalorder %s373, %s376
    %p382 = scmp.eq.s32.totalorder %s20, 0
    %p383 = por %p381, %p382
    %p384 = scmp.ne.s32.totalorder %s373, %s376
    %p385 = scmp.eq.s32.totalorder %s25, 1
    %p386 = por %p384, %p385
    %p387 = scmp.ne.s32.totalorder %s376, %s377
    %p388 = scmp.eq.s32.totalorder %s25, 0
    %p389 = por %p387, %p388
    %p390 = scmp.ne.s32.totalorder %s376, %s377
    %p391 = scmp.eq.s32.totalorder %s26, 1
    %p392 = por %p390, %p391
    %p394 = scmp.ne.s32.totalorder %s377, %s393
    %p395 = scmp.eq.s32.totalorder %s26, 0
    %p396 = por %p394, %p395
    %p397 = scmp.le.s32.totalorder 1, %s20
    %p398 = scmp.lt.s32.totalorder %s20, 3
    %p399 = pnand %p397, %p398
    %p400 = pneg %p399
    // Predicated region
    $region9: #{_forward.3} parent=5 // pred_check
      _
    $region10: #{_forward.3} parent=5 // pred_check_branch
      %402 = sbr.rel (%p399) target = $region12
    $region11: #{_forward.3} parent=5 // pred_region
      %s403 = ssub.s32 %s20, 1
      // Predicated region
      $region13: #{_forward.3} parent=11 // pred_check
        %p404 = pneg %p172
      $region14: #{_forward.3} parent=11 // pred_check_branch
        %406 = sbr.rel (%p404) target = $region16
      $region15: #{_forward.3} parent=11 // pred_region
        _
      $region16: #{_forward.3} parent=11 // pred_fallthru
        _
      // Predicated region
      $region17: #{_forward.3} parent=11 // pred_check
        %p407 = pneg %p193
      $region18: #{_forward.3} parent=11 // pred_check_branch
        %409 = sbr.rel (%p407) target = $region20
      $region19: #{_forward.3} parent=11 // pred_region
        _
      $region20: #{_forward.3} parent=11 // pred_fallthru
        _
      // Predicated region
      $region21: #{_forward.3} parent=11 // pred_check
        %p410 = pneg %p214
      $region22: #{_forward.3} parent=11 // pred_check_branch
        %412 = sbr.rel (%p410) target = $region24
      $region23: #{_forward.3} parent=11 // pred_region
        _
      $region24: #{_forward.3} parent=11 // pred_fallthru
        _
      // Predicated region
      $region25: #{_forward.3} parent=11 // pred_check
        %p413 = pneg %p235
      $region26: #{_forward.3} parent=11 // pred_check_branch
        %415 = sbr.rel (%p413) target = $region28
      $region27: #{_forward.3} parent=11 // pred_region
        _
      $region28: #{_forward.3} parent=11 // pred_fallthru
        _
      // Predicated region
      $region29: #{_forward.3} parent=11 // pred_check
        %p416 = pneg %p256
      $region30: #{_forward.3} parent=11 // pred_check_branch
        %418 = sbr.rel (%p416) target = $region32
      $region31: #{_forward.3} parent=11 // pred_region
        _
      $region32: #{_forward.3} parent=11 // pred_fallthru
        _
      // Predicated region
      $region33: #{_forward.3} parent=11 // pred_check
        %p419 = pneg %p277
      $region34: #{_forward.3} parent=11 // pred_check_branch
        %421 = sbr.rel (%p419) target = $region36
      $region35: #{_forward.3} parent=11 // pred_region
        _
      $region36: #{_forward.3} parent=11 // pred_fallthru
        _
      // Predicated region
      $region37: #{_forward.3} parent=11 // pred_check
        %p422 = pneg %p298
      $region38: #{_forward.3} parent=11 // pred_check_branch
        %424 = sbr.rel (%p422) target = $region40
      $region39: #{_forward.3} parent=11 // pred_region
        _
      $region40: #{_forward.3} parent=11 // pred_fallthru
        _
      // Predicated region
      $region41: #{_forward.3} parent=11 // pred_check
        %p425 = pneg %p319
      $region42: #{_forward.3} parent=11 // pred_check_branch
        %427 = sbr.rel (%p425) target = $region44
      $region43: #{_forward.3} parent=11 // pred_region
        _
      $region44: #{_forward.3} parent=11 // pred_fallthru
        _
      // Predicated region
      $region45: #{_forward.3} parent=11 // pred_check
        %p428 = pneg %p340
      $region46: #{_forward.3} parent=11 // pred_check_branch
        %430 = sbr.rel (%p428) target = $region48
      $region47: #{_forward.3} parent=11 // pred_region
        _
      $region48: #{_forward.3} parent=11 // pred_fallthru
        _
      // Predicated region
      $region49: #{_forward.3} parent=11 // pred_check
        %p431 = pneg %p361
      $region50: #{_forward.3} parent=11 // pred_check_branch
        %433 = sbr.rel (%p431) target = $region52
      $region51: #{_forward.3} parent=11 // pred_region
        _
      $region52: #{_forward.3} parent=11 // pred_fallthru
        _
    $region12: #{_forward.3} parent=5 // pred_fallthru
      _
    %p434 = scmp.lt.s32.totalorder %s20, 2
    // Predicated region
    $region53: #{_forward.3} parent=5 // pred_check
      %p435 = pneg %p434
    $region54: #{_forward.3} parent=5 // pred_check_branch
      %437 = sbr.rel (%p435) target = $region56
    $region55: #{_forward.3} parent=5 // pred_region
      // Predicated region
      $region57: #{_forward.3} parent=55 // pred_check
        %p438 = pneg %p61
      $region58: #{_forward.3} parent=55 // pred_check_branch
        %440 = sbr.rel (%p438) target = $region60
      $region59: #{_forward.3} parent=55 // pred_region
        %p441 = scmp.lt.s32.totalorder %s27, 1
        %s442 = scalar_select %p441, %s27, 1
        %p443 = scmp.lt.s32.totalorder %s28, 0
        %s444 = scalar_select %p443, %s28, 0
        %s445 = sadd.s32 %s444, %s442
        %s446 = smul.addr %s445, 8
        %s447 = scalar_lea.vmem %s0, %s446
      $region60: #{_forward.3} parent=55 // pred_fallthru
        _
      // Predicated region
      $region61: #{_forward.3} parent=55 // pred_check
        %p448 = pneg %p89
      $region62: #{_forward.3} parent=55 // pred_check_branch
        %450 = sbr.rel (%p448) target = $region64
      $region63: #{_forward.3} parent=55 // pred_region
        %p451 = scmp.lt.s32.totalorder %s27, 1
        %s452 = scalar_select %p451, %s27, 1
        %p453 = scmp.lt.s32.totalorder %s28, 0
        %s454 = scalar_select %p453, %s28, 0
        %s455 = sadd.s32 %s454, %s452
        %s456 = smul.addr %s455, 4
        %s457 = scalar_lea.vmem %s1, %s456
      $region64: #{_forward.3} parent=55 // pred_fallthru
        _
      // Predicated region
      $region65: #{_forward.3} parent=55 // pred_check
        %p458 = pneg %p117
      $region66: #{_forward.3} parent=55 // pred_check_branch
        %460 = sbr.rel (%p458) target = $region68
      $region67: #{_forward.3} parent=55 // pred_region
        %p461 = scmp.lt.s32.totalorder %s27, 1
        %s462 = scalar_select %p461, %s27, 1
        %p463 = scmp.lt.s32.totalorder %s29, 0
        %s464 = scalar_select %p463, %s29, 0
        %s465 = sadd.s32 %s464, %s462
        %s466 = smul.addr %s465, 4
        %s467 = scalar_lea.vmem %s2, %s466
      $region68: #{_forward.3} parent=55 // pred_fallthru
        _
      // Predicated region
      $region69: #{_forward.3} parent=55 // pred_check
        %p468 = pneg %p145
      $region70: #{_forward.3} parent=55 // pred_check_branch
        %470 = sbr.rel (%p468) target = $region72
      $region71: #{_forward.3} parent=55 // pred_region
        %p471 = scmp.lt.s32.totalorder %s27, 1
        %s472 = scalar_select %p471, %s27, 1
        %p473 = scmp.lt.s32.totalorder %s29, 0
        %s474 = scalar_select %p473, %s29, 0
        %s475 = sadd.s32 %s474, %s472
        %s476 = smul.addr %s475, 4
        %s477 = scalar_lea.vmem %s3, %s476
      $region72: #{_forward.3} parent=55 // pred_fallthru
        _
    $region56: #{_forward.3} parent=5 // pred_fallthru
      _
    %p478 = scmp.le.s32.totalorder 1, %s20
    %p479 = scmp.lt.s32.totalorder %s20, 3
    %p480 = pnand %p478, %p479
    %p481 = pneg %p480
    // Predicated region
    $region73: #{_forward.3} parent=5 // pred_check
      _
    $region74: #{_forward.3} parent=5 // pred_check_branch
      %483 = sbr.rel (%p480) target = $region76
    $region75: #{_forward.3} parent=5 // pred_region
      %s484 = ssub.s32 %s20, 1
      %p485 = scmp.lt.s32.totalorder %s30, 1
      %s486 = scalar_select %p485, %s30, 1
      %p487 = scmp.lt.s32.totalorder %s31, 0
      %s488 = scalar_select %p487, %s31, 0
      %s489 = sadd.s32 %s488, %s486
      %s490 = smul.addr %s489, 8
      %s491 = scalar_lea.vmem %s0, %s490
      %p492 = pneg %p67
      %p493 = pneg %p64
      %p494 = scmp.lt.s32.totalorder %s30, 1
      %s495 = scalar_select %p494, %s30, 1
      %p496 = scmp.lt.s32.totalorder %s31, 0
      %s497 = scalar_select %p496, %s31, 0
      %s498 = sadd.s32 %s497, %s495
      %s499 = smul.addr %s498, 4
      %s500 = scalar_lea.vmem %s1, %s499
      %p501 = pneg %p95
      %p502 = pneg %p92
      %p503 = scmp.lt.s32.totalorder %s30, 1
      %s504 = scalar_select %p503, %s30, 1
      %p505 = scmp.lt.s32.totalorder %s32, 0
      %s506 = scalar_select %p505, %s32, 0
      %s507 = sadd.s32 %s506, %s504
      %s508 = smul.addr %s507, 4
      %s509 = scalar_lea.vmem %s2, %s508
      %p510 = pneg %p123
      %p511 = pneg %p120
      %p512 = scmp.lt.s32.totalorder %s30, 1
      %s513 = scalar_select %p512, %s30, 1
      %p514 = scmp.lt.s32.totalorder %s32, 0
      %s515 = scalar_select %p514, %s32, 0
      %s516 = sadd.s32 %s515, %s513
      %s517 = smul.addr %s516, 4
      %s518 = scalar_lea.vmem %s3, %s517
      %p519 = pneg %p151
      %p520 = pneg %p148
      %p521 = pneg %p172
      %p522 = pneg %p169
      %p523 = pneg %p193
      %p524 = pneg %p190
      %p525 = pneg %p214
      %p526 = pneg %p211
      %p527 = pneg %p235
      %p528 = pneg %p232
      %p529 = pneg %p256
      %p530 = pneg %p253
      %p531 = pneg %p277
      %p532 = pneg %p274
      %p533 = pneg %p298
      %p534 = pneg %p295
      %p535 = pneg %p319
      %p536 = pneg %p316
      %p537 = pneg %p340
      %p538 = pneg %p337
      %p539 = pneg %p361
      %p540 = pneg %p358
      %p541 = pneg %p389
      %p542 = pneg %p386
      %p543 = scmp.lt.s32.totalorder %s30, 1
      %s544 = scalar_select %p543, %s30, 1
      %p545 = scmp.lt.s32.totalorder %s31, 0
      %s546 = scalar_select %p545, %s31, 0
      %s547 = sadd.s32 %s546, %s544
      %s548 = smul.addr %s547, 8
      %s549 = scalar_lea.vmem %s14, %s548
      %p550 = scmp.lt.s32.totalorder %s30, 1
      %s551 = scalar_select %p550, %s30, 1
      %p552 = scmp.lt.s32.totalorder %s31, 0
      %s553 = scalar_select %p552, %s31, 0
      %s554 = sadd.s32 %s553, %s551
      %s555 = smul.addr %s554, 8
      %s556 = scalar_lea.vmem %s0, %s555
      %p557 = scmp.lt.s32.totalorder %s30, 1
      %s558 = scalar_select %p557, %s30, 1
      %p559 = scmp.lt.s32.totalorder %s31, 0
      %s560 = scalar_select %p559, %s31, 0
      %s561 = sadd.s32 %s560, %s558
      %s562 = smul.addr %s561, 4
      %s563 = scalar_lea.vmem %s1, %s562
      %p564 = scmp.lt.s32.totalorder %s30, 1
      %s565 = scalar_select %p564, %s30, 1
      %p566 = scmp.lt.s32.totalorder %s32, 0
      %s567 = scalar_select %p566, %s32, 0
      %s568 = sadd.s32 %s567, %s565
      %s569 = smul.addr %s568, 4
      %s570 = scalar_lea.vmem %s2, %s569
      %p571 = scmp.lt.s32.totalorder %s30, 1
      %s572 = scalar_select %p571, %s30, 1
      %p573 = scmp.lt.s32.totalorder %s32, 0
      %s574 = scalar_select %p573, %s32, 0
      %s575 = sadd.s32 %s574, %s572
      %s576 = smul.addr %s575, 4
      %s577 = scalar_lea.vmem %s3, %s576
      %p578 = scmp.lt.s32.totalorder %s30, 1
      %s579 = scalar_select %p578, %s30, 1
      %p580 = scmp.lt.s32.totalorder %s31, 0
      %s581 = scalar_select %p580, %s31, 0
      %s582 = sadd.s32 %s581, %s579
      %s583 = smul.addr %s582, 8
      %s584 = scalar_lea.vmem %s14, %s583
      %p586 = scmp.eq.s32.totalorder %s32, 0
      // Predicated region
      $region77: #{_forward.3} parent=75 // pred_check
        %p587 = pneg %p586
      $region78: #{_forward.3} parent=75 // pred_check_branch
        %589 = sbr.rel (%p587) target = $region80
      $region79: #{_forward.3} parent=75 // pred_region
        %v590 = vld [vmem:[%s563] sm:$0xf]
        %v591 = vld [vmem:[%s4] sm:$0xf]
        %v592 = vld [vmem:[%s4 + $0x4] sm:$0xf]
        %v593 = vld [vmem:[%s4 + $0x8] sm:$0xf]
        %v594 = vld [vmem:[%s4 + $0xc] sm:$0xf]
        %v595 = vld [vmem:[%s8] sm:$0x1]
        %v597 = vlaneseq
        %v598 = vshrl.u32 %v597, 7
        %v599 = vsub.s32 0, %v598
        %v600 = vrot.slane %v595, %v599
        %v606 = vunpack.c.l.b16 %v591
        %v607 = vunpack.c.l.b16 %v592
        %v608 = vunpack.c.l.b16 %v593
        %v609 = vunpack.c.l.b16 %v594
        %v610 = vpack.c.b16 %v607, %v606
        %v611 = vpack.c.b16 %v609, %v608
        %vm614 = vcmask 261120
        %v616 = vsel %vm614, %v590, 0
        %618 = vmatprep.subr.bf16.mxu0 0
        %619 = vmatpush1.bf16.msra.mxu0 %v610
        %620 = vmatprep.subr.bf16.mxu0 0
        %621 = vmatpush1.bf16.msra.mxu0 %v611
        %622 = vmatprep.subr.bf16.mxu0 0
        %623 = vmatpush1.bf16.msra.mxu0 0
        %624 = vmatprep.subr.bf16.mxu0 0
        %625 = vmatpush1.bf16.msra.mxu0 0
        %626 = vmatprep.subr.bf16.mxu0 0
        %627 = vmatpush1.bf16.msra.mxu0 0
        %628 = vmatprep.subr.bf16.mxu0 0
        %629 = vmatpush1.bf16.msra.mxu0 0
        %630 = vmatprep.subr.bf16.mxu0 0
        %631 = vmatpush1.bf16.msra.mxu0 0
        %632 = vmatprep.subr.bf16.mxu0 0
        %633 = vmatpush1.bf16.msra.mxu0 0
        %634 = vmatprep.subr.bf16.mxu0 0
        %635 = vmatpush1.bf16.msra.mxu0 0
        %636 = vmatprep.subr.bf16.mxu0 0
        %637 = vmatpush1.bf16.msra.mxu0 0
        %638 = vmatprep.subr.bf16.mxu0 0
        %639 = vmatpush1.bf16.msra.mxu0 0
        %640 = vmatprep.subr.bf16.mxu0 0
        %641 = vmatpush1.bf16.msra.mxu0 0
        %642 = vmatprep.subr.bf16.mxu0 0
        %643 = vmatpush1.bf16.msra.mxu0 0
        %644 = vmatprep.subr.bf16.mxu0 0
        %645 = vmatpush1.bf16.msra.mxu0 0
        %646 = vmatprep.subr.bf16.mxu0 0
        %647 = vmatpush1.bf16.msra.mxu0 0
        %648 = vmatprep.subr.bf16.mxu0 0
        %649 = vmatpush1.bf16.msra.mxu0 0
        %650 = vmatprep.mubr.bf16.mxu0 0
        %651 = vmatmul.mubr.bf16.gmra.mrb[0].mxu0 %v616
        %v652 = vpop.f32.mrb[0].mxu0
        %v653 = vadd.f32 %v600, %v652
        %v654 = vpop.f32.mrb[0].mxu0
        %v655 = vpop.f32.mrb[0].mxu0
        %v656 = vpop.f32.mrb[0].mxu0
        %657 = vdwg.mxu0
        %v658 = vpack.c.bf16 %v653, %v653
        %vm659 = vcmask 257024
        %660 = vst.msk [vmem:[#allocation2] sm:$0xf] %vm659, %v658
        %vm661 = vcmask 7168
        %662 = vst.msk [vmem:[#allocation3] sm:$0xff] %vm661, -inf
        %663 = vst.msk [vmem:[#allocation3 + $0x8] sm:$0xff] %vm661, -inf
        %664 = vst.msk [vmem:[#allocation3 + $0x10] sm:$0xff] %vm661, -inf
        %665 = vst.msk [vmem:[#allocation3 + $0x18] sm:$0xff] %vm661, -inf
        %666 = vst.msk [vmem:[#allocation3 + $0x20] sm:$0xff] %vm661, -inf
        %667 = vst.msk [vmem:[#allocation3 + $0x28] sm:$0xff] %vm661, -inf
        %668 = vst.msk [vmem:[#allocation3 + $0x30] sm:$0xff] %vm661, -inf
        %669 = vst.msk [vmem:[#allocation3 + $0x38] sm:$0xff] %vm661, -inf
        %670 = vst.msk [vmem:[#allocation4] sm:$0xff] %vm661, 0.0
        %671 = vst.msk [vmem:[#allocation4 + $0x8] sm:$0xff] %vm661, 0.0
        %672 = vst.msk [vmem:[#allocation4 + $0x10] sm:$0xff] %vm661, 0.0
        %673 = vst.msk [vmem:[#allocation4 + $0x18] sm:$0xff] %vm661, 0.0
        %674 = vst.msk [vmem:[#allocation4 + $0x20] sm:$0xff] %vm661, 0.0
        %675 = vst.msk [vmem:[#allocation4 + $0x28] sm:$0xff] %vm661, 0.0
        %676 = vst.msk [vmem:[#allocation4 + $0x30] sm:$0xff] %vm661, 0.0
        %677 = vst.msk [vmem:[#allocation4 + $0x38] sm:$0xff] %vm661, 0.0
        %vm678 = vcmask 31744
        %679 = vst.msk [vmem:[#allocation5] sm:$0xff] %vm678, 0.0
        %680 = vst.msk [vmem:[#allocation5 + $0x8] sm:$0xff] %vm678, 0.0
        %681 = vst.msk [vmem:[#allocation5 + $0x10] sm:$0xff] %vm678, 0.0
        %682 = vst.msk [vmem:[#allocation5 + $0x18] sm:$0xff] %vm678, 0.0
        %683 = vst.msk [vmem:[#allocation5 + $0x20] sm:$0xff] %vm678, 0.0
        %684 = vst.msk [vmem:[#allocation5 + $0x28] sm:$0xff] %vm678, 0.0
        %685 = vst.msk [vmem:[#allocation5 + $0x30] sm:$0xff] %vm678, 0.0
        %686 = vst.msk [vmem:[#allocation5 + $0x38] sm:$0xff] %vm678, 0.0
      $region80: #{_forward.3} parent=75 // pred_fallthru
        _
      %v687 = vld [vmem:[%s570] sm:$0xf]
      %v688 = vld [vmem:[%s5] sm:$0xf]
      %v689 = vld [vmem:[%s5 + $0x4] sm:$0xf]
      %v690 = vld [vmem:[%s5 + $0x8] sm:$0xf]
      %v691 = vld [vmem:[%s5 + $0xc] sm:$0xf]
      %v692 = vld [vmem:[%s9] sm:$0x1]
      %v694 = vlaneseq
      %v695 = vshrl.u32 %v694, 7
      %v696 = vsub.s32 0, %v695
      %v697 = vrot.slane %v692, %v696
      %v703 = vunpack.c.l.b16 %v688
      %v704 = vunpack.c.l.b16 %v689
      %v705 = vunpack.c.l.b16 %v690
      %v706 = vunpack.c.l.b16 %v691
      %v707 = vpack.c.b16 %v704, %v703
      %v708 = vpack.c.b16 %v706, %v705
      %vm711 = vcmask 261120
      %v713 = vsel %vm711, %v687, 0
      %715 = vmatprep.subr.bf16.mxu0 0
      %716 = vmatpush1.bf16.msra.mxu0 %v707
      %717 = vmatprep.subr.bf16.mxu0 0
      %718 = vmatpush1.bf16.msra.mxu0 %v708
      %719 = vmatprep.subr.bf16.mxu0 0
      %720 = vmatpush1.bf16.msra.mxu0 0
      %721 = vmatprep.subr.bf16.mxu0 0
      %722 = vmatpush1.bf16.msra.mxu0 0
      %723 = vmatprep.subr.bf16.mxu0 0
      %724 = vmatpush1.bf16.msra.mxu0 0
      %725 = vmatprep.subr.bf16.mxu0 0
      %726 = vmatpush1.bf16.msra.mxu0 0
      %727 = vmatprep.subr.bf16.mxu0 0
      %728 = vmatpush1.bf16.msra.mxu0 0
      %729 = vmatprep.subr.bf16.mxu0 0
      %730 = vmatpush1.bf16.msra.mxu0 0
      %731 = vmatprep.subr.bf16.mxu0 0
      %732 = vmatpush1.bf16.msra.mxu0 0
      %733 = vmatprep.subr.bf16.mxu0 0
      %734 = vmatpush1.bf16.msra.mxu0 0
      %735 = vmatprep.subr.bf16.mxu0 0
      %736 = vmatpush1.bf16.msra.mxu0 0
      %737 = vmatprep.subr.bf16.mxu0 0
      %738 = vmatpush1.bf16.msra.mxu0 0
      %739 = vmatprep.subr.bf16.mxu0 0
      %740 = vmatpush1.bf16.msra.mxu0 0
      %741 = vmatprep.subr.bf16.mxu0 0
      %742 = vmatpush1.bf16.msra.mxu0 0
      %743 = vmatprep.subr.bf16.mxu0 0
      %744 = vmatpush1.bf16.msra.mxu0 0
      %745 = vmatprep.subr.bf16.mxu0 0
      %746 = vmatpush1.bf16.msra.mxu0 0
      %747 = vmatprep.mubr.bf16.mxu0 0
      %748 = vmatmul.mubr.bf16.gmra.mrb[0].mxu0 %v713
      %v749 = vpop.f32.mrb[0].mxu0
      %v750 = vadd.f32 %v697, %v749
      %v751 = vpop.f32.mrb[0].mxu0
      %v752 = vpop.f32.mrb[0].mxu0
      %v753 = vpop.f32.mrb[0].mxu0
      %754 = vdwg.mxu0
      %v755 = vpack.c.bf16 %v750, %v750
      %v756 = vld [vmem:[%s577] sm:$0xf]
      %v757 = vld [vmem:[%s6] sm:$0xf]
      %v758 = vld [vmem:[%s6 + $0x4] sm:$0xf]
      %v759 = vld [vmem:[%s6 + $0x8] sm:$0xf]
      %v760 = vld [vmem:[%s6 + $0xc] sm:$0xf]
      %v761 = vld [vmem:[%s10] sm:$0x1]
      %v763 = vlaneseq
      %v764 = vshrl.u32 %v763, 7
      %v765 = vsub.s32 0, %v764
      %v766 = vrot.slane %v761, %v765
      %v772 = vunpack.c.l.b16 %v757
      %v773 = vunpack.c.l.b16 %v758
      %v774 = vunpack.c.l.b16 %v759
      %v775 = vunpack.c.l.b16 %v760
      %v776 = vpack.c.b16 %v773, %v772
      %v777 = vpack.c.b16 %v775, %v774
      %v781 = vsel %vm711, %v756, 0
      %783 = vmatprep.subr.bf16.mxu0 0
      %784 = vmatpush1.bf16.msra.mxu0 %v776
      %785 = vmatprep.subr.bf16.mxu0 0
      %786 = vmatpush1.bf16.msra.mxu0 %v777
      %787 = vmatprep.subr.bf16.mxu0 0
      %788 = vmatpush1.bf16.msra.mxu0 0
      %789 = vmatprep.subr.bf16.mxu0 0
      %790 = vmatpush1.bf16.msra.mxu0 0
      %791 = vmatprep.subr.bf16.mxu0 0
      %792 = vmatpush1.bf16.msra.mxu0 0
      %793 = vmatprep.subr.bf16.mxu0 0
      %794 = vmatpush1.bf16.msra.mxu0 0
      %795 = vmatprep.subr.bf16.mxu0 0
      %796 = vmatpush1.bf16.msra.mxu0 0
      %797 = vmatprep.subr.bf16.mxu0 0
      %798 = vmatpush1.bf16.msra.mxu0 0
      %799 = vmatprep.subr.bf16.mxu0 0
      %800 = vmatpush1.bf16.msra.mxu0 0
      %801 = vmatprep.subr.bf16.mxu0 0
      %802 = vmatpush1.bf16.msra.mxu0 0
      %803 = vmatprep.subr.bf16.mxu0 0
      %804 = vmatpush1.bf16.msra.mxu0 0
      %805 = vmatprep.subr.bf16.mxu0 0
      %806 = vmatpush1.bf16.msra.mxu0 0
      %807 = vmatprep.subr.bf16.mxu0 0
      %808 = vmatpush1.bf16.msra.mxu0 0
      %809 = vmatprep.subr.bf16.mxu0 0
      %810 = vmatpush1.bf16.msra.mxu0 0
      %811 = vmatprep.subr.bf16.mxu0 0
      %812 = vmatpush1.bf16.msra.mxu0 0
      %813 = vmatprep.subr.bf16.mxu0 0
      %814 = vmatpush1.bf16.msra.mxu0 0
      %815 = vmatprep.mubr.bf16.mxu0 0
      %816 = vmatmul.mubr.bf16.gmra.mrb[0].mxu0 %v781
      %v817 = vpop.f32.mrb[0].mxu0
      %v818 = vadd.f32 %v766, %v817
      %v819 = vpop.f32.mrb[0].mxu0
      %v820 = vpop.f32.mrb[0].mxu0
      %v821 = vpop.f32.mrb[0].mxu0
      %822 = vdwg.mxu0
      %v823 = vpack.c.bf16 %v818, %v818
      %v824 = vld [vmem:[#allocation2] sm:$0xf]
      %vm825 = vcmask 31744
      %v827 = vsel %vm825, %v824, 0
      %v830 = vsel %vm825, %v755, 0
      %832 = vmatprep.subr.bf16.mxu0 0
      %833 = vmatpush1.bf16.xpose.msra.mxu0 %v830
      %834 = vmatprep.subr.bf16.mxu0 0
      %835 = vmatpush1.bf16.xpose.msra.mxu0 0
      %836 = vmatprep.subr.bf16.mxu0 0
      %837 = vmatpush1.bf16.xpose.msra.mxu0 0
      %838 = vmatprep.subr.bf16.mxu0 0
      %839 = vmatpush1.bf16.xpose.msra.mxu0 0
      %840 = vmatprep.subr.bf16.mxu0 0
      %841 = vmatpush1.bf16.xpose.msra.mxu0 0
      %842 = vmatprep.subr.bf16.mxu0 0
      %843 = vmatpush1.bf16.xpose.msra.mxu0 0
      %844 = vmatprep.subr.bf16.mxu0 0
      %845 = vmatpush1.bf16.xpose.msra.mxu0 0
      %846 = vmatprep.subr.bf16.mxu0 0
      %847 = vmatpush1.bf16.xpose.msra.mxu0 0
      %848 = vmatprep.subr.bf16.mxu0 0
      %849 = vmatpush1.bf16.xpose.msra.mxu0 0
      %850 = vmatprep.subr.bf16.mxu0 0
      %851 = vmatpush1.bf16.xpose.msra.mxu0 0
      %852 = vmatprep.subr.bf16.mxu0 0
      %853 = vmatpush1.bf16.xpose.msra.mxu0 0
      %854 = vmatprep.subr.bf16.mxu0 0
      %855 = vmatpush1.bf16.xpose.msra.mxu0 0
      %856 = vmatprep.subr.bf16.mxu0 0
      %857 = vmatpush1.bf16.xpose.msra.mxu0 0
      %858 = vmatprep.subr.bf16.mxu0 0
      %859 = vmatpush1.bf16.xpose.msra.mxu0 0
      %860 = vmatprep.subr.bf16.mxu0 0
      %861 = vmatpush1.bf16.xpose.msra.mxu0 0
      %862 = vmatprep.subr.bf16.mxu0 0
      %863 = vmatpush1.bf16.xpose.msra.mxu0 0
      %864 = vmatprep.mubr.bf16.mxu0 0
      %865 = vmatmul.mubr.bf16.gmra.mrb[0].mxu0 %v827
      %v866 = vpop.f32.mrb[0].mxu0
      %v867 = vadd.f32 0.0, %v866
      %v868 = vpop.f32.mrb[0].mxu0
      %v869 = vpop.f32.mrb[0].mxu0
      %v870 = vpop.f32.mrb[0].mxu0
      %871 = vdwg.mxu0
      %v872 = vld [vmem:[#allocation3] sm:$0xff]
      %vm873 = vcmask 64512
      %v874 = vsel %vm873, %v867, -inf
      %875 = vmax.xlane.f32.xlu0 %v874
      %v876 = vpop.xlane.xlu0 %875
      %v877 = vmax.f32 %v872, %v876
      %v878 = vsub.f32 %v872, %v877
      %v879 = vmul.f32 %v878, 1.442695
      %v880 = vpow.pop %v879
      %882 = vset.pattern.permute.xlu0 0
      %883 = vperm.xlu0 %882, %v877
      %v884 = vpop.permute.xlu0 %883
      %v886 = vsub.f32 %v867, %v884
      %v887 = vmul.f32 %v886, 1.442695
      %v888 = vpow.pop %v887
      %v889 = vld [vmem:[#allocation4] sm:$0xff]
      %v890 = vmul.f32 %v880, %v889
      %v891 = vsel %vm873, %v888, 0.0
      %892 = vadd.xlane.f32.xlu0 %v891
      %v893 = vpop.xlane.xlu0 %892
      %v894 = vadd.f32 %v890, %v893
      %vm895 = vcmask 7168
      %896 = vst.msk [vmem:[#allocation4] sm:$0xff] %vm895, %v894
      %v897 = vld [vmem:[#allocation5] sm:$0xff]
      %899 = vset.pattern.permute.xlu0 0
      %900 = vperm.xlu0 %899, %v880
      %v901 = vpop.permute.xlu0 %900
      %v903 = vmul.f32 %v901, %v897
      %v904 = vpack.c.bf16 %v888, %v888
      %v906 = vsel %vm873, %v904, 0
      %vm908 = vcmask 1043456
      %v910 = vsel %vm908, %v823, 0
      %912 = vmatprep.subr.bf16.mxu0 0
      %913 = vmatpush1.bf16.msra.mxu0 %v910
      %914 = vmatprep.subr.bf16.mxu0 0
      %915 = vmatpush1.bf16.msra.mxu0 0
      %916 = vmatprep.subr.bf16.mxu0 0
      %917 = vmatpush1.bf16.msra.mxu0 0
      %918 = vmatprep.subr.bf16.mxu0 0
      %919 = vmatpush1.bf16.msra.mxu0 0
      %920 = vmatprep.subr.bf16.mxu0 0
      %921 = vmatpush1.bf16.msra.mxu0 0
      %922 = vmatprep.subr.bf16.mxu0 0
      %923 = vmatpush1.bf16.msra.mxu0 0
      %924 = vmatprep.subr.bf16.mxu0 0
      %925 = vmatpush1.bf16.msra.mxu0 0
      %926 = vmatprep.subr.bf16.mxu0 0
      %927 = vmatpush1.bf16.msra.mxu0 0
      %928 = vmatprep.subr.bf16.mxu0 0
      %929 = vmatpush1.bf16.msra.mxu0 0
      %930 = vmatprep.subr.bf16.mxu0 0
      %931 = vmatpush1.bf16.msra.mxu0 0
      %932 = vmatprep.subr.bf16.mxu0 0
      %933 = vmatpush1.bf16.msra.mxu0 0
      %934 = vmatprep.subr.bf16.mxu0 0
      %935 = vmatpush1.bf16.msra.mxu0 0
      %936 = vmatprep.subr.bf16.mxu0 0
      %937 = vmatpush1.bf16.msra.mxu0 0
      %938 = vmatprep.subr.bf16.mxu0 0
      %939 = vmatpush1.bf16.msra.mxu0 0
      %940 = vmatprep.subr.bf16.mxu0 0
      %941 = vmatpush1.bf16.msra.mxu0 0
      %942 = vmatprep.subr.bf16.mxu0 0
      %943 = vmatpush1.bf16.msra.mxu0 0
      %944 = vmatprep.mubr.bf16.mxu0 0
      %945 = vmatmul.mubr.bf16.gmra.mrb[0].mxu0 %v906
      %v946 = vpop.f32.mrb[0].mxu0
      %v947 = vadd.f32 0.0, %v946
      %v948 = vpop.f32.mrb[0].mxu0
      %v949 = vpop.f32.mrb[0].mxu0
      %v950 = vpop.f32.mrb[0].mxu0
      %951 = vdwg.mxu0
      %v952 = vadd.f32 %v903, %v947
      %953 = vst.msk [vmem:[#allocation5] sm:$0xff] %vm825, %v952
      %954 = vst.msk [vmem:[#allocation3] sm:$0xff] %vm895, %v877
      %v956 = vunpack.c.l.b16 %v824
      %v957 = vpack.c.b16 %v956, %v956
      %958 = vrot.lane.b32.xlu0 %v957, 124
      %v959 = vpop.permute.xlu0 %958
      %961 = vrot.lane.b32.xlu0 %v755, 124
      %v962 = vpop.permute.xlu0 %961
      %v964 = vsel %vm825, %v959, 0
      %v967 = vsel %vm825, %v962, 0
      %969 = vmatprep.subr.bf16.mxu0 0
      %970 = vmatpush1.bf16.xpose.msra.mxu0 %v967
      %971 = vmatprep.subr.bf16.mxu0 0
      %972 = vmatpush1.bf16.xpose.msra.mxu0 0
      %973 = vmatprep.subr.bf16.mxu0 0
      %974 = vmatpush1.bf16.xpose.msra.mxu0 0
      %975 = vmatprep.subr.bf16.mxu0 0
      %976 = vmatpush1.bf16.xpose.msra.mxu0 0
      %977 = vmatprep.subr.bf16.mxu0 0
      %978 = vmatpush1.bf16.xpose.msra.mxu0 0
      %979 = vmatprep.subr.bf16.mxu0 0
      %980 = vmatpush1.bf16.xpose.msra.mxu0 0
      %981 = vmatprep.subr.bf16.mxu0 0
      %982 = vmatpush1.bf16.xpose.msra.mxu0 0
      %983 = vmatprep.subr.bf16.mxu0 0
      %984 = vmatpush1.bf16.xpose.msra.mxu0 0
      %985 = vmatprep.subr.bf16.mxu0 0
      %986 = vmatpush1.bf16.xpose.msra.mxu0 0
      %987 = vmatprep.subr.bf16.mxu0 0
      %988 = vmatpush1.bf16.xpose.msra.mxu0 0
      %989 = vmatprep.subr.bf16.mxu0 0
      %990 = vmatpush1.bf16.xpose.msra.mxu0 0
      %991 = vmatprep.subr.bf16.mxu0 0
      %992 = vmatpush1.bf16.xpose.msra.mxu0 0
      %993 = vmatprep.subr.bf16.mxu0 0
      %994 = vmatpush1.bf16.xpose.msra.mxu0 0
      %995 = vmatprep.subr.bf16.mxu0 0
      %996 = vmatpush1.bf16.xpose.msra.mxu0 0
      %997 = vmatprep.subr.bf16.mxu0 0
      %998 = vmatpush1.bf16.xpose.msra.mxu0 0
      %999 = vmatprep.subr.bf16.mxu0 0
      %1000 = vmatpush1.bf16.xpose.msra.mxu0 0
      %1001 = vmatprep.mubr.bf16.mxu0 0
      %1002 = vmatmul.mubr.bf16.gmra.mrb[0].mxu0 %v964
      %v1003 = vpop.f32.mrb[0].mxu0
      %v1004 = vadd.f32 0.0, %v1003
      %v1005 = vpop.f32.mrb[0].mxu0
      %v1006 = vpop.f32.mrb[0].mxu0
      %v1007 = vpop.f32.mrb[0].mxu0
      %1008 = vdwg.mxu0
      %s1009 = scalar_lea.vmem [#allocation3], 8
      %v1010 = vld [vmem:[%s1009] sm:$0xff]
      %v1011 = vsel %vm873, %v1004, -inf
      %1012 = vmax.xlane.f32.xlu0 %v1011
      %v1013 = vpop.xlane.xlu0 %1012
      %v1014 = vmax.f32 %v1010, %v1013
      %v1015 = vsub.f32 %v1010, %v1014
      %v1016 = vmul.f32 %v1015, 1.442695
      %v1017 = vpow.pop %v1016
      %1019 = vset.pattern.permute.xlu0 0
      %1020 = vperm.xlu0 %1019, %v1014
      %v1021 = vpop.permute.xlu0 %1020
      %v1023 = vsub.f32 %v1004, %v1021
      %v1024 = vmul.f32 %v1023, 1.442695
      %v1025 = vpow.pop %v1024
      %s1026 = scalar_lea.vmem [#allocation4], 8
      %v1027 = vld [vmem:[%s1026] sm:$0xff]
      %v1028 = vmul.f32 %v1017, %v1027
      %v1029 = vsel %vm873, %v1025, 0.0
      %1030 = vadd.xlane.f32.xlu0 %v1029
      %v1031 = vpop.xlane.xlu0 %1030
      %v1032 = vadd.f32 %v1028, %v1031
      %1033 = vst.msk [vmem:[%s1026] sm:$0xff] %vm895, %v1032
      %s1034 = scalar_lea.vmem [#allocation5], 8
      %v1035 = vld [vmem:[%s1034] sm:$0xff]
      %1037 = vset.pattern.permute.xlu0 0
      %1038 = vperm.xlu0 %1037, %v1017
      %v1039 = vpop.permute.xlu0 %1038
      %v1041 = vmul.f32 %v1039, %v1035
      %v1042 = vpack.c.bf16 %v1025, %v1025
      %1044 = vrot.lane.b32.xlu0 %v823, 124
      %v1045 = vpop.permute.xlu0 %1044
      %v1047 = vsel %vm873, %v1042, 0
      %v1050 = vsel %vm908, %v1045, 0
      %1052 = vmatprep.subr.bf16.mxu0 0
      %1053 = vmatpush1.bf16.msra.mxu0 %v1050
      %1054 = vmatprep.subr.bf16.mxu0 0
      %1055 = vmatpush1.bf16.msra.mxu0 0
      %1056 = vmatprep.subr.bf16.mxu0 0
      %1057 = vmatpush1.bf16.msra.mxu0 0
      %1058 = vmatprep.subr.bf16.mxu0 0
      %1059 = vmatpush1.bf16.msra.mxu0 0
      %1060 = vmatprep.subr.bf16.mxu0 0
      %1061 = vmatpush1.bf16.msra.mxu0 0
      %1062 = vmatprep.subr.bf16.mxu0 0
      %1063 = vmatpush1.bf16.msra.mxu0 0
      %1064 = vmatprep.subr.bf16.mxu0 0
      %1065 = vmatpush1.bf16.msra.mxu0 0
      %1066 = vmatprep.subr.bf16.mxu0 0
      %1067 = vmatpush1.bf16.msra.mxu0 0
      %1068 = vmatprep.subr.bf16.mxu0 0
      %1069 = vmatpush1.bf16.msra.mxu0 0
      %1070 = vmatprep.subr.bf16.mxu0 0
      %1071 = vmatpush1.bf16.msra.mxu0 0
      %1072 = vmatprep.subr.bf16.mxu0 0
      %1073 = vmatpush1.bf16.msra.mxu0 0
      %1074 = vmatprep.subr.bf16.mxu0 0
      %1075 = vmatpush1.bf16.msra.mxu0 0
      %1076 = vmatprep.subr.bf16.mxu0 0
      %1077 = vmatpush1.bf16.msra.mxu0 0
      %1078 = vmatprep.subr.bf16.mxu0 0
      %1079 = vmatpush1.bf16.msra.mxu0 0
      %1080 = vmatprep.subr.bf16.mxu0 0
      %1081 = vmatpush1.bf16.msra.mxu0 0
      %1082 = vmatprep.subr.bf16.mxu0 0
      %1083 = vmatpush1.bf16.msra.mxu0 0
      %1084 = vmatprep.mubr.bf16.mxu0 0
      %1085 = vmatmul.mubr.bf16.gmra.mrb[0].mxu0 %v1047
      %v1086 = vpop.f32.mrb[0].mxu0
      %v1087 = vadd.f32 0.0, %v1086
      %v1088 = vpop.f32.mrb[0].mxu0
      %v1089 = vpop.f32.mrb[0].mxu0
      %v1090 = vpop.f32.mrb[0].mxu0
      %1091 = vdwg.mxu0
      %v1092 = vadd.f32 %v1041, %v1087
      %1093 = vst.msk [vmem:[%s1034] sm:$0xff] %vm825, %v1092
      %1094 = vst.msk [vmem:[%s1009] sm:$0xff] %vm895, %v1014
      %1095 = vrot.lane.b32.xlu0 %v957, 120
      %v1096 = vpop.permute.xlu0 %1095
      %1097 = vrot.lane.b32.xlu0 %v755, 120
      %v1098 = vpop.permute.xlu0 %1097
      %v1100 = vsel %vm825, %v1096, 0
      %v1103 = vsel %vm825, %v1098, 0
      %1105 = vmatprep.subr.bf16.mxu0 0
      %1106 = vmatpush1.bf16.xpose.msra.mxu0 %v1103
      %1107 = vmatprep.subr.bf16.mxu0 0
      %1108 = vmatpush1.bf16.xpose.msra.mxu0 0
      %1109 = vmatprep.subr.bf16.mxu0 0
      %1110 = vmatpush1.bf16.xpose.msra.mxu0 0
      %1111 = vmatprep.subr.bf16.mxu0 0
      %1112 = vmatpush1.bf16.xpose.msra.mxu0 0
      %1113 = vmatprep.subr.bf16.mxu0 0
      %1114 = vmatpush1.bf16.xpose.msra.mxu0 0
      %1115 = vmatprep.subr.bf16.mxu0 0
      %1116 = vmatpush1.bf16.xpose.msra.mxu0 0
      %1117 = vmatprep.subr.bf16.mxu0 0
      %1118 = vmatpush1.bf16.xpose.msra.mxu0 0
      %1119 = vmatprep.subr.bf16.mxu0 0
      %1120 = vmatpush1.bf16.xpose.msra.mxu0 0
      %1121 = vmatprep.subr.bf16.mxu0 0
      %1122 = vmatpush1.bf16.xpose.msra.mxu0 0
      %1123 = vmatprep.subr.bf16.mxu0 0
      %1124 = vmatpush1.bf16.xpose.msra.mxu0 0
      %1125 = vmatprep.subr.bf16.mxu0 0
      %1126 = vmatpush1.bf16.xpose.msra.mxu0 0
      %1127 = vmatprep.subr.bf16.mxu0 0
      %1128 = vmatpush1.bf16.xpose.msra.mxu0 0
      %1129 = vmatprep.subr.bf16.mxu0 0
      %1130 = vmatpush1.bf16.xpose.msra.mxu0 0
      %1131 = vmatprep.subr.bf16.mxu0 0
      %1132 = vmatpush1.bf16.xpose.msra.mxu0 0
      %1133 = vmatprep.subr.bf16.mxu0 0
      %1134 = vmatpush1.bf16.xpose.msra.mxu0 0
      %1135 = vmatprep.subr.bf16.mxu0 0
      %1136 = vmatpush1.bf16.xpose.msra.mxu0 0
      %1137 = vmatprep.mubr.bf16.mxu0 0
      %1138 = vmatmul.mubr.bf16.gmra.mrb[0].mxu0 %v1100
      %v1139 = vpop.f32.mrb[0].mxu0
      %v1140 = vadd.f32 0.0, %v1139
      %v1141 = vpop.f32.mrb[0].mxu0
      %v1142 = vpop.f32.mrb[0].mxu0
      %v1143 = vpop.f32.mrb[0].mxu0
      %1144 = vdwg.mxu0
      %s1145 = scalar_lea.vmem [#allocation3], 16
      %v1146 = vld [vmem:[%s1145] sm:$0xff]
      %v1147 = vsel %vm873, %v1140, -inf
      %1148 = vmax.xlane.f32.xlu0 %v1147
      %v1149 = vpop.xlane.xlu0 %1148
      %v1150 = vmax.f32 %v1146, %v1149
      %v1151 = vsub.f32 %v1146, %v1150
      %v1152 = vmul.f32 %v1151, 1.442695
      %v1153 = vpow.pop %v1152
      %1155 = vset.pattern.permute.xlu0 0
      %1156 = vperm.xlu0 %1155, %v1150
      %v1157 = vpop.permute.xlu0 %1156
      %v1159 = vsub.f32 %v1140, %v1157
      %v1160 = vmul.f32 %v1159, 1.442695
      %v1161 = vpow.pop %v1160
      %s1162 = scalar_lea.vmem [#allocation4], 16
      %v1163 = vld [vmem:[%s1162] sm:$0xff]
      %v1164 = vmul.f32 %v1153, %v1163
      %v1165 = vsel %vm873, %v1161, 0.0
      %1166 = vadd.xlane.f32.xlu0 %v1165
      %v1167 = vpop.xlane.xlu0 %1166
      %v1168 = vadd.f32 %v1164, %v1167
      %1169 = vst.msk [vmem:[%s1162] sm:$0xff] %vm895, %v1168
      %s1170 = scalar_lea.vmem [#allocation5], 16
      %v1171 = vld [vmem:[%s1170] sm:$0xff]
      %1173 = vset.pattern.permute.xlu0 0
      %1174 = vperm.xlu0 %1173, %v1153
      %v1175 = vpop.permute.xlu0 %1174
      %v1177 = vmul.f32 %v1175, %v1171
      %v1178 = vpack.c.bf16 %v1161, %v1161
      %1179 = vrot.lane.b32.xlu0 %v823, 120
      %v1180 = vpop.permute.xlu0 %1179
      %v1182 = vsel %vm873, %v1178, 0
      %v1185 = vsel %vm908, %v1180, 0
      %1187 = vmatprep.subr.bf16.mxu0 0
      %1188 = vmatpush1.bf16.msra.mxu0 %v1185
      %1189 = vmatprep.subr.bf16.mxu0 0
      %1190 = vmatpush1.bf16.msra.mxu0 0
      %1191 = vmatprep.subr.bf16.mxu0 0
      %1192 = vmatpush1.bf16.msra.mxu0 0
      %1193 = vmatprep.subr.bf16.mxu0 0
      %1194 = vmatpush1.bf16.msra.mxu0 0
      %1195 = vmatprep.subr.bf16.mxu0 0
      %1196 = vmatpush1.bf16.msra.mxu0 0
      %1197 = vmatprep.subr.bf16.mxu0 0
      %1198 = vmatpush1.bf16.msra.mxu0 0
      %1199 = vmatprep.subr.bf16.mxu0 0
      %1200 = vmatpush1.bf16.msra.mxu0 0
      %1201 = vmatprep.subr.bf16.mxu0 0
      %1202 = vmatpush1.bf16.msra.mxu0 0
      %1203 = vmatprep.subr.bf16.mxu0 0
      %1204 = vmatpush1.bf16.msra.mxu0 0
      %1205 = vmatprep.subr.bf16.mxu0 0
      %1206 = vmatpush1.bf16.msra.mxu0 0
      %1207 = vmatprep.subr.bf16.mxu0 0
      %1208 = vmatpush1.bf16.msra.mxu0 0
      %1209 = vmatprep.subr.bf16.mxu0 0
      %1210 = vmatpush1.bf16.msra.mxu0 0
      %1211 = vmatprep.subr.bf16.mxu0 0
      %1212 = vmatpush1.bf16.msra.mxu0 0
      %1213 = vmatprep.subr.bf16.mxu0 0
      %1214 = vmatpush1.bf16.msra.mxu0 0
      %1215 = vmatprep.subr.bf16.mxu0 0
      %1216 = vmatpush1.bf16.msra.mxu0 0
      %1217 = vmatprep.subr.bf16.mxu0 0
      %1218 = vmatpush1.bf16.msra.mxu0 0
      %1219 = vmatprep.mubr.bf16.mxu0 0
      %1220 = vmatmul.mubr.bf16.gmra.mrb[0].mxu0 %v1182
      %v1221 = vpop.f32.mrb[0].mxu0
      %v1222 = vadd.f32 0.0, %v1221
      %v1223 = vpop.f32.mrb[0].mxu0
      %v1224 = vpop.f32.mrb[0].mxu0
      %v1225 = vpop.f32.mrb[0].mxu0
      %1226 = vdwg.mxu0
      %v1227 = vadd.f32 %v1177, %v1222
      %1228 = vst.msk [vmem:[%s1170] sm:$0xff] %vm825, %v1227
      %1229 = vst.msk [vmem:[%s1145] sm:$0xff] %vm895, %v1150
      %1230 = vrot.lane.b32.xlu0 %v957, 116
      %v1231 = vpop.permute.xlu0 %1230
      %1232 = vrot.lane.b32.xlu0 %v755, 116
      %v1233 = vpop.permute.xlu0 %1232
      %v1235 = vsel %vm825, %v1231, 0
      %v1238 = vsel %vm825, %v1233, 0
      %1240 = vmatprep.subr.bf16.mxu0 0
      %1241 = vmatpush1.bf16.xpose.msra.mxu0 %v1238
      %1242 = vmatprep.subr.bf16.mxu0 0
      %1243 = vmatpush1.bf16.xpose.msra.mxu0 0
      %1244 = vmatprep.subr.bf16.mxu0 0
      %1245 = vmatpush1.bf16.xpose.msra.mxu0 0
      %1246 = vmatprep.subr.bf16.mxu0 0
      %1247 = vmatpush1.bf16.xpose.msra.mxu0 0
      %1248 = vmatprep.subr.bf16.mxu0 0
      %1249 = vmatpush1.bf16.xpose.msra.mxu0 0
      %1250 = vmatprep.subr.bf16.mxu0 0
      %1251 = vmatpush1.bf16.xpose.msra.mxu0 0
      %1252 = vmatprep.subr.bf16.mxu0 0
      %1253 = vmatpush1.bf16.xpose.msra.mxu0 0
      %1254 = vmatprep.subr.bf16.mxu0 0
      %1255 = vmatpush1.bf16.xpose.msra.mxu0 0
      %1256 = vmatprep.subr.bf16.mxu0 0
      %1257 = vmatpush1.bf16.xpose.msra.mxu0 0
      %1258 = vmatprep.subr.bf16.mxu0 0
      %1259 = vmatpush1.bf16.xpose.msra.mxu0 0
      %1260 = vmatprep.subr.bf16.mxu0 0
      %1261 = vmatpush1.bf16.xpose.msra.mxu0 0
      %1262 = vmatprep.subr.bf16.mxu0 0
      %1263 = vmatpush1.bf16.xpose.msra.mxu0 0
      %1264 = vmatprep.subr.bf16.mxu0 0
      %1265 = vmatpush1.bf16.xpose.msra.mxu0 0
      %1266 = vmatprep.subr.bf16.mxu0 0
      %1267 = vmatpush1.bf16.xpose.msra.mxu0 0
      %1268 = vmatprep.subr.bf16.mxu0 0
      %1269 = vmatpush1.bf16.xpose.msra.mxu0 0
      %1270 = vmatprep.subr.bf16.mxu0 0
      %1271 = vmatpush1.bf16.xpose.msra.mxu0 0
      %1272 = vmatprep.mubr.bf16.mxu0 0
      %1273 = vmatmul.mubr.bf16.gmra.mrb[0].mxu0 %v1235
      %v1274 = vpop.f32.mrb[0].mxu0
      %v1275 = vadd.f32 0.0, %v1274
      %v1276 = vpop.f32.mrb[0].mxu0
      %v1277 = vpop.f32.mrb[0].mxu0
      %v1278 = vpop.f32.mrb[0].mxu0
      %1279 = vdwg.mxu0
      %s1280 = scalar_lea.vmem [#allocation3], 24
      %v1281 = vld [vmem:[%s1280] sm:$0xff]
      %v1282 = vsel %vm873, %v1275, -inf
      %1283 = vmax.xlane.f32.xlu0 %v1282
      %v1284 = vpop.xlane.xlu0 %1283
      %v1285 = vmax.f32 %v1281, %v1284
      %v1286 = vsub.f32 %v1281, %v1285
      %v1287 = vmul.f32 %v1286, 1.442695
      %v1288 = vpow.pop %v1287
      %1290 = vset.pattern.permute.xlu0 0
      %1291 = vperm.xlu0 %1290, %v1285
      %v1292 = vpop.permute.xlu0 %1291
      %v1294 = vsub.f32 %v1275, %v1292
      %v1295 = vmul.f32 %v1294, 1.442695
      %v1296 = vpow.pop %v1295
      %s1297 = scalar_lea.vmem [#allocation4], 24
      %v1298 = vld [vmem:[%s1297] sm:$0xff]
      %v1299 = vmul.f32 %v1288, %v1298
      %v1300 = vsel %vm873, %v1296, 0.0
      %1301 = vadd.xlane.f32.xlu0 %v1300
      %v1302 = vpop.xlane.xlu0 %1301
      %v1303 = vadd.f32 %v1299, %v1302
      %1304 = vst.msk [vmem:[%s1297] sm:$0xff] %vm895, %v1303
      %s1305 = scalar_lea.vmem [#allocation5], 24
      %v1306 = vld [vmem:[%s1305] sm:$0xff]
      %1308 = vset.pattern.permute.xlu0 0
      %1309 = vperm.xlu0 %1308, %v1288
      %v1310 = vpop.permute.xlu0 %1309
      %v1312 = vmul.f32 %v1310, %v1306
      %v1313 = vpack.c.bf16 %v1296, %v1296
      %1314 = vrot.lane.b32.xlu0 %v823, 116
      %v1315 = vpop.permute.xlu0 %1314
      %v1317 = vsel %vm873, %v1313, 0
      %v1320 = vsel %vm908, %v1315, 0
      %1322 = vmatprep.subr.bf16.mxu0 0
      %1323 = vmatpush1.bf16.msra.mxu0 %v1320
      %1324 = vmatprep.subr.bf16.mxu0 0
      %1325 = vmatpush1.bf16.msra.mxu0 0
      %1326 = vmatprep.subr.bf16.mxu0 0
      %1327 = vmatpush1.bf16.msra.mxu0 0
      %1328 = vmatprep.subr.bf16.mxu0 0
      %1329 = vmatpush1.bf16.msra.mxu0 0
      %1330 = vmatprep.subr.bf16.mxu0 0
      %1331 = vmatpush1.bf16.msra.mxu0 0
      %1332 = vmatprep.subr.bf16.mxu0 0
      %1333 = vmatpush1.bf16.msra.mxu0 0
      %1334 = vmatprep.subr.bf16.mxu0 0
      %1335 = vmatpush1.bf16.msra.mxu0 0
      %1336 = vmatprep.subr.bf16.mxu0 0
      %1337 = vmatpush1.bf16.msra.mxu0 0
      %1338 = vmatprep.subr.bf16.mxu0 0
      %1339 = vmatpush1.bf16.msra.mxu0 0
      %1340 = vmatprep.subr.bf16.mxu0 0
      %1341 = vmatpush1.bf16.msra.mxu0 0
      %1342 = vmatprep.subr.bf16.mxu0 0
      %1343 = vmatpush1.bf16.msra.mxu0 0
      %1344 = vmatprep.subr.bf16.mxu0 0
      %1345 = vmatpush1.bf16.msra.mxu0 0
      %1346 = vmatprep.subr.bf16.mxu0 0
      %1347 = vmatpush1.bf16.msra.mxu0 0
      %1348 = vmatprep.subr.bf16.mxu0 0
      %1349 = vmatpush1.bf16.msra.mxu0 0
      %1350 = vmatprep.subr.bf16.mxu0 0
      %1351 = vmatpush1.bf16.msra.mxu0 0
      %1352 = vmatprep.subr.bf16.mxu0 0
      %1353 = vmatpush1.bf16.msra.mxu0 0
      %1354 = vmatprep.mubr.bf16.mxu0 0
      %1355 = vmatmul.mubr.bf16.gmra.mrb[0].mxu0 %v1317
      %v1356 = vpop.f32.mrb[0].mxu0
      %v1357 = vadd.f32 0.0, %v1356
      %v1358 = vpop.f32.mrb[0].mxu0
      %v1359 = vpop.f32.mrb[0].mxu0
      %v1360 = vpop.f32.mrb[0].mxu0
      %1361 = vdwg.mxu0
      %v1362 = vadd.f32 %v1312, %v1357
      %1363 = vst.msk [vmem:[%s1305] sm:$0xff] %vm825, %v1362
      %1364 = vst.msk [vmem:[%s1280] sm:$0xff] %vm895, %v1285
      %1365 = vrot.lane.b32.xlu0 %v957, 112
      %v1366 = vpop.permute.xlu0 %1365
      %1367 = vrot.lane.b32.xlu0 %v755, 112
      %v1368 = vpop.permute.xlu0 %1367
      %v1370 = vsel %vm825, %v1366, 0
      %v1373 = vsel %vm825, %v1368, 0
      %1375 = vmatprep.subr.bf16.mxu0 0
      %1376 = vmatpush1.bf16.xpose.msra.mxu0 %v1373
      %1377 = vmatprep.subr.bf16.mxu0 0
      %1378 = vmatpush1.bf16.xpose.msra.mxu0 0
      %1379 = vmatprep.subr.bf16.mxu0 0
      %1380 = vmatpush1.bf16.xpose.msra.mxu0 0
      %1381 = vmatprep.subr.bf16.mxu0 0
      %1382 = vmatpush1.bf16.xpose.msra.mxu0 0
      %1383 = vmatprep.subr.bf16.mxu0 0
      %1384 = vmatpush1.bf16.xpose.msra.mxu0 0
      %1385 = vmatprep.subr.bf16.mxu0 0
      %1386 = vmatpush1.bf16.xpose.msra.mxu0 0
      %1387 = vmatprep.subr.bf16.mxu0 0
      %1388 = vmatpush1.bf16.xpose.msra.mxu0 0
      %1389 = vmatprep.subr.bf16.mxu0 0
      %1390 = vmatpush1.bf16.xpose.msra.mxu0 0
      %1391 = vmatprep.subr.bf16.mxu0 0
      %1392 = vmatpush1.bf16.xpose.msra.mxu0 0
      %1393 = vmatprep.subr.bf16.mxu0 0
      %1394 = vmatpush1.bf16.xpose.msra.mxu0 0
      %1395 = vmatprep.subr.bf16.mxu0 0
      %1396 = vmatpush1.bf16.xpose.msra.mxu0 0
      %1397 = vmatprep.subr.bf16.mxu0 0
      %1398 = vmatpush1.bf16.xpose.msra.mxu0 0
      %1399 = vmatprep.subr.bf16.mxu0 0
      %1400 = vmatpush1.bf16.xpose.msra.mxu0 0
      %1401 = vmatprep.subr.bf16.mxu0 0
      %1402 = vmatpush1.bf16.xpose.msra.mxu0 0
      %1403 = vmatprep.subr.bf16.mxu0 0
      %1404 = vmatpush1.bf16.xpose.msra.mxu0 0
      %1405 = vmatprep.subr.bf16.mxu0 0
      %1406 = vmatpush1.bf16.xpose.msra.mxu0 0
      %1407 = vmatprep.mubr.bf16.mxu0 0
      %1408 = vmatmul.mubr.bf16.gmra.mrb[0].mxu0 %v1370
      %v1409 = vpop.f32.mrb[0].mxu0
      %v1410 = vadd.f32 0.0, %v1409
      %v1411 = vpop.f32.mrb[0].mxu0
      %v1412 = vpop.f32.mrb[0].mxu0
      %v1413 = vpop.f32.mrb[0].mxu0
      %1414 = vdwg.mxu0
      %s1415 = scalar_lea.vmem [#allocation3], 32
      %v1416 = vld [vmem:[%s1415] sm:$0xff]
      %v1417 = vsel %vm873, %v1410, -inf
      %1418 = vmax.xlane.f32.xlu0 %v1417
      %v1419 = vpop.xlane.xlu0 %1418
      %v1420 = vmax.f32 %v1416, %v1419
      %v1421 = vsub.f32 %v1416, %v1420
      %v1422 = vmul.f32 %v1421, 1.442695
      %v1423 = vpow.pop %v1422
      %1425 = vset.pattern.permute.xlu0 0
      %1426 = vperm.xlu0 %1425, %v1420
      %v1427 = vpop.permute.xlu0 %1426
      %v1429 = vsub.f32 %v1410, %v1427
      %v1430 = vmul.f32 %v1429, 1.442695
      %v1431 = vpow.pop %v1430
      %s1432 = scalar_lea.vmem [#allocation4], 32
      %v1433 = vld [vmem:[%s1432] sm:$0xff]
      %v1434 = vmul.f32 %v1423, %v1433
      %v1435 = vsel %vm873, %v1431, 0.0
      %1436 = vadd.xlane.f32.xlu0 %v1435
      %v1437 = vpop.xlane.xlu0 %1436
      %v1438 = vadd.f32 %v1434, %v1437
      %1439 = vst.msk [vmem:[%s1432] sm:$0xff] %vm895, %v1438
      %s1440 = scalar_lea.vmem [#allocation5], 32
      %v1441 = vld [vmem:[%s1440] sm:$0xff]
      %1443 = vset.pattern.permute.xlu0 0
      %1444 = vperm.xlu0 %1443, %v1423
      %v1445 = vpop.permute.xlu0 %1444
      %v1447 = vmul.f32 %v1445, %v1441
      %v1448 = vpack.c.bf16 %v1431, %v1431
      %1449 = vrot.lane.b32.xlu0 %v823, 112
      %v1450 = vpop.permute.xlu0 %1449
      %v1452 = vsel %vm873, %v1448, 0
      %v1455 = vsel %vm908, %v1450, 0
      %1457 = vmatprep.subr.bf16.mxu0 0
      %1458 = vmatpush1.bf16.msra.mxu0 %v1455
      %1459 = vmatprep.subr.bf16.mxu0 0
      %1460 = vmatpush1.bf16.msra.mxu0 0
      %1461 = vmatprep.subr.bf16.mxu0 0
      %1462 = vmatpush1.bf16.msra.mxu0 0
      %1463 = vmatprep.subr.bf16.mxu0 0
      %1464 = vmatpush1.bf16.msra.mxu0 0
      %1465 = vmatprep.subr.bf16.mxu0 0
      %1466 = vmatpush1.bf16.msra.mxu0 0
      %1467 = vmatprep.subr.bf16.mxu0 0
      %1468 = vmatpush1.bf16.msra.mxu0 0
      %1469 = vmatprep.subr.bf16.mxu0 0
      %1470 = vmatpush1.bf16.msra.mxu0 0
      %1471 = vmatprep.subr.bf16.mxu0 0
      %1472 = vmatpush1.bf16.msra.mxu0 0
      %1473 = vmatprep.subr.bf16.mxu0 0
      %1474 = vmatpush1.bf16.msra.mxu0 0
      %1475 = vmatprep.subr.bf16.mxu0 0
      %1476 = vmatpush1.bf16.msra.mxu0 0
      %1477 = vmatprep.subr.bf16.mxu0 0
      %1478 = vmatpush1.bf16.msra.mxu0 0
      %1479 = vmatprep.subr.bf16.mxu0 0
      %1480 = vmatpush1.bf16.msra.mxu0 0
      %1481 = vmatprep.subr.bf16.mxu0 0
      %1482 = vmatpush1.bf16.msra.mxu0 0
      %1483 = vmatprep.subr.bf16.mxu0 0
      %1484 = vmatpush1.bf16.msra.mxu0 0
      %1485 = vmatprep.subr.bf16.mxu0 0
      %1486 = vmatpush1.bf16.msra.mxu0 0
      %1487 = vmatprep.subr.bf16.mxu0 0
      %1488 = vmatpush1.bf16.msra.mxu0 0
      %1489 = vmatprep.mubr.bf16.mxu0 0
      %1490 = vmatmul.mubr.bf16.gmra.mrb[0].mxu0 %v1452
      %v1491 = vpop.f32.mrb[0].mxu0
      %v1492 = vadd.f32 0.0, %v1491
      %v1493 = vpop.f32.mrb[0].mxu0
      %v1494 = vpop.f32.mrb[0].mxu0
      %v1495 = vpop.f32.mrb[0].mxu0
      %1496 = vdwg.mxu0
      %v1497 = vadd.f32 %v1447, %v1492
      %1498 = vst.msk [vmem:[%s1440] sm:$0xff] %vm825, %v1497
      %1499 = vst.msk [vmem:[%s1415] sm:$0xff] %vm895, %v1420
      %1500 = vrot.lane.b32.xlu0 %v957, 108
      %v1501 = vpop.permute.xlu0 %1500
      %1502 = vrot.lane.b32.xlu0 %v755, 108
      %v1503 = vpop.permute.xlu0 %1502
      %v1505 = vsel %vm825, %v1501, 0
      %v1508 = vsel %vm825, %v1503, 0
      %1510 = vmatprep.subr.bf16.mxu0 0
      %1511 = vmatpush1.bf16.xpose.msra.mxu0 %v1508
      %1512 = vmatprep.subr.bf16.mxu0 0
      %1513 = vmatpush1.bf16.xpose.msra.mxu0 0
      %1514 = vmatprep.subr.bf16.mxu0 0
      %1515 = vmatpush1.bf16.xpose.msra.mxu0 0
      %1516 = vmatprep.subr.bf16.mxu0 0
      %1517 = vmatpush1.bf16.xpose.msra.mxu0 0
      %1518 = vmatprep.subr.bf16.mxu0 0
      %1519 = vmatpush1.bf16.xpose.msra.mxu0 0
      %1520 = vmatprep.subr.bf16.mxu0 0
      %1521 = vmatpush1.bf16.xpose.msra.mxu0 0
      %1522 = vmatprep.subr.bf16.mxu0 0
      %1523 = vmatpush1.bf16.xpose.msra.mxu0 0
      %1524 = vmatprep.subr.bf16.mxu0 0
      %1525 = vmatpush1.bf16.xpose.msra.mxu0 0
      %1526 = vmatprep.subr.bf16.mxu0 0
      %1527 = vmatpush1.bf16.xpose.msra.mxu0 0
      %1528 = vmatprep.subr.bf16.mxu0 0
      %1529 = vmatpush1.bf16.xpose.msra.mxu0 0
      %1530 = vmatprep.subr.bf16.mxu0 0
      %1531 = vmatpush1.bf16.xpose.msra.mxu0 0
      %1532 = vmatprep.subr.bf16.mxu0 0
      %1533 = vmatpush1.bf16.xpose.msra.mxu0 0
      %1534 = vmatprep.subr.bf16.mxu0 0
      %1535 = vmatpush1.bf16.xpose.msra.mxu0 0
      %1536 = vmatprep.subr.bf16.mxu0 0
      %1537 = vmatpush1.bf16.xpose.msra.mxu0 0
      %1538 = vmatprep.subr.bf16.mxu0 0
      %1539 = vmatpush1.bf16.xpose.msra.mxu0 0
      %1540 = vmatprep.subr.bf16.mxu0 0
      %1541 = vmatpush1.bf16.xpose.msra.mxu0 0
      %1542 = vmatprep.mubr.bf16.mxu0 0
      %1543 = vmatmul.mubr.bf16.gmra.mrb[0].mxu0 %v1505
      %v1544 = vpop.f32.mrb[0].mxu0
      %v1545 = vadd.f32 0.0, %v1544
      %v1546 = vpop.f32.mrb[0].mxu0
      %v1547 = vpop.f32.mrb[0].mxu0
      %v1548 = vpop.f32.mrb[0].mxu0
      %1549 = vdwg.mxu0
      %s1550 = scalar_lea.vmem [#allocation3], 40
      %v1551 = vld [vmem:[%s1550] sm:$0xff]
      %v1552 = vsel %vm873, %v1545, -inf
      %1553 = vmax.xlane.f32.xlu0 %v1552
      %v1554 = vpop.xlane.xlu0 %1553
      %v1555 = vmax.f32 %v1551, %v1554
      %v1556 = vsub.f32 %v1551, %v1555
      %v1557 = vmul.f32 %v1556, 1.442695
      %v1558 = vpow.pop %v1557
      %1560 = vset.pattern.permute.xlu0 0
      %1561 = vperm.xlu0 %1560, %v1555
      %v1562 = vpop.permute.xlu0 %1561
      %v1564 = vsub.f32 %v1545, %v1562
      %v1565 = vmul.f32 %v1564, 1.442695
      %v1566 = vpow.pop %v1565
      %s1567 = scalar_lea.vmem [#allocation4], 40
      %v1568 = vld [vmem:[%s1567] sm:$0xff]
      %v1569 = vmul.f32 %v1558, %v1568
      %v1570 = vsel %vm873, %v1566, 0.0
      %1571 = vadd.xlane.f32.xlu0 %v1570
      %v1572 = vpop.xlane.xlu0 %1571
      %v1573 = vadd.f32 %v1569, %v1572
      %1574 = vst.msk [vmem:[%s1567] sm:$0xff] %vm895, %v1573
      %s1575 = scalar_lea.vmem [#allocation5], 40
      %v1576 = vld [vmem:[%s1575] sm:$0xff]
      %1578 = vset.pattern.permute.xlu0 0
      %1579 = vperm.xlu0 %1578, %v1558
      %v1580 = vpop.permute.xlu0 %1579
      %v1582 = vmul.f32 %v1580, %v1576
      %v1583 = vpack.c.bf16 %v1566, %v1566
      %1584 = vrot.lane.b32.xlu0 %v823, 108
      %v1585 = vpop.permute.xlu0 %1584
      %v1587 = vsel %vm873, %v1583, 0
      %v1590 = vsel %vm908, %v1585, 0
      %1592 = vmatprep.subr.bf16.mxu0 0
      %1593 = vmatpush1.bf16.msra.mxu0 %v1590
      %1594 = vmatprep.subr.bf16.mxu0 0
      %1595 = vmatpush1.bf16.msra.mxu0 0
      %1596 = vmatprep.subr.bf16.mxu0 0
      %1597 = vmatpush1.bf16.msra.mxu0 0
      %1598 = vmatprep.subr.bf16.mxu0 0
      %1599 = vmatpush1.bf16.msra.mxu0 0
      %1600 = vmatprep.subr.bf16.mxu0 0
      %1601 = vmatpush1.bf16.msra.mxu0 0
      %1602 = vmatprep.subr.bf16.mxu0 0
      %1603 = vmatpush1.bf16.msra.mxu0 0
      %1604 = vmatprep.subr.bf16.mxu0 0
      %1605 = vmatpush1.bf16.msra.mxu0 0
      %1606 = vmatprep.subr.bf16.mxu0 0
      %1607 = vmatpush1.bf16.msra.mxu0 0
      %1608 = vmatprep.subr.bf16.mxu0 0
      %1609 = vmatpush1.bf16.msra.mxu0 0
      %1610 = vmatprep.subr.bf16.mxu0 0
      %1611 = vmatpush1.bf16.msra.mxu0 0
      %1612 = vmatprep.subr.bf16.mxu0 0
      %1613 = vmatpush1.bf16.msra.mxu0 0
      %1614 = vmatprep.subr.bf16.mxu0 0
      %1615 = vmatpush1.bf16.msra.mxu0 0
      %1616 = vmatprep.subr.bf16.mxu0 0
      %1617 = vmatpush1.bf16.msra.mxu0 0
      %1618 = vmatprep.subr.bf16.mxu0 0
      %1619 = vmatpush1.bf16.msra.mxu0 0
      %1620 = vmatprep.subr.bf16.mxu0 0
      %1621 = vmatpush1.bf16.msra.mxu0 0
      %1622 = vmatprep.subr.bf16.mxu0 0
      %1623 = vmatpush1.bf16.msra.mxu0 0
      %1624 = vmatprep.mubr.bf16.mxu0 0
      %1625 = vmatmul.mubr.bf16.gmra.mrb[0].mxu0 %v1587
      %v1626 = vpop.f32.mrb[0].mxu0
      %v1627 = vadd.f32 0.0, %v1626
      %v1628 = vpop.f32.mrb[0].mxu0
      %v1629 = vpop.f32.mrb[0].mxu0
      %v1630 = vpop.f32.mrb[0].mxu0
      %1631 = vdwg.mxu0
      %v1632 = vadd.f32 %v1582, %v1627
      %1633 = vst.msk [vmem:[%s1575] sm:$0xff] %vm825, %v1632
      %1634 = vst.msk [vmem:[%s1550] sm:$0xff] %vm895, %v1555
      %1635 = vrot.lane.b32.xlu0 %v957, 104
      %v1636 = vpop.permute.xlu0 %1635
      %1637 = vrot.lane.b32.xlu0 %v755, 104
      %v1638 = vpop.permute.xlu0 %1637
      %v1640 = vsel %vm825, %v1636, 0
      %v1643 = vsel %vm825, %v1638, 0
      %1645 = vmatprep.subr.bf16.mxu0 0
      %1646 = vmatpush1.bf16.xpose.msra.mxu0 %v1643
      %1647 = vmatprep.subr.bf16.mxu0 0
      %1648 = vmatpush1.bf16.xpose.msra.mxu0 0
      %1649 = vmatprep.subr.bf16.mxu0 0
      %1650 = vmatpush1.bf16.xpose.msra.mxu0 0
      %1651 = vmatprep.subr.bf16.mxu0 0
      %1652 = vmatpush1.bf16.xpose.msra.mxu0 0
      %1653 = vmatprep.subr.bf16.mxu0 0
      %1654 = vmatpush1.bf16.xpose.msra.mxu0 0
      %1655 = vmatprep.subr.bf16.mxu0 0
      %1656 = vmatpush1.bf16.xpose.msra.mxu0 0
      %1657 = vmatprep.subr.bf16.mxu0 0
      %1658 = vmatpush1.bf16.xpose.msra.mxu0 0
      %1659 = vmatprep.subr.bf16.mxu0 0
      %1660 = vmatpush1.bf16.xpose.msra.mxu0 0
      %1661 = vmatprep.subr.bf16.mxu0 0
      %1662 = vmatpush1.bf16.xpose.msra.mxu0 0
      %1663 = vmatprep.subr.bf16.mxu0 0
      %1664 = vmatpush1.bf16.xpose.msra.mxu0 0
      %1665 = vmatprep.subr.bf16.mxu0 0
      %1666 = vmatpush1.bf16.xpose.msra.mxu0 0
      %1667 = vmatprep.subr.bf16.mxu0 0
      %1668 = vmatpush1.bf16.xpose.msra.mxu0 0
      %1669 = vmatprep.subr.bf16.mxu0 0
      %1670 = vmatpush1.bf16.xpose.msra.mxu0 0
      %1671 = vmatprep.subr.bf16.mxu0 0
      %1672 = vmatpush1.bf16.xpose.msra.mxu0 0
      %1673 = vmatprep.subr.bf16.mxu0 0
      %1674 = vmatpush1.bf16.xpose.msra.mxu0 0
      %1675 = vmatprep.subr.bf16.mxu0 0
      %1676 = vmatpush1.bf16.xpose.msra.mxu0 0
      %1677 = vmatprep.mubr.bf16.mxu0 0
      %1678 = vmatmul.mubr.bf16.gmra.mrb[0].mxu0 %v1640
      %v1679 = vpop.f32.mrb[0].mxu0
      %v1680 = vadd.f32 0.0, %v1679
      %v1681 = vpop.f32.mrb[0].mxu0
      %v1682 = vpop.f32.mrb[0].mxu0
      %v1683 = vpop.f32.mrb[0].mxu0
      %1684 = vdwg.mxu0
      %s1685 = scalar_lea.vmem [#allocation3], 48
      %v1686 = vld [vmem:[%s1685] sm:$0xff]
      %v1687 = vsel %vm873, %v1680, -inf
      %1688 = vmax.xlane.f32.xlu0 %v1687
      %v1689 = vpop.xlane.xlu0 %1688
      %v1690 = vmax.f32 %v1686, %v1689
      %v1691 = vsub.f32 %v1686, %v1690
      %v1692 = vmul.f32 %v1691, 1.442695
      %v1693 = vpow.pop %v1692
      %1695 = vset.pattern.permute.xlu0 0
      %1696 = vperm.xlu0 %1695, %v1690
      %v1697 = vpop.permute.xlu0 %1696
      %v1699 = vsub.f32 %v1680, %v1697
      %v1700 = vmul.f32 %v1699, 1.442695
      %v1701 = vpow.pop %v1700
      %s1702 = scalar_lea.vmem [#allocation4], 48
      %v1703 = vld [vmem:[%s1702] sm:$0xff]
      %v1704 = vmul.f32 %v1693, %v1703
      %v1705 = vsel %vm873, %v1701, 0.0
      %1706 = vadd.xlane.f32.xlu0 %v1705
      %v1707 = vpop.xlane.xlu0 %1706
      %v1708 = vadd.f32 %v1704, %v1707
      %1709 = vst.msk [vmem:[%s1702] sm:$0xff] %vm895, %v1708
      %s1710 = scalar_lea.vmem [#allocation5], 48
      %v1711 = vld [vmem:[%s1710] sm:$0xff]
      %1713 = vset.pattern.permute.xlu0 0
      %1714 = vperm.xlu0 %1713, %v1693
      %v1715 = vpop.permute.xlu0 %1714
      %v1717 = vmul.f32 %v1715, %v1711
      %v1718 = vpack.c.bf16 %v1701, %v1701
      %1719 = vrot.lane.b32.xlu0 %v823, 104
      %v1720 = vpop.permute.xlu0 %1719
      %v1722 = vsel %vm873, %v1718, 0
      %v1725 = vsel %vm908, %v1720, 0
      %1727 = vmatprep.subr.bf16.mxu0 0
      %1728 = vmatpush1.bf16.msra.mxu0 %v1725
      %1729 = vmatprep.subr.bf16.mxu0 0
      %1730 = vmatpush1.bf16.msra.mxu0 0
      %1731 = vmatprep.subr.bf16.mxu0 0
      %1732 = vmatpush1.bf16.msra.mxu0 0
      %1733 = vmatprep.subr.bf16.mxu0 0
      %1734 = vmatpush1.bf16.msra.mxu0 0
      %1735 = vmatprep.subr.bf16.mxu0 0
      %1736 = vmatpush1.bf16.msra.mxu0 0
      %1737 = vmatprep.subr.bf16.mxu0 0
      %1738 = vmatpush1.bf16.msra.mxu0 0
      %1739 = vmatprep.subr.bf16.mxu0 0
      %1740 = vmatpush1.bf16.msra.mxu0 0
      %1741 = vmatprep.subr.bf16.mxu0 0
      %1742 = vmatpush1.bf16.msra.mxu0 0
      %1743 = vmatprep.subr.bf16.mxu0 0
      %1744 = vmatpush1.bf16.msra.mxu0 0
      %1745 = vmatprep.subr.bf16.mxu0 0
      %1746 = vmatpush1.bf16.msra.mxu0 0
      %1747 = vmatprep.subr.bf16.mxu0 0
      %1748 = vmatpush1.bf16.msra.mxu0 0
      %1749 = vmatprep.subr.bf16.mxu0 0
      %1750 = vmatpush1.bf16.msra.mxu0 0
      %1751 = vmatprep.subr.bf16.mxu0 0
      %1752 = vmatpush1.bf16.msra.mxu0 0
      %1753 = vmatprep.subr.bf16.mxu0 0
      %1754 = vmatpush1.bf16.msra.mxu0 0
      %1755 = vmatprep.subr.bf16.mxu0 0
      %1756 = vmatpush1.bf16.msra.mxu0 0
      %1757 = vmatprep.subr.bf16.mxu0 0
      %1758 = vmatpush1.bf16.msra.mxu0 0
      %1759 = vmatprep.mubr.bf16.mxu0 0
      %1760 = vmatmul.mubr.bf16.gmra.mrb[0].mxu0 %v1722
      %v1761 = vpop.f32.mrb[0].mxu0
      %v1762 = vadd.f32 0.0, %v1761
      %v1763 = vpop.f32.mrb[0].mxu0
      %v1764 = vpop.f32.mrb[0].mxu0
      %v1765 = vpop.f32.mrb[0].mxu0
      %1766 = vdwg.mxu0
      %v1767 = vadd.f32 %v1717, %v1762
      %1768 = vst.msk [vmem:[%s1710] sm:$0xff] %vm825, %v1767
      %1769 = vst.msk [vmem:[%s1685] sm:$0xff] %vm895, %v1690
      %1770 = vrot.lane.b32.xlu0 %v957, 100
      %v1771 = vpop.permute.xlu0 %1770
      %1772 = vrot.lane.b32.xlu0 %v755, 100
      %v1773 = vpop.permute.xlu0 %1772
      %v1775 = vsel %vm825, %v1771, 0
      %v1778 = vsel %vm825, %v1773, 0
      %1780 = vmatprep.subr.bf16.mxu0 0
      %1781 = vmatpush1.bf16.xpose.msra.mxu0 %v1778
      %1782 = vmatprep.subr.bf16.mxu0 0
      %1783 = vmatpush1.bf16.xpose.msra.mxu0 0
      %1784 = vmatprep.subr.bf16.mxu0 0
      %1785 = vmatpush1.bf16.xpose.msra.mxu0 0
      %1786 = vmatprep.subr.bf16.mxu0 0
      %1787 = vmatpush1.bf16.xpose.msra.mxu0 0
      %1788 = vmatprep.subr.bf16.mxu0 0
      %1789 = vmatpush1.bf16.xpose.msra.mxu0 0
      %1790 = vmatprep.subr.bf16.mxu0 0
      %1791 = vmatpush1.bf16.xpose.msra.mxu0 0
      %1792 = vmatprep.subr.bf16.mxu0 0
      %1793 = vmatpush1.bf16.xpose.msra.mxu0 0
      %1794 = vmatprep.subr.bf16.mxu0 0
      %1795 = vmatpush1.bf16.xpose.msra.mxu0 0
      %1796 = vmatprep.subr.bf16.mxu0 0
      %1797 = vmatpush1.bf16.xpose.msra.mxu0 0
      %1798 = vmatprep.subr.bf16.mxu0 0
      %1799 = vmatpush1.bf16.xpose.msra.mxu0 0
      %1800 = vmatprep.subr.bf16.mxu0 0
      %1801 = vmatpush1.bf16.xpose.msra.mxu0 0
      %1802 = vmatprep.subr.bf16.mxu0 0
      %1803 = vmatpush1.bf16.xpose.msra.mxu0 0
      %1804 = vmatprep.subr.bf16.mxu0 0
      %1805 = vmatpush1.bf16.xpose.msra.mxu0 0
      %1806 = vmatprep.subr.bf16.mxu0 0
      %1807 = vmatpush1.bf16.xpose.msra.mxu0 0
      %1808 = vmatprep.subr.bf16.mxu0 0
      %1809 = vmatpush1.bf16.xpose.msra.mxu0 0
      %1810 = vmatprep.subr.bf16.mxu0 0
      %1811 = vmatpush1.bf16.xpose.msra.mxu0 0
      %1812 = vmatprep.mubr.bf16.mxu0 0
      %1813 = vmatmul.mubr.bf16.gmra.mrb[0].mxu0 %v1775
      %v1814 = vpop.f32.mrb[0].mxu0
      %v1815 = vadd.f32 0.0, %v1814
      %v1816 = vpop.f32.mrb[0].mxu0
      %v1817 = vpop.f32.mrb[0].mxu0
      %v1818 = vpop.f32.mrb[0].mxu0
      %1819 = vdwg.mxu0
      %s1820 = scalar_lea.vmem [#allocation3], 56
      %v1821 = vld [vmem:[%s1820] sm:$0xff]
      %v1822 = vsel %vm873, %v1815, -inf
      %1823 = vmax.xlane.f32.xlu0 %v1822
      %v1824 = vpop.xlane.xlu0 %1823
      %v1825 = vmax.f32 %v1821, %v1824
      %v1826 = vsub.f32 %v1821, %v1825
      %v1827 = vmul.f32 %v1826, 1.442695
      %v1828 = vpow.pop %v1827
      %1830 = vset.pattern.permute.xlu0 0
      %1831 = vperm.xlu0 %1830, %v1825
      %v1832 = vpop.permute.xlu0 %1831
      %v1834 = vsub.f32 %v1815, %v1832
      %v1835 = vmul.f32 %v1834, 1.442695
      %v1836 = vpow.pop %v1835
      %s1837 = scalar_lea.vmem [#allocation4], 56
      %v1838 = vld [vmem:[%s1837] sm:$0xff]
      %v1839 = vmul.f32 %v1828, %v1838
      %v1840 = vsel %vm873, %v1836, 0.0
      %1841 = vadd.xlane.f32.xlu0 %v1840
      %v1842 = vpop.xlane.xlu0 %1841
      %v1843 = vadd.f32 %v1839, %v1842
      %1844 = vst.msk [vmem:[%s1837] sm:$0xff] %vm895, %v1843
      %s1845 = scalar_lea.vmem [#allocation5], 56
      %v1846 = vld [vmem:[%s1845] sm:$0xff]
      %1848 = vset.pattern.permute.xlu0 0
      %1849 = vperm.xlu0 %1848, %v1828
      %v1850 = vpop.permute.xlu0 %1849
      %v1852 = vmul.f32 %v1850, %v1846
      %v1853 = vpack.c.bf16 %v1836, %v1836
      %1854 = vrot.lane.b32.xlu0 %v823, 100
      %v1855 = vpop.permute.xlu0 %1854
      %v1857 = vsel %vm873, %v1853, 0
      %v1860 = vsel %vm908, %v1855, 0
      %1862 = vmatprep.subr.bf16.mxu0 0
      %1863 = vmatpush1.bf16.msra.mxu0 %v1860
      %1864 = vmatprep.subr.bf16.mxu0 0
      %1865 = vmatpush1.bf16.msra.mxu0 0
      %1866 = vmatprep.subr.bf16.mxu0 0
      %1867 = vmatpush1.bf16.msra.mxu0 0
      %1868 = vmatprep.subr.bf16.mxu0 0
      %1869 = vmatpush1.bf16.msra.mxu0 0
      %1870 = vmatprep.subr.bf16.mxu0 0
      %1871 = vmatpush1.bf16.msra.mxu0 0
      %1872 = vmatprep.subr.bf16.mxu0 0
      %1873 = vmatpush1.bf16.msra.mxu0 0
      %1874 = vmatprep.subr.bf16.mxu0 0
      %1875 = vmatpush1.bf16.msra.mxu0 0
      %1876 = vmatprep.subr.bf16.mxu0 0
      %1877 = vmatpush1.bf16.msra.mxu0 0
      %1878 = vmatprep.subr.bf16.mxu0 0
      %1879 = vmatpush1.bf16.msra.mxu0 0
      %1880 = vmatprep.subr.bf16.mxu0 0
      %1881 = vmatpush1.bf16.msra.mxu0 0
      %1882 = vmatprep.subr.bf16.mxu0 0
      %1883 = vmatpush1.bf16.msra.mxu0 0
      %1884 = vmatprep.subr.bf16.mxu0 0
      %1885 = vmatpush1.bf16.msra.mxu0 0
      %1886 = vmatprep.subr.bf16.mxu0 0
      %1887 = vmatpush1.bf16.msra.mxu0 0
      %1888 = vmatprep.subr.bf16.mxu0 0
      %1889 = vmatpush1.bf16.msra.mxu0 0
      %1890 = vmatprep.subr.bf16.mxu0 0
      %1891 = vmatpush1.bf16.msra.mxu0 0
      %1892 = vmatprep.subr.bf16.mxu0 0
      %1893 = vmatpush1.bf16.msra.mxu0 0
      %1894 = vmatprep.mubr.bf16.mxu0 0
      %1895 = vmatmul.mubr.bf16.gmra.mrb[0].mxu0 %v1857
      %v1896 = vpop.f32.mrb[0].mxu0
      %v1897 = vadd.f32 0.0, %v1896
      %v1898 = vpop.f32.mrb[0].mxu0
      %v1899 = vpop.f32.mrb[0].mxu0
      %v1900 = vpop.f32.mrb[0].mxu0
      %1901 = vdwg.mxu0
      %v1902 = vadd.f32 %v1852, %v1897
      %1903 = vst.msk [vmem:[%s1845] sm:$0xff] %vm825, %v1902
      %1904 = vst.msk [vmem:[%s1820] sm:$0xff] %vm895, %v1825
      // Predicated region
      $region81: #{_forward.3} parent=75 // pred_check
        %p1905 = pneg %p586
      $region82: #{_forward.3} parent=75 // pred_check_branch
        %1907 = sbr.rel (%p1905) target = $region84
      $region83: #{_forward.3} parent=75 // pred_region
        %v1908 = vld [vmem:[#allocation5] sm:$0xff]
        %v1909 = vld [vmem:[#allocation4] sm:$0xff]
        %1911 = vset.pattern.permute.xlu0 0
        %1912 = vperm.xlu0 %1911, %v1909
        %v1913 = vpop.permute.xlu0 %1912
        %v1915 = vrcp.pop %v1913
        %v1916 = vmul.f32 %v1908, %v1915
        %v1917 = vpack.c.bf16 %v1916, %v1916
        %v1918 = vld [vmem:[%s7] sm:$0x3]
        %v1919 = vld [vmem:[%s1034] sm:$0xff]
        %v1920 = vld [vmem:[%s1026] sm:$0xff]
        %1922 = vset.pattern.permute.xlu0 0
        %1923 = vperm.xlu0 %1922, %v1920
        %v1924 = vpop.permute.xlu0 %1923
        %v1926 = vrcp.pop %v1924
        %v1927 = vmul.f32 %v1919, %v1926
        %v1928 = vpack.c.bf16 %v1927, %v1927
        %s1929 = scalar_lea.vmem %s7, 2
        %v1930 = vld [vmem:[%s1929] sm:$0x3]
        %v1932 = vsel %vm825, %v1928, 0
        %vm1934 = vcmask 1041408
        %v1936 = vsel %vm1934, %v1930, 0
        %1938 = vmatprep.subr.bf16.mxu0 0
        %1939 = vmatpush1.bf16.msra.mxu0 %v1936
        %1940 = vmatprep.subr.bf16.mxu0 0
        %1941 = vmatpush1.bf16.msra.mxu0 0
        %1942 = vmatprep.subr.bf16.mxu0 0
        %1943 = vmatpush1.bf16.msra.mxu0 0
        %1944 = vmatprep.subr.bf16.mxu0 0
        %1945 = vmatpush1.bf16.msra.mxu0 0
        %1946 = vmatprep.subr.bf16.mxu0 0
        %1947 = vmatpush1.bf16.msra.mxu0 0
        %1948 = vmatprep.subr.bf16.mxu0 0
        %1949 = vmatpush1.bf16.msra.mxu0 0
        %1950 = vmatprep.subr.bf16.mxu0 0
        %1951 = vmatpush1.bf16.msra.mxu0 0
        %1952 = vmatprep.subr.bf16.mxu0 0
        %1953 = vmatpush1.bf16.msra.mxu0 0
        %1954 = vmatprep.subr.bf16.mxu0 0
        %1955 = vmatpush1.bf16.msra.mxu0 0
        %1956 = vmatprep.subr.bf16.mxu0 0
        %1957 = vmatpush1.bf16.msra.mxu0 0
        %1958 = vmatprep.subr.bf16.mxu0 0
        %1959 = vmatpush1.bf16.msra.mxu0 0
        %1960 = vmatprep.subr.bf16.mxu0 0
        %1961 = vmatpush1.bf16.msra.mxu0 0
        %1962 = vmatprep.subr.bf16.mxu0 0
        %1963 = vmatpush1.bf16.msra.mxu0 0
        %1964 = vmatprep.subr.bf16.mxu0 0
        %1965 = vmatpush1.bf16.msra.mxu0 0
        %1966 = vmatprep.subr.bf16.mxu0 0
        %1967 = vmatpush1.bf16.msra.mxu0 0
        %1968 = vmatprep.subr.bf16.mxu0 0
        %1969 = vmatpush1.bf16.msra.mxu0 0
        %1970 = vmatprep.mubr.bf16.mxu0 0
        %1971 = vmatmul.mubr.bf16.gmra.mrb[0].mxu0 %v1932
        %v1972 = vpop.f32.mrb[0].mxu0
        %v1973 = vadd.f32 0.0, %v1972
        %v1974 = vpop.f32.mrb[0].mxu0
        %v1975 = vpop.f32.mrb[0].mxu0
        %v1976 = vpop.f32.mrb[0].mxu0
        %1977 = vdwg.mxu0
        %v1979 = vsel %vm825, %v1917, 0
        %v1982 = vsel %vm1934, %v1918, 0
        %1984 = vmatprep.subr.bf16.mxu0 0
        %1985 = vmatpush1.bf16.msra.mxu0 %v1982
        %1986 = vmatprep.subr.bf16.mxu0 0
        %1987 = vmatpush1.bf16.msra.mxu0 0
        %1988 = vmatprep.subr.bf16.mxu0 0
        %1989 = vmatpush1.bf16.msra.mxu0 0
        %1990 = vmatprep.subr.bf16.mxu0 0
        %1991 = vmatpush1.bf16.msra.mxu0 0
        %1992 = vmatprep.subr.bf16.mxu0 0
        %1993 = vmatpush1.bf16.msra.mxu0 0
        %1994 = vmatprep.subr.bf16.mxu0 0
        %1995 = vmatpush1.bf16.msra.mxu0 0
        %1996 = vmatprep.subr.bf16.mxu0 0
        %1997 = vmatpush1.bf16.msra.mxu0 0
        %1998 = vmatprep.subr.bf16.mxu0 0
        %1999 = vmatpush1.bf16.msra.mxu0 0
        %2000 = vmatprep.subr.bf16.mxu0 0
        %2001 = vmatpush1.bf16.msra.mxu0 0
        %2002 = vmatprep.subr.bf16.mxu0 0
        %2003 = vmatpush1.bf16.msra.mxu0 0
        %2004 = vmatprep.subr.bf16.mxu0 0
        %2005 = vmatpush1.bf16.msra.mxu0 0
        %2006 = vmatprep.subr.bf16.mxu0 0
        %2007 = vmatpush1.bf16.msra.mxu0 0
        %2008 = vmatprep.subr.bf16.mxu0 0
        %2009 = vmatpush1.bf16.msra.mxu0 0
        %2010 = vmatprep.subr.bf16.mxu0 0
        %2011 = vmatpush1.bf16.msra.mxu0 0
        %2012 = vmatprep.subr.bf16.mxu0 0
        %2013 = vmatpush1.bf16.msra.mxu0 0
        %2014 = vmatprep.subr.bf16.mxu0 0
        %2015 = vmatpush1.bf16.msra.mxu0 0
        %2016 = vmatprep.mubr.bf16.mxu0 0
        %2017 = vmatmul.mubr.bf16.gmra.mrb[0].mxu0 %v1979
        %v2018 = vpop.f32.mrb[0].mxu0
        %v2019 = vadd.f32 %v1973, %v2018
        %v2020 = vpop.f32.mrb[0].mxu0
        %v2021 = vpop.f32.mrb[0].mxu0
        %v2022 = vpop.f32.mrb[0].mxu0
        %2023 = vdwg.mxu0
        %v2024 = vld [vmem:[%s1170] sm:$0xff]
        %v2025 = vld [vmem:[%s1162] sm:$0xff]
        %2027 = vset.pattern.permute.xlu0 0
        %2028 = vperm.xlu0 %2027, %v2025
        %v2029 = vpop.permute.xlu0 %2028
        %v2031 = vrcp.pop %v2029
        %v2032 = vmul.f32 %v2024, %v2031
        %v2033 = vpack.c.bf16 %v2032, %v2032
        %s2034 = scalar_lea.vmem %s7, 4
        %v2035 = vld [vmem:[%s2034] sm:$0x3]
        %v2037 = vsel %vm825, %v2033, 0
        %v2040 = vsel %vm1934, %v2035, 0
        %2042 = vmatprep.subr.bf16.mxu0 0
        %2043 = vmatpush1.bf16.msra.mxu0 %v2040
        %2044 = vmatprep.subr.bf16.mxu0 0
        %2045 = vmatpush1.bf16.msra.mxu0 0
        %2046 = vmatprep.subr.bf16.mxu0 0
        %2047 = vmatpush1.bf16.msra.mxu0 0
        %2048 = vmatprep.subr.bf16.mxu0 0
        %2049 = vmatpush1.bf16.msra.mxu0 0
        %2050 = vmatprep.subr.bf16.mxu0 0
        %2051 = vmatpush1.bf16.msra.mxu0 0
        %2052 = vmatprep.subr.bf16.mxu0 0
        %2053 = vmatpush1.bf16.msra.mxu0 0
        %2054 = vmatprep.subr.bf16.mxu0 0
        %2055 = vmatpush1.bf16.msra.mxu0 0
        %2056 = vmatprep.subr.bf16.mxu0 0
        %2057 = vmatpush1.bf16.msra.mxu0 0
        %2058 = vmatprep.subr.bf16.mxu0 0
        %2059 = vmatpush1.bf16.msra.mxu0 0
        %2060 = vmatprep.subr.bf16.mxu0 0
        %2061 = vmatpush1.bf16.msra.mxu0 0
        %2062 = vmatprep.subr.bf16.mxu0 0
        %2063 = vmatpush1.bf16.msra.mxu0 0
        %2064 = vmatprep.subr.bf16.mxu0 0
        %2065 = vmatpush1.bf16.msra.mxu0 0
        %2066 = vmatprep.subr.bf16.mxu0 0
        %2067 = vmatpush1.bf16.msra.mxu0 0
        %2068 = vmatprep.subr.bf16.mxu0 0
        %2069 = vmatpush1.bf16.msra.mxu0 0
        %2070 = vmatprep.subr.bf16.mxu0 0
        %2071 = vmatpush1.bf16.msra.mxu0 0
        %2072 = vmatprep.subr.bf16.mxu0 0
        %2073 = vmatpush1.bf16.msra.mxu0 0
        %2074 = vmatprep.mubr.bf16.mxu0 0
        %2075 = vmatmul.mubr.bf16.gmra.mrb[0].mxu0 %v2037
        %v2076 = vpop.f32.mrb[0].mxu0
        %v2077 = vadd.f32 0.0, %v2076
        %v2078 = vpop.f32.mrb[0].mxu0
        %v2079 = vpop.f32.mrb[0].mxu0
        %v2080 = vpop.f32.mrb[0].mxu0
        %2081 = vdwg.mxu0
        %v2082 = vadd.f32 %v2019, %v2077
        %v2083 = vld [vmem:[%s1305] sm:$0xff]
        %v2084 = vld [vmem:[%s1297] sm:$0xff]
        %2086 = vset.pattern.permute.xlu0 0
        %2087 = vperm.xlu0 %2086, %v2084
        %v2088 = vpop.permute.xlu0 %2087
        %v2090 = vrcp.pop %v2088
        %v2091 = vmul.f32 %v2083, %v2090
        %v2092 = vpack.c.bf16 %v2091, %v2091
        %s2093 = scalar_lea.vmem %s7, 6
        %v2094 = vld [vmem:[%s2093] sm:$0x3]
        %v2096 = vsel %vm825, %v2092, 0
        %v2099 = vsel %vm1934, %v2094, 0
        %2101 = vmatprep.subr.bf16.mxu0 0
        %2102 = vmatpush1.bf16.msra.mxu0 %v2099
        %2103 = vmatprep.subr.bf16.mxu0 0
        %2104 = vmatpush1.bf16.msra.mxu0 0
        %2105 = vmatprep.subr.bf16.mxu0 0
        %2106 = vmatpush1.bf16.msra.mxu0 0
        %2107 = vmatprep.subr.bf16.mxu0 0
        %2108 = vmatpush1.bf16.msra.mxu0 0
        %2109 = vmatprep.subr.bf16.mxu0 0
        %2110 = vmatpush1.bf16.msra.mxu0 0
        %2111 = vmatprep.subr.bf16.mxu0 0
        %2112 = vmatpush1.bf16.msra.mxu0 0
        %2113 = vmatprep.subr.bf16.mxu0 0
        %2114 = vmatpush1.bf16.msra.mxu0 0
        %2115 = vmatprep.subr.bf16.mxu0 0
        %2116 = vmatpush1.bf16.msra.mxu0 0
        %2117 = vmatprep.subr.bf16.mxu0 0
        %2118 = vmatpush1.bf16.msra.mxu0 0
        %2119 = vmatprep.subr.bf16.mxu0 0
        %2120 = vmatpush1.bf16.msra.mxu0 0
        %2121 = vmatprep.subr.bf16.mxu0 0
        %2122 = vmatpush1.bf16.msra.mxu0 0
        %2123 = vmatprep.subr.bf16.mxu0 0
        %2124 = vmatpush1.bf16.msra.mxu0 0
        %2125 = vmatprep.subr.bf16.mxu0 0
        %2126 = vmatpush1.bf16.msra.mxu0 0
        %2127 = vmatprep.subr.bf16.mxu0 0
        %2128 = vmatpush1.bf16.msra.mxu0 0
        %2129 = vmatprep.subr.bf16.mxu0 0
        %2130 = vmatpush1.bf16.msra.mxu0 0
        %2131 = vmatprep.subr.bf16.mxu0 0
        %2132 = vmatpush1.bf16.msra.mxu0 0
        %2133 = vmatprep.mubr.bf16.mxu0 0
        %2134 = vmatmul.mubr.bf16.gmra.mrb[0].mxu0 %v2096
        %v2135 = vpop.f32.mrb[0].mxu0
        %v2136 = vadd.f32 0.0, %v2135
        %v2137 = vpop.f32.mrb[0].mxu0
        %v2138 = vpop.f32.mrb[0].mxu0
        %v2139 = vpop.f32.mrb[0].mxu0
        %2140 = vdwg.mxu0
        %v2141 = vadd.f32 %v2082, %v2136
        %v2142 = vld [vmem:[%s1440] sm:$0xff]
        %v2143 = vld [vmem:[%s1432] sm:$0xff]
        %2145 = vset.pattern.permute.xlu0 0
        %2146 = vperm.xlu0 %2145, %v2143
        %v2147 = vpop.permute.xlu0 %2146
        %v2149 = vrcp.pop %v2147
        %v2150 = vmul.f32 %v2142, %v2149
        %v2151 = vpack.c.bf16 %v2150, %v2150
        %s2152 = scalar_lea.vmem %s7, 8
        %v2153 = vld [vmem:[%s2152] sm:$0x3]
        %v2155 = vsel %vm825, %v2151, 0
        %v2158 = vsel %vm1934, %v2153, 0
        %2160 = vmatprep.subr.bf16.mxu0 0
        %2161 = vmatpush1.bf16.msra.mxu0 %v2158
        %2162 = vmatprep.subr.bf16.mxu0 0
        %2163 = vmatpush1.bf16.msra.mxu0 0
        %2164 = vmatprep.subr.bf16.mxu0 0
        %2165 = vmatpush1.bf16.msra.mxu0 0
        %2166 = vmatprep.subr.bf16.mxu0 0
        %2167 = vmatpush1.bf16.msra.mxu0 0
        %2168 = vmatprep.subr.bf16.mxu0 0
        %2169 = vmatpush1.bf16.msra.mxu0 0
        %2170 = vmatprep.subr.bf16.mxu0 0
        %2171 = vmatpush1.bf16.msra.mxu0 0
        %2172 = vmatprep.subr.bf16.mxu0 0
        %2173 = vmatpush1.bf16.msra.mxu0 0
        %2174 = vmatprep.subr.bf16.mxu0 0
        %2175 = vmatpush1.bf16.msra.mxu0 0
        %2176 = vmatprep.subr.bf16.mxu0 0
        %2177 = vmatpush1.bf16.msra.mxu0 0
        %2178 = vmatprep.subr.bf16.mxu0 0
        %2179 = vmatpush1.bf16.msra.mxu0 0
        %2180 = vmatprep.subr.bf16.mxu0 0
        %2181 = vmatpush1.bf16.msra.mxu0 0
        %2182 = vmatprep.subr.bf16.mxu0 0
        %2183 = vmatpush1.bf16.msra.mxu0 0
        %2184 = vmatprep.subr.bf16.mxu0 0
        %2185 = vmatpush1.bf16.msra.mxu0 0
        %2186 = vmatprep.subr.bf16.mxu0 0
        %2187 = vmatpush1.bf16.msra.mxu0 0
        %2188 = vmatprep.subr.bf16.mxu0 0
        %2189 = vmatpush1.bf16.msra.mxu0 0
        %2190 = vmatprep.subr.bf16.mxu0 0
        %2191 = vmatpush1.bf16.msra.mxu0 0
        %2192 = vmatprep.mubr.bf16.mxu0 0
        %2193 = vmatmul.mubr.bf16.gmra.mrb[0].mxu0 %v2155
        %v2194 = vpop.f32.mrb[0].mxu0
        %v2195 = vadd.f32 0.0, %v2194
        %v2196 = vpop.f32.mrb[0].mxu0
        %v2197 = vpop.f32.mrb[0].mxu0
        %v2198 = vpop.f32.mrb[0].mxu0
        %2199 = vdwg.mxu0
        %v2200 = vadd.f32 %v2141, %v2195
        %v2201 = vld [vmem:[%s1575] sm:$0xff]
        %v2202 = vld [vmem:[%s1567] sm:$0xff]
        %2204 = vset.pattern.permute.xlu0 0
        %2205 = vperm.xlu0 %2204, %v2202
        %v2206 = vpop.permute.xlu0 %2205
        %v2208 = vrcp.pop %v2206
        %v2209 = vmul.f32 %v2201, %v2208
        %v2210 = vpack.c.bf16 %v2209, %v2209
        %s2211 = scalar_lea.vmem %s7, 10
        %v2212 = vld [vmem:[%s2211] sm:$0x3]
        %v2214 = vsel %vm825, %v2210, 0
        %v2217 = vsel %vm1934, %v2212, 0
        %2219 = vmatprep.subr.bf16.mxu0 0
        %2220 = vmatpush1.bf16.msra.mxu0 %v2217
        %2221 = vmatprep.subr.bf16.mxu0 0
        %2222 = vmatpush1.bf16.msra.mxu0 0
        %2223 = vmatprep.subr.bf16.mxu0 0
        %2224 = vmatpush1.bf16.msra.mxu0 0
        %2225 = vmatprep.subr.bf16.mxu0 0
        %2226 = vmatpush1.bf16.msra.mxu0 0
        %2227 = vmatprep.subr.bf16.mxu0 0
        %2228 = vmatpush1.bf16.msra.mxu0 0
        %2229 = vmatprep.subr.bf16.mxu0 0
        %2230 = vmatpush1.bf16.msra.mxu0 0
        %2231 = vmatprep.subr.bf16.mxu0 0
        %2232 = vmatpush1.bf16.msra.mxu0 0
        %2233 = vmatprep.subr.bf16.mxu0 0
        %2234 = vmatpush1.bf16.msra.mxu0 0
        %2235 = vmatprep.subr.bf16.mxu0 0
        %2236 = vmatpush1.bf16.msra.mxu0 0
        %2237 = vmatprep.subr.bf16.mxu0 0
        %2238 = vmatpush1.bf16.msra.mxu0 0
        %2239 = vmatprep.subr.bf16.mxu0 0
        %2240 = vmatpush1.bf16.msra.mxu0 0
        %2241 = vmatprep.subr.bf16.mxu0 0
        %2242 = vmatpush1.bf16.msra.mxu0 0
        %2243 = vmatprep.subr.bf16.mxu0 0
        %2244 = vmatpush1.bf16.msra.mxu0 0
        %2245 = vmatprep.subr.bf16.mxu0 0
        %2246 = vmatpush1.bf16.msra.mxu0 0
        %2247 = vmatprep.subr.bf16.mxu0 0
        %2248 = vmatpush1.bf16.msra.mxu0 0
        %2249 = vmatprep.subr.bf16.mxu0 0
        %2250 = vmatpush1.bf16.msra.mxu0 0
        %2251 = vmatprep.mubr.bf16.mxu0 0
        %2252 = vmatmul.mubr.bf16.gmra.mrb[0].mxu0 %v2214
        %v2253 = vpop.f32.mrb[0].mxu0
        %v2254 = vadd.f32 0.0, %v2253
        %v2255 = vpop.f32.mrb[0].mxu0
        %v2256 = vpop.f32.mrb[0].mxu0
        %v2257 = vpop.f32.mrb[0].mxu0
        %2258 = vdwg.mxu0
        %v2259 = vadd.f32 %v2200, %v2254
        %v2260 = vld [vmem:[%s1710] sm:$0xff]
        %v2261 = vld [vmem:[%s1702] sm:$0xff]
        %2263 = vset.pattern.permute.xlu0 0
        %2264 = vperm.xlu0 %2263, %v2261
        %v2265 = vpop.permute.xlu0 %2264
        %v2267 = vrcp.pop %v2265
        %v2268 = vmul.f32 %v2260, %v2267
        %v2269 = vpack.c.bf16 %v2268, %v2268
        %s2270 = scalar_lea.vmem %s7, 12
        %v2271 = vld [vmem:[%s2270] sm:$0x3]
        %v2273 = vsel %vm825, %v2269, 0
        %v2276 = vsel %vm1934, %v2271, 0
        %2278 = vmatprep.subr.bf16.mxu0 0
        %2279 = vmatpush1.bf16.msra.mxu0 %v2276
        %2280 = vmatprep.subr.bf16.mxu0 0
        %2281 = vmatpush1.bf16.msra.mxu0 0
        %2282 = vmatprep.subr.bf16.mxu0 0
        %2283 = vmatpush1.bf16.msra.mxu0 0
        %2284 = vmatprep.subr.bf16.mxu0 0
        %2285 = vmatpush1.bf16.msra.mxu0 0
        %2286 = vmatprep.subr.bf16.mxu0 0
        %2287 = vmatpush1.bf16.msra.mxu0 0
        %2288 = vmatprep.subr.bf16.mxu0 0
        %2289 = vmatpush1.bf16.msra.mxu0 0
        %2290 = vmatprep.subr.bf16.mxu0 0
        %2291 = vmatpush1.bf16.msra.mxu0 0
        %2292 = vmatprep.subr.bf16.mxu0 0
        %2293 = vmatpush1.bf16.msra.mxu0 0
        %2294 = vmatprep.subr.bf16.mxu0 0
        %2295 = vmatpush1.bf16.msra.mxu0 0
        %2296 = vmatprep.subr.bf16.mxu0 0
        %2297 = vmatpush1.bf16.msra.mxu0 0
        %2298 = vmatprep.subr.bf16.mxu0 0
        %2299 = vmatpush1.bf16.msra.mxu0 0
        %2300 = vmatprep.subr.bf16.mxu0 0
        %2301 = vmatpush1.bf16.msra.mxu0 0
        %2302 = vmatprep.subr.bf16.mxu0 0
        %2303 = vmatpush1.bf16.msra.mxu0 0
        %2304 = vmatprep.subr.bf16.mxu0 0
        %2305 = vmatpush1.bf16.msra.mxu0 0
        %2306 = vmatprep.subr.bf16.mxu0 0
        %2307 = vmatpush1.bf16.msra.mxu0 0
        %2308 = vmatprep.subr.bf16.mxu0 0
        %2309 = vmatpush1.bf16.msra.mxu0 0
        %2310 = vmatprep.mubr.bf16.mxu0 0
        %2311 = vmatmul.mubr.bf16.gmra.mrb[0].mxu0 %v2273
        %v2312 = vpop.f32.mrb[0].mxu0
        %v2313 = vadd.f32 0.0, %v2312
        %v2314 = vpop.f32.mrb[0].mxu0
        %v2315 = vpop.f32.mrb[0].mxu0
        %v2316 = vpop.f32.mrb[0].mxu0
        %2317 = vdwg.mxu0
        %v2318 = vadd.f32 %v2259, %v2313
        %v2319 = vld [vmem:[%s1845] sm:$0xff]
        %v2320 = vld [vmem:[%s1837] sm:$0xff]
        %2322 = vset.pattern.permute.xlu0 0
        %2323 = vperm.xlu0 %2322, %v2320
        %v2324 = vpop.permute.xlu0 %2323
        %v2326 = vrcp.pop %v2324
        %v2327 = vmul.f32 %v2319, %v2326
        %v2328 = vpack.c.bf16 %v2327, %v2327
        %s2329 = scalar_lea.vmem %s7, 14
        %v2330 = vld [vmem:[%s2329] sm:$0x3]
        %v2332 = vsel %vm825, %v2328, 0
        %v2335 = vsel %vm1934, %v2330, 0
        %2337 = vmatprep.subr.bf16.mxu0 0
        %2338 = vmatpush1.bf16.msra.mxu0 %v2335
        %2339 = vmatprep.subr.bf16.mxu0 0
        %2340 = vmatpush1.bf16.msra.mxu0 0
        %2341 = vmatprep.subr.bf16.mxu0 0
        %2342 = vmatpush1.bf16.msra.mxu0 0
        %2343 = vmatprep.subr.bf16.mxu0 0
        %2344 = vmatpush1.bf16.msra.mxu0 0
        %2345 = vmatprep.subr.bf16.mxu0 0
        %2346 = vmatpush1.bf16.msra.mxu0 0
        %2347 = vmatprep.subr.bf16.mxu0 0
        %2348 = vmatpush1.bf16.msra.mxu0 0
        %2349 = vmatprep.subr.bf16.mxu0 0
        %2350 = vmatpush1.bf16.msra.mxu0 0
        %2351 = vmatprep.subr.bf16.mxu0 0
        %2352 = vmatpush1.bf16.msra.mxu0 0
        %2353 = vmatprep.subr.bf16.mxu0 0
        %2354 = vmatpush1.bf16.msra.mxu0 0
        %2355 = vmatprep.subr.bf16.mxu0 0
        %2356 = vmatpush1.bf16.msra.mxu0 0
        %2357 = vmatprep.subr.bf16.mxu0 0
        %2358 = vmatpush1.bf16.msra.mxu0 0
        %2359 = vmatprep.subr.bf16.mxu0 0
        %2360 = vmatpush1.bf16.msra.mxu0 0
        %2361 = vmatprep.subr.bf16.mxu0 0
        %2362 = vmatpush1.bf16.msra.mxu0 0
        %2363 = vmatprep.subr.bf16.mxu0 0
        %2364 = vmatpush1.bf16.msra.mxu0 0
        %2365 = vmatprep.subr.bf16.mxu0 0
        %2366 = vmatpush1.bf16.msra.mxu0 0
        %2367 = vmatprep.subr.bf16.mxu0 0
        %2368 = vmatpush1.bf16.msra.mxu0 0
        %2369 = vmatprep.mubr.bf16.mxu0 0
        %2370 = vmatmul.mubr.bf16.gmra.mrb[0].mxu0 %v2332
        %v2371 = vpop.f32.mrb[0].mxu0
        %v2372 = vadd.f32 0.0, %v2371
        %v2373 = vpop.f32.mrb[0].mxu0
        %v2374 = vpop.f32.mrb[0].mxu0
        %v2375 = vpop.f32.mrb[0].mxu0
        %2376 = vdwg.mxu0
        %v2377 = vadd.f32 %v2318, %v2372
        %v2378 = vld [vmem:[%s556] sm:$0xff]
        %v2379 = vadd.f32 %v2378, %v2377
        %v2380 = vld [vmem:[%s11] sm:$0x1]
        %v2382 = vlaneseq
        %v2383 = vshrl.u32 %v2382, 7
        %v2384 = vsub.s32 0, %v2383
        %v2385 = vrot.slane %v2380, %v2384
        %v2387 = vadd.f32 %v2379, %v2385
        %v2388 = vld [vmem:[%s12] sm:$0x1]
        %v2389 = vld [vmem:[%s13] sm:$0x1]
        %v2390 = vsel %vm711, %v2387, 0.0
        %2391 = vadd.xlane.f32.xlu0 %v2390
        %v2392 = vpop.xlane.xlu0 %2391
        %v2393 = vrcp.pop 32.0
        %v2394 = vmul.f32 %v2392, %v2393
        %v2395 = vsub.f32 %v2387, %v2394
        %v2396 = vmul.f32 %v2395, %v2395
        %v2397 = vsel %vm711, %v2396, 0.0
        %2398 = vadd.xlane.f32.xlu0 %v2397
        %v2399 = vpop.xlane.xlu0 %2398
        %v2400 = vmul.f32 %v2399, %v2393
        %v2401 = vadd.f32 %v2400, 1e-05
        %v2402 = vrsqrt.pop %v2401
        %v2403 = vmul.f32 %v2395, %v2402
        %v2405 = vlaneseq
        %v2406 = vshrl.u32 %v2405, 7
        %v2407 = vsub.s32 0, %v2406
        %v2408 = vrot.slane %v2388, %v2407
        %v2410 = vmul.f32 %v2403, %v2408
        %v2412 = vlaneseq
        %v2413 = vshrl.u32 %v2412, 7
        %v2414 = vsub.s32 0, %v2413
        %v2415 = vrot.slane %v2389, %v2414
        %v2417 = vadd.f32 %v2410, %v2415
        %2418 = vst.msk [vmem:[%s584] sm:$0xff] %vm711, %v2417
      $region84: #{_forward.3} parent=75 // pred_fallthru
        _
      %p2419 = scmp.lt.s32.totalorder %s30, 1
      %s2420 = scalar_select %p2419, %s30, 1
      %p2421 = scmp.lt.s32.totalorder %s31, 0
      %s2422 = scalar_select %p2421, %s31, 0
      %s2423 = sadd.s32 %s2422, %s2420
      %s2424 = smul.addr %s2423, 8
      %s2425 = scalar_lea.vmem %s14, %s2424
      // Predicated region
      $region85: #{_forward.3} parent=75 // pred_check
        %p2426 = pneg %p386
      $region86: #{_forward.3} parent=75 // pred_check_branch
        %2428 = sbr.rel (%p2426) target = $region88
      $region87: #{_forward.3} parent=75 // pred_region
        _
      $region88: #{_forward.3} parent=75 // pred_fallthru
        _
    $region76: #{_forward.3} parent=5 // pred_fallthru
      _
    %p2429 = scmp.le.s32.totalorder 2, %s20
    // Predicated region
    $region89: #{_forward.3} parent=5 // pred_check
      %p2430 = pneg %p2429
    $region90: #{_forward.3} parent=5 // pred_check_branch
      %2432 = sbr.rel (%p2430) target = $region92
    $region91: #{_forward.3} parent=5 // pred_region
      %s2433 = ssub.s32 %s20, 2
      // Predicated region
      $region93: #{_forward.3} parent=91 // pred_check
        %p2434 = pneg %p392
      $region94: #{_forward.3} parent=91 // pred_check_branch
        %2436 = sbr.rel (%p2434) target = $region96
      $region95: #{_forward.3} parent=91 // pred_region
        %p2437 = scmp.lt.s32.totalorder %s33, 1
        %s2438 = scalar_select %p2437, %s33, 1
        %p2439 = scmp.lt.s32.totalorder %s34, 0
        %s2440 = scalar_select %p2439, %s34, 0
        %s2441 = sadd.s32 %s2440, %s2438
        %s2442 = smul.addr %s2441, 8
        %s2443 = scalar_lea.vmem %s14, %s2442
      $region96: #{_forward.3} parent=91 // pred_fallthru
        _
    $region92: #{_forward.3} parent=5 // pred_fallthru
      _
  $region6: #{_forward.3} parent=0 // loop_footer
    %s24 = sadd.s32 1, %s20
  $region7: #{_forward.3} parent=0 // loop_footer_branch
    %19 = sbr.rel target = $region3
  $region8: #{_forward.3} parent=0 // loop_exit
    _

// kernel: _forward.4
$region0: #{_forward.4}
  #allocation0 [shape = 'u32[]', space=smem, size = 0x4, offset = 0x4, fixed_abs, tag = 'smem constant byte address 0x4 - core index']
  #allocation1 [shape = 'u32[144,128]{1,0:T(1,128)}', space=vmem, size = 0x12000, scoped, tag = 'internal scratch']
  #allocation2 [shape = 'bf16[8,32]{1,0:T(8,128)(2,1)}', space=vmem, size = 0x800, scoped, tag = 'scratch operand']
  #allocation3 [shape = 'f32[8,8,1]{2,1,0:T(8,128)}', space=vmem, size = 0x8000, scoped, tag = 'scratch operand']
  #allocation4 [shape = 'f32[8,8,1]{2,1,0:T(8,128)}', space=vmem, size = 0x8000, scoped, tag = 'scratch operand']
  #allocation5 [shape = 'f32[8,8,4]{2,1,0:T(8,128)}', space=vmem, size = 0x8000, scoped, tag = 'scratch operand']
  %s0 = inlined_call_operand.vmem [shape: f32[2,8,32], index: 0, kind: input, shape index: {}]
  %s1 = inlined_call_operand.vmem [shape: bf16[2,8,32], index: 1, kind: input, shape index: {}]
  %s2 = inlined_call_operand.vmem [shape: bf16[2,16,32], index: 2, kind: input, shape index: {}]
  %s3 = inlined_call_operand.vmem [shape: bf16[2,16,32], index: 3, kind: input, shape index: {}]
  %s4 = inlined_call_operand.vmem [shape: bf16[32,32], index: 4, kind: input, shape index: {}]
  %s5 = inlined_call_operand.vmem [shape: bf16[32,32], index: 5, kind: input, shape index: {}]
  %s6 = inlined_call_operand.vmem [shape: bf16[32,32], index: 6, kind: input, shape index: {}]
  %s7 = inlined_call_operand.vmem [shape: bf16[8,4,32], index: 7, kind: input, shape index: {}]
  %s8 = inlined_call_operand.vmem [shape: f32[1,32], index: 8, kind: input, shape index: {}]
  %s9 = inlined_call_operand.vmem [shape: f32[1,32], index: 9, kind: input, shape index: {}]
  %s10 = inlined_call_operand.vmem [shape: f32[1,32], index: 10, kind: input, shape index: {}]
  %s11 = inlined_call_operand.vmem [shape: f32[1,32], index: 11, kind: input, shape index: {}]
  %s12 = inlined_call_operand.vmem [shape: f32[1,32], index: 12, kind: input, shape index: {}]
  %s13 = inlined_call_operand.vmem [shape: f32[1,32], index: 13, kind: input, shape index: {}]
  %s14 = inlined_call_operand.vmem [shape: f32[2,8,32], index: 14, kind: output, shape index: {}]
  %s15 = sld [smem:[#allocation0]]
  $region97: #{_forward.4} parent=0
    _
  %s17 = ssub.s32 1, %s15
  %s18 = scalar_select 0, %s17, %s15
  loop: start=0, step=1, limit=4
  $region2: #{_forward.4} parent=0 // loop_pre_header
    _
  $region3: #{_forward.4} parent=0 // loop_header
    %s20 = sphi 0, %s24
    %p21 = scmp.ge.s32.totalorder %s20, 4
    %s27 = sphi 0, %s46
    %s28 = sphi 0, %s42
    %s29 = sphi 0, %s38
    %s30 = sphi 0, %s27
    %s31 = sphi 0, %s28
    %s32 = sphi 0, %s29
    %s33 = sphi 0, %s30
    %s34 = sphi 0, %s31
    %s35 = sphi 0, %s32
    %s51 = sphi 0, %s53
    %s54 = sphi 0, %s51
    %s55 = sphi 0, %s54
    %s71 = sphi 0, %s55
    %s79 = sphi 0, %s81
    %s82 = sphi 0, %s79
    %s83 = sphi 0, %s82
    %s99 = sphi 0, %s83
    %s107 = sphi 0, %s109
    %s110 = sphi 0, %s107
    %s111 = sphi 0, %s110
    %s127 = sphi 0, %s111
    %s135 = sphi 0, %s137
    %s138 = sphi 0, %s135
    %s139 = sphi 0, %s138
    %s155 = sphi 0, %s139
    %s159 = sphi 0, %s159
    %s161 = sphi 0, %s159
    %s162 = sphi 0, %s161
    %s176 = sphi 0, %s162
    %s180 = sphi 0, %s180
    %s182 = sphi 0, %s180
    %s183 = sphi 0, %s182
    %s197 = sphi 0, %s183
    %s201 = sphi 0, %s201
    %s203 = sphi 0, %s201
    %s204 = sphi 0, %s203
    %s218 = sphi 0, %s204
    %s222 = sphi 0, %s222
    %s224 = sphi 0, %s222
    %s225 = sphi 0, %s224
    %s239 = sphi 0, %s225
    %s243 = sphi 0, %s243
    %s245 = sphi 0, %s243
    %s246 = sphi 0, %s245
    %s260 = sphi 0, %s246
    %s264 = sphi 0, %s264
    %s266 = sphi 0, %s264
    %s267 = sphi 0, %s266
    %s281 = sphi 0, %s267
    %s285 = sphi 0, %s285
    %s287 = sphi 0, %s285
    %s288 = sphi 0, %s287
    %s302 = sphi 0, %s288
    %s306 = sphi 0, %s306
    %s308 = sphi 0, %s306
    %s309 = sphi 0, %s308
    %s323 = sphi 0, %s309
    %s327 = sphi 0, %s327
    %s329 = sphi 0, %s327
    %s330 = sphi 0, %s329
    %s344 = sphi 0, %s330
    %s348 = sphi 0, %s348
    %s350 = sphi 0, %s348
    %s351 = sphi 0, %s350
    %s365 = sphi 0, %s351
    %s373 = sphi 0, %s375
    %s376 = sphi 0, %s373
    %s377 = sphi 0, %s376
    %s393 = sphi 0, %s377
  $region4: #{_forward.4} parent=0 // loop_header_branch
    %23 = sbr.rel (%p21) target = $region8
  $region5: #{_forward.4} parent=0 // loop_body
    %s25 = ssub.s32 %s20, 1
    %s26 = ssub.s32 %s20, 2
    %s36 = sadd.s32 1, %s29
    %p37 = scmp.ge.s32.totalorder %s36, 1
    %s38 = scalar_select %p37, 0, %s36
    %s39 = sadd.s32 1, %s28
    %s40 = scalar_select %p37, %s39, %s28
    %p41 = scmp.ge.s32.totalorder %s40, 1
    %s42 = scalar_select %p41, 0, %s40
    %s43 = sadd.s32 1, %s27
    %s44 = scalar_select %p41, %s43, %s27
    %p45 = scmp.ge.s32.totalorder %s44, 2
    %s46 = scalar_select %p45, 0, %s44
    %s47 = ssub.s32 %s27, %s46
    %s48 = ssub.s32 %s28, %s42
    %s49 = sor.u32 %s47, %s48
    %p50 = scmp.eq.s32.totalorder %s49, 0
    %s52 = sadd.s32 %s51, 1
    %s53 = scalar_select %p50, %s51, %s52
    %p56 = pneg %p50
    %p57 = scmp.eq.s32.totalorder %s20, 1
    %p58 = por %p56, %p57
    %p59 = scmp.ne.s32.totalorder %s51, %s54
    %p60 = scmp.eq.s32.totalorder %s20, 0
    %p61 = por %p59, %p60
    %p62 = scmp.ne.s32.totalorder %s51, %s54
    %p63 = scmp.eq.s32.totalorder %s25, 1
    %p64 = por %p62, %p63
    %p65 = scmp.ne.s32.totalorder %s54, %s55
    %p66 = scmp.eq.s32.totalorder %s25, 0
    %p67 = por %p65, %p66
    %p68 = scmp.ne.s32.totalorder %s54, %s55
    %p69 = scmp.eq.s32.totalorder %s26, 1
    %p70 = por %p68, %p69
    %p72 = scmp.ne.s32.totalorder %s55, %s71
    %p73 = scmp.eq.s32.totalorder %s26, 0
    %p74 = por %p72, %p73
    %s75 = ssub.s32 %s27, %s46
    %s76 = ssub.s32 %s28, %s42
    %s77 = sor.u32 %s75, %s76
    %p78 = scmp.eq.s32.totalorder %s77, 0
    %s80 = sadd.s32 %s79, 1
    %s81 = scalar_select %p78, %s79, %s80
    %p84 = pneg %p78
    %p85 = scmp.eq.s32.totalorder %s20, 1
    %p86 = por %p84, %p85
    %p87 = scmp.ne.s32.totalorder %s79, %s82
    %p88 = scmp.eq.s32.totalorder %s20, 0
    %p89 = por %p87, %p88
    %p90 = scmp.ne.s32.totalorder %s79, %s82
    %p91 = scmp.eq.s32.totalorder %s25, 1
    %p92 = por %p90, %p91
    %p93 = scmp.ne.s32.totalorder %s82, %s83
    %p94 = scmp.eq.s32.totalorder %s25, 0
    %p95 = por %p93, %p94
    %p96 = scmp.ne.s32.totalorder %s82, %s83
    %p97 = scmp.eq.s32.totalorder %s26, 1
    %p98 = por %p96, %p97
    %p100 = scmp.ne.s32.totalorder %s83, %s99
    %p101 = scmp.eq.s32.totalorder %s26, 0
    %p102 = por %p100, %p101
    %s103 = ssub.s32 %s27, %s46
    %s104 = ssub.s32 %s29, %s38
    %s105 = sor.u32 %s103, %s104
    %p106 = scmp.eq.s32.totalorder %s105, 0
    %s108 = sadd.s32 %s107, 1
    %s109 = scalar_select %p106, %s107, %s108
    %p112 = pneg %p106
    %p113 = scmp.eq.s32.totalorder %s20, 1
    %p114 = por %p112, %p113
    %p115 = scmp.ne.s32.totalorder %s107, %s110
    %p116 = scmp.eq.s32.totalorder %s20, 0
    %p117 = por %p115, %p116
    %p118 = scmp.ne.s32.totalorder %s107, %s110
    %p119 = scmp.eq.s32.totalorder %s25, 1
    %p120 = por %p118, %p119
    %p121 = scmp.ne.s32.totalorder %s110, %s111
    %p122 = scmp.eq.s32.totalorder %s25, 0
    %p123 = por %p121, %p122
    %p124 = scmp.ne.s32.totalorder %s110, %s111
    %p125 = scmp.eq.s32.totalorder %s26, 1
    %p126 = por %p124, %p125
    %p128 = scmp.ne.s32.totalorder %s111, %s127
    %p129 = scmp.eq.s32.totalorder %s26, 0
    %p130 = por %p128, %p129
    %s131 = ssub.s32 %s27, %s46
    %s132 = ssub.s32 %s29, %s38
    %s133 = sor.u32 %s131, %s132
    %p134 = scmp.eq.s32.totalorder %s133, 0
    %s136 = sadd.s32 %s135, 1
    %s137 = scalar_select %p134, %s135, %s136
    %p140 = pneg %p134
    %p141 = scmp.eq.s32.totalorder %s20, 1
    %p142 = por %p140, %p141
    %p143 = scmp.ne.s32.totalorder %s135, %s138
    %p144 = scmp.eq.s32.totalorder %s20, 0
    %p145 = por %p143, %p144
    %p146 = scmp.ne.s32.totalorder %s135, %s138
    %p147 = scmp.eq.s32.totalorder %s25, 1
    %p148 = por %p146, %p147
    %p149 = scmp.ne.s32.totalorder %s138, %s139
    %p150 = scmp.eq.s32.totalorder %s25, 0
    %p151 = por %p149, %p150
    %p152 = scmp.ne.s32.totalorder %s138, %s139
    %p153 = scmp.eq.s32.totalorder %s26, 1
    %p154 = por %p152, %p153
    %p156 = scmp.ne.s32.totalorder %s139, %s155
    %p157 = scmp.eq.s32.totalorder %s26, 0
    %p158 = por %p156, %p157
    %s160 = sadd.s32 %s159, 1
    %p163 = scmp.eq.s32.totalorder %s20, 1
    %p164 = scmp.ne.s32.totalorder %s159, %s161
    %p165 = scmp.eq.s32.totalorder %s20, 0
    %p166 = por %p164, %p165
    %p167 = scmp.ne.s32.totalorder %s159, %s161
    %p168 = scmp.eq.s32.totalorder %s25, 1
    %p169 = por %p167, %p168
    %p170 = scmp.ne.s32.totalorder %s161, %s162
    %p171 = scmp.eq.s32.totalorder %s25, 0
    %p172 = por %p170, %p171
    %p173 = scmp.ne.s32.totalorder %s161, %s162
    %p174 = scmp.eq.s32.totalorder %s26, 1
    %p175 = por %p173, %p174
    %p177 = scmp.ne.s32.totalorder %s162, %s176
    %p178 = scmp.eq.s32.totalorder %s26, 0
    %p179 = por %p177, %p178
    %s181 = sadd.s32 %s180, 1
    %p184 = scmp.eq.s32.totalorder %s20, 1
    %p185 = scmp.ne.s32.totalorder %s180, %s182
    %p186 = scmp.eq.s32.totalorder %s20, 0
    %p187 = por %p185, %p186
    %p188 = scmp.ne.s32.totalorder %s180, %s182
    %p189 = scmp.eq.s32.totalorder %s25, 1
    %p190 = por %p188, %p189
    %p191 = scmp.ne.s32.totalorder %s182, %s183
    %p192 = scmp.eq.s32.totalorder %s25, 0
    %p193 = por %p191, %p192
    %p194 = scmp.ne.s32.totalorder %s182, %s183
    %p195 = scmp.eq.s32.totalorder %s26, 1
    %p196 = por %p194, %p195
    %p198 = scmp.ne.s32.totalorder %s183, %s197
    %p199 = scmp.eq.s32.totalorder %s26, 0
    %p200 = por %p198, %p199
    %s202 = sadd.s32 %s201, 1
    %p205 = scmp.eq.s32.totalorder %s20, 1
    %p206 = scmp.ne.s32.totalorder %s201, %s203
    %p207 = scmp.eq.s32.totalorder %s20, 0
    %p208 = por %p206, %p207
    %p209 = scmp.ne.s32.totalorder %s201, %s203
    %p210 = scmp.eq.s32.totalorder %s25, 1
    %p211 = por %p209, %p210
    %p212 = scmp.ne.s32.totalorder %s203, %s204
    %p213 = scmp.eq.s32.totalorder %s25, 0
    %p214 = por %p212, %p213
    %p215 = scmp.ne.s32.totalorder %s203, %s204
    %p216 = scmp.eq.s32.totalorder %s26, 1
    %p217 = por %p215, %p216
    %p219 = scmp.ne.s32.totalorder %s204, %s218
    %p220 = scmp.eq.s32.totalorder %s26, 0
    %p221 = por %p219, %p220
    %s223 = sadd.s32 %s222, 1
    %p226 = scmp.eq.s32.totalorder %s20, 1
    %p227 = scmp.ne.s32.totalorder %s222, %s224
    %p228 = scmp.eq.s32.totalorder %s20, 0
    %p229 = por %p227, %p228
    %p230 = scmp.ne.s32.totalorder %s222, %s224
    %p231 = scmp.eq.s32.totalorder %s25, 1
    %p232 = por %p230, %p231
    %p233 = scmp.ne.s32.totalorder %s224, %s225
    %p234 = scmp.eq.s32.totalorder %s25, 0
    %p235 = por %p233, %p234
    %p236 = scmp.ne.s32.totalorder %s224, %s225
    %p237 = scmp.eq.s32.totalorder %s26, 1
    %p238 = por %p236, %p237
    %p240 = scmp.ne.s32.totalorder %s225, %s239
    %p241 = scmp.eq.s32.totalorder %s26, 0
    %p242 = por %p240, %p241
    %s244 = sadd.s32 %s243, 1
    %p247 = scmp.eq.s32.totalorder %s20, 1
    %p248 = scmp.ne.s32.totalorder %s243, %s245
    %p249 = scmp.eq.s32.totalorder %s20, 0
    %p250 = por %p248, %p249
    %p251 = scmp.ne.s32.totalorder %s243, %s245
    %p252 = scmp.eq.s32.totalorder %s25, 1
    %p253 = por %p251, %p252
    %p254 = scmp.ne.s32.totalorder %s245, %s246
    %p255 = scmp.eq.s32.totalorder %s25, 0
    %p256 = por %p254, %p255
    %p257 = scmp.ne.s32.totalorder %s245, %s246
    %p258 = scmp.eq.s32.totalorder %s26, 1
    %p259 = por %p257, %p258
    %p261 = scmp.ne.s32.totalorder %s246, %s260
    %p262 = scmp.eq.s32.totalorder %s26, 0
    %p263 = por %p261, %p262
    %s265 = sadd.s32 %s264, 1
    %p268 = scmp.eq.s32.totalorder %s20, 1
    %p269 = scmp.ne.s32.totalorder %s264, %s266
    %p270 = scmp.eq.s32.totalorder %s20, 0
    %p271 = por %p269, %p270
    %p272 = scmp.ne.s32.totalorder %s264, %s266
    %p273 = scmp.eq.s32.totalorder %s25, 1
    %p274 = por %p272, %p273
    %p275 = scmp.ne.s32.totalorder %s266, %s267
    %p276 = scmp.eq.s32.totalorder %s25, 0
    %p277 = por %p275, %p276
    %p278 = scmp.ne.s32.totalorder %s266, %s267
    %p279 = scmp.eq.s32.totalorder %s26, 1
    %p280 = por %p278, %p279
    %p282 = scmp.ne.s32.totalorder %s267, %s281
    %p283 = scmp.eq.s32.totalorder %s26, 0
    %p284 = por %p282, %p283
    %s286 = sadd.s32 %s285, 1
    %p289 = scmp.eq.s32.totalorder %s20, 1
    %p290 = scmp.ne.s32.totalorder %s285, %s287
    %p291 = scmp.eq.s32.totalorder %s20, 0
    %p292 = por %p290, %p291
    %p293 = scmp.ne.s32.totalorder %s285, %s287
    %p294 = scmp.eq.s32.totalorder %s25, 1
    %p295 = por %p293, %p294
    %p296 = scmp.ne.s32.totalorder %s287, %s288
    %p297 = scmp.eq.s32.totalorder %s25, 0
    %p298 = por %p296, %p297
    %p299 = scmp.ne.s32.totalorder %s287, %s288
    %p300 = scmp.eq.s32.totalorder %s26, 1
    %p301 = por %p299, %p300
    %p303 = scmp.ne.s32.totalorder %s288, %s302
    %p304 = scmp.eq.s32.totalorder %s26, 0
    %p305 = por %p303, %p304
    %s307 = sadd.s32 %s306, 1
    %p310 = scmp.eq.s32.totalorder %s20, 1
    %p311 = scmp.ne.s32.totalorder %s306, %s308
    %p312 = scmp.eq.s32.totalorder %s20, 0
    %p313 = por %p311, %p312
    %p314 = scmp.ne.s32.totalorder %s306, %s308
    %p315 = scmp.eq.s32.totalorder %s25, 1
    %p316 = por %p314, %p315
    %p317 = scmp.ne.s32.totalorder %s308, %s309
    %p318 = scmp.eq.s32.totalorder %s25, 0
    %p319 = por %p317, %p318
    %p320 = scmp.ne.s32.totalorder %s308, %s309
    %p321 = scmp.eq.s32.totalorder %s26, 1
    %p322 = por %p320, %p321
    %p324 = scmp.ne.s32.totalorder %s309, %s323
    %p325 = scmp.eq.s32.totalorder %s26, 0
    %p326 = por %p324, %p325
    %s328 = sadd.s32 %s327, 1
    %p331 = scmp.eq.s32.totalorder %s20, 1
    %p332 = scmp.ne.s32.totalorder %s327, %s329
    %p333 = scmp.eq.s32.totalorder %s20, 0
    %p334 = por %p332, %p333
    %p335 = scmp.ne.s32.totalorder %s327, %s329
    %p336 = scmp.eq.s32.totalorder %s25, 1
    %p337 = por %p335, %p336
    %p338 = scmp.ne.s32.totalorder %s329, %s330
    %p339 = scmp.eq.s32.totalorder %s25, 0
    %p340 = por %p338, %p339
    %p341 = scmp.ne.s32.totalorder %s329, %s330
    %p342 = scmp.eq.s32.totalorder %s26, 1
    %p343 = por %p341, %p342
    %p345 = scmp.ne.s32.totalorder %s330, %s344
    %p346 = scmp.eq.s32.totalorder %s26, 0
    %p347 = por %p345, %p346
    %s349 = sadd.s32 %s348, 1
    %p352 = scmp.eq.s32.totalorder %s20, 1
    %p353 = scmp.ne.s32.totalorder %s348, %s350
    %p354 = scmp.eq.s32.totalorder %s20, 0
    %p355 = por %p353, %p354
    %p356 = scmp.ne.s32.totalorder %s348, %s350
    %p357 = scmp.eq.s32.totalorder %s25, 1
    %p358 = por %p356, %p357
    %p359 = scmp.ne.s32.totalorder %s350, %s351
    %p360 = scmp.eq.s32.totalorder %s25, 0
    %p361 = por %p359, %p360
    %p362 = scmp.ne.s32.totalorder %s350, %s351
    %p363 = scmp.eq.s32.totalorder %s26, 1
    %p364 = por %p362, %p363
    %p366 = scmp.ne.s32.totalorder %s351, %s365
    %p367 = scmp.eq.s32.totalorder %s26, 0
    %p368 = por %p366, %p367
    %s369 = ssub.s32 %s27, %s46
    %s370 = ssub.s32 %s28, %s42
    %s371 = sor.u32 %s369, %s370
    %p372 = scmp.eq.s32.totalorder %s371, 0
    %s374 = sadd.s32 %s373, 1
    %s375 = scalar_select %p372, %s373, %s374
    %p378 = pneg %p372
    %p379 = scmp.eq.s32.totalorder %s20, 1
    %p380 = por %p378, %p379
    %p381 = scmp.ne.s32.totalorder %s373, %s376
    %p382 = scmp.eq.s32.totalorder %s20, 0
    %p383 = por %p381, %p382
    %p384 = scmp.ne.s32.totalorder %s373, %s376
    %p385 = scmp.eq.s32.totalorder %s25, 1
    %p386 = por %p384, %p385
    %p387 = scmp.ne.s32.totalorder %s376, %s377
    %p388 = scmp.eq.s32.totalorder %s25, 0
    %p389 = por %p387, %p388
    %p390 = scmp.ne.s32.totalorder %s376, %s377
    %p391 = scmp.eq.s32.totalorder %s26, 1
    %p392 = por %p390, %p391
    %p394 = scmp.ne.s32.totalorder %s377, %s393
    %p395 = scmp.eq.s32.totalorder %s26, 0
    %p396 = por %p394, %p395
    %p397 = scmp.le.s32.totalorder 1, %s20
    %p398 = scmp.lt.s32.totalorder %s20, 3
    %p399 = pnand %p397, %p398
    %p400 = pneg %p399
    // Predicated region
    $region9: #{_forward.4} parent=5 // pred_check
      _
    $region10: #{_forward.4} parent=5 // pred_check_branch
      %402 = sbr.rel (%p399) target = $region12
    $region11: #{_forward.4} parent=5 // pred_region
      %s403 = ssub.s32 %s20, 1
      // Predicated region
      $region13: #{_forward.4} parent=11 // pred_check
        %p404 = pneg %p172
      $region14: #{_forward.4} parent=11 // pred_check_branch
        %406 = sbr.rel (%p404) target = $region16
      $region15: #{_forward.4} parent=11 // pred_region
        _
      $region16: #{_forward.4} parent=11 // pred_fallthru
        _
      // Predicated region
      $region17: #{_forward.4} parent=11 // pred_check
        %p407 = pneg %p193
      $region18: #{_forward.4} parent=11 // pred_check_branch
        %409 = sbr.rel (%p407) target = $region20
      $region19: #{_forward.4} parent=11 // pred_region
        _
      $region20: #{_forward.4} parent=11 // pred_fallthru
        _
      // Predicated region
      $region21: #{_forward.4} parent=11 // pred_check
        %p410 = pneg %p214
      $region22: #{_forward.4} parent=11 // pred_check_branch
        %412 = sbr.rel (%p410) target = $region24
      $region23: #{_forward.4} parent=11 // pred_region
        _
      $region24: #{_forward.4} parent=11 // pred_fallthru
        _
      // Predicated region
      $region25: #{_forward.4} parent=11 // pred_check
        %p413 = pneg %p235
      $region26: #{_forward.4} parent=11 // pred_check_branch
        %415 = sbr.rel (%p413) target = $region28
      $region27: #{_forward.4} parent=11 // pred_region
        _
      $region28: #{_forward.4} parent=11 // pred_fallthru
        _
      // Predicated region
      $region29: #{_forward.4} parent=11 // pred_check
        %p416 = pneg %p256
      $region30: #{_forward.4} parent=11 // pred_check_branch
        %418 = sbr.rel (%p416) target = $region32
      $region31: #{_forward.4} parent=11 // pred_region
        _
      $region32: #{_forward.4} parent=11 // pred_fallthru
        _
      // Predicated region
      $region33: #{_forward.4} parent=11 // pred_check
        %p419 = pneg %p277
      $region34: #{_forward.4} parent=11 // pred_check_branch
        %421 = sbr.rel (%p419) target = $region36
      $region35: #{_forward.4} parent=11 // pred_region
        _
      $region36: #{_forward.4} parent=11 // pred_fallthru
        _
      // Predicated region
      $region37: #{_forward.4} parent=11 // pred_check
        %p422 = pneg %p298
      $region38: #{_forward.4} parent=11 // pred_check_branch
        %424 = sbr.rel (%p422) target = $region40
      $region39: #{_forward.4} parent=11 // pred_region
        _
      $region40: #{_forward.4} parent=11 // pred_fallthru
        _
      // Predicated region
      $region41: #{_forward.4} parent=11 // pred_check
        %p425 = pneg %p319
      $region42: #{_forward.4} parent=11 // pred_check_branch
        %427 = sbr.rel (%p425) target = $region44
      $region43: #{_forward.4} parent=11 // pred_region
        _
      $region44: #{_forward.4} parent=11 // pred_fallthru
        _
      // Predicated region
      $region45: #{_forward.4} parent=11 // pred_check
        %p428 = pneg %p340
      $region46: #{_forward.4} parent=11 // pred_check_branch
        %430 = sbr.rel (%p428) target = $region48
      $region47: #{_forward.4} parent=11 // pred_region
        _
      $region48: #{_forward.4} parent=11 // pred_fallthru
        _
      // Predicated region
      $region49: #{_forward.4} parent=11 // pred_check
        %p431 = pneg %p361
      $region50: #{_forward.4} parent=11 // pred_check_branch
        %433 = sbr.rel (%p431) target = $region52
      $region51: #{_forward.4} parent=11 // pred_region
        _
      $region52: #{_forward.4} parent=11 // pred_fallthru
        _
    $region12: #{_forward.4} parent=5 // pred_fallthru
      _
    %p434 = scmp.lt.s32.totalorder %s20, 2
    // Predicated region
    $region53: #{_forward.4} parent=5 // pred_check
      %p435 = pneg %p434
    $region54: #{_forward.4} parent=5 // pred_check_branch
      %437 = sbr.rel (%p435) target = $region56
    $region55: #{_forward.4} parent=5 // pred_region
      // Predicated region
      $region57: #{_forward.4} parent=55 // pred_check
        %p438 = pneg %p61
      $region58: #{_forward.4} parent=55 // pred_check_branch
        %440 = sbr.rel (%p438) target = $region60
      $region59: #{_forward.4} parent=55 // pred_region
        %p441 = scmp.lt.s32.totalorder %s27, 1
        %s442 = scalar_select %p441, %s27, 1
        %p443 = scmp.lt.s32.totalorder %s28, 0
        %s444 = scalar_select %p443, %s28, 0
        %s445 = sadd.s32 %s444, %s442
        %s446 = smul.addr %s445, 8
        %s447 = scalar_lea.vmem %s0, %s446
      $region60: #{_forward.4} parent=55 // pred_fallthru
        _
      // Predicated region
      $region61: #{_forward.4} parent=55 // pred_check
        %p448 = pneg %p89
      $region62: #{_forward.4} parent=55 // pred_check_branch
        %450 = sbr.rel (%p448) target = $region64
      $region63: #{_forward.4} parent=55 // pred_region
        %p451 = scmp.lt.s32.totalorder %s27, 1
        %s452 = scalar_select %p451, %s27, 1
        %p453 = scmp.lt.s32.totalorder %s28, 0
        %s454 = scalar_select %p453, %s28, 0
        %s455 = sadd.s32 %s454, %s452
        %s456 = smul.addr %s455, 4
        %s457 = scalar_lea.vmem %s1, %s456
      $region64: #{_forward.4} parent=55 // pred_fallthru
        _
      // Predicated region
      $region65: #{_forward.4} parent=55 // pred_check
        %p458 = pneg %p117
      $region66: #{_forward.4} parent=55 // pred_check_branch
        %460 = sbr.rel (%p458) target = $region68
      $region67: #{_forward.4} parent=55 // pred_region
        %s461 = smul.u32 2, %s29
        %p462 = scmp.lt.s32.totalorder %s27, 1
        %s463 = scalar_select %p462, %s27, 1
        %p464 = scmp.lt.s32.totalorder %s461, 1
        %s465 = scalar_select %p464, %s461, 1
        %s466 = smul.addr %s463, 2
        %s467 = sadd.s32 %s465, %s466
        %s468 = smul.addr %s467, 4
        %s469 = scalar_lea.vmem %s2, %s468
        %s470 = smul.u32 2, %s29
      $region68: #{_forward.4} parent=55 // pred_fallthru
        _
      // Predicated region
      $region69: #{_forward.4} parent=55 // pred_check
        %p471 = pneg %p145
      $region70: #{_forward.4} parent=55 // pred_check_branch
        %473 = sbr.rel (%p471) target = $region72
      $region71: #{_forward.4} parent=55 // pred_region
        %s474 = smul.u32 2, %s29
        %p475 = scmp.lt.s32.totalorder %s27, 1
        %s476 = scalar_select %p475, %s27, 1
        %p477 = scmp.lt.s32.totalorder %s474, 1
        %s478 = scalar_select %p477, %s474, 1
        %s479 = smul.addr %s476, 2
        %s480 = sadd.s32 %s478, %s479
        %s481 = smul.addr %s480, 4
        %s482 = scalar_lea.vmem %s3, %s481
        %s483 = smul.u32 2, %s29
      $region72: #{_forward.4} parent=55 // pred_fallthru
        _
    $region56: #{_forward.4} parent=5 // pred_fallthru
      _
    %p484 = scmp.le.s32.totalorder 1, %s20
    %p485 = scmp.lt.s32.totalorder %s20, 3
    %p486 = pnand %p484, %p485
    %p487 = pneg %p486
    // Predicated region
    $region73: #{_forward.4} parent=5 // pred_check
      _
    $region74: #{_forward.4} parent=5 // pred_check_branch
      %489 = sbr.rel (%p486) target = $region76
    $region75: #{_forward.4} parent=5 // pred_region
      %s490 = ssub.s32 %s20, 1
      %p491 = scmp.lt.s32.totalorder %s30, 1
      %s492 = scalar_select %p491, %s30, 1
      %p493 = scmp.lt.s32.totalorder %s31, 0
      %s494 = scalar_select %p493, %s31, 0
      %s495 = sadd.s32 %s494, %s492
      %s496 = smul.addr %s495, 8
      %s497 = scalar_lea.vmem %s0, %s496
      %p498 = pneg %p67
      %p499 = pneg %p64
      %p500 = scmp.lt.s32.totalorder %s30, 1
      %s501 = scalar_select %p500, %s30, 1
      %p502 = scmp.lt.s32.totalorder %s31, 0
      %s503 = scalar_select %p502, %s31, 0
      %s504 = sadd.s32 %s503, %s501
      %s505 = smul.addr %s504, 4
      %s506 = scalar_lea.vmem %s1, %s505
      %p507 = pneg %p95
      %p508 = pneg %p92
      %s509 = smul.u32 2, %s32
      %p510 = scmp.lt.s32.totalorder %s30, 1
      %s511 = scalar_select %p510, %s30, 1
      %p512 = scmp.lt.s32.totalorder %s509, 1
      %s513 = scalar_select %p512, %s509, 1
      %s514 = smul.addr %s511, 2
      %s515 = sadd.s32 %s513, %s514
      %s516 = smul.addr %s515, 4
      %s517 = scalar_lea.vmem %s2, %s516
      %p518 = pneg %p123
      %p519 = pneg %p120
      %s520 = smul.u32 2, %s32
      %p521 = scmp.lt.s32.totalorder %s30, 1
      %s522 = scalar_select %p521, %s30, 1
      %p523 = scmp.lt.s32.totalorder %s520, 1
      %s524 = scalar_select %p523, %s520, 1
      %s525 = smul.addr %s522, 2
      %s526 = sadd.s32 %s524, %s525
      %s527 = smul.addr %s526, 4
      %s528 = scalar_lea.vmem %s3, %s527
      %p529 = pneg %p151
      %p530 = pneg %p148
      %p531 = pneg %p172
      %p532 = pneg %p169
      %p533 = pneg %p193
      %p534 = pneg %p190
      %p535 = pneg %p214
      %p536 = pneg %p211
      %p537 = pneg %p235
      %p538 = pneg %p232
      %p539 = pneg %p256
      %p540 = pneg %p253
      %p541 = pneg %p277
      %p542 = pneg %p274
      %p543 = pneg %p298
      %p544 = pneg %p295
      %p545 = pneg %p319
      %p546 = pneg %p316
      %p547 = pneg %p340
      %p548 = pneg %p337
      %p549 = pneg %p361
      %p550 = pneg %p358
      %p551 = pneg %p389
      %p552 = pneg %p386
      %p553 = scmp.lt.s32.totalorder %s30, 1
      %s554 = scalar_select %p553, %s30, 1
      %p555 = scmp.lt.s32.totalorder %s31, 0
      %s556 = scalar_select %p555, %s31, 0
      %s557 = sadd.s32 %s556, %s554
      %s558 = smul.addr %s557, 8
      %s559 = scalar_lea.vmem %s14, %s558
      %p560 = scmp.lt.s32.totalorder %s30, 1
      %s561 = scalar_select %p560, %s30, 1
      %p562 = scmp.lt.s32.totalorder %s31, 0
      %s563 = scalar_select %p562, %s31, 0
      %s564 = sadd.s32 %s563, %s561
      %s565 = smul.addr %s564, 8
      %s566 = scalar_lea.vmem %s0, %s565
      %p567 = scmp.lt.s32.totalorder %s30, 1
      %s568 = scalar_select %p567, %s30, 1
      %p569 = scmp.lt.s32.totalorder %s31, 0
      %s570 = scalar_select %p569, %s31, 0
      %s571 = sadd.s32 %s570, %s568
      %s572 = smul.addr %s571, 4
      %s573 = scalar_lea.vmem %s1, %s572
      %s574 = smul.u32 2, %s32
      %p575 = scmp.lt.s32.totalorder %s30, 1
      %s576 = scalar_select %p575, %s30, 1
      %p577 = scmp.lt.s32.totalorder %s574, 1
      %s578 = scalar_select %p577, %s574, 1
      %s579 = smul.addr %s576, 2
      %s580 = sadd.s32 %s578, %s579
      %s581 = smul.addr %s580, 4
      %s582 = scalar_lea.vmem %s2, %s581
      %s583 = smul.u32 2, %s32
      %s584 = smul.u32 2, %s32
      %p585 = scmp.lt.s32.totalorder %s30, 1
      %s586 = scalar_select %p585, %s30, 1
      %p587 = scmp.lt.s32.totalorder %s584, 1
      %s588 = scalar_select %p587, %s584, 1
      %s589 = smul.addr %s586, 2
      %s590 = sadd.s32 %s588, %s589
      %s591 = smul.addr %s590, 4
      %s592 = scalar_lea.vmem %s3, %s591
      %s593 = smul.u32 2, %s32
      %p594 = scmp.lt.s32.totalorder %s30, 1
      %s595 = scalar_select %p594, %s30, 1
      %p596 = scmp.lt.s32.totalorder %s31, 0
      %s597 = scalar_select %p596, %s31, 0
      %s598 = sadd.s32 %s597, %s595
      %s599 = smul.addr %s598, 8
      %s600 = scalar_lea.vmem %s14, %s599
      %p602 = scmp.eq.s32.totalorder %s32, 0
      // Predicated region
      $region77: #{_forward.4} parent=75 // pred_check
        %p603 = pneg %p602
      $region78: #{_forward.4} parent=75 // pred_check_branch
        %605 = sbr.rel (%p603) target = $region80
      $region79: #{_forward.4} parent=75 // pred_region
        %v606 = vld [vmem:[%s573] sm:$0xf]
        %v607 = vld [vmem:[%s4] sm:$0xf]
        %v608 = vld [vmem:[%s4 + $0x4] sm:$0xf]
        %v609 = vld [vmem:[%s4 + $0x8] sm:$0xf]
        %v610 = vld [vmem:[%s4 + $0xc] sm:$0xf]
        %v611 = vld [vmem:[%s8] sm:$0x1]
        %v613 = vlaneseq
        %v614 = vshrl.u32 %v613, 7
        %v615 = vsub.s32 0, %v614
        %v616 = vrot.slane %v611, %v615
        %v622 = vunpack.c.l.b16 %v607
        %v623 = vunpack.c.l.b16 %v608
        %v624 = vunpack.c.l.b16 %v609
        %v625 = vunpack.c.l.b16 %v610
        %v626 = vpack.c.b16 %v623, %v622
        %v627 = vpack.c.b16 %v625, %v624
        %vm630 = vcmask 261120
        %v632 = vsel %vm630, %v606, 0
        %634 = vmatprep.subr.bf16.mxu0 0
        %635 = vmatpush1.bf16.msra.mxu0 %v626
        %636 = vmatprep.subr.bf16.mxu0 0
        %637 = vmatpush1.bf16.msra.mxu0 %v627
        %638 = vmatprep.subr.bf16.mxu0 0
        %639 = vmatpush1.bf16.msra.mxu0 0
        %640 = vmatprep.subr.bf16.mxu0 0
        %641 = vmatpush1.bf16.msra.mxu0 0
        %642 = vmatprep.subr.bf16.mxu0 0
        %643 = vmatpush1.bf16.msra.mxu0 0
        %644 = vmatprep.subr.bf16.mxu0 0
        %645 = vmatpush1.bf16.msra.mxu0 0
        %646 = vmatprep.subr.bf16.mxu0 0
        %647 = vmatpush1.bf16.msra.mxu0 0
        %648 = vmatprep.subr.bf16.mxu0 0
        %649 = vmatpush1.bf16.msra.mxu0 0
        %650 = vmatprep.subr.bf16.mxu0 0
        %651 = vmatpush1.bf16.msra.mxu0 0
        %652 = vmatprep.subr.bf16.mxu0 0
        %653 = vmatpush1.bf16.msra.mxu0 0
        %654 = vmatprep.subr.bf16.mxu0 0
        %655 = vmatpush1.bf16.msra.mxu0 0
        %656 = vmatprep.subr.bf16.mxu0 0
        %657 = vmatpush1.bf16.msra.mxu0 0
        %658 = vmatprep.subr.bf16.mxu0 0
        %659 = vmatpush1.bf16.msra.mxu0 0
        %660 = vmatprep.subr.bf16.mxu0 0
        %661 = vmatpush1.bf16.msra.mxu0 0
        %662 = vmatprep.subr.bf16.mxu0 0
        %663 = vmatpush1.bf16.msra.mxu0 0
        %664 = vmatprep.subr.bf16.mxu0 0
        %665 = vmatpush1.bf16.msra.mxu0 0
        %666 = vmatprep.mubr.bf16.mxu0 0
        %667 = vmatmul.mubr.bf16.gmra.mrb[0].mxu0 %v632
        %v668 = vpop.f32.mrb[0].mxu0
        %v669 = vadd.f32 %v616, %v668
        %v670 = vpop.f32.mrb[0].mxu0
        %v671 = vpop.f32.mrb[0].mxu0
        %v672 = vpop.f32.mrb[0].mxu0
        %673 = vdwg.mxu0
        %v674 = vpack.c.bf16 %v669, %v669
        %vm675 = vcmask 257024
        %676 = vst.msk [vmem:[#allocation2] sm:$0xf] %vm675, %v674
        %vm677 = vcmask 7168
        %678 = vst.msk [vmem:[#allocation3] sm:$0xff] %vm677, -inf
        %679 = vst.msk [vmem:[#allocation3 + $0x8] sm:$0xff] %vm677, -inf
        %680 = vst.msk [vmem:[#allocation3 + $0x10] sm:$0xff] %vm677, -inf
        %681 = vst.msk [vmem:[#allocation3 + $0x18] sm:$0xff] %vm677, -inf
        %682 = vst.msk [vmem:[#allocation3 + $0x20] sm:$0xff] %vm677, -inf
        %683 = vst.msk [vmem:[#allocation3 + $0x28] sm:$0xff] %vm677, -inf
        %684 = vst.msk [vmem:[#allocation3 + $0x30] sm:$0xff] %vm677, -inf
        %685 = vst.msk [vmem:[#allocation3 + $0x38] sm:$0xff] %vm677, -inf
        %686 = vst.msk [vmem:[#allocation4] sm:$0xff] %vm677, 0.0
        %687 = vst.msk [vmem:[#allocation4 + $0x8] sm:$0xff] %vm677, 0.0
        %688 = vst.msk [vmem:[#allocation4 + $0x10] sm:$0xff] %vm677, 0.0
        %689 = vst.msk [vmem:[#allocation4 + $0x18] sm:$0xff] %vm677, 0.0
        %690 = vst.msk [vmem:[#allocation4 + $0x20] sm:$0xff] %vm677, 0.0
        %691 = vst.msk [vmem:[#allocation4 + $0x28] sm:$0xff] %vm677, 0.0
        %692 = vst.msk [vmem:[#allocation4 + $0x30] sm:$0xff] %vm677, 0.0
        %693 = vst.msk [vmem:[#allocation4 + $0x38] sm:$0xff] %vm677, 0.0
        %vm694 = vcmask 31744
        %695 = vst.msk [vmem:[#allocation5] sm:$0xff] %vm694, 0.0
        %696 = vst.msk [vmem:[#allocation5 + $0x8] sm:$0xff] %vm694, 0.0
        %697 = vst.msk [vmem:[#allocation5 + $0x10] sm:$0xff] %vm694, 0.0
        %698 = vst.msk [vmem:[#allocation5 + $0x18] sm:$0xff] %vm694, 0.0
        %699 = vst.msk [vmem:[#allocation5 + $0x20] sm:$0xff] %vm694, 0.0
        %700 = vst.msk [vmem:[#allocation5 + $0x28] sm:$0xff] %vm694, 0.0
        %701 = vst.msk [vmem:[#allocation5 + $0x30] sm:$0xff] %vm694, 0.0
        %702 = vst.msk [vmem:[#allocation5 + $0x38] sm:$0xff] %vm694, 0.0
      $region80: #{_forward.4} parent=75 // pred_fallthru
        _
      %v703 = vld [vmem:[%s582] sm:$0xf]
      %v704 = vld [vmem:[%s582 + $0x4] sm:$0xf]
      %v705 = vld [vmem:[%s5] sm:$0xf]
      %v706 = vld [vmem:[%s5 + $0x4] sm:$0xf]
      %v707 = vld [vmem:[%s5 + $0x8] sm:$0xf]
      %v708 = vld [vmem:[%s5 + $0xc] sm:$0xf]
      %v709 = vld [vmem:[%s9] sm:$0x1]
      %v711 = vlaneseq
      %v712 = vshrl.u32 %v711, 7
      %v713 = vsub.s32 0, %v712
      %v714 = vrot.slane %v709, %v713
      %v718 = vunpack.c.l.b16 %v703
      %v719 = vunpack.c.l.b16 %v704
      %v720 = vpack.c.b16 %v719, %v718
      %v725 = vunpack.c.l.b16 %v705
      %v726 = vunpack.c.l.b16 %v706
      %v727 = vunpack.c.l.b16 %v707
      %v728 = vunpack.c.l.b16 %v708
      %v729 = vpack.c.b16 %v726, %v725
      %v730 = vpack.c.b16 %v728, %v727
      %vm733 = vcmask 261120
      %v735 = vsel %vm733, %v720, 0
      %737 = vmatprep.subr.bf16.mxu0 0
      %738 = vmatpush1.bf16.msra.mxu0 %v729
      %739 = vmatprep.subr.bf16.mxu0 0
      %740 = vmatpush1.bf16.msra.mxu0 %v730
      %741 = vmatprep.subr.bf16.mxu0 0
      %742 = vmatpush1.bf16.msra.mxu0 0
      %743 = vmatprep.subr.bf16.mxu0 0
      %744 = vmatpush1.bf16.msra.mxu0 0
      %745 = vmatprep.subr.bf16.mxu0 0
      %746 = vmatpush1.bf16.msra.mxu0 0
      %747 = vmatprep.subr.bf16.mxu0 0
      %748 = vmatpush1.bf16.msra.mxu0 0
      %749 = vmatprep.subr.bf16.mxu0 0
      %750 = vmatpush1.bf16.msra.mxu0 0
      %751 = vmatprep.subr.bf16.mxu0 0
      %752 = vmatpush1.bf16.msra.mxu0 0
      %753 = vmatprep.subr.bf16.mxu0 0
      %754 = vmatpush1.bf16.msra.mxu0 0
      %755 = vmatprep.subr.bf16.mxu0 0
      %756 = vmatpush1.bf16.msra.mxu0 0
      %757 = vmatprep.subr.bf16.mxu0 0
      %758 = vmatpush1.bf16.msra.mxu0 0
      %759 = vmatprep.subr.bf16.mxu0 0
      %760 = vmatpush1.bf16.msra.mxu0 0
      %761 = vmatprep.subr.bf16.mxu0 0
      %762 = vmatpush1.bf16.msra.mxu0 0
      %763 = vmatprep.subr.bf16.mxu0 0
      %764 = vmatpush1.bf16.msra.mxu0 0
      %765 = vmatprep.subr.bf16.mxu0 0
      %766 = vmatpush1.bf16.msra.mxu0 0
      %767 = vmatprep.subr.bf16.mxu0 0
      %768 = vmatpush1.bf16.msra.mxu0 0
      %769 = vmatprep.mubr.bf16.mxu0 0
      %770 = vmatmul.mubr.bf16.gmra.mrb[0].mxu0 %v735
      %v771 = vpop.f32.mrb[0].mxu0
      %v772 = vadd.f32 %v714, %v771
      %v773 = vpop.f32.mrb[0].mxu0
      %v774 = vpop.f32.mrb[0].mxu0
      %v775 = vadd.f32 %v714, %v774
      %v776 = vpop.f32.mrb[0].mxu0
      %777 = vdwg.mxu0
      %v778 = vpack.c.bf16 %v775, %v772
      %v779 = vld [vmem:[%s592] sm:$0xf]
      %v780 = vld [vmem:[%s592 + $0x4] sm:$0xf]
      %v781 = vld [vmem:[%s6] sm:$0xf]
      %v782 = vld [vmem:[%s6 + $0x4] sm:$0xf]
      %v783 = vld [vmem:[%s6 + $0x8] sm:$0xf]
      %v784 = vld [vmem:[%s6 + $0xc] sm:$0xf]
      %v785 = vld [vmem:[%s10] sm:$0x1]
      %v787 = vlaneseq
      %v788 = vshrl.u32 %v787, 7
      %v789 = vsub.s32 0, %v788
      %v790 = vrot.slane %v785, %v789
      %v794 = vunpack.c.l.b16 %v779
      %v795 = vunpack.c.l.b16 %v780
      %v796 = vpack.c.b16 %v795, %v794
      %v801 = vunpack.c.l.b16 %v781
      %v802 = vunpack.c.l.b16 %v782
      %v803 = vunpack.c.l.b16 %v783
      %v804 = vunpack.c.l.b16 %v784
      %v805 = vpack.c.b16 %v802, %v801
      %v806 = vpack.c.b16 %v804, %v803
      %v810 = vsel %vm733, %v796, 0
      %812 = vmatprep.subr.bf16.mxu0 0
      %813 = vmatpush1.bf16.msra.mxu0 %v805
      %814 = vmatprep.subr.bf16.mxu0 0
      %815 = vmatpush1.bf16.msra.mxu0 %v806
      %816 = vmatprep.subr.bf16.mxu0 0
      %817 = vmatpush1.bf16.msra.mxu0 0
      %818 = vmatprep.subr.bf16.mxu0 0
      %819 = vmatpush1.bf16.msra.mxu0 0
      %820 = vmatprep.subr.bf16.mxu0 0
      %821 = vmatpush1.bf16.msra.mxu0 0
      %822 = vmatprep.subr.bf16.mxu0 0
      %823 = vmatpush1.bf16.msra.mxu0 0
      %824 = vmatprep.subr.bf16.mxu0 0
      %825 = vmatpush1.bf16.msra.mxu0 0
      %826 = vmatprep.subr.bf16.mxu0 0
      %827 = vmatpush1.bf16.msra.mxu0 0
      %828 = vmatprep.subr.bf16.mxu0 0
      %829 = vmatpush1.bf16.msra.mxu0 0
      %830 = vmatprep.subr.bf16.mxu0 0
      %831 = vmatpush1.bf16.msra.mxu0 0
      %832 = vmatprep.subr.bf16.mxu0 0
      %833 = vmatpush1.bf16.msra.mxu0 0
      %834 = vmatprep.subr.bf16.mxu0 0
      %835 = vmatpush1.bf16.msra.mxu0 0
      %836 = vmatprep.subr.bf16.mxu0 0
      %837 = vmatpush1.bf16.msra.mxu0 0
      %838 = vmatprep.subr.bf16.mxu0 0
      %839 = vmatpush1.bf16.msra.mxu0 0
      %840 = vmatprep.subr.bf16.mxu0 0
      %841 = vmatpush1.bf16.msra.mxu0 0
      %842 = vmatprep.subr.bf16.mxu0 0
      %843 = vmatpush1.bf16.msra.mxu0 0
      %844 = vmatprep.mubr.bf16.mxu0 0
      %845 = vmatmul.mubr.bf16.gmra.mrb[0].mxu0 %v810
      %v846 = vpop.f32.mrb[0].mxu0
      %v847 = vadd.f32 %v790, %v846
      %v848 = vpop.f32.mrb[0].mxu0
      %v849 = vpop.f32.mrb[0].mxu0
      %v850 = vadd.f32 %v790, %v849
      %v851 = vpop.f32.mrb[0].mxu0
      %852 = vdwg.mxu0
      %v853 = vpack.c.bf16 %v850, %v847
      %v854 = vld [vmem:[#allocation2] sm:$0xf]
      %vm855 = vcmask 31744
      %v857 = vsel %vm855, %v854, 0
      %v860 = vsel %vm855, %v778, 0
      %862 = vmatprep.subr.bf16.mxu0 0
      %863 = vmatpush1.bf16.xpose.msra.mxu0 %v860
      %864 = vmatprep.subr.bf16.mxu0 0
      %865 = vmatpush1.bf16.xpose.msra.mxu0 0
      %866 = vmatprep.subr.bf16.mxu0 0
      %867 = vmatpush1.bf16.xpose.msra.mxu0 0
      %868 = vmatprep.subr.bf16.mxu0 0
      %869 = vmatpush1.bf16.xpose.msra.mxu0 0
      %870 = vmatprep.subr.bf16.mxu0 0
      %871 = vmatpush1.bf16.xpose.msra.mxu0 0
      %872 = vmatprep.subr.bf16.mxu0 0
      %873 = vmatpush1.bf16.xpose.msra.mxu0 0
      %874 = vmatprep.subr.bf16.mxu0 0
      %875 = vmatpush1.bf16.xpose.msra.mxu0 0
      %876 = vmatprep.subr.bf16.mxu0 0
      %877 = vmatpush1.bf16.xpose.msra.mxu0 0
      %878 = vmatprep.subr.bf16.mxu0 0
      %879 = vmatpush1.bf16.xpose.msra.mxu0 0
      %880 = vmatprep.subr.bf16.mxu0 0
      %881 = vmatpush1.bf16.xpose.msra.mxu0 0
      %882 = vmatprep.subr.bf16.mxu0 0
      %883 = vmatpush1.bf16.xpose.msra.mxu0 0
      %884 = vmatprep.subr.bf16.mxu0 0
      %885 = vmatpush1.bf16.xpose.msra.mxu0 0
      %886 = vmatprep.subr.bf16.mxu0 0
      %887 = vmatpush1.bf16.xpose.msra.mxu0 0
      %888 = vmatprep.subr.bf16.mxu0 0
      %889 = vmatpush1.bf16.xpose.msra.mxu0 0
      %890 = vmatprep.subr.bf16.mxu0 0
      %891 = vmatpush1.bf16.xpose.msra.mxu0 0
      %892 = vmatprep.subr.bf16.mxu0 0
      %893 = vmatpush1.bf16.xpose.msra.mxu0 0
      %894 = vmatprep.mubr.bf16.mxu0 0
      %895 = vmatmul.mubr.bf16.gmra.mrb[0].mxu0 %v857
      %v896 = vpop.f32.mrb[0].mxu0
      %v897 = vadd.f32 0.0, %v896
      %v898 = vpop.f32.mrb[0].mxu0
      %v899 = vpop.f32.mrb[0].mxu0
      %v900 = vpop.f32.mrb[0].mxu0
      %901 = vdwg.mxu0
      %v902 = vld [vmem:[#allocation3] sm:$0xff]
      %vm903 = vcmask 130048
      %v904 = vsel %vm903, %v897, -inf
      %905 = vmax.xlane.f32.xlu0 %v904
      %v906 = vpop.xlane.xlu0 %905
      %v907 = vmax.f32 %v902, %v906
      %v908 = vsub.f32 %v902, %v907
      %v909 = vmul.f32 %v908, 1.442695
      %v910 = vpow.pop %v909
      %912 = vset.pattern.permute.xlu0 0
      %913 = vperm.xlu0 %912, %v907
      %v914 = vpop.permute.xlu0 %913
      %v916 = vsub.f32 %v897, %v914
      %v917 = vmul.f32 %v916, 1.442695
      %v918 = vpow.pop %v917
      %v919 = vld [vmem:[#allocation4] sm:$0xff]
      %v920 = vmul.f32 %v910, %v919
      %v921 = vsel %vm903, %v918, 0.0
      %922 = vadd.xlane.f32.xlu0 %v921
      %v923 = vpop.xlane.xlu0 %922
      %v924 = vadd.f32 %v920, %v923
      %vm925 = vcmask 7168
      %926 = vst.msk [vmem:[#allocation4] sm:$0xff] %vm925, %v924
      %v927 = vld [vmem:[#allocation5] sm:$0xff]
      %929 = vset.pattern.permute.xlu0 0
      %930 = vperm.xlu0 %929, %v910
      %v931 = vpop.permute.xlu0 %930
      %v933 = vmul.f32 %v931, %v927
      %v934 = vpack.c.bf16 %v918, %v918
      %v936 = vsel %vm903, %v934, 0
      %938 = vmatprep.subr.bf16.mxu0 0
      %939 = vmatpush1.bf16.msra.mxu0 %v853
      %940 = vmatprep.subr.bf16.mxu0 0
      %941 = vmatpush1.bf16.msra.mxu0 0
      %942 = vmatprep.subr.bf16.mxu0 0
      %943 = vmatpush1.bf16.msra.mxu0 0
      %944 = vmatprep.subr.bf16.mxu0 0
      %945 = vmatpush1.bf16.msra.mxu0 0
      %946 = vmatprep.subr.bf16.mxu0 0
      %947 = vmatpush1.bf16.msra.mxu0 0
      %948 = vmatprep.subr.bf16.mxu0 0
      %949 = vmatpush1.bf16.msra.mxu0 0
      %950 = vmatprep.subr.bf16.mxu0 0
      %951 = vmatpush1.bf16.msra.mxu0 0
      %952 = vmatprep.subr.bf16.mxu0 0
      %953 = vmatpush1.bf16.msra.mxu0 0
      %954 = vmatprep.subr.bf16.mxu0 0
      %955 = vmatpush1.bf16.msra.mxu0 0
      %956 = vmatprep.subr.bf16.mxu0 0
      %957 = vmatpush1.bf16.msra.mxu0 0
      %958 = vmatprep.subr.bf16.mxu0 0
      %959 = vmatpush1.bf16.msra.mxu0 0
      %960 = vmatprep.subr.bf16.mxu0 0
      %961 = vmatpush1.bf16.msra.mxu0 0
      %962 = vmatprep.subr.bf16.mxu0 0
      %963 = vmatpush1.bf16.msra.mxu0 0
      %964 = vmatprep.subr.bf16.mxu0 0
      %965 = vmatpush1.bf16.msra.mxu0 0
      %966 = vmatprep.subr.bf16.mxu0 0
      %967 = vmatpush1.bf16.msra.mxu0 0
      %968 = vmatprep.subr.bf16.mxu0 0
      %969 = vmatpush1.bf16.msra.mxu0 0
      %970 = vmatprep.mubr.bf16.mxu0 0
      %971 = vmatmul.mubr.bf16.gmra.mrb[0].mxu0 %v936
      %v972 = vpop.f32.mrb[0].mxu0
      %v973 = vadd.f32 0.0, %v972
      %v974 = vpop.f32.mrb[0].mxu0
      %v975 = vpop.f32.mrb[0].mxu0
      %v976 = vpop.f32.mrb[0].mxu0
      %977 = vdwg.mxu0
      %v978 = vadd.f32 %v933, %v973
      %979 = vst.msk [vmem:[#allocation5] sm:$0xff] %vm855, %v978
      %980 = vst.msk [vmem:[#allocation3] sm:$0xff] %vm925, %v907
      %v982 = vunpack.c.l.b16 %v854
      %v983 = vpack.c.b16 %v982, %v982
      %984 = vrot.lane.b32.xlu0 %v983, 124
      %v985 = vpop.permute.xlu0 %984
      %987 = vrot.lane.b32.xlu0 %v778, 124
      %v988 = vpop.permute.xlu0 %987
      %v990 = vsel %vm855, %v985, 0
      %v993 = vsel %vm855, %v988, 0
      %995 = vmatprep.subr.bf16.mxu0 0
      %996 = vmatpush1.bf16.xpose.msra.mxu0 %v993
      %997 = vmatprep.subr.bf16.mxu0 0
      %998 = vmatpush1.bf16.xpose.msra.mxu0 0
      %999 = vmatprep.subr.bf16.mxu0 0
      %1000 = vmatpush1.bf16.xpose.msra.mxu0 0
      %1001 = vmatprep.subr.bf16.mxu0 0
      %1002 = vmatpush1.bf16.xpose.msra.mxu0 0
      %1003 = vmatprep.subr.bf16.mxu0 0
      %1004 = vmatpush1.bf16.xpose.msra.mxu0 0
      %1005 = vmatprep.subr.bf16.mxu0 0
      %1006 = vmatpush1.bf16.xpose.msra.mxu0 0
      %1007 = vmatprep.subr.bf16.mxu0 0
      %1008 = vmatpush1.bf16.xpose.msra.mxu0 0
      %1009 = vmatprep.subr.bf16.mxu0 0
      %1010 = vmatpush1.bf16.xpose.msra.mxu0 0
      %1011 = vmatprep.subr.bf16.mxu0 0
      %1012 = vmatpush1.bf16.xpose.msra.mxu0 0
      %1013 = vmatprep.subr.bf16.mxu0 0
      %1014 = vmatpush1.bf16.xpose.msra.mxu0 0
      %1015 = vmatprep.subr.bf16.mxu0 0
      %1016 = vmatpush1.bf16.xpose.msra.mxu0 0
      %1017 = vmatprep.subr.bf16.mxu0 0
      %1018 = vmatpush1.bf16.xpose.msra.mxu0 0
      %1019 = vmatprep.subr.bf16.mxu0 0
      %1020 = vmatpush1.bf16.xpose.msra.mxu0 0
      %1021 = vmatprep.subr.bf16.mxu0 0
      %1022 = vmatpush1.bf16.xpose.msra.mxu0 0
      %1023 = vmatprep.subr.bf16.mxu0 0
      %1024 = vmatpush1.bf16.xpose.msra.mxu0 0
      %1025 = vmatprep.subr.bf16.mxu0 0
      %1026 = vmatpush1.bf16.xpose.msra.mxu0 0
      %1027 = vmatprep.mubr.bf16.mxu0 0
      %1028 = vmatmul.mubr.bf16.gmra.mrb[0].mxu0 %v990
      %v1029 = vpop.f32.mrb[0].mxu0
      %v1030 = vadd.f32 0.0, %v1029
      %v1031 = vpop.f32.mrb[0].mxu0
      %v1032 = vpop.f32.mrb[0].mxu0
      %v1033 = vpop.f32.mrb[0].mxu0
      %1034 = vdwg.mxu0
      %s1035 = scalar_lea.vmem [#allocation3], 8
      %v1036 = vld [vmem:[%s1035] sm:$0xff]
      %v1037 = vsel %vm903, %v1030, -inf
      %1038 = vmax.xlane.f32.xlu0 %v1037
      %v1039 = vpop.xlane.xlu0 %1038
      %v1040 = vmax.f32 %v1036, %v1039
      %v1041 = vsub.f32 %v1036, %v1040
      %v1042 = vmul.f32 %v1041, 1.442695
      %v1043 = vpow.pop %v1042
      %1045 = vset.pattern.permute.xlu0 0
      %1046 = vperm.xlu0 %1045, %v1040
      %v1047 = vpop.permute.xlu0 %1046
      %v1049 = vsub.f32 %v1030, %v1047
      %v1050 = vmul.f32 %v1049, 1.442695
      %v1051 = vpow.pop %v1050
      %s1052 = scalar_lea.vmem [#allocation4], 8
      %v1053 = vld [vmem:[%s1052] sm:$0xff]
      %v1054 = vmul.f32 %v1043, %v1053
      %v1055 = vsel %vm903, %v1051, 0.0
      %1056 = vadd.xlane.f32.xlu0 %v1055
      %v1057 = vpop.xlane.xlu0 %1056
      %v1058 = vadd.f32 %v1054, %v1057
      %1059 = vst.msk [vmem:[%s1052] sm:$0xff] %vm925, %v1058
      %s1060 = scalar_lea.vmem [#allocation5], 8
      %v1061 = vld [vmem:[%s1060] sm:$0xff]
      %1063 = vset.pattern.permute.xlu0 0
      %1064 = vperm.xlu0 %1063, %v1043
      %v1065 = vpop.permute.xlu0 %1064
      %v1067 = vmul.f32 %v1065, %v1061
      %v1068 = vpack.c.bf16 %v1051, %v1051
      %1070 = vrot.lane.b32.xlu0 %v853, 124
      %v1071 = vpop.permute.xlu0 %1070
      %v1074 = vsel %vm903, %v1068, 0
      %1076 = vmatprep.subr.bf16.mxu0 0
      %1077 = vmatpush1.bf16.msra.mxu0 %v1071
      %1078 = vmatprep.subr.bf16.mxu0 0
      %1079 = vmatpush1.bf16.msra.mxu0 0
      %1080 = vmatprep.subr.bf16.mxu0 0
      %1081 = vmatpush1.bf16.msra.mxu0 0
      %1082 = vmatprep.subr.bf16.mxu0 0
      %1083 = vmatpush1.bf16.msra.mxu0 0
      %1084 = vmatprep.subr.bf16.mxu0 0
      %1085 = vmatpush1.bf16.msra.mxu0 0
      %1086 = vmatprep.subr.bf16.mxu0 0
      %1087 = vmatpush1.bf16.msra.mxu0 0
      %1088 = vmatprep.subr.bf16.mxu0 0
      %1089 = vmatpush1.bf16.msra.mxu0 0
      %1090 = vmatprep.subr.bf16.mxu0 0
      %1091 = vmatpush1.bf16.msra.mxu0 0
      %1092 = vmatprep.subr.bf16.mxu0 0
      %1093 = vmatpush1.bf16.msra.mxu0 0
      %1094 = vmatprep.subr.bf16.mxu0 0
      %1095 = vmatpush1.bf16.msra.mxu0 0
      %1096 = vmatprep.subr.bf16.mxu0 0
      %1097 = vmatpush1.bf16.msra.mxu0 0
      %1098 = vmatprep.subr.bf16.mxu0 0
      %1099 = vmatpush1.bf16.msra.mxu0 0
      %1100 = vmatprep.subr.bf16.mxu0 0
      %1101 = vmatpush1.bf16.msra.mxu0 0
      %1102 = vmatprep.subr.bf16.mxu0 0
      %1103 = vmatpush1.bf16.msra.mxu0 0
      %1104 = vmatprep.subr.bf16.mxu0 0
      %1105 = vmatpush1.bf16.msra.mxu0 0
      %1106 = vmatprep.subr.bf16.mxu0 0
      %1107 = vmatpush1.bf16.msra.mxu0 0
      %1108 = vmatprep.mubr.bf16.mxu0 0
      %1109 = vmatmul.mubr.bf16.gmra.mrb[0].mxu0 %v1074
      %v1110 = vpop.f32.mrb[0].mxu0
      %v1111 = vadd.f32 0.0, %v1110
      %v1112 = vpop.f32.mrb[0].mxu0
      %v1113 = vpop.f32.mrb[0].mxu0
      %v1114 = vpop.f32.mrb[0].mxu0
      %1115 = vdwg.mxu0
      %v1116 = vadd.f32 %v1067, %v1111
      %1117 = vst.msk [vmem:[%s1060] sm:$0xff] %vm855, %v1116
      %1118 = vst.msk [vmem:[%s1035] sm:$0xff] %vm925, %v1040
      %1119 = vrot.lane.b32.xlu0 %v983, 120
      %v1120 = vpop.permute.xlu0 %1119
      %1121 = vrot.lane.b32.xlu0 %v778, 120
      %v1122 = vpop.permute.xlu0 %1121
      %v1124 = vsel %vm855, %v1120, 0
      %v1127 = vsel %vm855, %v1122, 0
      %1129 = vmatprep.subr.bf16.mxu0 0
      %1130 = vmatpush1.bf16.xpose.msra.mxu0 %v1127
      %1131 = vmatprep.subr.bf16.mxu0 0
      %1132 = vmatpush1.bf16.xpose.msra.mxu0 0
      %1133 = vmatprep.subr.bf16.mxu0 0
      %1134 = vmatpush1.bf16.xpose.msra.mxu0 0
      %1135 = vmatprep.subr.bf16.mxu0 0
      %1136 = vmatpush1.bf16.xpose.msra.mxu0 0
      %1137 = vmatprep.subr.bf16.mxu0 0
      %1138 = vmatpush1.bf16.xpose.msra.mxu0 0
      %1139 = vmatprep.subr.bf16.mxu0 0
      %1140 = vmatpush1.bf16.xpose.msra.mxu0 0
      %1141 = vmatprep.subr.bf16.mxu0 0
      %1142 = vmatpush1.bf16.xpose.msra.mxu0 0
      %1143 = vmatprep.subr.bf16.mxu0 0
      %1144 = vmatpush1.bf16.xpose.msra.mxu0 0
      %1145 = vmatprep.subr.bf16.mxu0 0
      %1146 = vmatpush1.bf16.xpose.msra.mxu0 0
      %1147 = vmatprep.subr.bf16.mxu0 0
      %1148 = vmatpush1.bf16.xpose.msra.mxu0 0
      %1149 = vmatprep.subr.bf16.mxu0 0
      %1150 = vmatpush1.bf16.xpose.msra.mxu0 0
      %1151 = vmatprep.subr.bf16.mxu0 0
      %1152 = vmatpush1.bf16.xpose.msra.mxu0 0
      %1153 = vmatprep.subr.bf16.mxu0 0
      %1154 = vmatpush1.bf16.xpose.msra.mxu0 0
      %1155 = vmatprep.subr.bf16.mxu0 0
      %1156 = vmatpush1.bf16.xpose.msra.mxu0 0
      %1157 = vmatprep.subr.bf16.mxu0 0
      %1158 = vmatpush1.bf16.xpose.msra.mxu0 0
      %1159 = vmatprep.subr.bf16.mxu0 0
      %1160 = vmatpush1.bf16.xpose.msra.mxu0 0
      %1161 = vmatprep.mubr.bf16.mxu0 0
      %1162 = vmatmul.mubr.bf16.gmra.mrb[0].mxu0 %v1124
      %v1163 = vpop.f32.mrb[0].mxu0
      %v1164 = vadd.f32 0.0, %v1163
      %v1165 = vpop.f32.mrb[0].mxu0
      %v1166 = vpop.f32.mrb[0].mxu0
      %v1167 = vpop.f32.mrb[0].mxu0
      %1168 = vdwg.mxu0
      %s1169 = scalar_lea.vmem [#allocation3], 16
      %v1170 = vld [vmem:[%s1169] sm:$0xff]
      %v1171 = vsel %vm903, %v1164, -inf
      %1172 = vmax.xlane.f32.xlu0 %v1171
      %v1173 = vpop.xlane.xlu0 %1172
      %v1174 = vmax.f32 %v1170, %v1173
      %v1175 = vsub.f32 %v1170, %v1174
      %v1176 = vmul.f32 %v1175, 1.442695
      %v1177 = vpow.pop %v1176
      %1179 = vset.pattern.permute.xlu0 0
      %1180 = vperm.xlu0 %1179, %v1174
      %v1181 = vpop.permute.xlu0 %1180
      %v1183 = vsub.f32 %v1164, %v1181
      %v1184 = vmul.f32 %v1183, 1.442695
      %v1185 = vpow.pop %v1184
      %s1186 = scalar_lea.vmem [#allocation4], 16
      %v1187 = vld [vmem:[%s1186] sm:$0xff]
      %v1188 = vmul.f32 %v1177, %v1187
      %v1189 = vsel %vm903, %v1185, 0.0
      %1190 = vadd.xlane.f32.xlu0 %v1189
      %v1191 = vpop.xlane.xlu0 %1190
      %v1192 = vadd.f32 %v1188, %v1191
      %1193 = vst.msk [vmem:[%s1186] sm:$0xff] %vm925, %v1192
      %s1194 = scalar_lea.vmem [#allocation5], 16
      %v1195 = vld [vmem:[%s1194] sm:$0xff]
      %1197 = vset.pattern.permute.xlu0 0
      %1198 = vperm.xlu0 %1197, %v1177
      %v1199 = vpop.permute.xlu0 %1198
      %v1201 = vmul.f32 %v1199, %v1195
      %v1202 = vpack.c.bf16 %v1185, %v1185
      %1203 = vrot.lane.b32.xlu0 %v853, 120
      %v1204 = vpop.permute.xlu0 %1203
      %v1207 = vsel %vm903, %v1202, 0
      %1209 = vmatprep.subr.bf16.mxu0 0
      %1210 = vmatpush1.bf16.msra.mxu0 %v1204
      %1211 = vmatprep.subr.bf16.mxu0 0
      %1212 = vmatpush1.bf16.msra.mxu0 0
      %1213 = vmatprep.subr.bf16.mxu0 0
      %1214 = vmatpush1.bf16.msra.mxu0 0
      %1215 = vmatprep.subr.bf16.mxu0 0
      %1216 = vmatpush1.bf16.msra.mxu0 0
      %1217 = vmatprep.subr.bf16.mxu0 0
      %1218 = vmatpush1.bf16.msra.mxu0 0
      %1219 = vmatprep.subr.bf16.mxu0 0
      %1220 = vmatpush1.bf16.msra.mxu0 0
      %1221 = vmatprep.subr.bf16.mxu0 0
      %1222 = vmatpush1.bf16.msra.mxu0 0
      %1223 = vmatprep.subr.bf16.mxu0 0
      %1224 = vmatpush1.bf16.msra.mxu0 0
      %1225 = vmatprep.subr.bf16.mxu0 0
      %1226 = vmatpush1.bf16.msra.mxu0 0
      %1227 = vmatprep.subr.bf16.mxu0 0
      %1228 = vmatpush1.bf16.msra.mxu0 0
      %1229 = vmatprep.subr.bf16.mxu0 0
      %1230 = vmatpush1.bf16.msra.mxu0 0
      %1231 = vmatprep.subr.bf16.mxu0 0
      %1232 = vmatpush1.bf16.msra.mxu0 0
      %1233 = vmatprep.subr.bf16.mxu0 0
      %1234 = vmatpush1.bf16.msra.mxu0 0
      %1235 = vmatprep.subr.bf16.mxu0 0
      %1236 = vmatpush1.bf16.msra.mxu0 0
      %1237 = vmatprep.subr.bf16.mxu0 0
      %1238 = vmatpush1.bf16.msra.mxu0 0
      %1239 = vmatprep.subr.bf16.mxu0 0
      %1240 = vmatpush1.bf16.msra.mxu0 0
      %1241 = vmatprep.mubr.bf16.mxu0 0
      %1242 = vmatmul.mubr.bf16.gmra.mrb[0].mxu0 %v1207
      %v1243 = vpop.f32.mrb[0].mxu0
      %v1244 = vadd.f32 0.0, %v1243
      %v1245 = vpop.f32.mrb[0].mxu0
      %v1246 = vpop.f32.mrb[0].mxu0
      %v1247 = vpop.f32.mrb[0].mxu0
      %1248 = vdwg.mxu0
      %v1249 = vadd.f32 %v1201, %v1244
      %1250 = vst.msk [vmem:[%s1194] sm:$0xff] %vm855, %v1249
      %1251 = vst.msk [vmem:[%s1169] sm:$0xff] %vm925, %v1174
      %1252 = vrot.lane.b32.xlu0 %v983, 116
      %v1253 = vpop.permute.xlu0 %1252
      %1254 = vrot.lane.b32.xlu0 %v778, 116
      %v1255 = vpop.permute.xlu0 %1254
      %v1257 = vsel %vm855, %v1253, 0
      %v1260 = vsel %vm855, %v1255, 0
      %1262 = vmatprep.subr.bf16.mxu0 0
      %1263 = vmatpush1.bf16.xpose.msra.mxu0 %v1260
      %1264 = vmatprep.subr.bf16.mxu0 0
      %1265 = vmatpush1.bf16.xpose.msra.mxu0 0
      %1266 = vmatprep.subr.bf16.mxu0 0
      %1267 = vmatpush1.bf16.xpose.msra.mxu0 0
      %1268 = vmatprep.subr.bf16.mxu0 0
      %1269 = vmatpush1.bf16.xpose.msra.mxu0 0
      %1270 = vmatprep.subr.bf16.mxu0 0
      %1271 = vmatpush1.bf16.xpose.msra.mxu0 0
      %1272 = vmatprep.subr.bf16.mxu0 0
      %1273 = vmatpush1.bf16.xpose.msra.mxu0 0
      %1274 = vmatprep.subr.bf16.mxu0 0
      %1275 = vmatpush1.bf16.xpose.msra.mxu0 0
      %1276 = vmatprep.subr.bf16.mxu0 0
      %1277 = vmatpush1.bf16.xpose.msra.mxu0 0
      %1278 = vmatprep.subr.bf16.mxu0 0
      %1279 = vmatpush1.bf16.xpose.msra.mxu0 0
      %1280 = vmatprep.subr.bf16.mxu0 0
      %1281 = vmatpush1.bf16.xpose.msra.mxu0 0
      %1282 = vmatprep.subr.bf16.mxu0 0
      %1283 = vmatpush1.bf16.xpose.msra.mxu0 0
      %1284 = vmatprep.subr.bf16.mxu0 0
      %1285 = vmatpush1.bf16.xpose.msra.mxu0 0
      %1286 = vmatprep.subr.bf16.mxu0 0
      %1287 = vmatpush1.bf16.xpose.msra.mxu0 0
      %1288 = vmatprep.subr.bf16.mxu0 0
      %1289 = vmatpush1.bf16.xpose.msra.mxu0 0
      %1290 = vmatprep.subr.bf16.mxu0 0
      %1291 = vmatpush1.bf16.xpose.msra.mxu0 0
      %1292 = vmatprep.subr.bf16.mxu0 0
      %1293 = vmatpush1.bf16.xpose.msra.mxu0 0
      %1294 = vmatprep.mubr.bf16.mxu0 0
      %1295 = vmatmul.mubr.bf16.gmra.mrb[0].mxu0 %v1257
      %v1296 = vpop.f32.mrb[0].mxu0
      %v1297 = vadd.f32 0.0, %v1296
      %v1298 = vpop.f32.mrb[0].mxu0
      %v1299 = vpop.f32.mrb[0].mxu0
      %v1300 = vpop.f32.mrb[0].mxu0
      %1301 = vdwg.mxu0
      %s1302 = scalar_lea.vmem [#allocation3], 24
      %v1303 = vld [vmem:[%s1302] sm:$0xff]
      %v1304 = vsel %vm903, %v1297, -inf
      %1305 = vmax.xlane.f32.xlu0 %v1304
      %v1306 = vpop.xlane.xlu0 %1305
      %v1307 = vmax.f32 %v1303, %v1306
      %v1308 = vsub.f32 %v1303, %v1307
      %v1309 = vmul.f32 %v1308, 1.442695
      %v1310 = vpow.pop %v1309
      %1312 = vset.pattern.permute.xlu0 0
      %1313 = vperm.xlu0 %1312, %v1307
      %v1314 = vpop.permute.xlu0 %1313
      %v1316 = vsub.f32 %v1297, %v1314
      %v1317 = vmul.f32 %v1316, 1.442695
      %v1318 = vpow.pop %v1317
      %s1319 = scalar_lea.vmem [#allocation4], 24
      %v1320 = vld [vmem:[%s1319] sm:$0xff]
      %v1321 = vmul.f32 %v1310, %v1320
      %v1322 = vsel %vm903, %v1318, 0.0
      %1323 = vadd.xlane.f32.xlu0 %v1322
      %v1324 = vpop.xlane.xlu0 %1323
      %v1325 = vadd.f32 %v1321, %v1324
      %1326 = vst.msk [vmem:[%s1319] sm:$0xff] %vm925, %v1325
      %s1327 = scalar_lea.vmem [#allocation5], 24
      %v1328 = vld [vmem:[%s1327] sm:$0xff]
      %1330 = vset.pattern.permute.xlu0 0
      %1331 = vperm.xlu0 %1330, %v1310
      %v1332 = vpop.permute.xlu0 %1331
      %v1334 = vmul.f32 %v1332, %v1328
      %v1335 = vpack.c.bf16 %v1318, %v1318
      %1336 = vrot.lane.b32.xlu0 %v853, 116
      %v1337 = vpop.permute.xlu0 %1336
      %v1340 = vsel %vm903, %v1335, 0
      %1342 = vmatprep.subr.bf16.mxu0 0
      %1343 = vmatpush1.bf16.msra.mxu0 %v1337
      %1344 = vmatprep.subr.bf16.mxu0 0
      %1345 = vmatpush1.bf16.msra.mxu0 0
      %1346 = vmatprep.subr.bf16.mxu0 0
      %1347 = vmatpush1.bf16.msra.mxu0 0
      %1348 = vmatprep.subr.bf16.mxu0 0
      %1349 = vmatpush1.bf16.msra.mxu0 0
      %1350 = vmatprep.subr.bf16.mxu0 0
      %1351 = vmatpush1.bf16.msra.mxu0 0
      %1352 = vmatprep.subr.bf16.mxu0 0
      %1353 = vmatpush1.bf16.msra.mxu0 0
      %1354 = vmatprep.subr.bf16.mxu0 0
      %1355 = vmatpush1.bf16.msra.mxu0 0
      %1356 = vmatprep.subr.bf16.mxu0 0
      %1357 = vmatpush1.bf16.msra.mxu0 0
      %1358 = vmatprep.subr.bf16.mxu0 0
      %1359 = vmatpush1.bf16.msra.mxu0 0
      %1360 = vmatprep.subr.bf16.mxu0 0
      %1361 = vmatpush1.bf16.msra.mxu0 0
      %1362 = vmatprep.subr.bf16.mxu0 0
      %1363 = vmatpush1.bf16.msra.mxu0 0
      %1364 = vmatprep.subr.bf16.mxu0 0
      %1365 = vmatpush1.bf16.msra.mxu0 0
      %1366 = vmatprep.subr.bf16.mxu0 0
      %1367 = vmatpush1.bf16.msra.mxu0 0
      %1368 = vmatprep.subr.bf16.mxu0 0
      %1369 = vmatpush1.bf16.msra.mxu0 0
      %1370 = vmatprep.subr.bf16.mxu0 0
      %1371 = vmatpush1.bf16.msra.mxu0 0
      %1372 = vmatprep.subr.bf16.mxu0 0
      %1373 = vmatpush1.bf16.msra.mxu0 0
      %1374 = vmatprep.mubr.bf16.mxu0 0
      %1375 = vmatmul.mubr.bf16.gmra.mrb[0].mxu0 %v1340
      %v1376 = vpop.f32.mrb[0].mxu0
      %v1377 = vadd.f32 0.0, %v1376
      %v1378 = vpop.f32.mrb[0].mxu0
      %v1379 = vpop.f32.mrb[0].mxu0
      %v1380 = vpop.f32.mrb[0].mxu0
      %1381 = vdwg.mxu0
      %v1382 = vadd.f32 %v1334, %v1377
      %1383 = vst.msk [vmem:[%s1327] sm:$0xff] %vm855, %v1382
      %1384 = vst.msk [vmem:[%s1302] sm:$0xff] %vm925, %v1307
      %1385 = vrot.lane.b32.xlu0 %v983, 112
      %v1386 = vpop.permute.xlu0 %1385
      %1387 = vrot.lane.b32.xlu0 %v778, 112
      %v1388 = vpop.permute.xlu0 %1387
      %v1390 = vsel %vm855, %v1386, 0
      %v1393 = vsel %vm855, %v1388, 0
      %1395 = vmatprep.subr.bf16.mxu0 0
      %1396 = vmatpush1.bf16.xpose.msra.mxu0 %v1393
      %1397 = vmatprep.subr.bf16.mxu0 0
      %1398 = vmatpush1.bf16.xpose.msra.mxu0 0
      %1399 = vmatprep.subr.bf16.mxu0 0
      %1400 = vmatpush1.bf16.xpose.msra.mxu0 0
      %1401 = vmatprep.subr.bf16.mxu0 0
      %1402 = vmatpush1.bf16.xpose.msra.mxu0 0
      %1403 = vmatprep.subr.bf16.mxu0 0
      %1404 = vmatpush1.bf16.xpose.msra.mxu0 0
      %1405 = vmatprep.subr.bf16.mxu0 0
      %1406 = vmatpush1.bf16.xpose.msra.mxu0 0
      %1407 = vmatprep.subr.bf16.mxu0 0
      %1408 = vmatpush1.bf16.xpose.msra.mxu0 0
      %1409 = vmatprep.subr.bf16.mxu0 0
      %1410 = vmatpush1.bf16.xpose.msra.mxu0 0
      %1411 = vmatprep.subr.bf16.mxu0 0
      %1412 = vmatpush1.bf16.xpose.msra.mxu0 0
      %1413 = vmatprep.subr.bf16.mxu0 0
      %1414 = vmatpush1.bf16.xpose.msra.mxu0 0
      %1415 = vmatprep.subr.bf16.mxu0 0
      %1416 = vmatpush1.bf16.xpose.msra.mxu0 0
      %1417 = vmatprep.subr.bf16.mxu0 0
      %1418 = vmatpush1.bf16.xpose.msra.mxu0 0
      %1419 = vmatprep.subr.bf16.mxu0 0
      %1420 = vmatpush1.bf16.xpose.msra.mxu0 0
      %1421 = vmatprep.subr.bf16.mxu0 0
      %1422 = vmatpush1.bf16.xpose.msra.mxu0 0
      %1423 = vmatprep.subr.bf16.mxu0 0
      %1424 = vmatpush1.bf16.xpose.msra.mxu0 0
      %1425 = vmatprep.subr.bf16.mxu0 0
      %1426 = vmatpush1.bf16.xpose.msra.mxu0 0
      %1427 = vmatprep.mubr.bf16.mxu0 0
      %1428 = vmatmul.mubr.bf16.gmra.mrb[0].mxu0 %v1390
      %v1429 = vpop.f32.mrb[0].mxu0
      %v1430 = vadd.f32 0.0, %v1429
      %v1431 = vpop.f32.mrb[0].mxu0
      %v1432 = vpop.f32.mrb[0].mxu0
      %v1433 = vpop.f32.mrb[0].mxu0
      %1434 = vdwg.mxu0
      %s1435 = scalar_lea.vmem [#allocation3], 32
      %v1436 = vld [vmem:[%s1435] sm:$0xff]
      %v1437 = vsel %vm903, %v1430, -inf
      %1438 = vmax.xlane.f32.xlu0 %v1437
      %v1439 = vpop.xlane.xlu0 %1438
      %v1440 = vmax.f32 %v1436, %v1439
      %v1441 = vsub.f32 %v1436, %v1440
      %v1442 = vmul.f32 %v1441, 1.442695
      %v1443 = vpow.pop %v1442
      %1445 = vset.pattern.permute.xlu0 0
      %1446 = vperm.xlu0 %1445, %v1440
      %v1447 = vpop.permute.xlu0 %1446
      %v1449 = vsub.f32 %v1430, %v1447
      %v1450 = vmul.f32 %v1449, 1.442695
      %v1451 = vpow.pop %v1450
      %s1452 = scalar_lea.vmem [#allocation4], 32
      %v1453 = vld [vmem:[%s1452] sm:$0xff]
      %v1454 = vmul.f32 %v1443, %v1453
      %v1455 = vsel %vm903, %v1451, 0.0
      %1456 = vadd.xlane.f32.xlu0 %v1455
      %v1457 = vpop.xlane.xlu0 %1456
      %v1458 = vadd.f32 %v1454, %v1457
      %1459 = vst.msk [vmem:[%s1452] sm:$0xff] %vm925, %v1458
      %s1460 = scalar_lea.vmem [#allocation5], 32
      %v1461 = vld [vmem:[%s1460] sm:$0xff]
      %1463 = vset.pattern.permute.xlu0 0
      %1464 = vperm.xlu0 %1463, %v1443
      %v1465 = vpop.permute.xlu0 %1464
      %v1467 = vmul.f32 %v1465, %v1461
      %v1468 = vpack.c.bf16 %v1451, %v1451
      %1469 = vrot.lane.b32.xlu0 %v853, 112
      %v1470 = vpop.permute.xlu0 %1469
      %v1473 = vsel %vm903, %v1468, 0
      %1475 = vmatprep.subr.bf16.mxu0 0
      %1476 = vmatpush1.bf16.msra.mxu0 %v1470
      %1477 = vmatprep.subr.bf16.mxu0 0
      %1478 = vmatpush1.bf16.msra.mxu0 0
      %1479 = vmatprep.subr.bf16.mxu0 0
      %1480 = vmatpush1.bf16.msra.mxu0 0
      %1481 = vmatprep.subr.bf16.mxu0 0
      %1482 = vmatpush1.bf16.msra.mxu0 0
      %1483 = vmatprep.subr.bf16.mxu0 0
      %1484 = vmatpush1.bf16.msra.mxu0 0
      %1485 = vmatprep.subr.bf16.mxu0 0
      %1486 = vmatpush1.bf16.msra.mxu0 0
      %1487 = vmatprep.subr.bf16.mxu0 0
      %1488 = vmatpush1.bf16.msra.mxu0 0
      %1489 = vmatprep.subr.bf16.mxu0 0
      %1490 = vmatpush1.bf16.msra.mxu0 0
      %1491 = vmatprep.subr.bf16.mxu0 0
      %1492 = vmatpush1.bf16.msra.mxu0 0
      %1493 = vmatprep.subr.bf16.mxu0 0
      %1494 = vmatpush1.bf16.msra.mxu0 0
      %1495 = vmatprep.subr.bf16.mxu0 0
      %1496 = vmatpush1.bf16.msra.mxu0 0
      %1497 = vmatprep.subr.bf16.mxu0 0
      %1498 = vmatpush1.bf16.msra.mxu0 0
      %1499 = vmatprep.subr.bf16.mxu0 0
      %1500 = vmatpush1.bf16.msra.mxu0 0
      %1501 = vmatprep.subr.bf16.mxu0 0
      %1502 = vmatpush1.bf16.msra.mxu0 0
      %1503 = vmatprep.subr.bf16.mxu0 0
      %1504 = vmatpush1.bf16.msra.mxu0 0
      %1505 = vmatprep.subr.bf16.mxu0 0
      %1506 = vmatpush1.bf16.msra.mxu0 0
      %1507 = vmatprep.mubr.bf16.mxu0 0
      %1508 = vmatmul.mubr.bf16.gmra.mrb[0].mxu0 %v1473
      %v1509 = vpop.f32.mrb[0].mxu0
      %v1510 = vadd.f32 0.0, %v1509
      %v1511 = vpop.f32.mrb[0].mxu0
      %v1512 = vpop.f32.mrb[0].mxu0
      %v1513 = vpop.f32.mrb[0].mxu0
      %1514 = vdwg.mxu0
      %v1515 = vadd.f32 %v1467, %v1510
      %1516 = vst.msk [vmem:[%s1460] sm:$0xff] %vm855, %v1515
      %1517 = vst.msk [vmem:[%s1435] sm:$0xff] %vm925, %v1440
      %1518 = vrot.lane.b32.xlu0 %v983, 108
      %v1519 = vpop.permute.xlu0 %1518
      %1520 = vrot.lane.b32.xlu0 %v778, 108
      %v1521 = vpop.permute.xlu0 %1520
      %v1523 = vsel %vm855, %v1519, 0
      %v1526 = vsel %vm855, %v1521, 0
      %1528 = vmatprep.subr.bf16.mxu0 0
      %1529 = vmatpush1.bf16.xpose.msra.mxu0 %v1526
      %1530 = vmatprep.subr.bf16.mxu0 0
      %1531 = vmatpush1.bf16.xpose.msra.mxu0 0
      %1532 = vmatprep.subr.bf16.mxu0 0
      %1533 = vmatpush1.bf16.xpose.msra.mxu0 0
      %1534 = vmatprep.subr.bf16.mxu0 0
      %1535 = vmatpush1.bf16.xpose.msra.mxu0 0
      %1536 = vmatprep.subr.bf16.mxu0 0
      %1537 = vmatpush1.bf16.xpose.msra.mxu0 0
      %1538 = vmatprep.subr.bf16.mxu0 0
      %1539 = vmatpush1.bf16.xpose.msra.mxu0 0
      %1540 = vmatprep.subr.bf16.mxu0 0
      %1541 = vmatpush1.bf16.xpose.msra.mxu0 0
      %1542 = vmatprep.subr.bf16.mxu0 0
      %1543 = vmatpush1.bf16.xpose.msra.mxu0 0
      %1544 = vmatprep.subr.bf16.mxu0 0
      %1545 = vmatpush1.bf16.xpose.msra.mxu0 0
      %1546 = vmatprep.subr.bf16.mxu0 0
      %1547 = vmatpush1.bf16.xpose.msra.mxu0 0
      %1548 = vmatprep.subr.bf16.mxu0 0
      %1549 = vmatpush1.bf16.xpose.msra.mxu0 0
      %1550 = vmatprep.subr.bf16.mxu0 0
      %1551 = vmatpush1.bf16.xpose.msra.mxu0 0
      %1552 = vmatprep.subr.bf16.mxu0 0
      %1553 = vmatpush1.bf16.xpose.msra.mxu0 0
      %1554 = vmatprep.subr.bf16.mxu0 0
      %1555 = vmatpush1.bf16.xpose.msra.mxu0 0
      %1556 = vmatprep.subr.bf16.mxu0 0
      %1557 = vmatpush1.bf16.xpose.msra.mxu0 0
      %1558 = vmatprep.subr.bf16.mxu0 0
      %1559 = vmatpush1.bf16.xpose.msra.mxu0 0
      %1560 = vmatprep.mubr.bf16.mxu0 0
      %1561 = vmatmul.mubr.bf16.gmra.mrb[0].mxu0 %v1523
      %v1562 = vpop.f32.mrb[0].mxu0
      %v1563 = vadd.f32 0.0, %v1562
      %v1564 = vpop.f32.mrb[0].mxu0
      %v1565 = vpop.f32.mrb[0].mxu0
      %v1566 = vpop.f32.mrb[0].mxu0
      %1567 = vdwg.mxu0
      %s1568 = scalar_lea.vmem [#allocation3], 40
      %v1569 = vld [vmem:[%s1568] sm:$0xff]
      %v1570 = vsel %vm903, %v1563, -inf
      %1571 = vmax.xlane.f32.xlu0 %v1570
      %v1572 = vpop.xlane.xlu0 %1571
      %v1573 = vmax.f32 %v1569, %v1572
      %v1574 = vsub.f32 %v1569, %v1573
      %v1575 = vmul.f32 %v1574, 1.442695
      %v1576 = vpow.pop %v1575
      %1578 = vset.pattern.permute.xlu0 0
      %1579 = vperm.xlu0 %1578, %v1573
      %v1580 = vpop.permute.xlu0 %1579
      %v1582 = vsub.f32 %v1563, %v1580
      %v1583 = vmul.f32 %v1582, 1.442695
      %v1584 = vpow.pop %v1583
      %s1585 = scalar_lea.vmem [#allocation4], 40
      %v1586 = vld [vmem:[%s1585] sm:$0xff]
      %v1587 = vmul.f32 %v1576, %v1586
      %v1588 = vsel %vm903, %v1584, 0.0
      %1589 = vadd.xlane.f32.xlu0 %v1588
      %v1590 = vpop.xlane.xlu0 %1589
      %v1591 = vadd.f32 %v1587, %v1590
      %1592 = vst.msk [vmem:[%s1585] sm:$0xff] %vm925, %v1591
      %s1593 = scalar_lea.vmem [#allocation5], 40
      %v1594 = vld [vmem:[%s1593] sm:$0xff]
      %1596 = vset.pattern.permute.xlu0 0
      %1597 = vperm.xlu0 %1596, %v1576
      %v1598 = vpop.permute.xlu0 %1597
      %v1600 = vmul.f32 %v1598, %v1594
      %v1601 = vpack.c.bf16 %v1584, %v1584
      %1602 = vrot.lane.b32.xlu0 %v853, 108
      %v1603 = vpop.permute.xlu0 %1602
      %v1606 = vsel %vm903, %v1601, 0
      %1608 = vmatprep.subr.bf16.mxu0 0
      %1609 = vmatpush1.bf16.msra.mxu0 %v1603
      %1610 = vmatprep.subr.bf16.mxu0 0
      %1611 = vmatpush1.bf16.msra.mxu0 0
      %1612 = vmatprep.subr.bf16.mxu0 0
      %1613 = vmatpush1.bf16.msra.mxu0 0
      %1614 = vmatprep.subr.bf16.mxu0 0
      %1615 = vmatpush1.bf16.msra.mxu0 0
      %1616 = vmatprep.subr.bf16.mxu0 0
      %1617 = vmatpush1.bf16.msra.mxu0 0
      %1618 = vmatprep.subr.bf16.mxu0 0
      %1619 = vmatpush1.bf16.msra.mxu0 0
      %1620 = vmatprep.subr.bf16.mxu0 0
      %1621 = vmatpush1.bf16.msra.mxu0 0
      %1622 = vmatprep.subr.bf16.mxu0 0
      %1623 = vmatpush1.bf16.msra.mxu0 0
      %1624 = vmatprep.subr.bf16.mxu0 0
      %1625 = vmatpush1.bf16.msra.mxu0 0
      %1626 = vmatprep.subr.bf16.mxu0 0
      %1627 = vmatpush1.bf16.msra.mxu0 0
      %1628 = vmatprep.subr.bf16.mxu0 0
      %1629 = vmatpush1.bf16.msra.mxu0 0
      %1630 = vmatprep.subr.bf16.mxu0 0
      %1631 = vmatpush1.bf16.msra.mxu0 0
      %1632 = vmatprep.subr.bf16.mxu0 0
      %1633 = vmatpush1.bf16.msra.mxu0 0
      %1634 = vmatprep.subr.bf16.mxu0 0
      %1635 = vmatpush1.bf16.msra.mxu0 0
      %1636 = vmatprep.subr.bf16.mxu0 0
      %1637 = vmatpush1.bf16.msra.mxu0 0
      %1638 = vmatprep.subr.bf16.mxu0 0
      %1639 = vmatpush1.bf16.msra.mxu0 0
      %1640 = vmatprep.mubr.bf16.mxu0 0
      %1641 = vmatmul.mubr.bf16.gmra.mrb[0].mxu0 %v1606
      %v1642 = vpop.f32.mrb[0].mxu0
      %v1643 = vadd.f32 0.0, %v1642
      %v1644 = vpop.f32.mrb[0].mxu0
      %v1645 = vpop.f32.mrb[0].mxu0
      %v1646 = vpop.f32.mrb[0].mxu0
      %1647 = vdwg.mxu0
      %v1648 = vadd.f32 %v1600, %v1643
      %1649 = vst.msk [vmem:[%s1593] sm:$0xff] %vm855, %v1648
      %1650 = vst.msk [vmem:[%s1568] sm:$0xff] %vm925, %v1573
      %1651 = vrot.lane.b32.xlu0 %v983, 104
      %v1652 = vpop.permute.xlu0 %1651
      %1653 = vrot.lane.b32.xlu0 %v778, 104
      %v1654 = vpop.permute.xlu0 %1653
      %v1656 = vsel %vm855, %v1652, 0
      %v1659 = vsel %vm855, %v1654, 0
      %1661 = vmatprep.subr.bf16.mxu0 0
      %1662 = vmatpush1.bf16.xpose.msra.mxu0 %v1659
      %1663 = vmatprep.subr.bf16.mxu0 0
      %1664 = vmatpush1.bf16.xpose.msra.mxu0 0
      %1665 = vmatprep.subr.bf16.mxu0 0
      %1666 = vmatpush1.bf16.xpose.msra.mxu0 0
      %1667 = vmatprep.subr.bf16.mxu0 0
      %1668 = vmatpush1.bf16.xpose.msra.mxu0 0
      %1669 = vmatprep.subr.bf16.mxu0 0
      %1670 = vmatpush1.bf16.xpose.msra.mxu0 0
      %1671 = vmatprep.subr.bf16.mxu0 0
      %1672 = vmatpush1.bf16.xpose.msra.mxu0 0
      %1673 = vmatprep.subr.bf16.mxu0 0
      %1674 = vmatpush1.bf16.xpose.msra.mxu0 0
      %1675 = vmatprep.subr.bf16.mxu0 0
      %1676 = vmatpush1.bf16.xpose.msra.mxu0 0
      %1677 = vmatprep.subr.bf16.mxu0 0
      %1678 = vmatpush1.bf16.xpose.msra.mxu0 0
      %1679 = vmatprep.subr.bf16.mxu0 0
      %1680 = vmatpush1.bf16.xpose.msra.mxu0 0
      %1681 = vmatprep.subr.bf16.mxu0 0
      %1682 = vmatpush1.bf16.xpose.msra.mxu0 0
      %1683 = vmatprep.subr.bf16.mxu0 0
      %1684 = vmatpush1.bf16.xpose.msra.mxu0 0
      %1685 = vmatprep.subr.bf16.mxu0 0
      %1686 = vmatpush1.bf16.xpose.msra.mxu0 0
      %1687 = vmatprep.subr.bf16.mxu0 0
      %1688 = vmatpush1.bf16.xpose.msra.mxu0 0
      %1689 = vmatprep.subr.bf16.mxu0 0
      %1690 = vmatpush1.bf16.xpose.msra.mxu0 0
      %1691 = vmatprep.subr.bf16.mxu0 0
      %1692 = vmatpush1.bf16.xpose.msra.mxu0 0
      %1693 = vmatprep.mubr.bf16.mxu0 0
      %1694 = vmatmul.mubr.bf16.gmra.mrb[0].mxu0 %v1656
      %v1695 = vpop.f32.mrb[0].mxu0
      %v1696 = vadd.f32 0.0, %v1695
      %v1697 = vpop.f32.mrb[0].mxu0
      %v1698 = vpop.f32.mrb[0].mxu0
      %v1699 = vpop.f32.mrb[0].mxu0
      %1700 = vdwg.mxu0
      %s1701 = scalar_lea.vmem [#allocation3], 48
      %v1702 = vld [vmem:[%s1701] sm:$0xff]
      %v1703 = vsel %vm903, %v1696, -inf
      %1704 = vmax.xlane.f32.xlu0 %v1703
      %v1705 = vpop.xlane.xlu0 %1704
      %v1706 = vmax.f32 %v1702, %v1705
      %v1707 = vsub.f32 %v1702, %v1706
      %v1708 = vmul.f32 %v1707, 1.442695
      %v1709 = vpow.pop %v1708
      %1711 = vset.pattern.permute.xlu0 0
      %1712 = vperm.xlu0 %1711, %v1706
      %v1713 = vpop.permute.xlu0 %1712
      %v1715 = vsub.f32 %v1696, %v1713
      %v1716 = vmul.f32 %v1715, 1.442695
      %v1717 = vpow.pop %v1716
      %s1718 = scalar_lea.vmem [#allocation4], 48
      %v1719 = vld [vmem:[%s1718] sm:$0xff]
      %v1720 = vmul.f32 %v1709, %v1719
      %v1721 = vsel %vm903, %v1717, 0.0
      %1722 = vadd.xlane.f32.xlu0 %v1721
      %v1723 = vpop.xlane.xlu0 %1722
      %v1724 = vadd.f32 %v1720, %v1723
      %1725 = vst.msk [vmem:[%s1718] sm:$0xff] %vm925, %v1724
      %s1726 = scalar_lea.vmem [#allocation5], 48
      %v1727 = vld [vmem:[%s1726] sm:$0xff]
      %1729 = vset.pattern.permute.xlu0 0
      %1730 = vperm.xlu0 %1729, %v1709
      %v1731 = vpop.permute.xlu0 %1730
      %v1733 = vmul.f32 %v1731, %v1727
      %v1734 = vpack.c.bf16 %v1717, %v1717
      %1735 = vrot.lane.b32.xlu0 %v853, 104
      %v1736 = vpop.permute.xlu0 %1735
      %v1739 = vsel %vm903, %v1734, 0
      %1741 = vmatprep.subr.bf16.mxu0 0
      %1742 = vmatpush1.bf16.msra.mxu0 %v1736
      %1743 = vmatprep.subr.bf16.mxu0 0
      %1744 = vmatpush1.bf16.msra.mxu0 0
      %1745 = vmatprep.subr.bf16.mxu0 0
      %1746 = vmatpush1.bf16.msra.mxu0 0
      %1747 = vmatprep.subr.bf16.mxu0 0
      %1748 = vmatpush1.bf16.msra.mxu0 0
      %1749 = vmatprep.subr.bf16.mxu0 0
      %1750 = vmatpush1.bf16.msra.mxu0 0
      %1751 = vmatprep.subr.bf16.mxu0 0
      %1752 = vmatpush1.bf16.msra.mxu0 0
      %1753 = vmatprep.subr.bf16.mxu0 0
      %1754 = vmatpush1.bf16.msra.mxu0 0
      %1755 = vmatprep.subr.bf16.mxu0 0
      %1756 = vmatpush1.bf16.msra.mxu0 0
      %1757 = vmatprep.subr.bf16.mxu0 0
      %1758 = vmatpush1.bf16.msra.mxu0 0
      %1759 = vmatprep.subr.bf16.mxu0 0
      %1760 = vmatpush1.bf16.msra.mxu0 0
      %1761 = vmatprep.subr.bf16.mxu0 0
      %1762 = vmatpush1.bf16.msra.mxu0 0
      %1763 = vmatprep.subr.bf16.mxu0 0
      %1764 = vmatpush1.bf16.msra.mxu0 0
      %1765 = vmatprep.subr.bf16.mxu0 0
      %1766 = vmatpush1.bf16.msra.mxu0 0
      %1767 = vmatprep.subr.bf16.mxu0 0
      %1768 = vmatpush1.bf16.msra.mxu0 0
      %1769 = vmatprep.subr.bf16.mxu0 0
      %1770 = vmatpush1.bf16.msra.mxu0 0
      %1771 = vmatprep.subr.bf16.mxu0 0
      %1772 = vmatpush1.bf16.msra.mxu0 0
      %1773 = vmatprep.mubr.bf16.mxu0 0
      %1774 = vmatmul.mubr.bf16.gmra.mrb[0].mxu0 %v1739
      %v1775 = vpop.f32.mrb[0].mxu0
      %v1776 = vadd.f32 0.0, %v1775
      %v1777 = vpop.f32.mrb[0].mxu0
      %v1778 = vpop.f32.mrb[0].mxu0
      %v1779 = vpop.f32.mrb[0].mxu0
      %1780 = vdwg.mxu0
      %v1781 = vadd.f32 %v1733, %v1776
      %1782 = vst.msk [vmem:[%s1726] sm:$0xff] %vm855, %v1781
      %1783 = vst.msk [vmem:[%s1701] sm:$0xff] %vm925, %v1706
      %1784 = vrot.lane.b32.xlu0 %v983, 100
      %v1785 = vpop.permute.xlu0 %1784
      %1786 = vrot.lane.b32.xlu0 %v778, 100
      %v1787 = vpop.permute.xlu0 %1786
      %v1789 = vsel %vm855, %v1785, 0
      %v1792 = vsel %vm855, %v1787, 0
      %1794 = vmatprep.subr.bf16.mxu0 0
      %1795 = vmatpush1.bf16.xpose.msra.mxu0 %v1792
      %1796 = vmatprep.subr.bf16.mxu0 0
      %1797 = vmatpush1.bf16.xpose.msra.mxu0 0
      %1798 = vmatprep.subr.bf16.mxu0 0
      %1799 = vmatpush1.bf16.xpose.msra.mxu0 0
      %1800 = vmatprep.subr.bf16.mxu0 0
      %1801 = vmatpush1.bf16.xpose.msra.mxu0 0
      %1802 = vmatprep.subr.bf16.mxu0 0
      %1803 = vmatpush1.bf16.xpose.msra.mxu0 0
      %1804 = vmatprep.subr.bf16.mxu0 0
      %1805 = vmatpush1.bf16.xpose.msra.mxu0 0
      %1806 = vmatprep.subr.bf16.mxu0 0
      %1807 = vmatpush1.bf16.xpose.msra.mxu0 0
      %1808 = vmatprep.subr.bf16.mxu0 0
      %1809 = vmatpush1.bf16.xpose.msra.mxu0 0
      %1810 = vmatprep.subr.bf16.mxu0 0
      %1811 = vmatpush1.bf16.xpose.msra.mxu0 0
      %1812 = vmatprep.subr.bf16.mxu0 0
      %1813 = vmatpush1.bf16.xpose.msra.mxu0 0
      %1814 = vmatprep.subr.bf16.mxu0 0
      %1815 = vmatpush1.bf16.xpose.msra.mxu0 0
      %1816 = vmatprep.subr.bf16.mxu0 0
      %1817 = vmatpush1.bf16.xpose.msra.mxu0 0
      %1818 = vmatprep.subr.bf16.mxu0 0
      %1819 = vmatpush1.bf16.xpose.msra.mxu0 0
      %1820 = vmatprep.subr.bf16.mxu0 0
      %1821 = vmatpush1.bf16.xpose.msra.mxu0 0
      %1822 = vmatprep.subr.bf16.mxu0 0
      %1823 = vmatpush1.bf16.xpose.msra.mxu0 0
      %1824 = vmatprep.subr.bf16.mxu0 0
      %1825 = vmatpush1.bf16.xpose.msra.mxu0 0
      %1826 = vmatprep.mubr.bf16.mxu0 0
      %1827 = vmatmul.mubr.bf16.gmra.mrb[0].mxu0 %v1789
      %v1828 = vpop.f32.mrb[0].mxu0
      %v1829 = vadd.f32 0.0, %v1828
      %v1830 = vpop.f32.mrb[0].mxu0
      %v1831 = vpop.f32.mrb[0].mxu0
      %v1832 = vpop.f32.mrb[0].mxu0
      %1833 = vdwg.mxu0
      %s1834 = scalar_lea.vmem [#allocation3], 56
      %v1835 = vld [vmem:[%s1834] sm:$0xff]
      %v1836 = vsel %vm903, %v1829, -inf
      %1837 = vmax.xlane.f32.xlu0 %v1836
      %v1838 = vpop.xlane.xlu0 %1837
      %v1839 = vmax.f32 %v1835, %v1838
      %v1840 = vsub.f32 %v1835, %v1839
      %v1841 = vmul.f32 %v1840, 1.442695
      %v1842 = vpow.pop %v1841
      %1844 = vset.pattern.permute.xlu0 0
      %1845 = vperm.xlu0 %1844, %v1839
      %v1846 = vpop.permute.xlu0 %1845
      %v1848 = vsub.f32 %v1829, %v1846
      %v1849 = vmul.f32 %v1848, 1.442695
      %v1850 = vpow.pop %v1849
      %s1851 = scalar_lea.vmem [#allocation4], 56
      %v1852 = vld [vmem:[%s1851] sm:$0xff]
      %v1853 = vmul.f32 %v1842, %v1852
      %v1854 = vsel %vm903, %v1850, 0.0
      %1855 = vadd.xlane.f32.xlu0 %v1854
      %v1856 = vpop.xlane.xlu0 %1855
      %v1857 = vadd.f32 %v1853, %v1856
      %1858 = vst.msk [vmem:[%s1851] sm:$0xff] %vm925, %v1857
      %s1859 = scalar_lea.vmem [#allocation5], 56
      %v1860 = vld [vmem:[%s1859] sm:$0xff]
      %1862 = vset.pattern.permute.xlu0 0
      %1863 = vperm.xlu0 %1862, %v1842
      %v1864 = vpop.permute.xlu0 %1863
      %v1866 = vmul.f32 %v1864, %v1860
      %v1867 = vpack.c.bf16 %v1850, %v1850
      %1868 = vrot.lane.b32.xlu0 %v853, 100
      %v1869 = vpop.permute.xlu0 %1868
      %v1872 = vsel %vm903, %v1867, 0
      %1874 = vmatprep.subr.bf16.mxu0 0
      %1875 = vmatpush1.bf16.msra.mxu0 %v1869
      %1876 = vmatprep.subr.bf16.mxu0 0
      %1877 = vmatpush1.bf16.msra.mxu0 0
      %1878 = vmatprep.subr.bf16.mxu0 0
      %1879 = vmatpush1.bf16.msra.mxu0 0
      %1880 = vmatprep.subr.bf16.mxu0 0
      %1881 = vmatpush1.bf16.msra.mxu0 0
      %1882 = vmatprep.subr.bf16.mxu0 0
      %1883 = vmatpush1.bf16.msra.mxu0 0
      %1884 = vmatprep.subr.bf16.mxu0 0
      %1885 = vmatpush1.bf16.msra.mxu0 0
      %1886 = vmatprep.subr.bf16.mxu0 0
      %1887 = vmatpush1.bf16.msra.mxu0 0
      %1888 = vmatprep.subr.bf16.mxu0 0
      %1889 = vmatpush1.bf16.msra.mxu0 0
      %1890 = vmatprep.subr.bf16.mxu0 0
      %1891 = vmatpush1.bf16.msra.mxu0 0
      %1892 = vmatprep.subr.bf16.mxu0 0
      %1893 = vmatpush1.bf16.msra.mxu0 0
      %1894 = vmatprep.subr.bf16.mxu0 0
      %1895 = vmatpush1.bf16.msra.mxu0 0
      %1896 = vmatprep.subr.bf16.mxu0 0
      %1897 = vmatpush1.bf16.msra.mxu0 0
      %1898 = vmatprep.subr.bf16.mxu0 0
      %1899 = vmatpush1.bf16.msra.mxu0 0
      %1900 = vmatprep.subr.bf16.mxu0 0
      %1901 = vmatpush1.bf16.msra.mxu0 0
      %1902 = vmatprep.subr.bf16.mxu0 0
      %1903 = vmatpush1.bf16.msra.mxu0 0
      %1904 = vmatprep.subr.bf16.mxu0 0
      %1905 = vmatpush1.bf16.msra.mxu0 0
      %1906 = vmatprep.mubr.bf16.mxu0 0
      %1907 = vmatmul.mubr.bf16.gmra.mrb[0].mxu0 %v1872
      %v1908 = vpop.f32.mrb[0].mxu0
      %v1909 = vadd.f32 0.0, %v1908
      %v1910 = vpop.f32.mrb[0].mxu0
      %v1911 = vpop.f32.mrb[0].mxu0
      %v1912 = vpop.f32.mrb[0].mxu0
      %1913 = vdwg.mxu0
      %v1914 = vadd.f32 %v1866, %v1909
      %1915 = vst.msk [vmem:[%s1859] sm:$0xff] %vm855, %v1914
      %1916 = vst.msk [vmem:[%s1834] sm:$0xff] %vm925, %v1839
      // Predicated region
      $region81: #{_forward.4} parent=75 // pred_check
        %p1917 = pneg %p602
      $region82: #{_forward.4} parent=75 // pred_check_branch
        %1919 = sbr.rel (%p1917) target = $region84
      $region83: #{_forward.4} parent=75 // pred_region
        %v1920 = vld [vmem:[#allocation5] sm:$0xff]
        %v1921 = vld [vmem:[#allocation4] sm:$0xff]
        %1923 = vset.pattern.permute.xlu0 0
        %1924 = vperm.xlu0 %1923, %v1921
        %v1925 = vpop.permute.xlu0 %1924
        %v1927 = vrcp.pop %v1925
        %v1928 = vmul.f32 %v1920, %v1927
        %v1929 = vpack.c.bf16 %v1928, %v1928
        %v1930 = vld [vmem:[%s7] sm:$0x3]
        %v1931 = vld [vmem:[%s1060] sm:$0xff]
        %v1932 = vld [vmem:[%s1052] sm:$0xff]
        %1934 = vset.pattern.permute.xlu0 0
        %1935 = vperm.xlu0 %1934, %v1932
        %v1936 = vpop.permute.xlu0 %1935
        %v1938 = vrcp.pop %v1936
        %v1939 = vmul.f32 %v1931, %v1938
        %v1940 = vpack.c.bf16 %v1939, %v1939
        %s1941 = scalar_lea.vmem %s7, 2
        %v1942 = vld [vmem:[%s1941] sm:$0x3]
        %v1944 = vsel %vm855, %v1940, 0
        %vm1946 = vcmask 1041408
        %v1948 = vsel %vm1946, %v1942, 0
        %1950 = vmatprep.subr.bf16.mxu0 0
        %1951 = vmatpush1.bf16.msra.mxu0 %v1948
        %1952 = vmatprep.subr.bf16.mxu0 0
        %1953 = vmatpush1.bf16.msra.mxu0 0
        %1954 = vmatprep.subr.bf16.mxu0 0
        %1955 = vmatpush1.bf16.msra.mxu0 0
        %1956 = vmatprep.subr.bf16.mxu0 0
        %1957 = vmatpush1.bf16.msra.mxu0 0
        %1958 = vmatprep.subr.bf16.mxu0 0
        %1959 = vmatpush1.bf16.msra.mxu0 0
        %1960 = vmatprep.subr.bf16.mxu0 0
        %1961 = vmatpush1.bf16.msra.mxu0 0
        %1962 = vmatprep.subr.bf16.mxu0 0
        %1963 = vmatpush1.bf16.msra.mxu0 0
        %1964 = vmatprep.subr.bf16.mxu0 0
        %1965 = vmatpush1.bf16.msra.mxu0 0
        %1966 = vmatprep.subr.bf16.mxu0 0
        %1967 = vmatpush1.bf16.msra.mxu0 0
        %1968 = vmatprep.subr.bf16.mxu0 0
        %1969 = vmatpush1.bf16.msra.mxu0 0
        %1970 = vmatprep.subr.bf16.mxu0 0
        %1971 = vmatpush1.bf16.msra.mxu0 0
        %1972 = vmatprep.subr.bf16.mxu0 0
        %1973 = vmatpush1.bf16.msra.mxu0 0
        %1974 = vmatprep.subr.bf16.mxu0 0
        %1975 = vmatpush1.bf16.msra.mxu0 0
        %1976 = vmatprep.subr.bf16.mxu0 0
        %1977 = vmatpush1.bf16.msra.mxu0 0
        %1978 = vmatprep.subr.bf16.mxu0 0
        %1979 = vmatpush1.bf16.msra.mxu0 0
        %1980 = vmatprep.subr.bf16.mxu0 0
        %1981 = vmatpush1.bf16.msra.mxu0 0
        %1982 = vmatprep.mubr.bf16.mxu0 0
        %1983 = vmatmul.mubr.bf16.gmra.mrb[0].mxu0 %v1944
        %v1984 = vpop.f32.mrb[0].mxu0
        %v1985 = vadd.f32 0.0, %v1984
        %v1986 = vpop.f32.mrb[0].mxu0
        %v1987 = vpop.f32.mrb[0].mxu0
        %v1988 = vpop.f32.mrb[0].mxu0
        %1989 = vdwg.mxu0
        %v1991 = vsel %vm855, %v1929, 0
        %v1994 = vsel %vm1946, %v1930, 0
        %1996 = vmatprep.subr.bf16.mxu0 0
        %1997 = vmatpush1.bf16.msra.mxu0 %v1994
        %1998 = vmatprep.subr.bf16.mxu0 0
        %1999 = vmatpush1.bf16.msra.mxu0 0
        %2000 = vmatprep.subr.bf16.mxu0 0
        %2001 = vmatpush1.bf16.msra.mxu0 0
        %2002 = vmatprep.subr.bf16.mxu0 0
        %2003 = vmatpush1.bf16.msra.mxu0 0
        %2004 = vmatprep.subr.bf16.mxu0 0
        %2005 = vmatpush1.bf16.msra.mxu0 0
        %2006 = vmatprep.subr.bf16.mxu0 0
        %2007 = vmatpush1.bf16.msra.mxu0 0
        %2008 = vmatprep.subr.bf16.mxu0 0
        %2009 = vmatpush1.bf16.msra.mxu0 0
        %2010 = vmatprep.subr.bf16.mxu0 0
        %2011 = vmatpush1.bf16.msra.mxu0 0
        %2012 = vmatprep.subr.bf16.mxu0 0
        %2013 = vmatpush1.bf16.msra.mxu0 0
        %2014 = vmatprep.subr.bf16.mxu0 0
        %2015 = vmatpush1.bf16.msra.mxu0 0
        %2016 = vmatprep.subr.bf16.mxu0 0
        %2017 = vmatpush1.bf16.msra.mxu0 0
        %2018 = vmatprep.subr.bf16.mxu0 0
        %2019 = vmatpush1.bf16.msra.mxu0 0
        %2020 = vmatprep.subr.bf16.mxu0 0
        %2021 = vmatpush1.bf16.msra.mxu0 0
        %2022 = vmatprep.subr.bf16.mxu0 0
        %2023 = vmatpush1.bf16.msra.mxu0 0
        %2024 = vmatprep.subr.bf16.mxu0 0
        %2025 = vmatpush1.bf16.msra.mxu0 0
        %2026 = vmatprep.subr.bf16.mxu0 0
        %2027 = vmatpush1.bf16.msra.mxu0 0
        %2028 = vmatprep.mubr.bf16.mxu0 0
        %2029 = vmatmul.mubr.bf16.gmra.mrb[0].mxu0 %v1991
        %v2030 = vpop.f32.mrb[0].mxu0
        %v2031 = vadd.f32 %v1985, %v2030
        %v2032 = vpop.f32.mrb[0].mxu0
        %v2033 = vpop.f32.mrb[0].mxu0
        %v2034 = vpop.f32.mrb[0].mxu0
        %2035 = vdwg.mxu0
        %v2036 = vld [vmem:[%s1194] sm:$0xff]
        %v2037 = vld [vmem:[%s1186] sm:$0xff]
        %2039 = vset.pattern.permute.xlu0 0
        %2040 = vperm.xlu0 %2039, %v2037
        %v2041 = vpop.permute.xlu0 %2040
        %v2043 = vrcp.pop %v2041
        %v2044 = vmul.f32 %v2036, %v2043
        %v2045 = vpack.c.bf16 %v2044, %v2044
        %s2046 = scalar_lea.vmem %s7, 4
        %v2047 = vld [vmem:[%s2046] sm:$0x3]
        %v2049 = vsel %vm855, %v2045, 0
        %v2052 = vsel %vm1946, %v2047, 0
        %2054 = vmatprep.subr.bf16.mxu0 0
        %2055 = vmatpush1.bf16.msra.mxu0 %v2052
        %2056 = vmatprep.subr.bf16.mxu0 0
        %2057 = vmatpush1.bf16.msra.mxu0 0
        %2058 = vmatprep.subr.bf16.mxu0 0
        %2059 = vmatpush1.bf16.msra.mxu0 0
        %2060 = vmatprep.subr.bf16.mxu0 0
        %2061 = vmatpush1.bf16.msra.mxu0 0
        %2062 = vmatprep.subr.bf16.mxu0 0
        %2063 = vmatpush1.bf16.msra.mxu0 0
        %2064 = vmatprep.subr.bf16.mxu0 0
        %2065 = vmatpush1.bf16.msra.mxu0 0
        %2066 = vmatprep.subr.bf16.mxu0 0
        %2067 = vmatpush1.bf16.msra.mxu0 0
        %2068 = vmatprep.subr.bf16.mxu0 0
        %2069 = vmatpush1.bf16.msra.mxu0 0
        %2070 = vmatprep.subr.bf16.mxu0 0
        %2071 = vmatpush1.bf16.msra.mxu0 0
        %2072 = vmatprep.subr.bf16.mxu0 0
        %2073 = vmatpush1.bf16.msra.mxu0 0
        %2074 = vmatprep.subr.bf16.mxu0 0
        %2075 = vmatpush1.bf16.msra.mxu0 0
        %2076 = vmatprep.subr.bf16.mxu0 0
        %2077 = vmatpush1.bf16.msra.mxu0 0
        %2078 = vmatprep.subr.bf16.mxu0 0
        %2079 = vmatpush1.bf16.msra.mxu0 0
        %2080 = vmatprep.subr.bf16.mxu0 0
        %2081 = vmatpush1.bf16.msra.mxu0 0
        %2082 = vmatprep.subr.bf16.mxu0 0
        %2083 = vmatpush1.bf16.msra.mxu0 0
        %2084 = vmatprep.subr.bf16.mxu0 0
        %2085 = vmatpush1.bf16.msra.mxu0 0
        %2086 = vmatprep.mubr.bf16.mxu0 0
        %2087 = vmatmul.mubr.bf16.gmra.mrb[0].mxu0 %v2049
        %v2088 = vpop.f32.mrb[0].mxu0
        %v2089 = vadd.f32 0.0, %v2088
        %v2090 = vpop.f32.mrb[0].mxu0
        %v2091 = vpop.f32.mrb[0].mxu0
        %v2092 = vpop.f32.mrb[0].mxu0
        %2093 = vdwg.mxu0
        %v2094 = vadd.f32 %v2031, %v2089
        %v2095 = vld [vmem:[%s1327] sm:$0xff]
        %v2096 = vld [vmem:[%s1319] sm:$0xff]
        %2098 = vset.pattern.permute.xlu0 0
        %2099 = vperm.xlu0 %2098, %v2096
        %v2100 = vpop.permute.xlu0 %2099
        %v2102 = vrcp.pop %v2100
        %v2103 = vmul.f32 %v2095, %v2102
        %v2104 = vpack.c.bf16 %v2103, %v2103
        %s2105 = scalar_lea.vmem %s7, 6
        %v2106 = vld [vmem:[%s2105] sm:$0x3]
        %v2108 = vsel %vm855, %v2104, 0
        %v2111 = vsel %vm1946, %v2106, 0
        %2113 = vmatprep.subr.bf16.mxu0 0
        %2114 = vmatpush1.bf16.msra.mxu0 %v2111
        %2115 = vmatprep.subr.bf16.mxu0 0
        %2116 = vmatpush1.bf16.msra.mxu0 0
        %2117 = vmatprep.subr.bf16.mxu0 0
        %2118 = vmatpush1.bf16.msra.mxu0 0
        %2119 = vmatprep.subr.bf16.mxu0 0
        %2120 = vmatpush1.bf16.msra.mxu0 0
        %2121 = vmatprep.subr.bf16.mxu0 0
        %2122 = vmatpush1.bf16.msra.mxu0 0
        %2123 = vmatprep.subr.bf16.mxu0 0
        %2124 = vmatpush1.bf16.msra.mxu0 0
        %2125 = vmatprep.subr.bf16.mxu0 0
        %2126 = vmatpush1.bf16.msra.mxu0 0
        %2127 = vmatprep.subr.bf16.mxu0 0
        %2128 = vmatpush1.bf16.msra.mxu0 0
        %2129 = vmatprep.subr.bf16.mxu0 0
        %2130 = vmatpush1.bf16.msra.mxu0 0
        %2131 = vmatprep.subr.bf16.mxu0 0
        %2132 = vmatpush1.bf16.msra.mxu0 0
        %2133 = vmatprep.subr.bf16.mxu0 0
        %2134 = vmatpush1.bf16.msra.mxu0 0
        %2135 = vmatprep.subr.bf16.mxu0 0
        %2136 = vmatpush1.bf16.msra.mxu0 0
        %2137 = vmatprep.subr.bf16.mxu0 0
        %2138 = vmatpush1.bf16.msra.mxu0 0
        %2139 = vmatprep.subr.bf16.mxu0 0
        %2140 = vmatpush1.bf16.msra.mxu0 0
        %2141 = vmatprep.subr.bf16.mxu0 0
        %2142 = vmatpush1.bf16.msra.mxu0 0
        %2143 = vmatprep.subr.bf16.mxu0 0
        %2144 = vmatpush1.bf16.msra.mxu0 0
        %2145 = vmatprep.mubr.bf16.mxu0 0
        %2146 = vmatmul.mubr.bf16.gmra.mrb[0].mxu0 %v2108
        %v2147 = vpop.f32.mrb[0].mxu0
        %v2148 = vadd.f32 0.0, %v2147
        %v2149 = vpop.f32.mrb[0].mxu0
        %v2150 = vpop.f32.mrb[0].mxu0
        %v2151 = vpop.f32.mrb[0].mxu0
        %2152 = vdwg.mxu0
        %v2153 = vadd.f32 %v2094, %v2148
        %v2154 = vld [vmem:[%s1460] sm:$0xff]
        %v2155 = vld [vmem:[%s1452] sm:$0xff]
        %2157 = vset.pattern.permute.xlu0 0
        %2158 = vperm.xlu0 %2157, %v2155
        %v2159 = vpop.permute.xlu0 %2158
        %v2161 = vrcp.pop %v2159
        %v2162 = vmul.f32 %v2154, %v2161
        %v2163 = vpack.c.bf16 %v2162, %v2162
        %s2164 = scalar_lea.vmem %s7, 8
        %v2165 = vld [vmem:[%s2164] sm:$0x3]
        %v2167 = vsel %vm855, %v2163, 0
        %v2170 = vsel %vm1946, %v2165, 0
        %2172 = vmatprep.subr.bf16.mxu0 0
        %2173 = vmatpush1.bf16.msra.mxu0 %v2170
        %2174 = vmatprep.subr.bf16.mxu0 0
        %2175 = vmatpush1.bf16.msra.mxu0 0
        %2176 = vmatprep.subr.bf16.mxu0 0
        %2177 = vmatpush1.bf16.msra.mxu0 0
        %2178 = vmatprep.subr.bf16.mxu0 0
        %2179 = vmatpush1.bf16.msra.mxu0 0
        %2180 = vmatprep.subr.bf16.mxu0 0
        %2181 = vmatpush1.bf16.msra.mxu0 0
        %2182 = vmatprep.subr.bf16.mxu0 0
        %2183 = vmatpush1.bf16.msra.mxu0 0
        %2184 = vmatprep.subr.bf16.mxu0 0
        %2185 = vmatpush1.bf16.msra.mxu0 0
        %2186 = vmatprep.subr.bf16.mxu0 0
        %2187 = vmatpush1.bf16.msra.mxu0 0
        %2188 = vmatprep.subr.bf16.mxu0 0
        %2189 = vmatpush1.bf16.msra.mxu0 0
        %2190 = vmatprep.subr.bf16.mxu0 0
        %2191 = vmatpush1.bf16.msra.mxu0 0
        %2192 = vmatprep.subr.bf16.mxu0 0
        %2193 = vmatpush1.bf16.msra.mxu0 0
        %2194 = vmatprep.subr.bf16.mxu0 0
        %2195 = vmatpush1.bf16.msra.mxu0 0
        %2196 = vmatprep.subr.bf16.mxu0 0
        %2197 = vmatpush1.bf16.msra.mxu0 0
        %2198 = vmatprep.subr.bf16.mxu0 0
        %2199 = vmatpush1.bf16.msra.mxu0 0
        %2200 = vmatprep.subr.bf16.mxu0 0
        %2201 = vmatpush1.bf16.msra.mxu0 0
        %2202 = vmatprep.subr.bf16.mxu0 0
        %2203 = vmatpush1.bf16.msra.mxu0 0
        %2204 = vmatprep.mubr.bf16.mxu0 0
        %2205 = vmatmul.mubr.bf16.gmra.mrb[0].mxu0 %v2167
        %v2206 = vpop.f32.mrb[0].mxu0
        %v2207 = vadd.f32 0.0, %v2206
        %v2208 = vpop.f32.mrb[0].mxu0
        %v2209 = vpop.f32.mrb[0].mxu0
        %v2210 = vpop.f32.mrb[0].mxu0
        %2211 = vdwg.mxu0
        %v2212 = vadd.f32 %v2153, %v2207
        %v2213 = vld [vmem:[%s1593] sm:$0xff]
        %v2214 = vld [vmem:[%s1585] sm:$0xff]
        %2216 = vset.pattern.permute.xlu0 0
        %2217 = vperm.xlu0 %2216, %v2214
        %v2218 = vpop.permute.xlu0 %2217
        %v2220 = vrcp.pop %v2218
        %v2221 = vmul.f32 %v2213, %v2220
        %v2222 = vpack.c.bf16 %v2221, %v2221
        %s2223 = scalar_lea.vmem %s7, 10
        %v2224 = vld [vmem:[%s2223] sm:$0x3]
        %v2226 = vsel %vm855, %v2222, 0
        %v2229 = vsel %vm1946, %v2224, 0
        %2231 = vmatprep.subr.bf16.mxu0 0
        %2232 = vmatpush1.bf16.msra.mxu0 %v2229
        %2233 = vmatprep.subr.bf16.mxu0 0
        %2234 = vmatpush1.bf16.msra.mxu0 0
        %2235 = vmatprep.subr.bf16.mxu0 0
        %2236 = vmatpush1.bf16.msra.mxu0 0
        %2237 = vmatprep.subr.bf16.mxu0 0
        %2238 = vmatpush1.bf16.msra.mxu0 0
        %2239 = vmatprep.subr.bf16.mxu0 0
        %2240 = vmatpush1.bf16.msra.mxu0 0
        %2241 = vmatprep.subr.bf16.mxu0 0
        %2242 = vmatpush1.bf16.msra.mxu0 0
        %2243 = vmatprep.subr.bf16.mxu0 0
        %2244 = vmatpush1.bf16.msra.mxu0 0
        %2245 = vmatprep.subr.bf16.mxu0 0
        %2246 = vmatpush1.bf16.msra.mxu0 0
        %2247 = vmatprep.subr.bf16.mxu0 0
        %2248 = vmatpush1.bf16.msra.mxu0 0
        %2249 = vmatprep.subr.bf16.mxu0 0
        %2250 = vmatpush1.bf16.msra.mxu0 0
        %2251 = vmatprep.subr.bf16.mxu0 0
        %2252 = vmatpush1.bf16.msra.mxu0 0
        %2253 = vmatprep.subr.bf16.mxu0 0
        %2254 = vmatpush1.bf16.msra.mxu0 0
        %2255 = vmatprep.subr.bf16.mxu0 0
        %2256 = vmatpush1.bf16.msra.mxu0 0
        %2257 = vmatprep.subr.bf16.mxu0 0
        %2258 = vmatpush1.bf16.msra.mxu0 0
        %2259 = vmatprep.subr.bf16.mxu0 0
        %2260 = vmatpush1.bf16.msra.mxu0 0
        %2261 = vmatprep.subr.bf16.mxu0 0
        %2262 = vmatpush1.bf16.msra.mxu0 0
        %2263 = vmatprep.mubr.bf16.mxu0 0
        %2264 = vmatmul.mubr.bf16.gmra.mrb[0].mxu0 %v2226
        %v2265 = vpop.f32.mrb[0].mxu0
        %v2266 = vadd.f32 0.0, %v2265
        %v2267 = vpop.f32.mrb[0].mxu0
        %v2268 = vpop.f32.mrb[0].mxu0
        %v2269 = vpop.f32.mrb[0].mxu0
        %2270 = vdwg.mxu0
        %v2271 = vadd.f32 %v2212, %v2266
        %v2272 = vld [vmem:[%s1726] sm:$0xff]
        %v2273 = vld [vmem:[%s1718] sm:$0xff]
        %2275 = vset.pattern.permute.xlu0 0
        %2276 = vperm.xlu0 %2275, %v2273
        %v2277 = vpop.permute.xlu0 %2276
        %v2279 = vrcp.pop %v2277
        %v2280 = vmul.f32 %v2272, %v2279
        %v2281 = vpack.c.bf16 %v2280, %v2280
        %s2282 = scalar_lea.vmem %s7, 12
        %v2283 = vld [vmem:[%s2282] sm:$0x3]
        %v2285 = vsel %vm855, %v2281, 0
        %v2288 = vsel %vm1946, %v2283, 0
        %2290 = vmatprep.subr.bf16.mxu0 0
        %2291 = vmatpush1.bf16.msra.mxu0 %v2288
        %2292 = vmatprep.subr.bf16.mxu0 0
        %2293 = vmatpush1.bf16.msra.mxu0 0
        %2294 = vmatprep.subr.bf16.mxu0 0
        %2295 = vmatpush1.bf16.msra.mxu0 0
        %2296 = vmatprep.subr.bf16.mxu0 0
        %2297 = vmatpush1.bf16.msra.mxu0 0
        %2298 = vmatprep.subr.bf16.mxu0 0
        %2299 = vmatpush1.bf16.msra.mxu0 0
        %2300 = vmatprep.subr.bf16.mxu0 0
        %2301 = vmatpush1.bf16.msra.mxu0 0
        %2302 = vmatprep.subr.bf16.mxu0 0
        %2303 = vmatpush1.bf16.msra.mxu0 0
        %2304 = vmatprep.subr.bf16.mxu0 0
        %2305 = vmatpush1.bf16.msra.mxu0 0
        %2306 = vmatprep.subr.bf16.mxu0 0
        %2307 = vmatpush1.bf16.msra.mxu0 0
        %2308 = vmatprep.subr.bf16.mxu0 0
        %2309 = vmatpush1.bf16.msra.mxu0 0
        %2310 = vmatprep.subr.bf16.mxu0 0
        %2311 = vmatpush1.bf16.msra.mxu0 0
        %2312 = vmatprep.subr.bf16.mxu0 0
        %2313 = vmatpush1.bf16.msra.mxu0 0
        %2314 = vmatprep.subr.bf16.mxu0 0
        %2315 = vmatpush1.bf16.msra.mxu0 0
        %2316 = vmatprep.subr.bf16.mxu0 0
        %2317 = vmatpush1.bf16.msra.mxu0 0
        %2318 = vmatprep.subr.bf16.mxu0 0
        %2319 = vmatpush1.bf16.msra.mxu0 0
        %2320 = vmatprep.subr.bf16.mxu0 0
        %2321 = vmatpush1.bf16.msra.mxu0 0
        %2322 = vmatprep.mubr.bf16.mxu0 0
        %2323 = vmatmul.mubr.bf16.gmra.mrb[0].mxu0 %v2285
        %v2324 = vpop.f32.mrb[0].mxu0
        %v2325 = vadd.f32 0.0, %v2324
        %v2326 = vpop.f32.mrb[0].mxu0
        %v2327 = vpop.f32.mrb[0].mxu0
        %v2328 = vpop.f32.mrb[0].mxu0
        %2329 = vdwg.mxu0
        %v2330 = vadd.f32 %v2271, %v2325
        %v2331 = vld [vmem:[%s1859] sm:$0xff]
        %v2332 = vld [vmem:[%s1851] sm:$0xff]
        %2334 = vset.pattern.permute.xlu0 0
        %2335 = vperm.xlu0 %2334, %v2332
        %v2336 = vpop.permute.xlu0 %2335
        %v2338 = vrcp.pop %v2336
        %v2339 = vmul.f32 %v2331, %v2338
        %v2340 = vpack.c.bf16 %v2339, %v2339
        %s2341 = scalar_lea.vmem %s7, 14
        %v2342 = vld [vmem:[%s2341] sm:$0x3]
        %v2344 = vsel %vm855, %v2340, 0
        %v2347 = vsel %vm1946, %v2342, 0
        %2349 = vmatprep.subr.bf16.mxu0 0
        %2350 = vmatpush1.bf16.msra.mxu0 %v2347
        %2351 = vmatprep.subr.bf16.mxu0 0
        %2352 = vmatpush1.bf16.msra.mxu0 0
        %2353 = vmatprep.subr.bf16.mxu0 0
        %2354 = vmatpush1.bf16.msra.mxu0 0
        %2355 = vmatprep.subr.bf16.mxu0 0
        %2356 = vmatpush1.bf16.msra.mxu0 0
        %2357 = vmatprep.subr.bf16.mxu0 0
        %2358 = vmatpush1.bf16.msra.mxu0 0
        %2359 = vmatprep.subr.bf16.mxu0 0
        %2360 = vmatpush1.bf16.msra.mxu0 0
        %2361 = vmatprep.subr.bf16.mxu0 0
        %2362 = vmatpush1.bf16.msra.mxu0 0
        %2363 = vmatprep.subr.bf16.mxu0 0
        %2364 = vmatpush1.bf16.msra.mxu0 0
        %2365 = vmatprep.subr.bf16.mxu0 0
        %2366 = vmatpush1.bf16.msra.mxu0 0
        %2367 = vmatprep.subr.bf16.mxu0 0
        %2368 = vmatpush1.bf16.msra.mxu0 0
        %2369 = vmatprep.subr.bf16.mxu0 0
        %2370 = vmatpush1.bf16.msra.mxu0 0
        %2371 = vmatprep.subr.bf16.mxu0 0
        %2372 = vmatpush1.bf16.msra.mxu0 0
        %2373 = vmatprep.subr.bf16.mxu0 0
        %2374 = vmatpush1.bf16.msra.mxu0 0
        %2375 = vmatprep.subr.bf16.mxu0 0
        %2376 = vmatpush1.bf16.msra.mxu0 0
        %2377 = vmatprep.subr.bf16.mxu0 0
        %2378 = vmatpush1.bf16.msra.mxu0 0
        %2379 = vmatprep.subr.bf16.mxu0 0
        %2380 = vmatpush1.bf16.msra.mxu0 0
        %2381 = vmatprep.mubr.bf16.mxu0 0
        %2382 = vmatmul.mubr.bf16.gmra.mrb[0].mxu0 %v2344
        %v2383 = vpop.f32.mrb[0].mxu0
        %v2384 = vadd.f32 0.0, %v2383
        %v2385 = vpop.f32.mrb[0].mxu0
        %v2386 = vpop.f32.mrb[0].mxu0
        %v2387 = vpop.f32.mrb[0].mxu0
        %2388 = vdwg.mxu0
        %v2389 = vadd.f32 %v2330, %v2384
        %v2390 = vld [vmem:[%s566] sm:$0xff]
        %v2391 = vadd.f32 %v2390, %v2389
        %v2392 = vld [vmem:[%s11] sm:$0x1]
        %v2394 = vlaneseq
        %v2395 = vshrl.u32 %v2394, 7
        %v2396 = vsub.s32 0, %v2395
        %v2397 = vrot.slane %v2392, %v2396
        %v2399 = vadd.f32 %v2391, %v2397
        %v2400 = vld [vmem:[%s12] sm:$0x1]
        %v2401 = vld [vmem:[%s13] sm:$0x1]
        %v2402 = vsel %vm733, %v2399, 0.0
        %2403 = vadd.xlane.f32.xlu0 %v2402
        %v2404 = vpop.xlane.xlu0 %2403
        %v2405 = vrcp.pop 32.0
        %v2406 = vmul.f32 %v2404, %v2405
        %v2407 = vsub.f32 %v2399, %v2406
        %v2408 = vmul.f32 %v2407, %v2407
        %v2409 = vsel %vm733, %v2408, 0.0
        %2410 = vadd.xlane.f32.xlu0 %v2409
        %v2411 = vpop.xlane.xlu0 %2410
        %v2412 = vmul.f32 %v2411, %v2405
        %v2413 = vadd.f32 %v2412, 1e-05
        %v2414 = vrsqrt.pop %v2413
        %v2415 = vmul.f32 %v2407, %v2414
        %v2417 = vlaneseq
        %v2418 = vshrl.u32 %v2417, 7
        %v2419 = vsub.s32 0, %v2418
        %v2420 = vrot.slane %v2400, %v2419
        %v2422 = vmul.f32 %v2415, %v2420
        %v2424 = vlaneseq
        %v2425 = vshrl.u32 %v2424, 7
        %v2426 = vsub.s32 0, %v2425
        %v2427 = vrot.slane %v2401, %v2426
        %v2429 = vadd.f32 %v2422, %v2427
        %2430 = vst.msk [vmem:[%s600] sm:$0xff] %vm733, %v2429
      $region84: #{_forward.4} parent=75 // pred_fallthru
        _
      %p2431 = scmp.lt.s32.totalorder %s30, 1
      %s2432 = scalar_select %p2431, %s30, 1
      %p2433 = scmp.lt.s32.totalorder %s31, 0
      %s2434 = scalar_select %p2433, %s31, 0
      %s2435 = sadd.s32 %s2434, %s2432
      %s2436 = smul.addr %s2435, 8
      %s2437 = scalar_lea.vmem %s14, %s2436
      // Predicated region
      $region85: #{_forward.4} parent=75 // pred_check
        %p2438 = pneg %p386
      $region86: #{_forward.4} parent=75 // pred_check_branch
        %2440 = sbr.rel (%p2438) target = $region88
      $region87: #{_forward.4} parent=75 // pred_region
        _
      $region88: #{_forward.4} parent=75 // pred_fallthru
        _
    $region76: #{_forward.4} parent=5 // pred_fallthru
      _
    %p2441 = scmp.le.s32.totalorder 2, %s20
    // Predicated region
    $region89: #{_forward.4} parent=5 // pred_check
      %p2442 = pneg %p2441
    $region90: #{_forward.4} parent=5 // pred_check_branch
      %2444 = sbr.rel (%p2442) target = $region92
    $region91: #{_forward.4} parent=5 // pred_region
      %s2445 = ssub.s32 %s20, 2
      // Predicated region
      $region93: #{_forward.4} parent=91 // pred_check
        %p2446 = pneg %p392
      $region94: #{_forward.4} parent=91 // pred_check_branch
        %2448 = sbr.rel (%p2446) target = $region96
      $region95: #{_forward.4} parent=91 // pred_region
        %p2449 = scmp.lt.s32.totalorder %s33, 1
        %s2450 = scalar_select %p2449, %s33, 1
        %p2451 = scmp.lt.s32.totalorder %s34, 0
        %s2452 = scalar_select %p2451, %s34, 0
        %s2453 = sadd.s32 %s2452, %s2450
        %s2454 = smul.addr %s2453, 8
        %s2455 = scalar_lea.vmem %s14, %s2454
      $region96: #{_forward.4} parent=91 // pred_fallthru
        _
    $region92: #{_forward.4} parent=5 // pred_fallthru
      _
  $region6: #{_forward.4} parent=0 // loop_footer
    %s24 = sadd.s32 1, %s20
  $region7: #{_forward.4} parent=0 // loop_footer_branch
    %19 = sbr.rel target = $region3
  $region8: #{_forward.4} parent=0 // loop_exit
    _

</llo_original>
